<compile_context>
chip_gen: v6e
topology: v6e:2x2x1
jax: 0.10.0
libtpu: 0.0.40
codegen_flags: <defaults>
</compile_context>

<pallas_src>
import functools

import jax
import jax.numpy as jnp
from jax.experimental import pallas as pl
from jax.experimental.pallas import tpu as pltpu

EPS = 1e-5
LANE = 128
TILE_ROWS = 512  # sweep 512-1024 on v6e (128 MiB VMEM), 256-512 on v7x (64 MiB)

_CP_PARALLEL = pltpu.CompilerParams(
    dimension_semantics=("parallel",),
    vmem_limit_bytes=64 * 1024 * 1024,
)


def _rup(n, m):
    return ((n + m - 1) // m) * m


# ----------------------------- kernel helpers -------------------------------

def _partial_stats(y_f32, tm, real_m, mask_rows):
    """Per-tile sum / sum-of-squares over rows (padded rows excluded)."""
    c = y_f32.shape[-1]
    if mask_rows:
        base = pl.program_id(0) * tm
        rows = jax.lax.broadcasted_iota(jnp.int32, y_f32.shape, 0) + base
        ys = jnp.where(rows < real_m, y_f32, 0.0)
    else:
        ys = y_f32
    s = jnp.sum(ys, axis=0, keepdims=True).reshape(1, 1, c)
    q = jnp.sum(ys * ys, axis=0, keepdims=True).reshape(1, 1, c)
    return s, q


# ----------------------------- Pallas kernels ------------------------------

def _matmul_stats_kernel(x_ref, w_ref, y_ref, sum_ref, sq_ref, *,
                         tm, real_m, mask_rows):
    # 1x1 conv as plain matmul + BN partial stats.
    y = jnp.dot(x_ref[...], w_ref[...], preferred_element_type=jnp.float32)
    y_ref[...] = y.astype(y_ref.dtype)
    s, q = _partial_stats(y, tm, real_m, mask_rows)
    sum_ref[...] = s
    sq_ref[...] = q


def _dual_matmul_stats_kernel(x_ref, w1_ref, w2_ref, y1_ref, y2_ref,
                              s1_ref, q1_ref, s2_ref, q2_ref, *,
                              tm, real_m, mask_rows):
    # conv1 (1x1) and the stride-1 projection shortcut share one read of x.
    x = x_ref[...]
    y1 = jnp.dot(x, w1_ref[...], preferred_element_type=jnp.float32)
    y1_ref[...] = y1.astype(y1_ref.dtype)
    s, q = _partial_stats(y1, tm, real_m, mask_rows)
    s1_ref[...] = s
    q1_ref[...] = q
    y2 = jnp.dot(x, w2_ref[...], preferred_element_type=jnp.float32)
    y2_ref[...] = y2.astype(y2_ref.dtype)
    s, q = _partial_stats(y2, tm, real_m, mask_rows)
    s2_ref[...] = s
    q2_ref[...] = q


def _bn_matmul_stats_kernel(x_ref, is_ref, ib_ref, w_ref, y_ref, sum_ref,
                            sq_ref, *, tm, real_m, mask_rows):
    # Fused: ReLU(BN(prev conv output)) -> 1x1 conv -> partial BN stats.
    a = jnp.maximum(x_ref[...].astype(jnp.float32) * is_ref[...] + ib_ref[...],
                    0.0)
    y = jnp.dot(a.astype(jnp.bfloat16), w_ref[...],
                preferred_element_type=jnp.float32)
    y_ref[...] = y.astype(y_ref.dtype)
    s, q = _partial_stats(y, tm, real_m, mask_rows)
    sum_ref[...] = s
    sq_ref[...] = q


def _bn_conv3x3_stats_kernel(x_ref, is_ref, ib_ref, w_ref, y_ref, sum_ref,
                             sq_ref, pad_ref, *, stride, ho, wo):
    # One image per grid step. Fused: ReLU(BN1(y1)) -> zero-pad 1px halo in a
    # VMEM scratch -> 3x3 conv as 9 shifted MXU matmuls (no im2col, no host
    # halo copy) -> BN2 partial stats.
    h, w_in, cin = x_ref.shape[1], x_ref.shape[2], x_ref.shape[3]
    cout = y_ref.shape[-1]

    pad_ref[...] = jnp.zeros_like(pad_ref)  # halo stays zero
    s_in = is_ref[...].reshape(1, 1, cin)
    b_in = ib_ref[...].reshape(1, 1, cin)
    a = jnp.maximum(x_ref[0].astype(jnp.float32) * s_in + b_in, 0.0)
    pad_ref[pl.ds(1, h), pl.ds(1, w_in), :] = a

    acc = jnp.zeros((ho * wo, cout), jnp.float32)
    for dh in range(3):
        for dw in range(3):
            if stride == 1:
                patch = pad_ref[pl.ds(dh, ho), pl.ds(dw, wo), :]
            else:
                patch = pad_ref[pl.ds(dh, ho, stride=stride),
                                pl.ds(dw, wo, stride=stride), :]
            acc = acc + jnp.dot(
                patch.reshape(ho * wo, cin).astype(jnp.bfloat16),
                w_ref[dh * 3 + dw], preferred_element_type=jnp.float32)

    y_ref[...] = acc.reshape(1, ho, wo, cout).astype(y_ref.dtype)
    sum_ref[...] = jnp.sum(acc, axis=0, keepdims=True).reshape(1, 1, cout)
    sq_ref[...] = jnp.sum(acc * acc, axis=0, keepdims=True).reshape(1, 1, cout)


def _strided_proj_stats_kernel(x_ref, w_ref, y_ref, sum_ref, sq_ref, *,
                               stride, ho, wo):
    # Strided 1x1 projection shortcut: stride applied in-kernel via pl.ds.
    cin = x_ref.shape[-1]
    cout = y_ref.shape[-1]
    patch = x_ref[0, pl.ds(0, ho, stride=stride), pl.ds(0, wo, stride=stride), :]
    y = jnp.dot(patch.reshape(ho * wo, cin), w_ref[...],
                preferred_element_type=jnp.float32)
    y_ref[...] = y.reshape(1, ho, wo, cout)
    sum_ref[...] = jnp.sum(y, axis=0, keepdims=True).reshape(1, 1, cout)
    sq_ref[...] = jnp.sum(y * y, axis=0, keepdims=True).reshape(1, 1, cout)


def _bn_add_relu_kernel(y_ref, s_ref, b_ref, r_ref, rs_ref, rb_ref, o_ref):
    # Fused: BN3(y) + BN_sc(residual) + add + final ReLU.
    main = y_ref[...].astype(jnp.float32) * s_ref[...] + b_ref[...]
    res = r_ref[...].astype(jnp.float32) * rs_ref[...] + rb_ref[...]
    o_ref[...] = jnp.maximum(main + res, 0.0).astype(o_ref.dtype)


# ------------------------------ kernel wrappers -----------------------------

def matmul_stats(x2d, w2d, real_m, *, tm, out_dtype):
    mp, k = x2d.shape
    c = w2d.shape[1]
    t = mp // tm
    kernel = functools.partial(_matmul_stats_kernel, tm=tm, real_m=real_m,
                               mask_rows=(mp != real_m))
    return pl.pallas_call(
        kernel,
        out_shape=(jax.ShapeDtypeStruct((mp, c), out_dtype),
                   jax.ShapeDtypeStruct((t, 1, c), jnp.float32),
                   jax.ShapeDtypeStruct((t, 1, c), jnp.float32)),
        grid=(t,),
        in_specs=[pl.BlockSpec((tm, k), lambda i: (i, 0)),
                  pl.BlockSpec((k, c), lambda i: (0, 0))],
        out_specs=(pl.BlockSpec((tm, c), lambda i: (i, 0)),
                   pl.BlockSpec((1, 1, c), lambda i: (i, 0, 0)),
                   pl.BlockSpec((1, 1, c), lambda i: (i, 0, 0))),
        compiler_params=_CP_PARALLEL,
    )(x2d, w2d)


def dual_matmul_stats(x2d, w1, w2, real_m, *, tm, y1_dtype, y2_dtype):
    mp, k = x2d.shape
    c1, c2 = w1.shape[1], w2.shape[1]
    t = mp // tm
    kernel = functools.partial(_dual_matmul_stats_kernel, tm=tm, real_m=real_m,
                               mask_rows=(mp != real_m))
    return pl.pallas_call(
        kernel,
        out_shape=(jax.ShapeDtypeStruct((mp, c1), y1_dtype),
                   jax.ShapeDtypeStruct((mp, c2), y2_dtype),
                   jax.ShapeDtypeStruct((t, 1, c1), jnp.float32),
                   jax.ShapeDtypeStruct((t, 1, c1), jnp.float32),
                   jax.ShapeDtypeStruct((t, 1, c2), jnp.float32),
                   jax.ShapeDtypeStruct((t, 1, c2), jnp.float32)),
        grid=(t,),
        in_specs=[pl.BlockSpec((tm, k), lambda i: (i, 0)),
                  pl.BlockSpec((k, c1), lambda i: (0, 0)),
                  pl.BlockSpec((k, c2), lambda i: (0, 0))],
        out_specs=(pl.BlockSpec((tm, c1), lambda i: (i, 0)),
                   pl.BlockSpec((tm, c2), lambda i: (i, 0)),
                   pl.BlockSpec((1, 1, c1), lambda i: (i, 0, 0)),
                   pl.BlockSpec((1, 1, c1), lambda i: (i, 0, 0)),
                   pl.BlockSpec((1, 1, c2), lambda i: (i, 0, 0)),
                   pl.BlockSpec((1, 1, c2), lambda i: (i, 0, 0))),
        compiler_params=_CP_PARALLEL,
    )(x2d, w1, w2)


def bn_matmul_stats(y_prev, scale, shift, w2d, real_m, *, tm, out_dtype):
    mp, k = y_prev.shape
    c = w2d.shape[1]
    t = mp // tm
    kernel = functools.partial(_bn_matmul_stats_kernel, tm=tm, real_m=real_m,
                               mask_rows=(mp != real_m))
    return pl.pallas_call(
        kernel,
        out_shape=(jax.ShapeDtypeStruct((mp, c), out_dtype),
                   jax.ShapeDtypeStruct((t, 1, c), jnp.float32),
                   jax.ShapeDtypeStruct((t, 1, c), jnp.float32)),
        grid=(t,),
        in_specs=[pl.BlockSpec((tm, k), lambda i: (i, 0)),
                  pl.BlockSpec((1, k), lambda i: (0, 0)),
                  pl.BlockSpec((1, k), lambda i: (0, 0)),
                  pl.BlockSpec((k, c), lambda i: (0, 0))],
        out_specs=(pl.BlockSpec((tm, c), lambda i: (i, 0)),
                   pl.BlockSpec((1, 1, c), lambda i: (i, 0, 0)),
                   pl.BlockSpec((1, 1, c), lambda i: (i, 0, 0))),
        compiler_params=_CP_PARALLEL,
    )(y_prev, scale, shift, w2d)


def bn_conv3x3_stats(x_img, scale, shift, w_taps, *, stride, ho, wo, out_dtype):
    n, h, w, cin = x_img.shape
    cout = w_taps.shape[-1]
    kernel = functools.partial(_bn_conv3x3_stats_kernel, stride=stride,
                               ho=ho, wo=wo)
    # TODO(synk): for large images, block over output-row tiles (with halo)
    # instead of one whole image per grid step.
    return pl.pallas_call(
        kernel,
        out_shape=(jax.ShapeDtypeStruct((n, ho, wo, cout), out_dtype),
                   jax.ShapeDtypeStruct((n, 1, cout), jnp.float32),
                   jax.ShapeDtypeStruct((n, 1, cout), jnp.float32)),
        grid=(n,),
        in_specs=[pl.BlockSpec((1, h, w, cin), lambda i: (i, 0, 0, 0)),
                  pl.BlockSpec((1, cin), lambda i: (0, 0)),
                  pl.BlockSpec((1, cin), lambda i: (0, 0)),
                  pl.BlockSpec((9, cin, cout), lambda i: (0, 0, 0))],
        out_specs=(pl.BlockSpec((1, ho, wo, cout), lambda i: (i, 0, 0, 0)),
                   pl.BlockSpec((1, 1, cout), lambda i: (i, 0, 0)),
                   pl.BlockSpec((1, 1, cout), lambda i: (i, 0, 0))),
        scratch_shapes=[pltpu.VMEM((h + 2, w + 2, cin), jnp.float32)],
        compiler_params=_CP_PARALLEL,
    )(x_img, scale, shift, w_taps)


def strided_proj_stats(x_img, w2d, *, stride, ho, wo):
    n, h, w, cin = x_img.shape
    cout = w2d.shape[-1]
    kernel = functools.partial(_strided_proj_stats_kernel, stride=stride,
                               ho=ho, wo=wo)
    return pl.pallas_call(
        kernel,
        out_shape=(jax.ShapeDtypeStruct((n, ho, wo, cout), jnp.float32),
                   jax.ShapeDtypeStruct((n, 1, cout), jnp.float32),
                   jax.ShapeDtypeStruct((n, 1, cout), jnp.float32)),
        grid=(n,),
        in_specs=[pl.BlockSpec((1, h, w, cin), lambda i: (i, 0, 0, 0)),
                  pl.BlockSpec((cin, cout), lambda i: (0, 0))],
        out_specs=(pl.BlockSpec((1, ho, wo, cout), lambda i: (i, 0, 0, 0)),
                   pl.BlockSpec((1, 1, cout), lambda i: (i, 0, 0)),
                   pl.BlockSpec((1, 1, cout), lambda i: (i, 0, 0))),
        compiler_params=_CP_PARALLEL,
    )(x_img, w2d)


def bn_add_relu(y, scale, shift, resid, r_scale, r_shift, *, tm):
    mp, c = y.shape
    t = mp // tm
    return pl.pallas_call(
        _bn_add_relu_kernel,
        out_shape=jax.ShapeDtypeStruct((mp, c), jnp.float32),
        grid=(t,),
        in_specs=[pl.BlockSpec((tm, c), lambda i: (i, 0)),
                  pl.BlockSpec((1, c), lambda i: (0, 0)),
                  pl.BlockSpec((1, c), lambda i: (0, 0)),
                  pl.BlockSpec((tm, c), lambda i: (i, 0)),
                  pl.BlockSpec((1, c), lambda i: (0, 0)),
                  pl.BlockSpec((1, c), lambda i: (0, 0))],
        out_specs=pl.BlockSpec((tm, c), lambda i: (i, 0)),
        compiler_params=_CP_PARALLEL,
    )(y, scale, shift, resid, r_scale, r_shift)


# ------------------------------ glue (plain JAX) ----------------------------

def bn_scale_shift(sums, sqs, count, gamma, beta, cpad):
    """Tiny cross-tile reduction of partial stats -> affine (scale, shift)."""
    s = jnp.sum(sums, axis=(0, 1))                       # (cpad,)
    q = jnp.sum(sqs, axis=(0, 1))
    mean = s / count
    var = jnp.maximum(q / count - mean * mean, 0.0)      # biased var (BN norm)
    g = jnp.pad(gamma.astype(jnp.float32), (0, cpad - gamma.shape[0]))
    b = jnp.pad(beta.astype(jnp.float32), (0, cpad - beta.shape[0]))
    scale = g * jax.lax.rsqrt(var + EPS)                 # padded chans: g=0 -> 0
    shift = b - mean * scale
    return scale.reshape(1, cpad), shift.reshape(1, cpad)


def _pad_cols(x, cpad):
    c = x.shape[-1]
    if c == cpad:
        return x
    widths = [(0, 0)] * (x.ndim - 1) + [(0, cpad - c)]
    return jnp.pad(x, widths)


def _pad_rows(x, tm):
    m = x.shape[0]
    mp = _rup(m, tm)
    if mp == m:
        return x
    return jnp.pad(x, ((0, mp - m), (0, 0)))


def _pad2d(w, rpad, cpad):
    r, c = w.shape
    return jnp.pad(w, ((0, rpad - r), (0, cpad - c)))


def init_bottleneck_params(key, in_planes, planes, stride):
    expansion = 4
    out_planes = expansion * planes
    ks = jax.random.split(key, 8)

    def conv_init(k, shape):
        fan_in = shape[1] * shape[2] * shape[3]
        return jax.random.normal(k, shape, jnp.float32) * (2.0 / fan_in) ** 0.5

    params = {
        # torch conv weight layout: (out, in, kh, kw)
        "conv1_w": conv_init(ks[0], (planes, in_planes, 1, 1)),
        "conv2_w": conv_init(ks[1], (planes, planes, 3, 3)),
        "conv3_w": conv_init(ks[2], (out_planes, planes, 1, 1)),
        "bn1_g": 1.0 + 0.1 * jax.random.normal(ks[3], (planes,), jnp.float32),
        "bn1_b": 0.1 * jax.random.normal(ks[4], (planes,), jnp.float32),
        "bn2_g": 1.0 + 0.1 * jax.random.normal(ks[5], (planes,), jnp.float32),
        "bn2_b": 0.1 * jax.random.normal(ks[6], (planes,), jnp.float32),
        "bn3_g": jnp.ones((out_planes,), jnp.float32),
        "bn3_b": jnp.zeros((out_planes,), jnp.float32),
    }
    if stride != 1 or in_planes != out_planes:
        params["sc_w"] = conv_init(ks[7], (out_planes, in_planes, 1, 1))
        params["sc_g"] = jnp.ones((out_planes,), jnp.float32)
        params["sc_b"] = jnp.zeros((out_planes,), jnp.float32)
    return params


def bottleneck_forward(x_nchw, params, stride):
    expansion = 4
    x = jnp.transpose(x_nchw, (0, 2, 3, 1)).astype(jnp.float32)   # NCHW -> NHWC
    n, h, w, cin = x.shape
    planes = params["conv1_w"].shape[0]
    cout = expansion * planes
    has_proj = (stride != 1) or (cin != cout)

    # lane-dense channel padding (multiples of 128)
    cin_p = _rup(max(cin, LANE), LANE)
    p_p = _rup(max(planes, LANE), LANE)
    cout_p = _rup(max(cout, LANE), LANE)

    m1 = n * h * w
    ho = (h + 2 - 3) // stride + 1
    wo = (w + 2 - 3) // stride + 1
    m2 = n * ho * wo
    tm1 = min(TILE_ROWS, _rup(m1, 8))
    tm2 = min(TILE_ROWS, _rup(m2, 8))

    x2d_f32 = _pad_rows(_pad_cols(x.reshape(m1, cin), cin_p), tm1)
    x2d = x2d_f32.astype(jnp.bfloat16)

    w1 = params["conv1_w"].reshape(planes, cin).T                  # (cin, planes)
    w1p = _pad2d(w1, cin_p, p_p).astype(jnp.bfloat16)

    if has_proj:
        wsc = params["sc_w"].reshape(cout, cin).T                  # (cin, cout)
        wscp = _pad2d(wsc, cin_p, cout_p).astype(jnp.bfloat16)

    resid = None
    r_scale = None
    r_shift = None

    # ---- conv1 (1x1) [+ stride-1 projection shortcut fused: one read of x] ----
    if has_proj and stride == 1:
        y1, ysc, s1, q1, ssc, qsc = dual_matmul_stats(
            x2d, w1p, wscp, m1, tm=tm1,
            y1_dtype=jnp.bfloat16, y2_dtype=jnp.float32)
        r_scale, r_shift = bn_scale_shift(ssc, qsc, m2,
                                          params["sc_g"], params["sc_b"], cout_p)
        resid = ysc
    else:
        y1, s1, q1 = matmul_stats(x2d, w1p, m1, tm=tm1, out_dtype=jnp.bfloat16)
    sc1, sh1 = bn_scale_shift(s1, q1, m1, params["bn1_g"], params["bn1_b"], p_p)

    # ---- conv2 (3x3, stride, pad=1): fused BN1+ReLU + in-VMEM halo pad + conv ----
    y1_img = y1[:m1].reshape(n, h, w, p_p)
    w2 = jnp.transpose(params["conv2_w"], (2, 3, 1, 0)).reshape(9, planes, planes)
    w2p = jnp.pad(w2, ((0, 0), (0, p_p - planes), (0, p_p - planes))).astype(jnp.bfloat16)
    y2, s2, q2 = bn_conv3x3_stats(y1_img, sc1, sh1, w2p, stride=stride,
                                  ho=ho, wo=wo, out_dtype=jnp.bfloat16)
    sc2, sh2 = bn_scale_shift(s2, q2, m2, params["bn2_g"], params["bn2_b"], p_p)

    # ---- conv3 (1x1): fused BN2+ReLU + matmul + BN3 partial stats ----
    y2_2d = _pad_rows(y2.reshape(m2, p_p), tm2)
    w3 = params["conv3_w"].reshape(cout, planes).T                 # (planes, cout)
    w3p = _pad2d(w3, p_p, cout_p).astype(jnp.bfloat16)
    y3, s3, q3 = bn_matmul_stats(y2_2d, sc2, sh2, w3p, m2, tm=tm2,
                                 out_dtype=jnp.float32)
    sc3, sh3 = bn_scale_shift(s3, q3, m2, params["bn3_g"], params["bn3_b"], cout_p)

    # ---- remaining shortcut cases ----
    if not has_proj:
        resid = x2d_f32                                            # identity, f32
        r_scale = jnp.ones((1, cout_p), jnp.float32)
        r_shift = jnp.zeros((1, cout_p), jnp.float32)
    elif stride != 1:
        # strided 1x1 projection: stride handled inside the kernel (pl.ds stride)
        xs = _pad_cols(x, cin_p).astype(jnp.bfloat16)
        ysc4, ssc, qsc = strided_proj_stats(xs, wscp, stride=stride, ho=ho, wo=wo)
        resid = _pad_rows(ysc4.reshape(m2, cout_p), tm2)
        r_scale, r_shift = bn_scale_shift(ssc, qsc, m2,
                                          params["sc_g"], params["sc_b"], cout_p)

    # ---- fused BN3 + shortcut BN + residual add + final ReLU ----
    out = bn_add_relu(y3, sc3, sh3, resid, r_scale, r_shift, tm=tm2)
    out = out[:m2].reshape(n, ho, wo, cout_p)[..., :cout]
    return jnp.transpose(out, (0, 3, 1, 2))                        # NHWC -> NCHW


# ----------------------------------- main -----------------------------------

if __name__ == "__main__":
    key = jax.random.PRNGKey(0)
    kx, kp = jax.random.split(key)

    n, in_planes, h, w = 2, 8, 16, 16
    planes, stride = 4, 1      # 4*planes=16 != in_planes -> projection shortcut

    x = jax.random.normal(kx, (n, in_planes, h, w), jnp.float32)   # NCHW input
    params = init_bottleneck_params(kp, in_planes, planes, stride)

    fwd = jax.jit(functools.partial(bottleneck_forward, stride=stride))
    y = fwd(x, params)
    y = jax.block_until_ready(y)

    ho = (h + 2 - 3) // stride + 1
    expected = (n, 4 * planes, ho, ho)
    assert y.shape == expected, (y.shape, expected)
    assert bool(jnp.all(y >= 0.0))        # final ReLU
    assert bool(jnp.all(jnp.isfinite(y)))
    print("KERNEL_OK")
</pallas_src>

<mosaic_0001>
module attributes {stable_mosaic.version = 11 : i64} {
  func.func @_dual_matmul_stats_kernel(%arg0: i32, %arg1: memref<512x128xbf16, #tpu.memory_space<vmem>>, %arg2: memref<128x128xbf16, #tpu.memory_space<vmem>>, %arg3: memref<128x128xbf16, #tpu.memory_space<vmem>>, %arg4: memref<512x128xbf16, #tpu.memory_space<vmem>>, %arg5: memref<512x128xf32, #tpu.memory_space<vmem>>, %arg6: memref<1x1x128xf32, #tpu.memory_space<vmem>>, %arg7: memref<1x1x128xf32, #tpu.memory_space<vmem>>, %arg8: memref<1x1x128xf32, #tpu.memory_space<vmem>>, %arg9: memref<1x1x128xf32, #tpu.memory_space<vmem>>) attributes {dimension_semantics = [#tpu.dimension_semantics<parallel>], iteration_bounds = array<i64: 1>, scalar_prefetch = 0 : i64, scratch_operands = 0 : i64, tpu.core_type = #tpu.core_type<tc>, window_params = [{transform_indices = @transform_0, window_bounds = array<i64: 512, 128>}, {pipeline_mode = #tpu.pipeline_mode<synchronous>, transform_indices = @transform_1, window_bounds = array<i64: 128, 128>}, {pipeline_mode = #tpu.pipeline_mode<synchronous>, transform_indices = @transform_2, window_bounds = array<i64: 128, 128>}, {transform_indices = @transform_3, window_bounds = array<i64: 512, 128>}, {transform_indices = @transform_4, window_bounds = array<i64: 512, 128>}, {transform_indices = @transform_5, window_bounds = array<i64: 1, 1, 128>}, {transform_indices = @transform_6, window_bounds = array<i64: 1, 1, 128>}, {transform_indices = @transform_7, window_bounds = array<i64: 1, 1, 128>}, {transform_indices = @transform_8, window_bounds = array<i64: 1, 1, 128>}]} {
    %c0 = arith.constant 0 : index
    %c0_0 = arith.constant 0 : index
    %0 = vector.load %arg1[%c0, %c0_0] : memref<512x128xbf16, #tpu.memory_space<vmem>>, vector<512x128xbf16>
    %c0_1 = arith.constant 0 : index
    %c0_2 = arith.constant 0 : index
    %1 = vector.load %arg2[%c0_1, %c0_2] : memref<128x128xbf16, #tpu.memory_space<vmem>>, vector<128x128xbf16>
    %cst = arith.constant dense<0.000000e+00> : vector<512x128xf32>
    %2 = tpu.matmul %0, %1, %cst {dimension_numbers = #tpu.dot_dimension_numbers<[1], [0], [0], [1], [0, 0, 1, 1], [], []>} : vector<512x128xbf16>, vector<128x128xbf16>, vector<512x128xf32> -> vector<512x128xf32>
    %3 = arith.truncf %2 : vector<512x128xf32> to vector<512x128xbf16>
    %c0_3 = arith.constant 0 : index
    %c0_4 = arith.constant 0 : index
    %4 = vector.load %arg4[%c0_3, %c0_4] : memref<512x128xbf16, #tpu.memory_space<vmem>>, vector<512x128xbf16>
    tpu.vector_store %arg4[%c0_3, %c0_4], %3 {strides = array<i32>} : memref<512x128xbf16, #tpu.memory_space<vmem>>, vector<512x128xbf16>,
    %cst_5 = arith.constant dense<0.000000e+00> : vector<128xf32>
    %5 = vector.multi_reduction <add>, %2, %cst_5 [0] : vector<512x128xf32> to vector<128xf32>
    %6 = vector.shape_cast %5 : vector<128xf32> to vector<1x128xf32>
    %7 = vector.shape_cast %6 : vector<1x128xf32> to vector<1x1x128xf32>
    %8 = arith.mulf %2, %2 : vector<512x128xf32>
    %cst_6 = arith.constant dense<0.000000e+00> : vector<128xf32>
    %9 = vector.multi_reduction <add>, %8, %cst_6 [0] : vector<512x128xf32> to vector<128xf32>
    %10 = vector.shape_cast %9 : vector<128xf32> to vector<1x128xf32>
    %11 = vector.shape_cast %10 : vector<1x128xf32> to vector<1x1x128xf32>
    %c0_7 = arith.constant 0 : index
    %c0_8 = arith.constant 0 : index
    %c0_9 = arith.constant 0 : index
    %12 = vector.load %arg6[%c0_7, %c0_8, %c0_9] : memref<1x1x128xf32, #tpu.memory_space<vmem>>, vector<1x1x128xf32>
    tpu.vector_store %arg6[%c0_7, %c0_8, %c0_9], %7 {strides = array<i32>} : memref<1x1x128xf32, #tpu.memory_space<vmem>>, vector<1x1x128xf32>,
    %c0_10 = arith.constant 0 : index
    %c0_11 = arith.constant 0 : index
    %c0_12 = arith.constant 0 : index
    %13 = vector.load %arg7[%c0_10, %c0_11, %c0_12] : memref<1x1x128xf32, #tpu.memory_space<vmem>>, vector<1x1x128xf32>
    tpu.vector_store %arg7[%c0_10, %c0_11, %c0_12], %11 {strides = array<i32>} : memref<1x1x128xf32, #tpu.memory_space<vmem>>, vector<1x1x128xf32>,
    %c0_13 = arith.constant 0 : index
    %c0_14 = arith.constant 0 : index
    %14 = vector.load %arg3[%c0_13, %c0_14] : memref<128x128xbf16, #tpu.memory_space<vmem>>, vector<128x128xbf16>
    %cst_15 = arith.constant dense<0.000000e+00> : vector<512x128xf32>
    %15 = tpu.matmul %0, %14, %cst_15 {dimension_numbers = #tpu.dot_dimension_numbers<[1], [0], [0], [1], [0, 0, 1, 1], [], []>} : vector<512x128xbf16>, vector<128x128xbf16>, vector<512x128xf32> -> vector<512x128xf32>
    %c0_16 = arith.constant 0 : index
    %c0_17 = arith.constant 0 : index
    %16 = vector.load %arg5[%c0_16, %c0_17] : memref<512x128xf32, #tpu.memory_space<vmem>>, vector<512x128xf32>
    tpu.vector_store %arg5[%c0_16, %c0_17], %15 {strides = array<i32>} : memref<512x128xf32, #tpu.memory_space<vmem>>, vector<512x128xf32>,
    %cst_18 = arith.constant dense<0.000000e+00> : vector<128xf32>
    %17 = vector.multi_reduction <add>, %15, %cst_18 [0] : vector<512x128xf32> to vector<128xf32>
    %18 = vector.shape_cast %17 : vector<128xf32> to vector<1x128xf32>
    %19 = vector.shape_cast %18 : vector<1x128xf32> to vector<1x1x128xf32>
    %20 = arith.mulf %15, %15 : vector<512x128xf32>
    %cst_19 = arith.constant dense<0.000000e+00> : vector<128xf32>
    %21 = vector.multi_reduction <add>, %20, %cst_19 [0] : vector<512x128xf32> to vector<128xf32>
    %22 = vector.shape_cast %21 : vector<128xf32> to vector<1x128xf32>
    %23 = vector.shape_cast %22 : vector<1x128xf32> to vector<1x1x128xf32>
    %c0_20 = arith.constant 0 : index
    %c0_21 = arith.constant 0 : index
    %c0_22 = arith.constant 0 : index
    %24 = vector.load %arg8[%c0_20, %c0_21, %c0_22] : memref<1x1x128xf32, #tpu.memory_space<vmem>>, vector<1x1x128xf32>
    tpu.vector_store %arg8[%c0_20, %c0_21, %c0_22], %19 {strides = array<i32>} : memref<1x1x128xf32, #tpu.memory_space<vmem>>, vector<1x1x128xf32>,
    %c0_23 = arith.constant 0 : index
    %c0_24 = arith.constant 0 : index
    %c0_25 = arith.constant 0 : index
    %25 = vector.load %arg9[%c0_23, %c0_24, %c0_25] : memref<1x1x128xf32, #tpu.memory_space<vmem>>, vector<1x1x128xf32>
    tpu.vector_store %arg9[%c0_23, %c0_24, %c0_25], %23 {strides = array<i32>} : memref<1x1x128xf32, #tpu.memory_space<vmem>>, vector<1x1x128xf32>,
    return
  }
  func.func @transform_0(%arg0: i32) -> (i32, i32) {
    %c0_i32 = arith.constant 0 : i32
    %c0_i32_0 = arith.constant 0 : i32
    return %arg0, %c0_i32 : i32, i32
  }
  func.func @transform_1(%arg0: i32) -> (i32, i32) {
    %c0_i32 = arith.constant 0 : i32
    %c0_i32_0 = arith.constant 0 : i32
    %c0_i32_1 = arith.constant 0 : i32
    return %c0_i32, %c0_i32_0 : i32, i32
  }
  func.func @transform_2(%arg0: i32) -> (i32, i32) {
    %c0_i32 = arith.constant 0 : i32
    %c0_i32_0 = arith.constant 0 : i32
    %c0_i32_1 = arith.constant 0 : i32
    return %c0_i32, %c0_i32_0 : i32, i32
  }
  func.func @transform_3(%arg0: i32) -> (i32, i32) {
    %c0_i32 = arith.constant 0 : i32
    %c0_i32_0 = arith.constant 0 : i32
    return %arg0, %c0_i32 : i32, i32
  }
  func.func @transform_4(%arg0: i32) -> (i32, i32) {
    %c0_i32 = arith.constant 0 : i32
    %c0_i32_0 = arith.constant 0 : i32
    return %arg0, %c0_i32 : i32, i32
  }
  func.func @transform_5(%arg0: i32) -> (i32, i32, i32) {
    %c0_i32 = arith.constant 0 : i32
    %c0_i32_0 = arith.constant 0 : i32
    %c0_i32_1 = arith.constant 0 : i32
    return %arg0, %c0_i32, %c0_i32_0 : i32, i32, i32
  }
  func.func @transform_6(%arg0: i32) -> (i32, i32, i32) {
    %c0_i32 = arith.constant 0 : i32
    %c0_i32_0 = arith.constant 0 : i32
    %c0_i32_1 = arith.constant 0 : i32
    return %arg0, %c0_i32, %c0_i32_0 : i32, i32, i32
  }
  func.func @transform_7(%arg0: i32) -> (i32, i32, i32) {
    %c0_i32 = arith.constant 0 : i32
    %c0_i32_0 = arith.constant 0 : i32
    %c0_i32_1 = arith.constant 0 : i32
    return %arg0, %c0_i32, %c0_i32_0 : i32, i32, i32
  }
  func.func @transform_8(%arg0: i32) -> (i32, i32, i32) {
    %c0_i32 = arith.constant 0 : i32
    %c0_i32_0 = arith.constant 0 : i32
    %c0_i32_1 = arith.constant 0 : i32
    return %arg0, %c0_i32, %c0_i32_0 : i32, i32, i32
  }
}

module attributes {stable_mosaic.version = 11 : i64} {
  func.func @_bn_conv3x3_stats_kernel(%arg0: i32, %arg1: memref<1x16x16x128xbf16, #tpu.memory_space<vmem>>, %arg2: memref<1x128xf32, #tpu.memory_space<vmem>>, %arg3: memref<1x128xf32, #tpu.memory_space<vmem>>, %arg4: memref<9x128x128xbf16, #tpu.memory_space<vmem>>, %arg5: memref<1x16x16x128xbf16, #tpu.memory_space<vmem>>, %arg6: memref<1x1x128xf32, #tpu.memory_space<vmem>>, %arg7: memref<1x1x128xf32, #tpu.memory_space<vmem>>, %arg8: memref<18x18x128xf32, #tpu.memory_space<vmem>>) attributes {dimension_semantics = [#tpu.dimension_semantics<parallel>], iteration_bounds = array<i64: 2>, scalar_prefetch = 0 : i64, scratch_operands = 1 : i64, tpu.core_type = #tpu.core_type<tc>, window_params = [{transform_indices = @transform_0, window_bounds = array<i64: 1, 16, 16, 128>}, {pipeline_mode = #tpu.pipeline_mode<synchronous>, transform_indices = @transform_1, window_bounds = array<i64: 1, 128>}, {pipeline_mode = #tpu.pipeline_mode<synchronous>, transform_indices = @transform_2, window_bounds = array<i64: 1, 128>}, {pipeline_mode = #tpu.pipeline_mode<synchronous>, transform_indices = @transform_3, window_bounds = array<i64: 9, 128, 128>}, {transform_indices = @transform_4, window_bounds = array<i64: 1, 16, 16, 128>}, {transform_indices = @transform_5, window_bounds = array<i64: 1, 1, 128>}, {transform_indices = @transform_6, window_bounds = array<i64: 1, 1, 128>}]} {
    %cst = arith.constant 0.000000e+00 : f32
    %0 = vector.broadcast %cst : f32 to vector<18x18x128xf32>
    %c0 = arith.constant 0 : index
    %c0_0 = arith.constant 0 : index
    %c0_1 = arith.constant 0 : index
    %1 = vector.load %arg8[%c0, %c0_0, %c0_1] : memref<18x18x128xf32, #tpu.memory_space<vmem>>, vector<18x18x128xf32>
    tpu.vector_store %arg8[%c0, %c0_0, %c0_1], %0 {strides = array<i32>} : memref<18x18x128xf32, #tpu.memory_space<vmem>>, vector<18x18x128xf32>,
    %c0_2 = arith.constant 0 : index
    %c0_3 = arith.constant 0 : index
    %2 = vector.load %arg2[%c0_2, %c0_3] : memref<1x128xf32, #tpu.memory_space<vmem>>, vector<1x128xf32>
    %3 = vector.shape_cast %2 : vector<1x128xf32> to vector<1x1x128xf32>
    %c0_4 = arith.constant 0 : index
    %c0_5 = arith.constant 0 : index
    %4 = vector.load %arg3[%c0_4, %c0_5] : memref<1x128xf32, #tpu.memory_space<vmem>>, vector<1x128xf32>
    %5 = vector.shape_cast %4 : vector<1x128xf32> to vector<1x1x128xf32>
    %c0_6 = arith.constant 0 : index
    %c0_7 = arith.constant 0 : index
    %c0_8 = arith.constant 0 : index
    %c0_9 = arith.constant 0 : index
    %6 = vector.load %arg1[%c0_6, %c0_7, %c0_8, %c0_9] : memref<1x16x16x128xbf16, #tpu.memory_space<vmem>>, vector<1x16x16x128xbf16>
    %7 = vector.shape_cast %6 : vector<1x16x16x128xbf16> to vector<16x16x128xbf16>
    %8 = arith.extf %7 : vector<16x16x128xbf16> to vector<16x16x128xf32>
    %9 = vector.broadcast %3 : vector<1x1x128xf32> to vector<16x16x128xf32>
    %10 = arith.mulf %8, %9 : vector<16x16x128xf32>
    %11 = vector.broadcast %5 : vector<1x1x128xf32> to vector<16x16x128xf32>
    %12 = arith.addf %10, %11 : vector<16x16x128xf32>
    %cst_10 = arith.constant 0.000000e+00 : f32
    %13 = vector.broadcast %cst_10 : f32 to vector<16x16x128xf32>
    %14 = arith.maximumf %12, %13 : vector<16x16x128xf32>
    %c1 = arith.constant 1 : index
    %c1_11 = arith.constant 1 : index
    %c0_12 = arith.constant 0 : index
    %15 = vector.load %arg8[%c1, %c1_11, %c0_12] : memref<18x18x128xf32, #tpu.memory_space<vmem>>, vector<16x16x128xf32>
    tpu.vector_store %arg8[%c1, %c1_11, %c0_12], %14 {strides = array<i32>} : memref<18x18x128xf32, #tpu.memory_space<vmem>>, vector<16x16x128xf32>,
    %cst_13 = arith.constant 0.000000e+00 : f32
    %16 = vector.broadcast %cst_13 : f32 to vector<256x128xf32>
    %c0_14 = arith.constant 0 : index
    %c0_15 = arith.constant 0 : index
    %c0_16 = arith.constant 0 : index
    %17 = vector.load %arg8[%c0_14, %c0_15, %c0_16] : memref<18x18x128xf32, #tpu.memory_space<vmem>>, vector<16x16x128xf32>
    %18 = vector.shape_cast %17 : vector<16x16x128xf32> to vector<256x128xf32>
    %19 = arith.truncf %18 : vector<256x128xf32> to vector<256x128xbf16>
    %c0_17 = arith.constant 0 : index
    %c0_18 = arith.constant 0 : index
    %c0_19 = arith.constant 0 : index
    %20 = vector.load %arg4[%c0_17, %c0_18, %c0_19] : memref<9x128x128xbf16, #tpu.memory_space<vmem>>, vector<1x128x128xbf16>
    %21 = vector.shape_cast %20 : vector<1x128x128xbf16> to vector<128x128xbf16>
    %cst_20 = arith.constant dense<0.000000e+00> : vector<256x128xf32>
    %22 = tpu.matmul %19, %21, %cst_20 {dimension_numbers = #tpu.dot_dimension_numbers<[1], [0], [0], [1], [0, 0, 1, 1], [], []>} : vector<256x128xbf16>, vector<128x128xbf16>, vector<256x128xf32> -> vector<256x128xf32>
    %23 = arith.addf %16, %22 : vector<256x128xf32>
    %c0_21 = arith.constant 0 : index
    %c1_22 = arith.constant 1 : index
    %c0_23 = arith.constant 0 : index
    %24 = vector.load %arg8[%c0_21, %c1_22, %c0_23] : memref<18x18x128xf32, #tpu.memory_space<vmem>>, vector<16x16x128xf32>
    %25 = vector.shape_cast %24 : vector<16x16x128xf32> to vector<256x128xf32>
    %26 = arith.truncf %25 : vector<256x128xf32> to vector<256x128xbf16>
    %c1_24 = arith.constant 1 : index
    %c0_25 = arith.constant 0 : index
    %c0_26 = arith.constant 0 : index
    %27 = vector.load %arg4[%c1_24, %c0_25, %c0_26] : memref<9x128x128xbf16, #tpu.memory_space<vmem>>, vector<1x128x128xbf16>
    %28 = vector.shape_cast %27 : vector<1x128x128xbf16> to vector<128x128xbf16>
    %cst_27 = arith.constant dense<0.000000e+00> : vector<256x128xf32>
    %29 = tpu.matmul %26, %28, %cst_27 {dimension_numbers = #tpu.dot_dimension_numbers<[1], [0], [0], [1], [0, 0, 1, 1], [], []>} : vector<256x128xbf16>, vector<128x128xbf16>, vector<256x128xf32> -> vector<256x128xf32>
    %30 = arith.addf %23, %29 : vector<256x128xf32>
    %c0_28 = arith.constant 0 : index
    %c2 = arith.constant 2 : index
    %c0_29 = arith.constant 0 : index
    %31 = vector.load %arg8[%c0_28, %c2, %c0_29] : memref<18x18x128xf32, #tpu.memory_space<vmem>>, vector<16x16x128xf32>
    %32 = vector.shape_cast %31 : vector<16x16x128xf32> to vector<256x128xf32>
    %33 = arith.truncf %32 : vector<256x128xf32> to vector<256x128xbf16>
    %c2_30 = arith.constant 2 : index
    %c0_31 = arith.constant 0 : index
    %c0_32 = arith.constant 0 : index
    %34 = vector.load %arg4[%c2_30, %c0_31, %c0_32] : memref<9x128x128xbf16, #tpu.memory_space<vmem>>, vector<1x128x128xbf16>
    %35 = vector.shape_cast %34 : vector<1x128x128xbf16> to vector<128x128xbf16>
    %cst_33 = arith.constant dense<0.000000e+00> : vector<256x128xf32>
    %36 = tpu.matmul %33, %35, %cst_33 {dimension_numbers = #tpu.dot_dimension_numbers<[1], [0], [0], [1], [0, 0, 1, 1], [], []>} : vector<256x128xbf16>, vector<128x128xbf16>, vector<256x128xf32> -> vector<256x128xf32>
    %37 = arith.addf %30, %36 : vector<256x128xf32>
    %c1_34 = arith.constant 1 : index
    %c0_35 = arith.constant 0 : index
    %c0_36 = arith.constant 0 : index
    %38 = vector.load %arg8[%c1_34, %c0_35, %c0_36] : memref<18x18x128xf32, #tpu.memory_space<vmem>>, vector<16x16x128xf32>
    %39 = vector.shape_cast %38 : vector<16x16x128xf32> to vector<256x128xf32>
    %40 = arith.truncf %39 : vector<256x128xf32> to vector<256x128xbf16>
    %c3 = arith.constant 3 : index
    %c0_37 = arith.constant 0 : index
    %c0_38 = arith.constant 0 : index
    %41 = vector.load %arg4[%c3, %c0_37, %c0_38] : memref<9x128x128xbf16, #tpu.memory_space<vmem>>, vector<1x128x128xbf16>
    %42 = vector.shape_cast %41 : vector<1x128x128xbf16> to vector<128x128xbf16>
    %cst_39 = arith.constant dense<0.000000e+00> : vector<256x128xf32>
    %43 = tpu.matmul %40, %42, %cst_39 {dimension_numbers = #tpu.dot_dimension_numbers<[1], [0], [0], [1], [0, 0, 1, 1], [], []>} : vector<256x128xbf16>, vector<128x128xbf16>, vector<256x128xf32> -> vector<256x128xf32>
    %44 = arith.addf %37, %43 : vector<256x128xf32>
    %c1_40 = arith.constant 1 : index
    %c1_41 = arith.constant 1 : index
    %c0_42 = arith.constant 0 : index
    %45 = vector.load %arg8[%c1_40, %c1_41, %c0_42] : memref<18x18x128xf32, #tpu.memory_space<vmem>>, vector<16x16x128xf32>
    %46 = vector.shape_cast %45 : vector<16x16x128xf32> to vector<256x128xf32>
    %47 = arith.truncf %46 : vector<256x128xf32> to vector<256x128xbf16>
    %c4 = arith.constant 4 : index
    %c0_43 = arith.constant 0 : index
    %c0_44 = arith.constant 0 : index
    %48 = vector.load %arg4[%c4, %c0_43, %c0_44] : memref<9x128x128xbf16, #tpu.memory_space<vmem>>, vector<1x128x128xbf16>
    %49 = vector.shape_cast %48 : vector<1x128x128xbf16> to vector<128x128xbf16>
    %cst_45 = arith.constant dense<0.000000e+00> : vector<256x128xf32>
    %50 = tpu.matmul %47, %49, %cst_45 {dimension_numbers = #tpu.dot_dimension_numbers<[1], [0], [0], [1], [0, 0, 1, 1], [], []>} : vector<256x128xbf16>, vector<128x128xbf16>, vector<256x128xf32> -> vector<256x128xf32>
    %51 = arith.addf %44, %50 : vector<256x128xf32>
    %c1_46 = arith.constant 1 : index
    %c2_47 = arith.constant 2 : index
    %c0_48 = arith.constant 0 : index
    %52 = vector.load %arg8[%c1_46, %c2_47, %c0_48] : memref<18x18x128xf32, #tpu.memory_space<vmem>>, vector<16x16x128xf32>
    %53 = vector.shape_cast %52 : vector<16x16x128xf32> to vector<256x128xf32>
    %54 = arith.truncf %53 : vector<256x128xf32> to vector<256x128xbf16>
    %c5 = arith.constant 5 : index
    %c0_49 = arith.constant 0 : index
    %c0_50 = arith.constant 0 : index
    %55 = vector.load %arg4[%c5, %c0_49, %c0_50] : memref<9x128x128xbf16, #tpu.memory_space<vmem>>, vector<1x128x128xbf16>
    %56 = vector.shape_cast %55 : vector<1x128x128xbf16> to vector<128x128xbf16>
    %cst_51 = arith.constant dense<0.000000e+00> : vector<256x128xf32>
    %57 = tpu.matmul %54, %56, %cst_51 {dimension_numbers = #tpu.dot_dimension_numbers<[1], [0], [0], [1], [0, 0, 1, 1], [], []>} : vector<256x128xbf16>, vector<128x128xbf16>, vector<256x128xf32> -> vector<256x128xf32>
    %58 = arith.addf %51, %57 : vector<256x128xf32>
    %c2_52 = arith.constant 2 : index
    %c0_53 = arith.constant 0 : index
    %c0_54 = arith.constant 0 : index
    %59 = vector.load %arg8[%c2_52, %c0_53, %c0_54] : memref<18x18x128xf32, #tpu.memory_space<vmem>>, vector<16x16x128xf32>
    %60 = vector.shape_cast %59 : vector<16x16x128xf32> to vector<256x128xf32>
    %61 = arith.truncf %60 : vector<256x128xf32> to vector<256x128xbf16>
    %c6 = arith.constant 6 : index
    %c0_55 = arith.constant 0 : index
    %c0_56 = arith.constant 0 : index
    %62 = vector.load %arg4[%c6, %c0_55, %c0_56] : memref<9x128x128xbf16, #tpu.memory_space<vmem>>, vector<1x128x128xbf16>
    %63 = vector.shape_cast %62 : vector<1x128x128xbf16> to vector<128x128xbf16>
    %cst_57 = arith.constant dense<0.000000e+00> : vector<256x128xf32>
    %64 = tpu.matmul %61, %63, %cst_57 {dimension_numbers = #tpu.dot_dimension_numbers<[1], [0], [0], [1], [0, 0, 1, 1], [], []>} : vector<256x128xbf16>, vector<128x128xbf16>, vector<256x128xf32> -> vector<256x128xf32>
    %65 = arith.addf %58, %64 : vector<256x128xf32>
    %c2_58 = arith.constant 2 : index
    %c1_59 = arith.constant 1 : index
    %c0_60 = arith.constant 0 : index
    %66 = vector.load %arg8[%c2_58, %c1_59, %c0_60] : memref<18x18x128xf32, #tpu.memory_space<vmem>>, vector<16x16x128xf32>
    %67 = vector.shape_cast %66 : vector<16x16x128xf32> to vector<256x128xf32>
    %68 = arith.truncf %67 : vector<256x128xf32> to vector<256x128xbf16>
    %c7 = arith.constant 7 : index
    %c0_61 = arith.constant 0 : index
    %c0_62 = arith.constant 0 : index
    %69 = vector.load %arg4[%c7, %c0_61, %c0_62] : memref<9x128x128xbf16, #tpu.memory_space<vmem>>, vector<1x128x128xbf16>
    %70 = vector.shape_cast %69 : vector<1x128x128xbf16> to vector<128x128xbf16>
    %cst_63 = arith.constant dense<0.000000e+00> : vector<256x128xf32>
    %71 = tpu.matmul %68, %70, %cst_63 {dimension_numbers = #tpu.dot_dimension_numbers<[1], [0], [0], [1], [0, 0, 1, 1], [], []>} : vector<256x128xbf16>, vector<128x128xbf16>, vector<256x128xf32> -> vector<256x128xf32>
    %72 = arith.addf %65, %71 : vector<256x128xf32>
    %c2_64 = arith.constant 2 : index
    %c2_65 = arith.constant 2 : index
    %c0_66 = arith.constant 0 : index
    %73 = vector.load %arg8[%c2_64, %c2_65, %c0_66] : memref<18x18x128xf32, #tpu.memory_space<vmem>>, vector<16x16x128xf32>
    %74 = vector.shape_cast %73 : vector<16x16x128xf32> to vector<256x128xf32>
    %75 = arith.truncf %74 : vector<256x128xf32> to vector<256x128xbf16>
    %c8 = arith.constant 8 : index
    %c0_67 = arith.constant 0 : index
    %c0_68 = arith.constant 0 : index
    %76 = vector.load %arg4[%c8, %c0_67, %c0_68] : memref<9x128x128xbf16, #tpu.memory_space<vmem>>, vector<1x128x128xbf16>
    %77 = vector.shape_cast %76 : vector<1x128x128xbf16> to vector<128x128xbf16>
    %cst_69 = arith.constant dense<0.000000e+00> : vector<256x128xf32>
    %78 = tpu.matmul %75, %77, %cst_69 {dimension_numbers = #tpu.dot_dimension_numbers<[1], [0], [0], [1], [0, 0, 1, 1], [], []>} : vector<256x128xbf16>, vector<128x128xbf16>, vector<256x128xf32> -> vector<256x128xf32>
    %79 = arith.addf %72, %78 : vector<256x128xf32>
    %80 = vector.shape_cast %79 : vector<256x128xf32> to vector<1x16x16x128xf32>
    %81 = arith.truncf %80 : vector<1x16x16x128xf32> to vector<1x16x16x128xbf16>
    %c0_70 = arith.constant 0 : index
    %c0_71 = arith.constant 0 : index
    %c0_72 = arith.constant 0 : index
    %c0_73 = arith.constant 0 : index
    %82 = vector.load %arg5[%c0_70, %c0_71, %c0_72, %c0_73] : memref<1x16x16x128xbf16, #tpu.memory_space<vmem>>, vector<1x16x16x128xbf16>
    tpu.vector_store %arg5[%c0_70, %c0_71, %c0_72, %c0_73], %81 {strides = array<i32>} : memref<1x16x16x128xbf16, #tpu.memory_space<vmem>>, vector<1x16x16x128xbf16>,
    %cst_74 = arith.constant dense<0.000000e+00> : vector<128xf32>
    %83 = vector.multi_reduction <add>, %79, %cst_74 [0] : vector<256x128xf32> to vector<128xf32>
    %84 = vector.shape_cast %83 : vector<128xf32> to vector<1x128xf32>
    %85 = vector.shape_cast %84 : vector<1x128xf32> to vector<1x1x128xf32>
    %c0_75 = arith.constant 0 : index
    %c0_76 = arith.constant 0 : index
    %c0_77 = arith.constant 0 : index
    %86 = vector.load %arg6[%c0_75, %c0_76, %c0_77] : memref<1x1x128xf32, #tpu.memory_space<vmem>>, vector<1x1x128xf32>
    tpu.vector_store %arg6[%c0_75, %c0_76, %c0_77], %85 {strides = array<i32>} : memref<1x1x128xf32, #tpu.memory_space<vmem>>, vector<1x1x128xf32>,
    %87 = arith.mulf %79, %79 : vector<256x128xf32>
    %cst_78 = arith.constant dense<0.000000e+00> : vector<128xf32>
    %88 = vector.multi_reduction <add>, %87, %cst_78 [0] : vector<256x128xf32> to vector<128xf32>
    %89 = vector.shape_cast %88 : vector<128xf32> to vector<1x128xf32>
    %90 = vector.shape_cast %89 : vector<1x128xf32> to vector<1x1x128xf32>
    %c0_79 = arith.constant 0 : index
    %c0_80 = arith.constant 0 : index
    %c0_81 = arith.constant 0 : index
    %91 = vector.load %arg7[%c0_79, %c0_80, %c0_81] : memref<1x1x128xf32, #tpu.memory_space<vmem>>, vector<1x1x128xf32>
    tpu.vector_store %arg7[%c0_79, %c0_80, %c0_81], %90 {strides = array<i32>} : memref<1x1x128xf32, #tpu.memory_space<vmem>>, vector<1x1x128xf32>,
    return
  }
  func.func @transform_0(%arg0: i32) -> (i32, i32, i32, i32) {
    %c0_i32 = arith.constant 0 : i32
    %c0_i32_0 = arith.constant 0 : i32
    %c0_i32_1 = arith.constant 0 : i32
    %c0_i32_2 = arith.constant 0 : i32
    return %arg0, %c0_i32, %c0_i32_0, %c0_i32_1 : i32, i32, i32, i32
  }
  func.func @transform_1(%arg0: i32) -> (i32, i32) {
    %c0_i32 = arith.constant 0 : i32
    %c0_i32_0 = arith.constant 0 : i32
    %c0_i32_1 = arith.constant 0 : i32
    return %c0_i32, %c0_i32_0 : i32, i32
  }
  func.func @transform_2(%arg0: i32) -> (i32, i32) {
    %c0_i32 = arith.constant 0 : i32
    %c0_i32_0 = arith.constant 0 : i32
    %c0_i32_1 = arith.constant 0 : i32
    return %c0_i32, %c0_i32_0 : i32, i32
  }
  func.func @transform_3(%arg0: i32) -> (i32, i32, i32) {
    %c0_i32 = arith.constant 0 : i32
    %c0_i32_0 = arith.constant 0 : i32
    %c0_i32_1 = arith.constant 0 : i32
    %c0_i32_2 = arith.constant 0 : i32
    return %c0_i32, %c0_i32_0, %c0_i32_1 : i32, i32, i32
  }
  func.func @transform_4(%arg0: i32) -> (i32, i32, i32, i32) {
    %c0_i32 = arith.constant 0 : i32
    %c0_i32_0 = arith.constant 0 : i32
    %c0_i32_1 = arith.constant 0 : i32
    %c0_i32_2 = arith.constant 0 : i32
    return %arg0, %c0_i32, %c0_i32_0, %c0_i32_1 : i32, i32, i32, i32
  }
  func.func @transform_5(%arg0: i32) -> (i32, i32, i32) {
    %c0_i32 = arith.constant 0 : i32
    %c0_i32_0 = arith.constant 0 : i32
    %c0_i32_1 = arith.constant 0 : i32
    return %arg0, %c0_i32, %c0_i32_0 : i32, i32, i32
  }
  func.func @transform_6(%arg0: i32) -> (i32, i32, i32) {
    %c0_i32 = arith.constant 0 : i32
    %c0_i32_0 = arith.constant 0 : i32
    %c0_i32_1 = arith.constant 0 : i32
    return %arg0, %c0_i32, %c0_i32_0 : i32, i32, i32
  }
}

module attributes {stable_mosaic.version = 11 : i64} {
  func.func @_bn_matmul_stats_kernel(%arg0: i32, %arg1: memref<512x128xbf16, #tpu.memory_space<vmem>>, %arg2: memref<1x128xf32, #tpu.memory_space<vmem>>, %arg3: memref<1x128xf32, #tpu.memory_space<vmem>>, %arg4: memref<128x128xbf16, #tpu.memory_space<vmem>>, %arg5: memref<512x128xf32, #tpu.memory_space<vmem>>, %arg6: memref<1x1x128xf32, #tpu.memory_space<vmem>>, %arg7: memref<1x1x128xf32, #tpu.memory_space<vmem>>) attributes {dimension_semantics = [#tpu.dimension_semantics<parallel>], iteration_bounds = array<i64: 1>, scalar_prefetch = 0 : i64, scratch_operands = 0 : i64, tpu.core_type = #tpu.core_type<tc>, window_params = [{transform_indices = @transform_0, window_bounds = array<i64: 512, 128>}, {pipeline_mode = #tpu.pipeline_mode<synchronous>, transform_indices = @transform_1, window_bounds = array<i64: 1, 128>}, {pipeline_mode = #tpu.pipeline_mode<synchronous>, transform_indices = @transform_2, window_bounds = array<i64: 1, 128>}, {pipeline_mode = #tpu.pipeline_mode<synchronous>, transform_indices = @transform_3, window_bounds = array<i64: 128, 128>}, {transform_indices = @transform_4, window_bounds = array<i64: 512, 128>}, {transform_indices = @transform_5, window_bounds = array<i64: 1, 1, 128>}, {transform_indices = @transform_6, window_bounds = array<i64: 1, 1, 128>}]} {
    %c0 = arith.constant 0 : index
    %c0_0 = arith.constant 0 : index
    %0 = vector.load %arg1[%c0, %c0_0] : memref<512x128xbf16, #tpu.memory_space<vmem>>, vector<512x128xbf16>
    %1 = arith.extf %0 : vector<512x128xbf16> to vector<512x128xf32>
    %c0_1 = arith.constant 0 : index
    %c0_2 = arith.constant 0 : index
    %2 = vector.load %arg2[%c0_1, %c0_2] : memref<1x128xf32, #tpu.memory_space<vmem>>, vector<1x128xf32>
    %3 = vector.broadcast %2 : vector<1x128xf32> to vector<512x128xf32>
    %4 = arith.mulf %1, %3 : vector<512x128xf32>
    %c0_3 = arith.constant 0 : index
    %c0_4 = arith.constant 0 : index
    %5 = vector.load %arg3[%c0_3, %c0_4] : memref<1x128xf32, #tpu.memory_space<vmem>>, vector<1x128xf32>
    %6 = vector.broadcast %5 : vector<1x128xf32> to vector<512x128xf32>
    %7 = arith.addf %4, %6 : vector<512x128xf32>
    %cst = arith.constant 0.000000e+00 : f32
    %8 = vector.broadcast %cst : f32 to vector<512x128xf32>
    %9 = arith.maximumf %7, %8 : vector<512x128xf32>
    %10 = arith.truncf %9 : vector<512x128xf32> to vector<512x128xbf16>
    %c0_5 = arith.constant 0 : index
    %c0_6 = arith.constant 0 : index
    %11 = vector.load %arg4[%c0_5, %c0_6] : memref<128x128xbf16, #tpu.memory_space<vmem>>, vector<128x128xbf16>
    %cst_7 = arith.constant dense<0.000000e+00> : vector<512x128xf32>
    %12 = tpu.matmul %10, %11, %cst_7 {dimension_numbers = #tpu.dot_dimension_numbers<[1], [0], [0], [1], [0, 0, 1, 1], [], []>} : vector<512x128xbf16>, vector<128x128xbf16>, vector<512x128xf32> -> vector<512x128xf32>
    %c0_8 = arith.constant 0 : index
    %c0_9 = arith.constant 0 : index
    %13 = vector.load %arg5[%c0_8, %c0_9] : memref<512x128xf32, #tpu.memory_space<vmem>>, vector<512x128xf32>
    tpu.vector_store %arg5[%c0_8, %c0_9], %12 {strides = array<i32>} : memref<512x128xf32, #tpu.memory_space<vmem>>, vector<512x128xf32>,
    %cst_10 = arith.constant dense<0.000000e+00> : vector<128xf32>
    %14 = vector.multi_reduction <add>, %12, %cst_10 [0] : vector<512x128xf32> to vector<128xf32>
    %15 = vector.shape_cast %14 : vector<128xf32> to vector<1x128xf32>
    %16 = vector.shape_cast %15 : vector<1x128xf32> to vector<1x1x128xf32>
    %17 = arith.mulf %12, %12 : vector<512x128xf32>
    %cst_11 = arith.constant dense<0.000000e+00> : vector<128xf32>
    %18 = vector.multi_reduction <add>, %17, %cst_11 [0] : vector<512x128xf32> to vector<128xf32>
    %19 = vector.shape_cast %18 : vector<128xf32> to vector<1x128xf32>
    %20 = vector.shape_cast %19 : vector<1x128xf32> to vector<1x1x128xf32>
    %c0_12 = arith.constant 0 : index
    %c0_13 = arith.constant 0 : index
    %c0_14 = arith.constant 0 : index
    %21 = vector.load %arg6[%c0_12, %c0_13, %c0_14] : memref<1x1x128xf32, #tpu.memory_space<vmem>>, vector<1x1x128xf32>
    tpu.vector_store %arg6[%c0_12, %c0_13, %c0_14], %16 {strides = array<i32>} : memref<1x1x128xf32, #tpu.memory_space<vmem>>, vector<1x1x128xf32>,
    %c0_15 = arith.constant 0 : index
    %c0_16 = arith.constant 0 : index
    %c0_17 = arith.constant 0 : index
    %22 = vector.load %arg7[%c0_15, %c0_16, %c0_17] : memref<1x1x128xf32, #tpu.memory_space<vmem>>, vector<1x1x128xf32>
    tpu.vector_store %arg7[%c0_15, %c0_16, %c0_17], %20 {strides = array<i32>} : memref<1x1x128xf32, #tpu.memory_space<vmem>>, vector<1x1x128xf32>,
    return
  }
  func.func @transform_0(%arg0: i32) -> (i32, i32) {
    %c0_i32 = arith.constant 0 : i32
    %c0_i32_0 = arith.constant 0 : i32
    return %arg0, %c0_i32 : i32, i32
  }
  func.func @transform_1(%arg0: i32) -> (i32, i32) {
    %c0_i32 = arith.constant 0 : i32
    %c0_i32_0 = arith.constant 0 : i32
    %c0_i32_1 = arith.constant 0 : i32
    return %c0_i32, %c0_i32_0 : i32, i32
  }
  func.func @transform_2(%arg0: i32) -> (i32, i32) {
    %c0_i32 = arith.constant 0 : i32
    %c0_i32_0 = arith.constant 0 : i32
    %c0_i32_1 = arith.constant 0 : i32
    return %c0_i32, %c0_i32_0 : i32, i32
  }
  func.func @transform_3(%arg0: i32) -> (i32, i32) {
    %c0_i32 = arith.constant 0 : i32
    %c0_i32_0 = arith.constant 0 : i32
    %c0_i32_1 = arith.constant 0 : i32
    return %c0_i32, %c0_i32_0 : i32, i32
  }
  func.func @transform_4(%arg0: i32) -> (i32, i32) {
    %c0_i32 = arith.constant 0 : i32
    %c0_i32_0 = arith.constant 0 : i32
    return %arg0, %c0_i32 : i32, i32
  }
  func.func @transform_5(%arg0: i32) -> (i32, i32, i32) {
    %c0_i32 = arith.constant 0 : i32
    %c0_i32_0 = arith.constant 0 : i32
    %c0_i32_1 = arith.constant 0 : i32
    return %arg0, %c0_i32, %c0_i32_0 : i32, i32, i32
  }
  func.func @transform_6(%arg0: i32) -> (i32, i32, i32) {
    %c0_i32 = arith.constant 0 : i32
    %c0_i32_0 = arith.constant 0 : i32
    %c0_i32_1 = arith.constant 0 : i32
    return %arg0, %c0_i32, %c0_i32_0 : i32, i32, i32
  }
}

module attributes {stable_mosaic.version = 11 : i64} {
  func.func @_bn_add_relu_kernel(%arg0: i32, %arg1: memref<512x128xf32, #tpu.memory_space<vmem>>, %arg2: memref<1x128xf32, #tpu.memory_space<vmem>>, %arg3: memref<1x128xf32, #tpu.memory_space<vmem>>, %arg4: memref<512x128xf32, #tpu.memory_space<vmem>>, %arg5: memref<1x128xf32, #tpu.memory_space<vmem>>, %arg6: memref<1x128xf32, #tpu.memory_space<vmem>>, %arg7: memref<512x128xf32, #tpu.memory_space<vmem>>) attributes {dimension_semantics = [#tpu.dimension_semantics<parallel>], iteration_bounds = array<i64: 1>, scalar_prefetch = 0 : i64, scratch_operands = 0 : i64, tpu.core_type = #tpu.core_type<tc>, window_params = [{transform_indices = @transform_0, window_bounds = array<i64: 512, 128>}, {pipeline_mode = #tpu.pipeline_mode<synchronous>, transform_indices = @transform_1, window_bounds = array<i64: 1, 128>}, {pipeline_mode = #tpu.pipeline_mode<synchronous>, transform_indices = @transform_2, window_bounds = array<i64: 1, 128>}, {transform_indices = @transform_3, window_bounds = array<i64: 512, 128>}, {pipeline_mode = #tpu.pipeline_mode<synchronous>, transform_indices = @transform_4, window_bounds = array<i64: 1, 128>}, {pipeline_mode = #tpu.pipeline_mode<synchronous>, transform_indices = @transform_5, window_bounds = array<i64: 1, 128>}, {transform_indices = @transform_6, window_bounds = array<i64: 512, 128>}]} {
    %c0 = arith.constant 0 : index
    %c0_0 = arith.constant 0 : index
    %0 = vector.load %arg1[%c0, %c0_0] : memref<512x128xf32, #tpu.memory_space<vmem>>, vector<512x128xf32>
    %c0_1 = arith.constant 0 : index
    %c0_2 = arith.constant 0 : index
    %1 = vector.load %arg2[%c0_1, %c0_2] : memref<1x128xf32, #tpu.memory_space<vmem>>, vector<1x128xf32>
    %2 = vector.broadcast %1 : vector<1x128xf32> to vector<512x128xf32>
    %3 = arith.mulf %0, %2 : vector<512x128xf32>
    %c0_3 = arith.constant 0 : index
    %c0_4 = arith.constant 0 : index
    %4 = vector.load %arg3[%c0_3, %c0_4] : memref<1x128xf32, #tpu.memory_space<vmem>>, vector<1x128xf32>
    %5 = vector.broadcast %4 : vector<1x128xf32> to vector<512x128xf32>
    %6 = arith.addf %3, %5 : vector<512x128xf32>
    %c0_5 = arith.constant 0 : index
    %c0_6 = arith.constant 0 : index
    %7 = vector.load %arg4[%c0_5, %c0_6] : memref<512x128xf32, #tpu.memory_space<vmem>>, vector<512x128xf32>
    %c0_7 = arith.constant 0 : index
    %c0_8 = arith.constant 0 : index
    %8 = vector.load %arg5[%c0_7, %c0_8] : memref<1x128xf32, #tpu.memory_space<vmem>>, vector<1x128xf32>
    %9 = vector.broadcast %8 : vector<1x128xf32> to vector<512x128xf32>
    %10 = arith.mulf %7, %9 : vector<512x128xf32>
    %c0_9 = arith.constant 0 : index
    %c0_10 = arith.constant 0 : index
    %11 = vector.load %arg6[%c0_9, %c0_10] : memref<1x128xf32, #tpu.memory_space<vmem>>, vector<1x128xf32>
    %12 = vector.broadcast %11 : vector<1x128xf32> to vector<512x128xf32>
    %13 = arith.addf %10, %12 : vector<512x128xf32>
    %14 = arith.addf %6, %13 : vector<512x128xf32>
    %cst = arith.constant 0.000000e+00 : f32
    %15 = vector.broadcast %cst : f32 to vector<512x128xf32>
    %16 = arith.maximumf %14, %15 : vector<512x128xf32>
    %c0_11 = arith.constant 0 : index
    %c0_12 = arith.constant 0 : index
    %17 = vector.load %arg7[%c0_11, %c0_12] : memref<512x128xf32, #tpu.memory_space<vmem>>, vector<512x128xf32>
    tpu.vector_store %arg7[%c0_11, %c0_12], %16 {strides = array<i32>} : memref<512x128xf32, #tpu.memory_space<vmem>>, vector<512x128xf32>,
    return
  }
  func.func @transform_0(%arg0: i32) -> (i32, i32) {
    %c0_i32 = arith.constant 0 : i32
    %c0_i32_0 = arith.constant 0 : i32
    return %arg0, %c0_i32 : i32, i32
  }
  func.func @transform_1(%arg0: i32) -> (i32, i32) {
    %c0_i32 = arith.constant 0 : i32
    %c0_i32_0 = arith.constant 0 : i32
    %c0_i32_1 = arith.constant 0 : i32
    return %c0_i32, %c0_i32_0 : i32, i32
  }
  func.func @transform_2(%arg0: i32) -> (i32, i32) {
    %c0_i32 = arith.constant 0 : i32
    %c0_i32_0 = arith.constant 0 : i32
    %c0_i32_1 = arith.constant 0 : i32
    return %c0_i32, %c0_i32_0 : i32, i32
  }
  func.func @transform_3(%arg0: i32) -> (i32, i32) {
    %c0_i32 = arith.constant 0 : i32
    %c0_i32_0 = arith.constant 0 : i32
    return %arg0, %c0_i32 : i32, i32
  }
  func.func @transform_4(%arg0: i32) -> (i32, i32) {
    %c0_i32 = arith.constant 0 : i32
    %c0_i32_0 = arith.constant 0 : i32
    %c0_i32_1 = arith.constant 0 : i32
    return %c0_i32, %c0_i32_0 : i32, i32
  }
  func.func @transform_5(%arg0: i32) -> (i32, i32) {
    %c0_i32 = arith.constant 0 : i32
    %c0_i32_0 = arith.constant 0 : i32
    %c0_i32_1 = arith.constant 0 : i32
    return %c0_i32, %c0_i32_0 : i32, i32
  }
  func.func @transform_6(%arg0: i32) -> (i32, i32) {
    %c0_i32 = arith.constant 0 : i32
    %c0_i32_0 = arith.constant 0 : i32
    return %arg0, %c0_i32 : i32, i32
  }
}

</mosaic_0001>

<llo_original>
// kernel: bottleneck_forward.7
$region0: #{bottleneck_forward.7}
  #allocation0 [shape = 'u32[]', space=smem, size = 0x4, offset = 0x4, fixed_abs, tag = 'smem constant byte address 0x4 - core index']
  #allocation1 [shape = 'u32[144,128]{1,0:T(1,128)}', space=vmem, size = 0x12000, scoped, tag = 'internal scratch']
  %s0 = inlined_call_operand.vmem [shape: f32[512,128], index: 0, kind: input, shape index: {}]
  %s1 = inlined_call_operand.vmem [shape: f32[1,128], index: 1, kind: input, shape index: {}]
  %s2 = inlined_call_operand.vmem [shape: f32[1,128], index: 2, kind: input, shape index: {}]
  %s3 = inlined_call_operand.vmem [shape: f32[512,128], index: 3, kind: input, shape index: {}]
  %s4 = inlined_call_operand.vmem [shape: f32[1,128], index: 4, kind: input, shape index: {}]
  %s5 = inlined_call_operand.vmem [shape: f32[1,128], index: 5, kind: input, shape index: {}]
  %s6 = inlined_call_operand.vmem [shape: f32[512,128], index: 6, kind: output, shape index: {}]
  %s7 = sld [smem:[#allocation0]]
  $region34: #{bottleneck_forward.7} parent=0
    _
  %s9 = ssub.s32 1, %s7
  %s10 = scalar_select 0, %s9, %s7
  // Predicated region
  $region2: #{bottleneck_forward.7} parent=0 // pred_check
    _
  $region3: #{bottleneck_forward.7} parent=0 // pred_check_branch
    %12 = sbr.rel (0) target = $region5
  $region4: #{bottleneck_forward.7} parent=0 // pred_region
    _
  $region5: #{bottleneck_forward.7} parent=0 // pred_fallthru
    _
  // Predicated region
  $region6: #{bottleneck_forward.7} parent=0 // pred_check
    _
  $region7: #{bottleneck_forward.7} parent=0 // pred_check_branch
    %14 = sbr.rel (0) target = $region9
  $region8: #{bottleneck_forward.7} parent=0 // pred_region
    _
  $region9: #{bottleneck_forward.7} parent=0 // pred_fallthru
    _
  // Predicated region
  $region10: #{bottleneck_forward.7} parent=0 // pred_check
    _
  $region11: #{bottleneck_forward.7} parent=0 // pred_check_branch
    %16 = sbr.rel (0) target = $region13
  $region12: #{bottleneck_forward.7} parent=0 // pred_region
    _
  $region13: #{bottleneck_forward.7} parent=0 // pred_fallthru
    _
  // Predicated region
  $region14: #{bottleneck_forward.7} parent=0 // pred_check
    _
  $region15: #{bottleneck_forward.7} parent=0 // pred_check_branch
    %18 = sbr.rel (0) target = $region17
  $region16: #{bottleneck_forward.7} parent=0 // pred_region
    _
  $region17: #{bottleneck_forward.7} parent=0 // pred_fallthru
    _
  // Predicated region
  $region18: #{bottleneck_forward.7} parent=0 // pred_check
    _
  $region19: #{bottleneck_forward.7} parent=0 // pred_check_branch
    %20 = sbr.rel (0) target = $region21
  $region20: #{bottleneck_forward.7} parent=0 // pred_region
    _
  $region21: #{bottleneck_forward.7} parent=0 // pred_fallthru
    _
  // Predicated region
  $region22: #{bottleneck_forward.7} parent=0 // pred_check
    _
  $region23: #{bottleneck_forward.7} parent=0 // pred_check_branch
    %22 = sbr.rel (0) target = $region25
  $region24: #{bottleneck_forward.7} parent=0 // pred_region
    _
  $region25: #{bottleneck_forward.7} parent=0 // pred_fallthru
    _
  %v23 = vld [vmem:[%s0] sm:$0xff]
  %v24 = vld [vmem:[%s0 + $0x8] sm:$0xff]
  %v25 = vld [vmem:[%s0 + $0x10] sm:$0xff]
  %v26 = vld [vmem:[%s0 + $0x18] sm:$0xff]
  %v27 = vld [vmem:[%s0 + $0x20] sm:$0xff]
  %v28 = vld [vmem:[%s0 + $0x28] sm:$0xff]
  %v29 = vld [vmem:[%s0 + $0x30] sm:$0xff]
  %v30 = vld [vmem:[%s0 + $0x38] sm:$0xff]
  %v31 = vld [vmem:[%s0 + $0x40] sm:$0xff]
  %v32 = vld [vmem:[%s0 + $0x48] sm:$0xff]
  %v33 = vld [vmem:[%s0 + $0x50] sm:$0xff]
  %v34 = vld [vmem:[%s0 + $0x58] sm:$0xff]
  %v35 = vld [vmem:[%s0 + $0x60] sm:$0xff]
  %v36 = vld [vmem:[%s0 + $0x68] sm:$0xff]
  %v37 = vld [vmem:[%s0 + $0x70] sm:$0xff]
  %v38 = vld [vmem:[%s0 + $0x78] sm:$0xff]
  %v39 = vld [vmem:[%s0 + $0x80] sm:$0xff]
  %v40 = vld [vmem:[%s0 + $0x88] sm:$0xff]
  %v41 = vld [vmem:[%s0 + $0x90] sm:$0xff]
  %v42 = vld [vmem:[%s0 + $0x98] sm:$0xff]
  %v43 = vld [vmem:[%s0 + $0xa0] sm:$0xff]
  %v44 = vld [vmem:[%s0 + $0xa8] sm:$0xff]
  %v45 = vld [vmem:[%s0 + $0xb0] sm:$0xff]
  %v46 = vld [vmem:[%s0 + $0xb8] sm:$0xff]
  %v47 = vld [vmem:[%s0 + $0xc0] sm:$0xff]
  %v48 = vld [vmem:[%s0 + $0xc8] sm:$0xff]
  %v49 = vld [vmem:[%s0 + $0xd0] sm:$0xff]
  %v50 = vld [vmem:[%s0 + $0xd8] sm:$0xff]
  %v51 = vld [vmem:[%s0 + $0xe0] sm:$0xff]
  %v52 = vld [vmem:[%s0 + $0xe8] sm:$0xff]
  %v53 = vld [vmem:[%s0 + $0xf0] sm:$0xff]
  %v54 = vld [vmem:[%s0 + $0xf8] sm:$0xff]
  %v55 = vld [vmem:[%s0 + $0x100] sm:$0xff]
  %v56 = vld [vmem:[%s0 + $0x108] sm:$0xff]
  %v57 = vld [vmem:[%s0 + $0x110] sm:$0xff]
  %v58 = vld [vmem:[%s0 + $0x118] sm:$0xff]
  %v59 = vld [vmem:[%s0 + $0x120] sm:$0xff]
  %v60 = vld [vmem:[%s0 + $0x128] sm:$0xff]
  %v61 = vld [vmem:[%s0 + $0x130] sm:$0xff]
  %v62 = vld [vmem:[%s0 + $0x138] sm:$0xff]
  %v63 = vld [vmem:[%s0 + $0x140] sm:$0xff]
  %v64 = vld [vmem:[%s0 + $0x148] sm:$0xff]
  %v65 = vld [vmem:[%s0 + $0x150] sm:$0xff]
  %v66 = vld [vmem:[%s0 + $0x158] sm:$0xff]
  %v67 = vld [vmem:[%s0 + $0x160] sm:$0xff]
  %v68 = vld [vmem:[%s0 + $0x168] sm:$0xff]
  %v69 = vld [vmem:[%s0 + $0x170] sm:$0xff]
  %v70 = vld [vmem:[%s0 + $0x178] sm:$0xff]
  %v71 = vld [vmem:[%s0 + $0x180] sm:$0xff]
  %v72 = vld [vmem:[%s0 + $0x188] sm:$0xff]
  %v73 = vld [vmem:[%s0 + $0x190] sm:$0xff]
  %v74 = vld [vmem:[%s0 + $0x198] sm:$0xff]
  %v75 = vld [vmem:[%s0 + $0x1a0] sm:$0xff]
  %v76 = vld [vmem:[%s0 + $0x1a8] sm:$0xff]
  %v77 = vld [vmem:[%s0 + $0x1b0] sm:$0xff]
  %v78 = vld [vmem:[%s0 + $0x1b8] sm:$0xff]
  %v79 = vld [vmem:[%s0 + $0x1c0] sm:$0xff]
  %v80 = vld [vmem:[%s0 + $0x1c8] sm:$0xff]
  %v81 = vld [vmem:[%s0 + $0x1d0] sm:$0xff]
  %v82 = vld [vmem:[%s0 + $0x1d8] sm:$0xff]
  %v83 = vld [vmem:[%s0 + $0x1e0] sm:$0xff]
  %v84 = vld [vmem:[%s0 + $0x1e8] sm:$0xff]
  %v85 = vld [vmem:[%s0 + $0x1f0] sm:$0xff]
  %v86 = vld [vmem:[%s0 + $0x1f8] sm:$0xff]
  %v87 = vld [vmem:[%s1] sm:$0x1]
  %v89 = vlaneseq
  %v90 = vshrl.u32 %v89, 7
  %v91 = vsub.s32 0, %v90
  %v92 = vrot.slane %v87, %v91
  %v94 = vmul.f32 %v23, %v92
  %v95 = vmul.f32 %v24, %v92
  %v96 = vmul.f32 %v25, %v92
  %v97 = vmul.f32 %v26, %v92
  %v98 = vmul.f32 %v27, %v92
  %v99 = vmul.f32 %v28, %v92
  %v100 = vmul.f32 %v29, %v92
  %v101 = vmul.f32 %v30, %v92
  %v102 = vmul.f32 %v31, %v92
  %v103 = vmul.f32 %v32, %v92
  %v104 = vmul.f32 %v33, %v92
  %v105 = vmul.f32 %v34, %v92
  %v106 = vmul.f32 %v35, %v92
  %v107 = vmul.f32 %v36, %v92
  %v108 = vmul.f32 %v37, %v92
  %v109 = vmul.f32 %v38, %v92
  %v110 = vmul.f32 %v39, %v92
  %v111 = vmul.f32 %v40, %v92
  %v112 = vmul.f32 %v41, %v92
  %v113 = vmul.f32 %v42, %v92
  %v114 = vmul.f32 %v43, %v92
  %v115 = vmul.f32 %v44, %v92
  %v116 = vmul.f32 %v45, %v92
  %v117 = vmul.f32 %v46, %v92
  %v118 = vmul.f32 %v47, %v92
  %v119 = vmul.f32 %v48, %v92
  %v120 = vmul.f32 %v49, %v92
  %v121 = vmul.f32 %v50, %v92
  %v122 = vmul.f32 %v51, %v92
  %v123 = vmul.f32 %v52, %v92
  %v124 = vmul.f32 %v53, %v92
  %v125 = vmul.f32 %v54, %v92
  %v126 = vmul.f32 %v55, %v92
  %v127 = vmul.f32 %v56, %v92
  %v128 = vmul.f32 %v57, %v92
  %v129 = vmul.f32 %v58, %v92
  %v130 = vmul.f32 %v59, %v92
  %v131 = vmul.f32 %v60, %v92
  %v132 = vmul.f32 %v61, %v92
  %v133 = vmul.f32 %v62, %v92
  %v134 = vmul.f32 %v63, %v92
  %v135 = vmul.f32 %v64, %v92
  %v136 = vmul.f32 %v65, %v92
  %v137 = vmul.f32 %v66, %v92
  %v138 = vmul.f32 %v67, %v92
  %v139 = vmul.f32 %v68, %v92
  %v140 = vmul.f32 %v69, %v92
  %v141 = vmul.f32 %v70, %v92
  %v142 = vmul.f32 %v71, %v92
  %v143 = vmul.f32 %v72, %v92
  %v144 = vmul.f32 %v73, %v92
  %v145 = vmul.f32 %v74, %v92
  %v146 = vmul.f32 %v75, %v92
  %v147 = vmul.f32 %v76, %v92
  %v148 = vmul.f32 %v77, %v92
  %v149 = vmul.f32 %v78, %v92
  %v150 = vmul.f32 %v79, %v92
  %v151 = vmul.f32 %v80, %v92
  %v152 = vmul.f32 %v81, %v92
  %v153 = vmul.f32 %v82, %v92
  %v154 = vmul.f32 %v83, %v92
  %v155 = vmul.f32 %v84, %v92
  %v156 = vmul.f32 %v85, %v92
  %v157 = vmul.f32 %v86, %v92
  %v158 = vld [vmem:[%s2] sm:$0x1]
  %v160 = vlaneseq
  %v161 = vshrl.u32 %v160, 7
  %v162 = vsub.s32 0, %v161
  %v163 = vrot.slane %v158, %v162
  %v165 = vadd.f32 %v94, %v163
  %v166 = vadd.f32 %v95, %v163
  %v167 = vadd.f32 %v96, %v163
  %v168 = vadd.f32 %v97, %v163
  %v169 = vadd.f32 %v98, %v163
  %v170 = vadd.f32 %v99, %v163
  %v171 = vadd.f32 %v100, %v163
  %v172 = vadd.f32 %v101, %v163
  %v173 = vadd.f32 %v102, %v163
  %v174 = vadd.f32 %v103, %v163
  %v175 = vadd.f32 %v104, %v163
  %v176 = vadd.f32 %v105, %v163
  %v177 = vadd.f32 %v106, %v163
  %v178 = vadd.f32 %v107, %v163
  %v179 = vadd.f32 %v108, %v163
  %v180 = vadd.f32 %v109, %v163
  %v181 = vadd.f32 %v110, %v163
  %v182 = vadd.f32 %v111, %v163
  %v183 = vadd.f32 %v112, %v163
  %v184 = vadd.f32 %v113, %v163
  %v185 = vadd.f32 %v114, %v163
  %v186 = vadd.f32 %v115, %v163
  %v187 = vadd.f32 %v116, %v163
  %v188 = vadd.f32 %v117, %v163
  %v189 = vadd.f32 %v118, %v163
  %v190 = vadd.f32 %v119, %v163
  %v191 = vadd.f32 %v120, %v163
  %v192 = vadd.f32 %v121, %v163
  %v193 = vadd.f32 %v122, %v163
  %v194 = vadd.f32 %v123, %v163
  %v195 = vadd.f32 %v124, %v163
  %v196 = vadd.f32 %v125, %v163
  %v197 = vadd.f32 %v126, %v163
  %v198 = vadd.f32 %v127, %v163
  %v199 = vadd.f32 %v128, %v163
  %v200 = vadd.f32 %v129, %v163
  %v201 = vadd.f32 %v130, %v163
  %v202 = vadd.f32 %v131, %v163
  %v203 = vadd.f32 %v132, %v163
  %v204 = vadd.f32 %v133, %v163
  %v205 = vadd.f32 %v134, %v163
  %v206 = vadd.f32 %v135, %v163
  %v207 = vadd.f32 %v136, %v163
  %v208 = vadd.f32 %v137, %v163
  %v209 = vadd.f32 %v138, %v163
  %v210 = vadd.f32 %v139, %v163
  %v211 = vadd.f32 %v140, %v163
  %v212 = vadd.f32 %v141, %v163
  %v213 = vadd.f32 %v142, %v163
  %v214 = vadd.f32 %v143, %v163
  %v215 = vadd.f32 %v144, %v163
  %v216 = vadd.f32 %v145, %v163
  %v217 = vadd.f32 %v146, %v163
  %v218 = vadd.f32 %v147, %v163
  %v219 = vadd.f32 %v148, %v163
  %v220 = vadd.f32 %v149, %v163
  %v221 = vadd.f32 %v150, %v163
  %v222 = vadd.f32 %v151, %v163
  %v223 = vadd.f32 %v152, %v163
  %v224 = vadd.f32 %v153, %v163
  %v225 = vadd.f32 %v154, %v163
  %v226 = vadd.f32 %v155, %v163
  %v227 = vadd.f32 %v156, %v163
  %v228 = vadd.f32 %v157, %v163
  %v229 = vld [vmem:[%s3] sm:$0xff]
  %v230 = vld [vmem:[%s3 + $0x8] sm:$0xff]
  %v231 = vld [vmem:[%s3 + $0x10] sm:$0xff]
  %v232 = vld [vmem:[%s3 + $0x18] sm:$0xff]
  %v233 = vld [vmem:[%s3 + $0x20] sm:$0xff]
  %v234 = vld [vmem:[%s3 + $0x28] sm:$0xff]
  %v235 = vld [vmem:[%s3 + $0x30] sm:$0xff]
  %v236 = vld [vmem:[%s3 + $0x38] sm:$0xff]
  %v237 = vld [vmem:[%s3 + $0x40] sm:$0xff]
  %v238 = vld [vmem:[%s3 + $0x48] sm:$0xff]
  %v239 = vld [vmem:[%s3 + $0x50] sm:$0xff]
  %v240 = vld [vmem:[%s3 + $0x58] sm:$0xff]
  %v241 = vld [vmem:[%s3 + $0x60] sm:$0xff]
  %v242 = vld [vmem:[%s3 + $0x68] sm:$0xff]
  %v243 = vld [vmem:[%s3 + $0x70] sm:$0xff]
  %v244 = vld [vmem:[%s3 + $0x78] sm:$0xff]
  %v245 = vld [vmem:[%s3 + $0x80] sm:$0xff]
  %v246 = vld [vmem:[%s3 + $0x88] sm:$0xff]
  %v247 = vld [vmem:[%s3 + $0x90] sm:$0xff]
  %v248 = vld [vmem:[%s3 + $0x98] sm:$0xff]
  %v249 = vld [vmem:[%s3 + $0xa0] sm:$0xff]
  %v250 = vld [vmem:[%s3 + $0xa8] sm:$0xff]
  %v251 = vld [vmem:[%s3 + $0xb0] sm:$0xff]
  %v252 = vld [vmem:[%s3 + $0xb8] sm:$0xff]
  %v253 = vld [vmem:[%s3 + $0xc0] sm:$0xff]
  %v254 = vld [vmem:[%s3 + $0xc8] sm:$0xff]
  %v255 = vld [vmem:[%s3 + $0xd0] sm:$0xff]
  %v256 = vld [vmem:[%s3 + $0xd8] sm:$0xff]
  %v257 = vld [vmem:[%s3 + $0xe0] sm:$0xff]
  %v258 = vld [vmem:[%s3 + $0xe8] sm:$0xff]
  %v259 = vld [vmem:[%s3 + $0xf0] sm:$0xff]
  %v260 = vld [vmem:[%s3 + $0xf8] sm:$0xff]
  %v261 = vld [vmem:[%s3 + $0x100] sm:$0xff]
  %v262 = vld [vmem:[%s3 + $0x108] sm:$0xff]
  %v263 = vld [vmem:[%s3 + $0x110] sm:$0xff]
  %v264 = vld [vmem:[%s3 + $0x118] sm:$0xff]
  %v265 = vld [vmem:[%s3 + $0x120] sm:$0xff]
  %v266 = vld [vmem:[%s3 + $0x128] sm:$0xff]
  %v267 = vld [vmem:[%s3 + $0x130] sm:$0xff]
  %v268 = vld [vmem:[%s3 + $0x138] sm:$0xff]
  %v269 = vld [vmem:[%s3 + $0x140] sm:$0xff]
  %v270 = vld [vmem:[%s3 + $0x148] sm:$0xff]
  %v271 = vld [vmem:[%s3 + $0x150] sm:$0xff]
  %v272 = vld [vmem:[%s3 + $0x158] sm:$0xff]
  %v273 = vld [vmem:[%s3 + $0x160] sm:$0xff]
  %v274 = vld [vmem:[%s3 + $0x168] sm:$0xff]
  %v275 = vld [vmem:[%s3 + $0x170] sm:$0xff]
  %v276 = vld [vmem:[%s3 + $0x178] sm:$0xff]
  %v277 = vld [vmem:[%s3 + $0x180] sm:$0xff]
  %v278 = vld [vmem:[%s3 + $0x188] sm:$0xff]
  %v279 = vld [vmem:[%s3 + $0x190] sm:$0xff]
  %v280 = vld [vmem:[%s3 + $0x198] sm:$0xff]
  %v281 = vld [vmem:[%s3 + $0x1a0] sm:$0xff]
  %v282 = vld [vmem:[%s3 + $0x1a8] sm:$0xff]
  %v283 = vld [vmem:[%s3 + $0x1b0] sm:$0xff]
  %v284 = vld [vmem:[%s3 + $0x1b8] sm:$0xff]
  %v285 = vld [vmem:[%s3 + $0x1c0] sm:$0xff]
  %v286 = vld [vmem:[%s3 + $0x1c8] sm:$0xff]
  %v287 = vld [vmem:[%s3 + $0x1d0] sm:$0xff]
  %v288 = vld [vmem:[%s3 + $0x1d8] sm:$0xff]
  %v289 = vld [vmem:[%s3 + $0x1e0] sm:$0xff]
  %v290 = vld [vmem:[%s3 + $0x1e8] sm:$0xff]
  %v291 = vld [vmem:[%s3 + $0x1f0] sm:$0xff]
  %v292 = vld [vmem:[%s3 + $0x1f8] sm:$0xff]
  %v293 = vld [vmem:[%s4] sm:$0x1]
  %v295 = vlaneseq
  %v296 = vshrl.u32 %v295, 7
  %v297 = vsub.s32 0, %v296
  %v298 = vrot.slane %v293, %v297
  %v300 = vmul.f32 %v229, %v298
  %v301 = vmul.f32 %v230, %v298
  %v302 = vmul.f32 %v231, %v298
  %v303 = vmul.f32 %v232, %v298
  %v304 = vmul.f32 %v233, %v298
  %v305 = vmul.f32 %v234, %v298
  %v306 = vmul.f32 %v235, %v298
  %v307 = vmul.f32 %v236, %v298
  %v308 = vmul.f32 %v237, %v298
  %v309 = vmul.f32 %v238, %v298
  %v310 = vmul.f32 %v239, %v298
  %v311 = vmul.f32 %v240, %v298
  %v312 = vmul.f32 %v241, %v298
  %v313 = vmul.f32 %v242, %v298
  %v314 = vmul.f32 %v243, %v298
  %v315 = vmul.f32 %v244, %v298
  %v316 = vmul.f32 %v245, %v298
  %v317 = vmul.f32 %v246, %v298
  %v318 = vmul.f32 %v247, %v298
  %v319 = vmul.f32 %v248, %v298
  %v320 = vmul.f32 %v249, %v298
  %v321 = vmul.f32 %v250, %v298
  %v322 = vmul.f32 %v251, %v298
  %v323 = vmul.f32 %v252, %v298
  %v324 = vmul.f32 %v253, %v298
  %v325 = vmul.f32 %v254, %v298
  %v326 = vmul.f32 %v255, %v298
  %v327 = vmul.f32 %v256, %v298
  %v328 = vmul.f32 %v257, %v298
  %v329 = vmul.f32 %v258, %v298
  %v330 = vmul.f32 %v259, %v298
  %v331 = vmul.f32 %v260, %v298
  %v332 = vmul.f32 %v261, %v298
  %v333 = vmul.f32 %v262, %v298
  %v334 = vmul.f32 %v263, %v298
  %v335 = vmul.f32 %v264, %v298
  %v336 = vmul.f32 %v265, %v298
  %v337 = vmul.f32 %v266, %v298
  %v338 = vmul.f32 %v267, %v298
  %v339 = vmul.f32 %v268, %v298
  %v340 = vmul.f32 %v269, %v298
  %v341 = vmul.f32 %v270, %v298
  %v342 = vmul.f32 %v271, %v298
  %v343 = vmul.f32 %v272, %v298
  %v344 = vmul.f32 %v273, %v298
  %v345 = vmul.f32 %v274, %v298
  %v346 = vmul.f32 %v275, %v298
  %v347 = vmul.f32 %v276, %v298
  %v348 = vmul.f32 %v277, %v298
  %v349 = vmul.f32 %v278, %v298
  %v350 = vmul.f32 %v279, %v298
  %v351 = vmul.f32 %v280, %v298
  %v352 = vmul.f32 %v281, %v298
  %v353 = vmul.f32 %v282, %v298
  %v354 = vmul.f32 %v283, %v298
  %v355 = vmul.f32 %v284, %v298
  %v356 = vmul.f32 %v285, %v298
  %v357 = vmul.f32 %v286, %v298
  %v358 = vmul.f32 %v287, %v298
  %v359 = vmul.f32 %v288, %v298
  %v360 = vmul.f32 %v289, %v298
  %v361 = vmul.f32 %v290, %v298
  %v362 = vmul.f32 %v291, %v298
  %v363 = vmul.f32 %v292, %v298
  %v364 = vld [vmem:[%s5] sm:$0x1]
  %v366 = vlaneseq
  %v367 = vshrl.u32 %v366, 7
  %v368 = vsub.s32 0, %v367
  %v369 = vrot.slane %v364, %v368
  %v371 = vadd.f32 %v300, %v369
  %v372 = vadd.f32 %v301, %v369
  %v373 = vadd.f32 %v302, %v369
  %v374 = vadd.f32 %v303, %v369
  %v375 = vadd.f32 %v304, %v369
  %v376 = vadd.f32 %v305, %v369
  %v377 = vadd.f32 %v306, %v369
  %v378 = vadd.f32 %v307, %v369
  %v379 = vadd.f32 %v308, %v369
  %v380 = vadd.f32 %v309, %v369
  %v381 = vadd.f32 %v310, %v369
  %v382 = vadd.f32 %v311, %v369
  %v383 = vadd.f32 %v312, %v369
  %v384 = vadd.f32 %v313, %v369
  %v385 = vadd.f32 %v314, %v369
  %v386 = vadd.f32 %v315, %v369
  %v387 = vadd.f32 %v316, %v369
  %v388 = vadd.f32 %v317, %v369
  %v389 = vadd.f32 %v318, %v369
  %v390 = vadd.f32 %v319, %v369
  %v391 = vadd.f32 %v320, %v369
  %v392 = vadd.f32 %v321, %v369
  %v393 = vadd.f32 %v322, %v369
  %v394 = vadd.f32 %v323, %v369
  %v395 = vadd.f32 %v324, %v369
  %v396 = vadd.f32 %v325, %v369
  %v397 = vadd.f32 %v326, %v369
  %v398 = vadd.f32 %v327, %v369
  %v399 = vadd.f32 %v328, %v369
  %v400 = vadd.f32 %v329, %v369
  %v401 = vadd.f32 %v330, %v369
  %v402 = vadd.f32 %v331, %v369
  %v403 = vadd.f32 %v332, %v369
  %v404 = vadd.f32 %v333, %v369
  %v405 = vadd.f32 %v334, %v369
  %v406 = vadd.f32 %v335, %v369
  %v407 = vadd.f32 %v336, %v369
  %v408 = vadd.f32 %v337, %v369
  %v409 = vadd.f32 %v338, %v369
  %v410 = vadd.f32 %v339, %v369
  %v411 = vadd.f32 %v340, %v369
  %v412 = vadd.f32 %v341, %v369
  %v413 = vadd.f32 %v342, %v369
  %v414 = vadd.f32 %v343, %v369
  %v415 = vadd.f32 %v344, %v369
  %v416 = vadd.f32 %v345, %v369
  %v417 = vadd.f32 %v346, %v369
  %v418 = vadd.f32 %v347, %v369
  %v419 = vadd.f32 %v348, %v369
  %v420 = vadd.f32 %v349, %v369
  %v421 = vadd.f32 %v350, %v369
  %v422 = vadd.f32 %v351, %v369
  %v423 = vadd.f32 %v352, %v369
  %v424 = vadd.f32 %v353, %v369
  %v425 = vadd.f32 %v354, %v369
  %v426 = vadd.f32 %v355, %v369
  %v427 = vadd.f32 %v356, %v369
  %v428 = vadd.f32 %v357, %v369
  %v429 = vadd.f32 %v358, %v369
  %v430 = vadd.f32 %v359, %v369
  %v431 = vadd.f32 %v360, %v369
  %v432 = vadd.f32 %v361, %v369
  %v433 = vadd.f32 %v362, %v369
  %v434 = vadd.f32 %v363, %v369
  %v435 = vadd.f32 %v165, %v371
  %v436 = vadd.f32 %v166, %v372
  %v437 = vadd.f32 %v167, %v373
  %v438 = vadd.f32 %v168, %v374
  %v439 = vadd.f32 %v169, %v375
  %v440 = vadd.f32 %v170, %v376
  %v441 = vadd.f32 %v171, %v377
  %v442 = vadd.f32 %v172, %v378
  %v443 = vadd.f32 %v173, %v379
  %v444 = vadd.f32 %v174, %v380
  %v445 = vadd.f32 %v175, %v381
  %v446 = vadd.f32 %v176, %v382
  %v447 = vadd.f32 %v177, %v383
  %v448 = vadd.f32 %v178, %v384
  %v449 = vadd.f32 %v179, %v385
  %v450 = vadd.f32 %v180, %v386
  %v451 = vadd.f32 %v181, %v387
  %v452 = vadd.f32 %v182, %v388
  %v453 = vadd.f32 %v183, %v389
  %v454 = vadd.f32 %v184, %v390
  %v455 = vadd.f32 %v185, %v391
  %v456 = vadd.f32 %v186, %v392
  %v457 = vadd.f32 %v187, %v393
  %v458 = vadd.f32 %v188, %v394
  %v459 = vadd.f32 %v189, %v395
  %v460 = vadd.f32 %v190, %v396
  %v461 = vadd.f32 %v191, %v397
  %v462 = vadd.f32 %v192, %v398
  %v463 = vadd.f32 %v193, %v399
  %v464 = vadd.f32 %v194, %v400
  %v465 = vadd.f32 %v195, %v401
  %v466 = vadd.f32 %v196, %v402
  %v467 = vadd.f32 %v197, %v403
  %v468 = vadd.f32 %v198, %v404
  %v469 = vadd.f32 %v199, %v405
  %v470 = vadd.f32 %v200, %v406
  %v471 = vadd.f32 %v201, %v407
  %v472 = vadd.f32 %v202, %v408
  %v473 = vadd.f32 %v203, %v409
  %v474 = vadd.f32 %v204, %v410
  %v475 = vadd.f32 %v205, %v411
  %v476 = vadd.f32 %v206, %v412
  %v477 = vadd.f32 %v207, %v413
  %v478 = vadd.f32 %v208, %v414
  %v479 = vadd.f32 %v209, %v415
  %v480 = vadd.f32 %v210, %v416
  %v481 = vadd.f32 %v211, %v417
  %v482 = vadd.f32 %v212, %v418
  %v483 = vadd.f32 %v213, %v419
  %v484 = vadd.f32 %v214, %v420
  %v485 = vadd.f32 %v215, %v421
  %v486 = vadd.f32 %v216, %v422
  %v487 = vadd.f32 %v217, %v423
  %v488 = vadd.f32 %v218, %v424
  %v489 = vadd.f32 %v219, %v425
  %v490 = vadd.f32 %v220, %v426
  %v491 = vadd.f32 %v221, %v427
  %v492 = vadd.f32 %v222, %v428
  %v493 = vadd.f32 %v223, %v429
  %v494 = vadd.f32 %v224, %v430
  %v495 = vadd.f32 %v225, %v431
  %v496 = vadd.f32 %v226, %v432
  %v497 = vadd.f32 %v227, %v433
  %v498 = vadd.f32 %v228, %v434
  %v499 = vmax.f32 %v435, 0.0
  %v500 = vmax.f32 %v436, 0.0
  %v501 = vmax.f32 %v437, 0.0
  %v502 = vmax.f32 %v438, 0.0
  %v503 = vmax.f32 %v439, 0.0
  %v504 = vmax.f32 %v440, 0.0
  %v505 = vmax.f32 %v441, 0.0
  %v506 = vmax.f32 %v442, 0.0
  %v507 = vmax.f32 %v443, 0.0
  %v508 = vmax.f32 %v444, 0.0
  %v509 = vmax.f32 %v445, 0.0
  %v510 = vmax.f32 %v446, 0.0
  %v511 = vmax.f32 %v447, 0.0
  %v512 = vmax.f32 %v448, 0.0
  %v513 = vmax.f32 %v449, 0.0
  %v514 = vmax.f32 %v450, 0.0
  %v515 = vmax.f32 %v451, 0.0
  %v516 = vmax.f32 %v452, 0.0
  %v517 = vmax.f32 %v453, 0.0
  %v518 = vmax.f32 %v454, 0.0
  %v519 = vmax.f32 %v455, 0.0
  %v520 = vmax.f32 %v456, 0.0
  %v521 = vmax.f32 %v457, 0.0
  %v522 = vmax.f32 %v458, 0.0
  %v523 = vmax.f32 %v459, 0.0
  %v524 = vmax.f32 %v460, 0.0
  %v525 = vmax.f32 %v461, 0.0
  %v526 = vmax.f32 %v462, 0.0
  %v527 = vmax.f32 %v463, 0.0
  %v528 = vmax.f32 %v464, 0.0
  %v529 = vmax.f32 %v465, 0.0
  %v530 = vmax.f32 %v466, 0.0
  %v531 = vmax.f32 %v467, 0.0
  %v532 = vmax.f32 %v468, 0.0
  %v533 = vmax.f32 %v469, 0.0
  %v534 = vmax.f32 %v470, 0.0
  %v535 = vmax.f32 %v471, 0.0
  %v536 = vmax.f32 %v472, 0.0
  %v537 = vmax.f32 %v473, 0.0
  %v538 = vmax.f32 %v474, 0.0
  %v539 = vmax.f32 %v475, 0.0
  %v540 = vmax.f32 %v476, 0.0
  %v541 = vmax.f32 %v477, 0.0
  %v542 = vmax.f32 %v478, 0.0
  %v543 = vmax.f32 %v479, 0.0
  %v544 = vmax.f32 %v480, 0.0
  %v545 = vmax.f32 %v481, 0.0
  %v546 = vmax.f32 %v482, 0.0
  %v547 = vmax.f32 %v483, 0.0
  %v548 = vmax.f32 %v484, 0.0
  %v549 = vmax.f32 %v485, 0.0
  %v550 = vmax.f32 %v486, 0.0
  %v551 = vmax.f32 %v487, 0.0
  %v552 = vmax.f32 %v488, 0.0
  %v553 = vmax.f32 %v489, 0.0
  %v554 = vmax.f32 %v490, 0.0
  %v555 = vmax.f32 %v491, 0.0
  %v556 = vmax.f32 %v492, 0.0
  %v557 = vmax.f32 %v493, 0.0
  %v558 = vmax.f32 %v494, 0.0
  %v559 = vmax.f32 %v495, 0.0
  %v560 = vmax.f32 %v496, 0.0
  %v561 = vmax.f32 %v497, 0.0
  %v562 = vmax.f32 %v498, 0.0
  %563 = vst [vmem:[%s6] sm:$0xff] %v499
  %564 = vst [vmem:[%s6 + $0x8] sm:$0xff] %v500
  %565 = vst [vmem:[%s6 + $0x10] sm:$0xff] %v501
  %566 = vst [vmem:[%s6 + $0x18] sm:$0xff] %v502
  %567 = vst [vmem:[%s6 + $0x20] sm:$0xff] %v503
  %568 = vst [vmem:[%s6 + $0x28] sm:$0xff] %v504
  %569 = vst [vmem:[%s6 + $0x30] sm:$0xff] %v505
  %570 = vst [vmem:[%s6 + $0x38] sm:$0xff] %v506
  %571 = vst [vmem:[%s6 + $0x40] sm:$0xff] %v507
  %572 = vst [vmem:[%s6 + $0x48] sm:$0xff] %v508
  %573 = vst [vmem:[%s6 + $0x50] sm:$0xff] %v509
  %574 = vst [vmem:[%s6 + $0x58] sm:$0xff] %v510
  %575 = vst [vmem:[%s6 + $0x60] sm:$0xff] %v511
  %576 = vst [vmem:[%s6 + $0x68] sm:$0xff] %v512
  %577 = vst [vmem:[%s6 + $0x70] sm:$0xff] %v513
  %578 = vst [vmem:[%s6 + $0x78] sm:$0xff] %v514
  %579 = vst [vmem:[%s6 + $0x80] sm:$0xff] %v515
  %580 = vst [vmem:[%s6 + $0x88] sm:$0xff] %v516
  %581 = vst [vmem:[%s6 + $0x90] sm:$0xff] %v517
  %582 = vst [vmem:[%s6 + $0x98] sm:$0xff] %v518
  %583 = vst [vmem:[%s6 + $0xa0] sm:$0xff] %v519
  %584 = vst [vmem:[%s6 + $0xa8] sm:$0xff] %v520
  %585 = vst [vmem:[%s6 + $0xb0] sm:$0xff] %v521
  %586 = vst [vmem:[%s6 + $0xb8] sm:$0xff] %v522
  %587 = vst [vmem:[%s6 + $0xc0] sm:$0xff] %v523
  %588 = vst [vmem:[%s6 + $0xc8] sm:$0xff] %v524
  %589 = vst [vmem:[%s6 + $0xd0] sm:$0xff] %v525
  %590 = vst [vmem:[%s6 + $0xd8] sm:$0xff] %v526
  %591 = vst [vmem:[%s6 + $0xe0] sm:$0xff] %v527
  %592 = vst [vmem:[%s6 + $0xe8] sm:$0xff] %v528
  %593 = vst [vmem:[%s6 + $0xf0] sm:$0xff] %v529
  %594 = vst [vmem:[%s6 + $0xf8] sm:$0xff] %v530
  %595 = vst [vmem:[%s6 + $0x100] sm:$0xff] %v531
  %596 = vst [vmem:[%s6 + $0x108] sm:$0xff] %v532
  %597 = vst [vmem:[%s6 + $0x110] sm:$0xff] %v533
  %598 = vst [vmem:[%s6 + $0x118] sm:$0xff] %v534
  %599 = vst [vmem:[%s6 + $0x120] sm:$0xff] %v535
  %600 = vst [vmem:[%s6 + $0x128] sm:$0xff] %v536
  %601 = vst [vmem:[%s6 + $0x130] sm:$0xff] %v537
  %602 = vst [vmem:[%s6 + $0x138] sm:$0xff] %v538
  %603 = vst [vmem:[%s6 + $0x140] sm:$0xff] %v539
  %604 = vst [vmem:[%s6 + $0x148] sm:$0xff] %v540
  %605 = vst [vmem:[%s6 + $0x150] sm:$0xff] %v541
  %606 = vst [vmem:[%s6 + $0x158] sm:$0xff] %v542
  %607 = vst [vmem:[%s6 + $0x160] sm:$0xff] %v543
  %608 = vst [vmem:[%s6 + $0x168] sm:$0xff] %v544
  %609 = vst [vmem:[%s6 + $0x170] sm:$0xff] %v545
  %610 = vst [vmem:[%s6 + $0x178] sm:$0xff] %v546
  %611 = vst [vmem:[%s6 + $0x180] sm:$0xff] %v547
  %612 = vst [vmem:[%s6 + $0x188] sm:$0xff] %v548
  %613 = vst [vmem:[%s6 + $0x190] sm:$0xff] %v549
  %614 = vst [vmem:[%s6 + $0x198] sm:$0xff] %v550
  %615 = vst [vmem:[%s6 + $0x1a0] sm:$0xff] %v551
  %616 = vst [vmem:[%s6 + $0x1a8] sm:$0xff] %v552
  %617 = vst [vmem:[%s6 + $0x1b0] sm:$0xff] %v553
  %618 = vst [vmem:[%s6 + $0x1b8] sm:$0xff] %v554
  %619 = vst [vmem:[%s6 + $0x1c0] sm:$0xff] %v555
  %620 = vst [vmem:[%s6 + $0x1c8] sm:$0xff] %v556
  %621 = vst [vmem:[%s6 + $0x1d0] sm:$0xff] %v557
  %622 = vst [vmem:[%s6 + $0x1d8] sm:$0xff] %v558
  %623 = vst [vmem:[%s6 + $0x1e0] sm:$0xff] %v559
  %624 = vst [vmem:[%s6 + $0x1e8] sm:$0xff] %v560
  %625 = vst [vmem:[%s6 + $0x1f0] sm:$0xff] %v561
  %626 = vst [vmem:[%s6 + $0x1f8] sm:$0xff] %v562
  // Predicated region
  $region26: #{bottleneck_forward.7} parent=0 // pred_check
    _
  $region27: #{bottleneck_forward.7} parent=0 // pred_check_branch
    %628 = sbr.rel (0) target = $region29
  $region28: #{bottleneck_forward.7} parent=0 // pred_region
    _
  $region29: #{bottleneck_forward.7} parent=0 // pred_fallthru
    _
  // Predicated region
  $region30: #{bottleneck_forward.7} parent=0 // pred_check
    _
  $region31: #{bottleneck_forward.7} parent=0 // pred_check_branch
    %630 = sbr.rel (0) target = $region33
  $region32: #{bottleneck_forward.7} parent=0 // pred_region
    _
  $region33: #{bottleneck_forward.7} parent=0 // pred_fallthru
    _

// kernel: bottleneck_forward.6
$region0: #{bottleneck_forward.6}
  #allocation0 [shape = 'u32[]', space=smem, size = 0x4, offset = 0x4, fixed_abs, tag = 'smem constant byte address 0x4 - core index']
  #allocation1 [shape = 'u32[144,128]{1,0:T(1,128)}', space=vmem, size = 0x12000, scoped, tag = 'internal scratch']
  %s0 = inlined_call_operand.vmem [shape: bf16[512,128], index: 0, kind: input, shape index: {}]
  %s1 = inlined_call_operand.vmem [shape: f32[1,128], index: 1, kind: input, shape index: {}]
  %s2 = inlined_call_operand.vmem [shape: f32[1,128], index: 2, kind: input, shape index: {}]
  %s3 = inlined_call_operand.vmem [shape: bf16[128,128], index: 3, kind: input, shape index: {}]
  %s4 = inlined_call_operand.vmem [shape: f32[512,128], index: 4, kind: output, shape index: {0}]
  %s5 = inlined_call_operand.vmem [shape: f32[1,1,128], index: 5, kind: output, shape index: {1}]
  %s6 = inlined_call_operand.vmem [shape: f32[1,1,128], index: 6, kind: output, shape index: {2}]
  %7 = xla_tuple %s4, %s5, %s6
  %s8 = sld [smem:[#allocation0]]
  $region42: #{bottleneck_forward.6} parent=0
    _
  %s10 = ssub.s32 1, %s8
  %s11 = scalar_select 0, %s10, %s8
  // Predicated region
  $region2: #{bottleneck_forward.6} parent=0 // pred_check
    _
  $region3: #{bottleneck_forward.6} parent=0 // pred_check_branch
    %13 = sbr.rel (0) target = $region5
  $region4: #{bottleneck_forward.6} parent=0 // pred_region
    _
  $region5: #{bottleneck_forward.6} parent=0 // pred_fallthru
    _
  // Predicated region
  $region6: #{bottleneck_forward.6} parent=0 // pred_check
    _
  $region7: #{bottleneck_forward.6} parent=0 // pred_check_branch
    %15 = sbr.rel (0) target = $region9
  $region8: #{bottleneck_forward.6} parent=0 // pred_region
    _
  $region9: #{bottleneck_forward.6} parent=0 // pred_fallthru
    _
  // Predicated region
  $region10: #{bottleneck_forward.6} parent=0 // pred_check
    _
  $region11: #{bottleneck_forward.6} parent=0 // pred_check_branch
    %17 = sbr.rel (0) target = $region13
  $region12: #{bottleneck_forward.6} parent=0 // pred_region
    _
  $region13: #{bottleneck_forward.6} parent=0 // pred_fallthru
    _
  // Predicated region
  $region14: #{bottleneck_forward.6} parent=0 // pred_check
    _
  $region15: #{bottleneck_forward.6} parent=0 // pred_check_branch
    %19 = sbr.rel (0) target = $region17
  $region16: #{bottleneck_forward.6} parent=0 // pred_region
    _
  $region17: #{bottleneck_forward.6} parent=0 // pred_fallthru
    _
  %v21 = vld [vmem:[%s0] sm:$0xf]
  %v22 = vld [vmem:[%s0 + $0x4] sm:$0xf]
  %v23 = vld [vmem:[%s0 + $0x8] sm:$0xf]
  %v24 = vld [vmem:[%s0 + $0xc] sm:$0xf]
  %v25 = vld [vmem:[%s0 + $0x10] sm:$0xf]
  %v26 = vld [vmem:[%s0 + $0x14] sm:$0xf]
  %v27 = vld [vmem:[%s0 + $0x18] sm:$0xf]
  %v28 = vld [vmem:[%s0 + $0x1c] sm:$0xf]
  %v29 = vld [vmem:[%s0 + $0x20] sm:$0xf]
  %v30 = vld [vmem:[%s0 + $0x24] sm:$0xf]
  %v31 = vld [vmem:[%s0 + $0x28] sm:$0xf]
  %v32 = vld [vmem:[%s0 + $0x2c] sm:$0xf]
  %v33 = vld [vmem:[%s0 + $0x30] sm:$0xf]
  %v34 = vld [vmem:[%s0 + $0x34] sm:$0xf]
  %v35 = vld [vmem:[%s0 + $0x38] sm:$0xf]
  %v36 = vld [vmem:[%s0 + $0x3c] sm:$0xf]
  %v37 = vld [vmem:[%s0 + $0x40] sm:$0xf]
  %v38 = vld [vmem:[%s0 + $0x44] sm:$0xf]
  %v39 = vld [vmem:[%s0 + $0x48] sm:$0xf]
  %v40 = vld [vmem:[%s0 + $0x4c] sm:$0xf]
  %v41 = vld [vmem:[%s0 + $0x50] sm:$0xf]
  %v42 = vld [vmem:[%s0 + $0x54] sm:$0xf]
  %v43 = vld [vmem:[%s0 + $0x58] sm:$0xf]
  %v44 = vld [vmem:[%s0 + $0x5c] sm:$0xf]
  %v45 = vld [vmem:[%s0 + $0x60] sm:$0xf]
  %v46 = vld [vmem:[%s0 + $0x64] sm:$0xf]
  %v47 = vld [vmem:[%s0 + $0x68] sm:$0xf]
  %v48 = vld [vmem:[%s0 + $0x6c] sm:$0xf]
  %v49 = vld [vmem:[%s0 + $0x70] sm:$0xf]
  %v50 = vld [vmem:[%s0 + $0x74] sm:$0xf]
  %v51 = vld [vmem:[%s0 + $0x78] sm:$0xf]
  %v52 = vld [vmem:[%s0 + $0x7c] sm:$0xf]
  %v53 = vld [vmem:[%s0 + $0x80] sm:$0xf]
  %v54 = vld [vmem:[%s0 + $0x84] sm:$0xf]
  %v55 = vld [vmem:[%s0 + $0x88] sm:$0xf]
  %v56 = vld [vmem:[%s0 + $0x8c] sm:$0xf]
  %v57 = vld [vmem:[%s0 + $0x90] sm:$0xf]
  %v58 = vld [vmem:[%s0 + $0x94] sm:$0xf]
  %v59 = vld [vmem:[%s0 + $0x98] sm:$0xf]
  %v60 = vld [vmem:[%s0 + $0x9c] sm:$0xf]
  %v61 = vld [vmem:[%s0 + $0xa0] sm:$0xf]
  %v62 = vld [vmem:[%s0 + $0xa4] sm:$0xf]
  %v63 = vld [vmem:[%s0 + $0xa8] sm:$0xf]
  %v64 = vld [vmem:[%s0 + $0xac] sm:$0xf]
  %v65 = vld [vmem:[%s0 + $0xb0] sm:$0xf]
  %v66 = vld [vmem:[%s0 + $0xb4] sm:$0xf]
  %v67 = vld [vmem:[%s0 + $0xb8] sm:$0xf]
  %v68 = vld [vmem:[%s0 + $0xbc] sm:$0xf]
  %v69 = vld [vmem:[%s0 + $0xc0] sm:$0xf]
  %v70 = vld [vmem:[%s0 + $0xc4] sm:$0xf]
  %v71 = vld [vmem:[%s0 + $0xc8] sm:$0xf]
  %v72 = vld [vmem:[%s0 + $0xcc] sm:$0xf]
  %v73 = vld [vmem:[%s0 + $0xd0] sm:$0xf]
  %v74 = vld [vmem:[%s0 + $0xd4] sm:$0xf]
  %v75 = vld [vmem:[%s0 + $0xd8] sm:$0xf]
  %v76 = vld [vmem:[%s0 + $0xdc] sm:$0xf]
  %v77 = vld [vmem:[%s0 + $0xe0] sm:$0xf]
  %v78 = vld [vmem:[%s0 + $0xe4] sm:$0xf]
  %v79 = vld [vmem:[%s0 + $0xe8] sm:$0xf]
  %v80 = vld [vmem:[%s0 + $0xec] sm:$0xf]
  %v81 = vld [vmem:[%s0 + $0xf0] sm:$0xf]
  %v82 = vld [vmem:[%s0 + $0xf4] sm:$0xf]
  %v83 = vld [vmem:[%s0 + $0xf8] sm:$0xf]
  %v84 = vld [vmem:[%s0 + $0xfc] sm:$0xf]
  %v85 = vunpack.c.l.bf16 %v21
  %v86 = vunpack.c.l.bf16 %v22
  %v87 = vunpack.c.l.bf16 %v23
  %v88 = vunpack.c.l.bf16 %v24
  %v89 = vunpack.c.l.bf16 %v25
  %v90 = vunpack.c.l.bf16 %v26
  %v91 = vunpack.c.l.bf16 %v27
  %v92 = vunpack.c.l.bf16 %v28
  %v93 = vunpack.c.l.bf16 %v29
  %v94 = vunpack.c.l.bf16 %v30
  %v95 = vunpack.c.l.bf16 %v31
  %v96 = vunpack.c.l.bf16 %v32
  %v97 = vunpack.c.l.bf16 %v33
  %v98 = vunpack.c.l.bf16 %v34
  %v99 = vunpack.c.l.bf16 %v35
  %v100 = vunpack.c.l.bf16 %v36
  %v101 = vunpack.c.l.bf16 %v37
  %v102 = vunpack.c.l.bf16 %v38
  %v103 = vunpack.c.l.bf16 %v39
  %v104 = vunpack.c.l.bf16 %v40
  %v105 = vunpack.c.l.bf16 %v41
  %v106 = vunpack.c.l.bf16 %v42
  %v107 = vunpack.c.l.bf16 %v43
  %v108 = vunpack.c.l.bf16 %v44
  %v109 = vunpack.c.l.bf16 %v45
  %v110 = vunpack.c.l.bf16 %v46
  %v111 = vunpack.c.l.bf16 %v47
  %v112 = vunpack.c.l.bf16 %v48
  %v113 = vunpack.c.l.bf16 %v49
  %v114 = vunpack.c.l.bf16 %v50
  %v115 = vunpack.c.l.bf16 %v51
  %v116 = vunpack.c.l.bf16 %v52
  %v117 = vunpack.c.l.bf16 %v53
  %v118 = vunpack.c.l.bf16 %v54
  %v119 = vunpack.c.l.bf16 %v55
  %v120 = vunpack.c.l.bf16 %v56
  %v121 = vunpack.c.l.bf16 %v57
  %v122 = vunpack.c.l.bf16 %v58
  %v123 = vunpack.c.l.bf16 %v59
  %v124 = vunpack.c.l.bf16 %v60
  %v125 = vunpack.c.l.bf16 %v61
  %v126 = vunpack.c.l.bf16 %v62
  %v127 = vunpack.c.l.bf16 %v63
  %v128 = vunpack.c.l.bf16 %v64
  %v129 = vunpack.c.l.bf16 %v65
  %v130 = vunpack.c.l.bf16 %v66
  %v131 = vunpack.c.l.bf16 %v67
  %v132 = vunpack.c.l.bf16 %v68
  %v133 = vunpack.c.l.bf16 %v69
  %v134 = vunpack.c.l.bf16 %v70
  %v135 = vunpack.c.l.bf16 %v71
  %v136 = vunpack.c.l.bf16 %v72
  %v137 = vunpack.c.l.bf16 %v73
  %v138 = vunpack.c.l.bf16 %v74
  %v139 = vunpack.c.l.bf16 %v75
  %v140 = vunpack.c.l.bf16 %v76
  %v141 = vunpack.c.l.bf16 %v77
  %v142 = vunpack.c.l.bf16 %v78
  %v143 = vunpack.c.l.bf16 %v79
  %v144 = vunpack.c.l.bf16 %v80
  %v145 = vunpack.c.l.bf16 %v81
  %v146 = vunpack.c.l.bf16 %v82
  %v147 = vunpack.c.l.bf16 %v83
  %v148 = vunpack.c.l.bf16 %v84
  %v149 = vld [vmem:[%s1] sm:$0x1]
  %v151 = vlaneseq
  %v152 = vshrl.u32 %v151, 7
  %v153 = vsub.s32 0, %v152
  %v154 = vrot.slane %v149, %v153
  %v156 = vmul.f32 %v85, %v154
  %v157 = vmul.f32 %v86, %v154
  %v158 = vmul.f32 %v87, %v154
  %v159 = vmul.f32 %v88, %v154
  %v160 = vmul.f32 %v89, %v154
  %v161 = vmul.f32 %v90, %v154
  %v162 = vmul.f32 %v91, %v154
  %v163 = vmul.f32 %v92, %v154
  %v164 = vmul.f32 %v93, %v154
  %v165 = vmul.f32 %v94, %v154
  %v166 = vmul.f32 %v95, %v154
  %v167 = vmul.f32 %v96, %v154
  %v168 = vmul.f32 %v97, %v154
  %v169 = vmul.f32 %v98, %v154
  %v170 = vmul.f32 %v99, %v154
  %v171 = vmul.f32 %v100, %v154
  %v172 = vmul.f32 %v101, %v154
  %v173 = vmul.f32 %v102, %v154
  %v174 = vmul.f32 %v103, %v154
  %v175 = vmul.f32 %v104, %v154
  %v176 = vmul.f32 %v105, %v154
  %v177 = vmul.f32 %v106, %v154
  %v178 = vmul.f32 %v107, %v154
  %v179 = vmul.f32 %v108, %v154
  %v180 = vmul.f32 %v109, %v154
  %v181 = vmul.f32 %v110, %v154
  %v182 = vmul.f32 %v111, %v154
  %v183 = vmul.f32 %v112, %v154
  %v184 = vmul.f32 %v113, %v154
  %v185 = vmul.f32 %v114, %v154
  %v186 = vmul.f32 %v115, %v154
  %v187 = vmul.f32 %v116, %v154
  %v188 = vmul.f32 %v117, %v154
  %v189 = vmul.f32 %v118, %v154
  %v190 = vmul.f32 %v119, %v154
  %v191 = vmul.f32 %v120, %v154
  %v192 = vmul.f32 %v121, %v154
  %v193 = vmul.f32 %v122, %v154
  %v194 = vmul.f32 %v123, %v154
  %v195 = vmul.f32 %v124, %v154
  %v196 = vmul.f32 %v125, %v154
  %v197 = vmul.f32 %v126, %v154
  %v198 = vmul.f32 %v127, %v154
  %v199 = vmul.f32 %v128, %v154
  %v200 = vmul.f32 %v129, %v154
  %v201 = vmul.f32 %v130, %v154
  %v202 = vmul.f32 %v131, %v154
  %v203 = vmul.f32 %v132, %v154
  %v204 = vmul.f32 %v133, %v154
  %v205 = vmul.f32 %v134, %v154
  %v206 = vmul.f32 %v135, %v154
  %v207 = vmul.f32 %v136, %v154
  %v208 = vmul.f32 %v137, %v154
  %v209 = vmul.f32 %v138, %v154
  %v210 = vmul.f32 %v139, %v154
  %v211 = vmul.f32 %v140, %v154
  %v212 = vmul.f32 %v141, %v154
  %v213 = vmul.f32 %v142, %v154
  %v214 = vmul.f32 %v143, %v154
  %v215 = vmul.f32 %v144, %v154
  %v216 = vmul.f32 %v145, %v154
  %v217 = vmul.f32 %v146, %v154
  %v218 = vmul.f32 %v147, %v154
  %v219 = vmul.f32 %v148, %v154
  %v220 = vld [vmem:[%s2] sm:$0x1]
  %v222 = vlaneseq
  %v223 = vshrl.u32 %v222, 7
  %v224 = vsub.s32 0, %v223
  %v225 = vrot.slane %v220, %v224
  %v227 = vadd.f32 %v156, %v225
  %v228 = vadd.f32 %v157, %v225
  %v229 = vadd.f32 %v158, %v225
  %v230 = vadd.f32 %v159, %v225
  %v231 = vadd.f32 %v160, %v225
  %v232 = vadd.f32 %v161, %v225
  %v233 = vadd.f32 %v162, %v225
  %v234 = vadd.f32 %v163, %v225
  %v235 = vadd.f32 %v164, %v225
  %v236 = vadd.f32 %v165, %v225
  %v237 = vadd.f32 %v166, %v225
  %v238 = vadd.f32 %v167, %v225
  %v239 = vadd.f32 %v168, %v225
  %v240 = vadd.f32 %v169, %v225
  %v241 = vadd.f32 %v170, %v225
  %v242 = vadd.f32 %v171, %v225
  %v243 = vadd.f32 %v172, %v225
  %v244 = vadd.f32 %v173, %v225
  %v245 = vadd.f32 %v174, %v225
  %v246 = vadd.f32 %v175, %v225
  %v247 = vadd.f32 %v176, %v225
  %v248 = vadd.f32 %v177, %v225
  %v249 = vadd.f32 %v178, %v225
  %v250 = vadd.f32 %v179, %v225
  %v251 = vadd.f32 %v180, %v225
  %v252 = vadd.f32 %v181, %v225
  %v253 = vadd.f32 %v182, %v225
  %v254 = vadd.f32 %v183, %v225
  %v255 = vadd.f32 %v184, %v225
  %v256 = vadd.f32 %v185, %v225
  %v257 = vadd.f32 %v186, %v225
  %v258 = vadd.f32 %v187, %v225
  %v259 = vadd.f32 %v188, %v225
  %v260 = vadd.f32 %v189, %v225
  %v261 = vadd.f32 %v190, %v225
  %v262 = vadd.f32 %v191, %v225
  %v263 = vadd.f32 %v192, %v225
  %v264 = vadd.f32 %v193, %v225
  %v265 = vadd.f32 %v194, %v225
  %v266 = vadd.f32 %v195, %v225
  %v267 = vadd.f32 %v196, %v225
  %v268 = vadd.f32 %v197, %v225
  %v269 = vadd.f32 %v198, %v225
  %v270 = vadd.f32 %v199, %v225
  %v271 = vadd.f32 %v200, %v225
  %v272 = vadd.f32 %v201, %v225
  %v273 = vadd.f32 %v202, %v225
  %v274 = vadd.f32 %v203, %v225
  %v275 = vadd.f32 %v204, %v225
  %v276 = vadd.f32 %v205, %v225
  %v277 = vadd.f32 %v206, %v225
  %v278 = vadd.f32 %v207, %v225
  %v279 = vadd.f32 %v208, %v225
  %v280 = vadd.f32 %v209, %v225
  %v281 = vadd.f32 %v210, %v225
  %v282 = vadd.f32 %v211, %v225
  %v283 = vadd.f32 %v212, %v225
  %v284 = vadd.f32 %v213, %v225
  %v285 = vadd.f32 %v214, %v225
  %v286 = vadd.f32 %v215, %v225
  %v287 = vadd.f32 %v216, %v225
  %v288 = vadd.f32 %v217, %v225
  %v289 = vadd.f32 %v218, %v225
  %v290 = vadd.f32 %v219, %v225
  %v291 = vmax.f32 %v227, 0.0
  %v292 = vmax.f32 %v228, 0.0
  %v293 = vmax.f32 %v229, 0.0
  %v294 = vmax.f32 %v230, 0.0
  %v295 = vmax.f32 %v231, 0.0
  %v296 = vmax.f32 %v232, 0.0
  %v297 = vmax.f32 %v233, 0.0
  %v298 = vmax.f32 %v234, 0.0
  %v299 = vmax.f32 %v235, 0.0
  %v300 = vmax.f32 %v236, 0.0
  %v301 = vmax.f32 %v237, 0.0
  %v302 = vmax.f32 %v238, 0.0
  %v303 = vmax.f32 %v239, 0.0
  %v304 = vmax.f32 %v240, 0.0
  %v305 = vmax.f32 %v241, 0.0
  %v306 = vmax.f32 %v242, 0.0
  %v307 = vmax.f32 %v243, 0.0
  %v308 = vmax.f32 %v244, 0.0
  %v309 = vmax.f32 %v245, 0.0
  %v310 = vmax.f32 %v246, 0.0
  %v311 = vmax.f32 %v247, 0.0
  %v312 = vmax.f32 %v248, 0.0
  %v313 = vmax.f32 %v249, 0.0
  %v314 = vmax.f32 %v250, 0.0
  %v315 = vmax.f32 %v251, 0.0
  %v316 = vmax.f32 %v252, 0.0
  %v317 = vmax.f32 %v253, 0.0
  %v318 = vmax.f32 %v254, 0.0
  %v319 = vmax.f32 %v255, 0.0
  %v320 = vmax.f32 %v256, 0.0
  %v321 = vmax.f32 %v257, 0.0
  %v322 = vmax.f32 %v258, 0.0
  %v323 = vmax.f32 %v259, 0.0
  %v324 = vmax.f32 %v260, 0.0
  %v325 = vmax.f32 %v261, 0.0
  %v326 = vmax.f32 %v262, 0.0
  %v327 = vmax.f32 %v263, 0.0
  %v328 = vmax.f32 %v264, 0.0
  %v329 = vmax.f32 %v265, 0.0
  %v330 = vmax.f32 %v266, 0.0
  %v331 = vmax.f32 %v267, 0.0
  %v332 = vmax.f32 %v268, 0.0
  %v333 = vmax.f32 %v269, 0.0
  %v334 = vmax.f32 %v270, 0.0
  %v335 = vmax.f32 %v271, 0.0
  %v336 = vmax.f32 %v272, 0.0
  %v337 = vmax.f32 %v273, 0.0
  %v338 = vmax.f32 %v274, 0.0
  %v339 = vmax.f32 %v275, 0.0
  %v340 = vmax.f32 %v276, 0.0
  %v341 = vmax.f32 %v277, 0.0
  %v342 = vmax.f32 %v278, 0.0
  %v343 = vmax.f32 %v279, 0.0
  %v344 = vmax.f32 %v280, 0.0
  %v345 = vmax.f32 %v281, 0.0
  %v346 = vmax.f32 %v282, 0.0
  %v347 = vmax.f32 %v283, 0.0
  %v348 = vmax.f32 %v284, 0.0
  %v349 = vmax.f32 %v285, 0.0
  %v350 = vmax.f32 %v286, 0.0
  %v351 = vmax.f32 %v287, 0.0
  %v352 = vmax.f32 %v288, 0.0
  %v353 = vmax.f32 %v289, 0.0
  %v354 = vmax.f32 %v290, 0.0
  %v355 = vpack.c.bf16 %v292, %v291
  %v356 = vpack.c.bf16 %v294, %v293
  %v357 = vpack.c.bf16 %v296, %v295
  %v358 = vpack.c.bf16 %v298, %v297
  %v359 = vpack.c.bf16 %v300, %v299
  %v360 = vpack.c.bf16 %v302, %v301
  %v361 = vpack.c.bf16 %v304, %v303
  %v362 = vpack.c.bf16 %v306, %v305
  %v363 = vpack.c.bf16 %v308, %v307
  %v364 = vpack.c.bf16 %v310, %v309
  %v365 = vpack.c.bf16 %v312, %v311
  %v366 = vpack.c.bf16 %v314, %v313
  %v367 = vpack.c.bf16 %v316, %v315
  %v368 = vpack.c.bf16 %v318, %v317
  %v369 = vpack.c.bf16 %v320, %v319
  %v370 = vpack.c.bf16 %v322, %v321
  %v371 = vpack.c.bf16 %v324, %v323
  %v372 = vpack.c.bf16 %v326, %v325
  %v373 = vpack.c.bf16 %v328, %v327
  %v374 = vpack.c.bf16 %v330, %v329
  %v375 = vpack.c.bf16 %v332, %v331
  %v376 = vpack.c.bf16 %v334, %v333
  %v377 = vpack.c.bf16 %v336, %v335
  %v378 = vpack.c.bf16 %v338, %v337
  %v379 = vpack.c.bf16 %v340, %v339
  %v380 = vpack.c.bf16 %v342, %v341
  %v381 = vpack.c.bf16 %v344, %v343
  %v382 = vpack.c.bf16 %v346, %v345
  %v383 = vpack.c.bf16 %v348, %v347
  %v384 = vpack.c.bf16 %v350, %v349
  %v385 = vpack.c.bf16 %v352, %v351
  %v386 = vpack.c.bf16 %v354, %v353
  %v387 = vld [vmem:[%s3] sm:$0xf]
  %v388 = vld [vmem:[%s3 + $0x4] sm:$0xf]
  %v389 = vld [vmem:[%s3 + $0x8] sm:$0xf]
  %v390 = vld [vmem:[%s3 + $0xc] sm:$0xf]
  %v391 = vld [vmem:[%s3 + $0x10] sm:$0xf]
  %v392 = vld [vmem:[%s3 + $0x14] sm:$0xf]
  %v393 = vld [vmem:[%s3 + $0x18] sm:$0xf]
  %v394 = vld [vmem:[%s3 + $0x1c] sm:$0xf]
  %v395 = vld [vmem:[%s3 + $0x20] sm:$0xf]
  %v396 = vld [vmem:[%s3 + $0x24] sm:$0xf]
  %v397 = vld [vmem:[%s3 + $0x28] sm:$0xf]
  %v398 = vld [vmem:[%s3 + $0x2c] sm:$0xf]
  %v399 = vld [vmem:[%s3 + $0x30] sm:$0xf]
  %v400 = vld [vmem:[%s3 + $0x34] sm:$0xf]
  %v401 = vld [vmem:[%s3 + $0x38] sm:$0xf]
  %v402 = vld [vmem:[%s3 + $0x3c] sm:$0xf]
  %v419 = vunpack.c.l.b16 %v387
  %v420 = vunpack.c.l.b16 %v388
  %v421 = vunpack.c.l.b16 %v389
  %v422 = vunpack.c.l.b16 %v390
  %v423 = vunpack.c.l.b16 %v391
  %v424 = vunpack.c.l.b16 %v392
  %v425 = vunpack.c.l.b16 %v393
  %v426 = vunpack.c.l.b16 %v394
  %v427 = vunpack.c.l.b16 %v395
  %v428 = vunpack.c.l.b16 %v396
  %v429 = vunpack.c.l.b16 %v397
  %v430 = vunpack.c.l.b16 %v398
  %v431 = vunpack.c.l.b16 %v399
  %v432 = vunpack.c.l.b16 %v400
  %v433 = vunpack.c.l.b16 %v401
  %v434 = vunpack.c.l.b16 %v402
  %v435 = vpack.c.b16 %v420, %v419
  %v436 = vpack.c.b16 %v422, %v421
  %v437 = vpack.c.b16 %v424, %v423
  %v438 = vpack.c.b16 %v426, %v425
  %v439 = vpack.c.b16 %v428, %v427
  %v440 = vpack.c.b16 %v430, %v429
  %v441 = vpack.c.b16 %v432, %v431
  %v442 = vpack.c.b16 %v434, %v433
  %451 = vmatprep.subr.bf16.mxu0 0
  %452 = vmatpush1.bf16.msra.mxu0 %v442
  %453 = vmatprep.subr.bf16.mxu0 0
  %454 = vmatpush1.bf16.msra.mxu0 %v441
  %455 = vmatprep.subr.bf16.mxu0 0
  %456 = vmatpush1.bf16.msra.mxu0 %v440
  %457 = vmatprep.subr.bf16.mxu0 0
  %458 = vmatpush1.bf16.msra.mxu0 %v439
  %459 = vmatprep.subr.bf16.mxu0 0
  %460 = vmatpush1.bf16.msra.mxu0 %v438
  %461 = vmatprep.subr.bf16.mxu0 0
  %462 = vmatpush1.bf16.msra.mxu0 %v437
  %463 = vmatprep.subr.bf16.mxu0 0
  %464 = vmatpush1.bf16.msra.mxu0 %v436
  %465 = vmatprep.subr.bf16.mxu0 0
  %466 = vmatpush1.bf16.msra.mxu0 %v435
  %467 = vmatprep.subr.bf16.mxu0 0
  %468 = vmatpush2.bf16.msra.mxu0 0
  %469 = vmatprep.subr.bf16.mxu0 0
  %470 = vmatpush2.bf16.msra.mxu0 0
  %471 = vmatprep.subr.bf16.mxu0 0
  %472 = vmatpush2.bf16.msra.mxu0 0
  %473 = vmatprep.subr.bf16.mxu0 0
  %474 = vmatpush2.bf16.msra.mxu0 0
  %475 = vmatprep.subr.bf16.mxu0 0
  %476 = vmatpush2.bf16.msra.mxu0 0
  %477 = vmatprep.subr.bf16.mxu0 0
  %478 = vmatpush2.bf16.msra.mxu0 0
  %479 = vmatprep.subr.bf16.mxu0 0
  %480 = vmatpush2.bf16.msra.mxu0 0
  %481 = vmatprep.subr.bf16.mxu0 0
  %482 = vmatpush2.bf16.msra.mxu0 0
  %483 = vmatprep.mubr.bf16.mxu0 0
  %484 = vmatmul.mubr.bf16.gmra.mxu0 %v355
  %v485 = vpop.f32.mrf.mxu0
  %v486 = vadd.f32 0.0, %v485
  %v487 = vpop.f32.mrf.mxu0
  %v488 = vpop.f32.mrf.mxu0
  %v489 = vadd.f32 0.0, %v488
  %v490 = vpop.f32.mrf.mxu0
  %491 = vmatprep.mubr.bf16.mxu0 0
  %492 = vmatmul.mubr.bf16.gmra.mxu0 %v356
  %v493 = vpop.f32.mrf.mxu0
  %v494 = vadd.f32 0.0, %v493
  %v495 = vpop.f32.mrf.mxu0
  %v496 = vpop.f32.mrf.mxu0
  %v497 = vadd.f32 0.0, %v496
  %v498 = vpop.f32.mrf.mxu0
  %499 = vmatprep.mubr.bf16.mxu0 0
  %500 = vmatmul.mubr.bf16.gmra.mxu0 %v357
  %v501 = vpop.f32.mrf.mxu0
  %v502 = vadd.f32 0.0, %v501
  %v503 = vpop.f32.mrf.mxu0
  %v504 = vpop.f32.mrf.mxu0
  %v505 = vadd.f32 0.0, %v504
  %v506 = vpop.f32.mrf.mxu0
  %507 = vmatprep.mubr.bf16.mxu0 0
  %508 = vmatmul.mubr.bf16.gmra.mxu0 %v358
  %v509 = vpop.f32.mrf.mxu0
  %v510 = vadd.f32 0.0, %v509
  %v511 = vpop.f32.mrf.mxu0
  %v512 = vpop.f32.mrf.mxu0
  %v513 = vadd.f32 0.0, %v512
  %v514 = vpop.f32.mrf.mxu0
  %515 = vmatprep.mubr.bf16.mxu0 0
  %516 = vmatmul.mubr.bf16.gmra.mxu0 %v359
  %v517 = vpop.f32.mrf.mxu0
  %v518 = vadd.f32 0.0, %v517
  %v519 = vpop.f32.mrf.mxu0
  %v520 = vpop.f32.mrf.mxu0
  %v521 = vadd.f32 0.0, %v520
  %v522 = vpop.f32.mrf.mxu0
  %523 = vmatprep.mubr.bf16.mxu0 0
  %524 = vmatmul.mubr.bf16.gmra.mxu0 %v360
  %v525 = vpop.f32.mrf.mxu0
  %v526 = vadd.f32 0.0, %v525
  %v527 = vpop.f32.mrf.mxu0
  %v528 = vpop.f32.mrf.mxu0
  %v529 = vadd.f32 0.0, %v528
  %v530 = vpop.f32.mrf.mxu0
  %531 = vmatprep.mubr.bf16.mxu0 0
  %532 = vmatmul.mubr.bf16.gmra.mxu0 %v361
  %v533 = vpop.f32.mrf.mxu0
  %v534 = vadd.f32 0.0, %v533
  %v535 = vpop.f32.mrf.mxu0
  %v536 = vpop.f32.mrf.mxu0
  %v537 = vadd.f32 0.0, %v536
  %v538 = vpop.f32.mrf.mxu0
  %539 = vmatprep.mubr.bf16.mxu0 0
  %540 = vmatmul.mubr.bf16.gmra.mxu0 %v362
  %v541 = vpop.f32.mrf.mxu0
  %v542 = vadd.f32 0.0, %v541
  %v543 = vpop.f32.mrf.mxu0
  %v544 = vpop.f32.mrf.mxu0
  %v545 = vadd.f32 0.0, %v544
  %v546 = vpop.f32.mrf.mxu0
  %547 = vmatprep.mubr.bf16.mxu0 0
  %548 = vmatmul.mubr.bf16.gmra.mxu0 %v363
  %v549 = vpop.f32.mrf.mxu0
  %v550 = vadd.f32 0.0, %v549
  %v551 = vpop.f32.mrf.mxu0
  %v552 = vpop.f32.mrf.mxu0
  %v553 = vadd.f32 0.0, %v552
  %v554 = vpop.f32.mrf.mxu0
  %555 = vmatprep.mubr.bf16.mxu0 0
  %556 = vmatmul.mubr.bf16.gmra.mxu0 %v364
  %v557 = vpop.f32.mrf.mxu0
  %v558 = vadd.f32 0.0, %v557
  %v559 = vpop.f32.mrf.mxu0
  %v560 = vpop.f32.mrf.mxu0
  %v561 = vadd.f32 0.0, %v560
  %v562 = vpop.f32.mrf.mxu0
  %563 = vmatprep.mubr.bf16.mxu0 0
  %564 = vmatmul.mubr.bf16.gmra.mxu0 %v365
  %v565 = vpop.f32.mrf.mxu0
  %v566 = vadd.f32 0.0, %v565
  %v567 = vpop.f32.mrf.mxu0
  %v568 = vpop.f32.mrf.mxu0
  %v569 = vadd.f32 0.0, %v568
  %v570 = vpop.f32.mrf.mxu0
  %571 = vmatprep.mubr.bf16.mxu0 0
  %572 = vmatmul.mubr.bf16.gmra.mxu0 %v366
  %v573 = vpop.f32.mrf.mxu0
  %v574 = vadd.f32 0.0, %v573
  %v575 = vpop.f32.mrf.mxu0
  %v576 = vpop.f32.mrf.mxu0
  %v577 = vadd.f32 0.0, %v576
  %v578 = vpop.f32.mrf.mxu0
  %579 = vmatprep.mubr.bf16.mxu0 0
  %580 = vmatmul.mubr.bf16.gmra.mxu0 %v367
  %v581 = vpop.f32.mrf.mxu0
  %v582 = vadd.f32 0.0, %v581
  %v583 = vpop.f32.mrf.mxu0
  %v584 = vpop.f32.mrf.mxu0
  %v585 = vadd.f32 0.0, %v584
  %v586 = vpop.f32.mrf.mxu0
  %587 = vmatprep.mubr.bf16.mxu0 0
  %588 = vmatmul.mubr.bf16.gmra.mxu0 %v368
  %v589 = vpop.f32.mrf.mxu0
  %v590 = vadd.f32 0.0, %v589
  %v591 = vpop.f32.mrf.mxu0
  %v592 = vpop.f32.mrf.mxu0
  %v593 = vadd.f32 0.0, %v592
  %v594 = vpop.f32.mrf.mxu0
  %595 = vmatprep.mubr.bf16.mxu0 0
  %596 = vmatmul.mubr.bf16.gmra.mxu0 %v369
  %v597 = vpop.f32.mrf.mxu0
  %v598 = vadd.f32 0.0, %v597
  %v599 = vpop.f32.mrf.mxu0
  %v600 = vpop.f32.mrf.mxu0
  %v601 = vadd.f32 0.0, %v600
  %v602 = vpop.f32.mrf.mxu0
  %603 = vmatprep.mubr.bf16.mxu0 0
  %604 = vmatmul.mubr.bf16.gmra.mxu0 %v370
  %v605 = vpop.f32.mrf.mxu0
  %v606 = vadd.f32 0.0, %v605
  %v607 = vpop.f32.mrf.mxu0
  %v608 = vpop.f32.mrf.mxu0
  %v609 = vadd.f32 0.0, %v608
  %v610 = vpop.f32.mrf.mxu0
  %611 = vmatprep.mubr.bf16.mxu0 0
  %612 = vmatmul.mubr.bf16.gmra.mxu0 %v371
  %v613 = vpop.f32.mrf.mxu0
  %v614 = vadd.f32 0.0, %v613
  %v615 = vpop.f32.mrf.mxu0
  %v616 = vpop.f32.mrf.mxu0
  %v617 = vadd.f32 0.0, %v616
  %v618 = vpop.f32.mrf.mxu0
  %619 = vmatprep.mubr.bf16.mxu0 0
  %620 = vmatmul.mubr.bf16.gmra.mxu0 %v372
  %v621 = vpop.f32.mrf.mxu0
  %v622 = vadd.f32 0.0, %v621
  %v623 = vpop.f32.mrf.mxu0
  %v624 = vpop.f32.mrf.mxu0
  %v625 = vadd.f32 0.0, %v624
  %v626 = vpop.f32.mrf.mxu0
  %627 = vmatprep.mubr.bf16.mxu0 0
  %628 = vmatmul.mubr.bf16.gmra.mxu0 %v373
  %v629 = vpop.f32.mrf.mxu0
  %v630 = vadd.f32 0.0, %v629
  %v631 = vpop.f32.mrf.mxu0
  %v632 = vpop.f32.mrf.mxu0
  %v633 = vadd.f32 0.0, %v632
  %v634 = vpop.f32.mrf.mxu0
  %635 = vmatprep.mubr.bf16.mxu0 0
  %636 = vmatmul.mubr.bf16.gmra.mxu0 %v374
  %v637 = vpop.f32.mrf.mxu0
  %v638 = vadd.f32 0.0, %v637
  %v639 = vpop.f32.mrf.mxu0
  %v640 = vpop.f32.mrf.mxu0
  %v641 = vadd.f32 0.0, %v640
  %v642 = vpop.f32.mrf.mxu0
  %643 = vmatprep.mubr.bf16.mxu0 0
  %644 = vmatmul.mubr.bf16.gmra.mxu0 %v375
  %v645 = vpop.f32.mrf.mxu0
  %v646 = vadd.f32 0.0, %v645
  %v647 = vpop.f32.mrf.mxu0
  %v648 = vpop.f32.mrf.mxu0
  %v649 = vadd.f32 0.0, %v648
  %v650 = vpop.f32.mrf.mxu0
  %651 = vmatprep.mubr.bf16.mxu0 0
  %652 = vmatmul.mubr.bf16.gmra.mxu0 %v376
  %v653 = vpop.f32.mrf.mxu0
  %v654 = vadd.f32 0.0, %v653
  %v655 = vpop.f32.mrf.mxu0
  %v656 = vpop.f32.mrf.mxu0
  %v657 = vadd.f32 0.0, %v656
  %v658 = vpop.f32.mrf.mxu0
  %659 = vmatprep.mubr.bf16.mxu0 0
  %660 = vmatmul.mubr.bf16.gmra.mxu0 %v377
  %v661 = vpop.f32.mrf.mxu0
  %v662 = vadd.f32 0.0, %v661
  %v663 = vpop.f32.mrf.mxu0
  %v664 = vpop.f32.mrf.mxu0
  %v665 = vadd.f32 0.0, %v664
  %v666 = vpop.f32.mrf.mxu0
  %667 = vmatprep.mubr.bf16.mxu0 0
  %668 = vmatmul.mubr.bf16.gmra.mxu0 %v378
  %v669 = vpop.f32.mrf.mxu0
  %v670 = vadd.f32 0.0, %v669
  %v671 = vpop.f32.mrf.mxu0
  %v672 = vpop.f32.mrf.mxu0
  %v673 = vadd.f32 0.0, %v672
  %v674 = vpop.f32.mrf.mxu0
  %675 = vmatprep.mubr.bf16.mxu0 0
  %676 = vmatmul.mubr.bf16.gmra.mxu0 %v379
  %v677 = vpop.f32.mrf.mxu0
  %v678 = vadd.f32 0.0, %v677
  %v679 = vpop.f32.mrf.mxu0
  %v680 = vpop.f32.mrf.mxu0
  %v681 = vadd.f32 0.0, %v680
  %v682 = vpop.f32.mrf.mxu0
  %683 = vmatprep.mubr.bf16.mxu0 0
  %684 = vmatmul.mubr.bf16.gmra.mxu0 %v380
  %v685 = vpop.f32.mrf.mxu0
  %v686 = vadd.f32 0.0, %v685
  %v687 = vpop.f32.mrf.mxu0
  %v688 = vpop.f32.mrf.mxu0
  %v689 = vadd.f32 0.0, %v688
  %v690 = vpop.f32.mrf.mxu0
  %691 = vmatprep.mubr.bf16.mxu0 0
  %692 = vmatmul.mubr.bf16.gmra.mxu0 %v381
  %v693 = vpop.f32.mrf.mxu0
  %v694 = vadd.f32 0.0, %v693
  %v695 = vpop.f32.mrf.mxu0
  %v696 = vpop.f32.mrf.mxu0
  %v697 = vadd.f32 0.0, %v696
  %v698 = vpop.f32.mrf.mxu0
  %699 = vmatprep.mubr.bf16.mxu0 0
  %700 = vmatmul.mubr.bf16.gmra.mxu0 %v382
  %v701 = vpop.f32.mrf.mxu0
  %v702 = vadd.f32 0.0, %v701
  %v703 = vpop.f32.mrf.mxu0
  %v704 = vpop.f32.mrf.mxu0
  %v705 = vadd.f32 0.0, %v704
  %v706 = vpop.f32.mrf.mxu0
  %707 = vmatprep.mubr.bf16.mxu0 0
  %708 = vmatmul.mubr.bf16.gmra.mxu0 %v383
  %v709 = vpop.f32.mrf.mxu0
  %v710 = vadd.f32 0.0, %v709
  %v711 = vpop.f32.mrf.mxu0
  %v712 = vpop.f32.mrf.mxu0
  %v713 = vadd.f32 0.0, %v712
  %v714 = vpop.f32.mrf.mxu0
  %715 = vmatprep.mubr.bf16.mxu0 0
  %716 = vmatmul.mubr.bf16.gmra.mxu0 %v384
  %v717 = vpop.f32.mrf.mxu0
  %v718 = vadd.f32 0.0, %v717
  %v719 = vpop.f32.mrf.mxu0
  %v720 = vpop.f32.mrf.mxu0
  %v721 = vadd.f32 0.0, %v720
  %v722 = vpop.f32.mrf.mxu0
  %723 = vmatprep.mubr.bf16.mxu0 0
  %724 = vmatmul.mubr.bf16.gmra.mxu0 %v385
  %v725 = vpop.f32.mrf.mxu0
  %v726 = vadd.f32 0.0, %v725
  %v727 = vpop.f32.mrf.mxu0
  %v728 = vpop.f32.mrf.mxu0
  %v729 = vadd.f32 0.0, %v728
  %v730 = vpop.f32.mrf.mxu0
  %731 = vmatprep.mubr.bf16.mxu0 0
  %732 = vmatmul.mubr.bf16.gmra.mxu0 %v386
  %v733 = vpop.f32.mrf.mxu0
  %v734 = vadd.f32 0.0, %v733
  %v735 = vpop.f32.mrf.mxu0
  %v736 = vpop.f32.mrf.mxu0
  %v737 = vadd.f32 0.0, %v736
  %v738 = vpop.f32.mrf.mxu0
  %739 = vdwg.mxu0
  %740 = vst [vmem:[%s4] sm:$0xff] %v486
  %741 = vst [vmem:[%s4 + $0x8] sm:$0xff] %v489
  %742 = vst [vmem:[%s4 + $0x10] sm:$0xff] %v494
  %743 = vst [vmem:[%s4 + $0x18] sm:$0xff] %v497
  %744 = vst [vmem:[%s4 + $0x20] sm:$0xff] %v502
  %745 = vst [vmem:[%s4 + $0x28] sm:$0xff] %v505
  %746 = vst [vmem:[%s4 + $0x30] sm:$0xff] %v510
  %747 = vst [vmem:[%s4 + $0x38] sm:$0xff] %v513
  %748 = vst [vmem:[%s4 + $0x40] sm:$0xff] %v518
  %749 = vst [vmem:[%s4 + $0x48] sm:$0xff] %v521
  %750 = vst [vmem:[%s4 + $0x50] sm:$0xff] %v526
  %751 = vst [vmem:[%s4 + $0x58] sm:$0xff] %v529
  %752 = vst [vmem:[%s4 + $0x60] sm:$0xff] %v534
  %753 = vst [vmem:[%s4 + $0x68] sm:$0xff] %v537
  %754 = vst [vmem:[%s4 + $0x70] sm:$0xff] %v542
  %755 = vst [vmem:[%s4 + $0x78] sm:$0xff] %v545
  %756 = vst [vmem:[%s4 + $0x80] sm:$0xff] %v550
  %757 = vst [vmem:[%s4 + $0x88] sm:$0xff] %v553
  %758 = vst [vmem:[%s4 + $0x90] sm:$0xff] %v558
  %759 = vst [vmem:[%s4 + $0x98] sm:$0xff] %v561
  %760 = vst [vmem:[%s4 + $0xa0] sm:$0xff] %v566
  %761 = vst [vmem:[%s4 + $0xa8] sm:$0xff] %v569
  %762 = vst [vmem:[%s4 + $0xb0] sm:$0xff] %v574
  %763 = vst [vmem:[%s4 + $0xb8] sm:$0xff] %v577
  %764 = vst [vmem:[%s4 + $0xc0] sm:$0xff] %v582
  %765 = vst [vmem:[%s4 + $0xc8] sm:$0xff] %v585
  %766 = vst [vmem:[%s4 + $0xd0] sm:$0xff] %v590
  %767 = vst [vmem:[%s4 + $0xd8] sm:$0xff] %v593
  %768 = vst [vmem:[%s4 + $0xe0] sm:$0xff] %v598
  %769 = vst [vmem:[%s4 + $0xe8] sm:$0xff] %v601
  %770 = vst [vmem:[%s4 + $0xf0] sm:$0xff] %v606
  %771 = vst [vmem:[%s4 + $0xf8] sm:$0xff] %v609
  %772 = vst [vmem:[%s4 + $0x100] sm:$0xff] %v614
  %773 = vst [vmem:[%s4 + $0x108] sm:$0xff] %v617
  %774 = vst [vmem:[%s4 + $0x110] sm:$0xff] %v622
  %775 = vst [vmem:[%s4 + $0x118] sm:$0xff] %v625
  %776 = vst [vmem:[%s4 + $0x120] sm:$0xff] %v630
  %777 = vst [vmem:[%s4 + $0x128] sm:$0xff] %v633
  %778 = vst [vmem:[%s4 + $0x130] sm:$0xff] %v638
  %779 = vst [vmem:[%s4 + $0x138] sm:$0xff] %v641
  %780 = vst [vmem:[%s4 + $0x140] sm:$0xff] %v646
  %781 = vst [vmem:[%s4 + $0x148] sm:$0xff] %v649
  %782 = vst [vmem:[%s4 + $0x150] sm:$0xff] %v654
  %783 = vst [vmem:[%s4 + $0x158] sm:$0xff] %v657
  %784 = vst [vmem:[%s4 + $0x160] sm:$0xff] %v662
  %785 = vst [vmem:[%s4 + $0x168] sm:$0xff] %v665
  %786 = vst [vmem:[%s4 + $0x170] sm:$0xff] %v670
  %787 = vst [vmem:[%s4 + $0x178] sm:$0xff] %v673
  %788 = vst [vmem:[%s4 + $0x180] sm:$0xff] %v678
  %789 = vst [vmem:[%s4 + $0x188] sm:$0xff] %v681
  %790 = vst [vmem:[%s4 + $0x190] sm:$0xff] %v686
  %791 = vst [vmem:[%s4 + $0x198] sm:$0xff] %v689
  %792 = vst [vmem:[%s4 + $0x1a0] sm:$0xff] %v694
  %793 = vst [vmem:[%s4 + $0x1a8] sm:$0xff] %v697
  %794 = vst [vmem:[%s4 + $0x1b0] sm:$0xff] %v702
  %795 = vst [vmem:[%s4 + $0x1b8] sm:$0xff] %v705
  %796 = vst [vmem:[%s4 + $0x1c0] sm:$0xff] %v710
  %797 = vst [vmem:[%s4 + $0x1c8] sm:$0xff] %v713
  %798 = vst [vmem:[%s4 + $0x1d0] sm:$0xff] %v718
  %799 = vst [vmem:[%s4 + $0x1d8] sm:$0xff] %v721
  %800 = vst [vmem:[%s4 + $0x1e0] sm:$0xff] %v726
  %801 = vst [vmem:[%s4 + $0x1e8] sm:$0xff] %v729
  %802 = vst [vmem:[%s4 + $0x1f0] sm:$0xff] %v734
  %803 = vst [vmem:[%s4 + $0x1f8] sm:$0xff] %v737
  %v804 = vadd.f32 %v486, %v489
  %v805 = vadd.f32 %v804, %v494
  %v806 = vadd.f32 %v805, %v497
  %v807 = vadd.f32 %v806, %v502
  %v808 = vadd.f32 %v807, %v505
  %v809 = vadd.f32 %v808, %v510
  %v810 = vadd.f32 %v809, %v513
  %v811 = vadd.f32 %v810, %v518
  %v812 = vadd.f32 %v811, %v521
  %v813 = vadd.f32 %v812, %v526
  %v814 = vadd.f32 %v813, %v529
  %v815 = vadd.f32 %v814, %v534
  %v816 = vadd.f32 %v815, %v537
  %v817 = vadd.f32 %v816, %v542
  %v818 = vadd.f32 %v817, %v545
  %v819 = vadd.f32 %v818, %v550
  %v820 = vadd.f32 %v819, %v553
  %v821 = vadd.f32 %v820, %v558
  %v822 = vadd.f32 %v821, %v561
  %v823 = vadd.f32 %v822, %v566
  %v824 = vadd.f32 %v823, %v569
  %v825 = vadd.f32 %v824, %v574
  %v826 = vadd.f32 %v825, %v577
  %v827 = vadd.f32 %v826, %v582
  %v828 = vadd.f32 %v827, %v585
  %v829 = vadd.f32 %v828, %v590
  %v830 = vadd.f32 %v829, %v593
  %v831 = vadd.f32 %v830, %v598
  %v832 = vadd.f32 %v831, %v601
  %v833 = vadd.f32 %v832, %v606
  %v834 = vadd.f32 %v833, %v609
  %v835 = vadd.f32 %v834, %v614
  %v836 = vadd.f32 %v835, %v617
  %v837 = vadd.f32 %v836, %v622
  %v838 = vadd.f32 %v837, %v625
  %v839 = vadd.f32 %v838, %v630
  %v840 = vadd.f32 %v839, %v633
  %v841 = vadd.f32 %v840, %v638
  %v842 = vadd.f32 %v841, %v641
  %v843 = vadd.f32 %v842, %v646
  %v844 = vadd.f32 %v843, %v649
  %v845 = vadd.f32 %v844, %v654
  %v846 = vadd.f32 %v845, %v657
  %v847 = vadd.f32 %v846, %v662
  %v848 = vadd.f32 %v847, %v665
  %v849 = vadd.f32 %v848, %v670
  %v850 = vadd.f32 %v849, %v673
  %v851 = vadd.f32 %v850, %v678
  %v852 = vadd.f32 %v851, %v681
  %v853 = vadd.f32 %v852, %v686
  %v854 = vadd.f32 %v853, %v689
  %v855 = vadd.f32 %v854, %v694
  %v856 = vadd.f32 %v855, %v697
  %v857 = vadd.f32 %v856, %v702
  %v858 = vadd.f32 %v857, %v705
  %v859 = vadd.f32 %v858, %v710
  %v860 = vadd.f32 %v859, %v713
  %v861 = vadd.f32 %v860, %v718
  %v862 = vadd.f32 %v861, %v721
  %v863 = vadd.f32 %v862, %v726
  %v864 = vadd.f32 %v863, %v729
  %v865 = vadd.f32 %v864, %v734
  %v866 = vadd.f32 %v865, %v737
  %v867 = vrot.slane %v866, 4
  %v868 = vadd.f32 %v866, %v867
  %v869 = vrot.slane %v868, 2
  %v870 = vadd.f32 %v868, %v869
  %v871 = vrot.slane %v870, 1
  %v872 = vadd.f32 %v870, %v871
  %v873 = vmul.f32 %v486, %v486
  %v874 = vmul.f32 %v489, %v489
  %v875 = vmul.f32 %v494, %v494
  %v876 = vmul.f32 %v497, %v497
  %v877 = vmul.f32 %v502, %v502
  %v878 = vmul.f32 %v505, %v505
  %v879 = vmul.f32 %v510, %v510
  %v880 = vmul.f32 %v513, %v513
  %v881 = vmul.f32 %v518, %v518
  %v882 = vmul.f32 %v521, %v521
  %v883 = vmul.f32 %v526, %v526
  %v884 = vmul.f32 %v529, %v529
  %v885 = vmul.f32 %v534, %v534
  %v886 = vmul.f32 %v537, %v537
  %v887 = vmul.f32 %v542, %v542
  %v888 = vmul.f32 %v545, %v545
  %v889 = vmul.f32 %v550, %v550
  %v890 = vmul.f32 %v553, %v553
  %v891 = vmul.f32 %v558, %v558
  %v892 = vmul.f32 %v561, %v561
  %v893 = vmul.f32 %v566, %v566
  %v894 = vmul.f32 %v569, %v569
  %v895 = vmul.f32 %v574, %v574
  %v896 = vmul.f32 %v577, %v577
  %v897 = vmul.f32 %v582, %v582
  %v898 = vmul.f32 %v585, %v585
  %v899 = vmul.f32 %v590, %v590
  %v900 = vmul.f32 %v593, %v593
  %v901 = vmul.f32 %v598, %v598
  %v902 = vmul.f32 %v601, %v601
  %v903 = vmul.f32 %v606, %v606
  %v904 = vmul.f32 %v609, %v609
  %v905 = vmul.f32 %v614, %v614
  %v906 = vmul.f32 %v617, %v617
  %v907 = vmul.f32 %v622, %v622
  %v908 = vmul.f32 %v625, %v625
  %v909 = vmul.f32 %v630, %v630
  %v910 = vmul.f32 %v633, %v633
  %v911 = vmul.f32 %v638, %v638
  %v912 = vmul.f32 %v641, %v641
  %v913 = vmul.f32 %v646, %v646
  %v914 = vmul.f32 %v649, %v649
  %v915 = vmul.f32 %v654, %v654
  %v916 = vmul.f32 %v657, %v657
  %v917 = vmul.f32 %v662, %v662
  %v918 = vmul.f32 %v665, %v665
  %v919 = vmul.f32 %v670, %v670
  %v920 = vmul.f32 %v673, %v673
  %v921 = vmul.f32 %v678, %v678
  %v922 = vmul.f32 %v681, %v681
  %v923 = vmul.f32 %v686, %v686
  %v924 = vmul.f32 %v689, %v689
  %v925 = vmul.f32 %v694, %v694
  %v926 = vmul.f32 %v697, %v697
  %v927 = vmul.f32 %v702, %v702
  %v928 = vmul.f32 %v705, %v705
  %v929 = vmul.f32 %v710, %v710
  %v930 = vmul.f32 %v713, %v713
  %v931 = vmul.f32 %v718, %v718
  %v932 = vmul.f32 %v721, %v721
  %v933 = vmul.f32 %v726, %v726
  %v934 = vmul.f32 %v729, %v729
  %v935 = vmul.f32 %v734, %v734
  %v936 = vmul.f32 %v737, %v737
  %v937 = vadd.f32 %v873, %v874
  %v938 = vadd.f32 %v937, %v875
  %v939 = vadd.f32 %v938, %v876
  %v940 = vadd.f32 %v939, %v877
  %v941 = vadd.f32 %v940, %v878
  %v942 = vadd.f32 %v941, %v879
  %v943 = vadd.f32 %v942, %v880
  %v944 = vadd.f32 %v943, %v881
  %v945 = vadd.f32 %v944, %v882
  %v946 = vadd.f32 %v945, %v883
  %v947 = vadd.f32 %v946, %v884
  %v948 = vadd.f32 %v947, %v885
  %v949 = vadd.f32 %v948, %v886
  %v950 = vadd.f32 %v949, %v887
  %v951 = vadd.f32 %v950, %v888
  %v952 = vadd.f32 %v951, %v889
  %v953 = vadd.f32 %v952, %v890
  %v954 = vadd.f32 %v953, %v891
  %v955 = vadd.f32 %v954, %v892
  %v956 = vadd.f32 %v955, %v893
  %v957 = vadd.f32 %v956, %v894
  %v958 = vadd.f32 %v957, %v895
  %v959 = vadd.f32 %v958, %v896
  %v960 = vadd.f32 %v959, %v897
  %v961 = vadd.f32 %v960, %v898
  %v962 = vadd.f32 %v961, %v899
  %v963 = vadd.f32 %v962, %v900
  %v964 = vadd.f32 %v963, %v901
  %v965 = vadd.f32 %v964, %v902
  %v966 = vadd.f32 %v965, %v903
  %v967 = vadd.f32 %v966, %v904
  %v968 = vadd.f32 %v967, %v905
  %v969 = vadd.f32 %v968, %v906
  %v970 = vadd.f32 %v969, %v907
  %v971 = vadd.f32 %v970, %v908
  %v972 = vadd.f32 %v971, %v909
  %v973 = vadd.f32 %v972, %v910
  %v974 = vadd.f32 %v973, %v911
  %v975 = vadd.f32 %v974, %v912
  %v976 = vadd.f32 %v975, %v913
  %v977 = vadd.f32 %v976, %v914
  %v978 = vadd.f32 %v977, %v915
  %v979 = vadd.f32 %v978, %v916
  %v980 = vadd.f32 %v979, %v917
  %v981 = vadd.f32 %v980, %v918
  %v982 = vadd.f32 %v981, %v919
  %v983 = vadd.f32 %v982, %v920
  %v984 = vadd.f32 %v983, %v921
  %v985 = vadd.f32 %v984, %v922
  %v986 = vadd.f32 %v985, %v923
  %v987 = vadd.f32 %v986, %v924
  %v988 = vadd.f32 %v987, %v925
  %v989 = vadd.f32 %v988, %v926
  %v990 = vadd.f32 %v989, %v927
  %v991 = vadd.f32 %v990, %v928
  %v992 = vadd.f32 %v991, %v929
  %v993 = vadd.f32 %v992, %v930
  %v994 = vadd.f32 %v993, %v931
  %v995 = vadd.f32 %v994, %v932
  %v996 = vadd.f32 %v995, %v933
  %v997 = vadd.f32 %v996, %v934
  %v998 = vadd.f32 %v997, %v935
  %v999 = vadd.f32 %v998, %v936
  %v1000 = vrot.slane %v999, 4
  %v1001 = vadd.f32 %v999, %v1000
  %v1002 = vrot.slane %v1001, 2
  %v1003 = vadd.f32 %v1001, %v1002
  %v1004 = vrot.slane %v1003, 1
  %v1005 = vadd.f32 %v1003, %v1004
  %1006 = vst [vmem:[%s5] sm:$0x1] %v872
  %1007 = vst [vmem:[%s6] sm:$0x1] %v1005
  // Predicated region
  $region18: #{bottleneck_forward.6} parent=0 // pred_check
    _
  $region19: #{bottleneck_forward.6} parent=0 // pred_check_branch
    %1009 = sbr.rel (0) target = $region21
  $region20: #{bottleneck_forward.6} parent=0 // pred_region
    _
  $region21: #{bottleneck_forward.6} parent=0 // pred_fallthru
    _
  // Predicated region
  $region22: #{bottleneck_forward.6} parent=0 // pred_check
    _
  $region23: #{bottleneck_forward.6} parent=0 // pred_check_branch
    %1011 = sbr.rel (0) target = $region25
  $region24: #{bottleneck_forward.6} parent=0 // pred_region
    _
  $region25: #{bottleneck_forward.6} parent=0 // pred_fallthru
    _
  // Predicated region
  $region26: #{bottleneck_forward.6} parent=0 // pred_check
    _
  $region27: #{bottleneck_forward.6} parent=0 // pred_check_branch
    %1013 = sbr.rel (0) target = $region29
  $region28: #{bottleneck_forward.6} parent=0 // pred_region
    _
  $region29: #{bottleneck_forward.6} parent=0 // pred_fallthru
    _
  // Predicated region
  $region30: #{bottleneck_forward.6} parent=0 // pred_check
    _
  $region31: #{bottleneck_forward.6} parent=0 // pred_check_branch
    %1015 = sbr.rel (0) target = $region33
  $region32: #{bottleneck_forward.6} parent=0 // pred_region
    _
  $region33: #{bottleneck_forward.6} parent=0 // pred_fallthru
    _
  // Predicated region
  $region34: #{bottleneck_forward.6} parent=0 // pred_check
    _
  $region35: #{bottleneck_forward.6} parent=0 // pred_check_branch
    %1017 = sbr.rel (0) target = $region37
  $region36: #{bottleneck_forward.6} parent=0 // pred_region
    _
  $region37: #{bottleneck_forward.6} parent=0 // pred_fallthru
    _
  // Predicated region
  $region38: #{bottleneck_forward.6} parent=0 // pred_check
    _
  $region39: #{bottleneck_forward.6} parent=0 // pred_check_branch
    %1019 = sbr.rel (0) target = $region41
  $region40: #{bottleneck_forward.6} parent=0 // pred_region
    _
  $region41: #{bottleneck_forward.6} parent=0 // pred_fallthru
    _

// kernel: bottleneck_forward.4
$region0: #{bottleneck_forward.4}
  #allocation0 [shape = 'u32[]', space=smem, size = 0x4, offset = 0x4, fixed_abs, tag = 'smem constant byte address 0x4 - core index']
  #allocation1 [shape = 'u32[144,128]{1,0:T(1,128)}', space=vmem, size = 0x12000, scoped, tag = 'internal scratch']
  %s0 = inlined_call_operand.vmem [shape: bf16[512,128], index: 0, kind: input, shape index: {}]
  %s1 = inlined_call_operand.vmem [shape: bf16[128,128], index: 1, kind: input, shape index: {}]
  %s2 = inlined_call_operand.vmem [shape: bf16[128,128], index: 2, kind: input, shape index: {}]
  %s3 = inlined_call_operand.vmem [shape: bf16[512,128], index: 3, kind: output, shape index: {0}]
  %s4 = inlined_call_operand.vmem [shape: f32[512,128], index: 4, kind: output, shape index: {1}]
  %s5 = inlined_call_operand.vmem [shape: f32[1,1,128], index: 5, kind: output, shape index: {2}]
  %s6 = inlined_call_operand.vmem [shape: f32[1,1,128], index: 6, kind: output, shape index: {3}]
  %s7 = inlined_call_operand.vmem [shape: f32[1,1,128], index: 7, kind: output, shape index: {4}]
  %s8 = inlined_call_operand.vmem [shape: f32[1,1,128], index: 8, kind: output, shape index: {5}]
  %9 = xla_tuple %s3, %s4, %s5, %s6, %s7, %s8
  %s10 = sld [smem:[#allocation0]]
  $region62: #{bottleneck_forward.4} parent=0
    _
  %s12 = ssub.s32 1, %s10
  %s13 = scalar_select 0, %s12, %s10
  // Predicated region
  $region2: #{bottleneck_forward.4} parent=0 // pred_check
    _
  $region3: #{bottleneck_forward.4} parent=0 // pred_check_branch
    %15 = sbr.rel (0) target = $region5
  $region4: #{bottleneck_forward.4} parent=0 // pred_region
    _
  $region5: #{bottleneck_forward.4} parent=0 // pred_fallthru
    _
  // Predicated region
  $region6: #{bottleneck_forward.4} parent=0 // pred_check
    _
  $region7: #{bottleneck_forward.4} parent=0 // pred_check_branch
    %17 = sbr.rel (0) target = $region9
  $region8: #{bottleneck_forward.4} parent=0 // pred_region
    _
  $region9: #{bottleneck_forward.4} parent=0 // pred_fallthru
    _
  // Predicated region
  $region10: #{bottleneck_forward.4} parent=0 // pred_check
    _
  $region11: #{bottleneck_forward.4} parent=0 // pred_check_branch
    %19 = sbr.rel (0) target = $region13
  $region12: #{bottleneck_forward.4} parent=0 // pred_region
    _
  $region13: #{bottleneck_forward.4} parent=0 // pred_fallthru
    _
  %v21 = vld [vmem:[%s0] sm:$0xf]
  %v22 = vld [vmem:[%s0 + $0x4] sm:$0xf]
  %v23 = vld [vmem:[%s0 + $0x8] sm:$0xf]
  %v24 = vld [vmem:[%s0 + $0xc] sm:$0xf]
  %v25 = vld [vmem:[%s0 + $0x10] sm:$0xf]
  %v26 = vld [vmem:[%s0 + $0x14] sm:$0xf]
  %v27 = vld [vmem:[%s0 + $0x18] sm:$0xf]
  %v28 = vld [vmem:[%s0 + $0x1c] sm:$0xf]
  %v29 = vld [vmem:[%s0 + $0x20] sm:$0xf]
  %v30 = vld [vmem:[%s0 + $0x24] sm:$0xf]
  %v31 = vld [vmem:[%s0 + $0x28] sm:$0xf]
  %v32 = vld [vmem:[%s0 + $0x2c] sm:$0xf]
  %v33 = vld [vmem:[%s0 + $0x30] sm:$0xf]
  %v34 = vld [vmem:[%s0 + $0x34] sm:$0xf]
  %v35 = vld [vmem:[%s0 + $0x38] sm:$0xf]
  %v36 = vld [vmem:[%s0 + $0x3c] sm:$0xf]
  %v37 = vld [vmem:[%s0 + $0x40] sm:$0xf]
  %v38 = vld [vmem:[%s0 + $0x44] sm:$0xf]
  %v39 = vld [vmem:[%s0 + $0x48] sm:$0xf]
  %v40 = vld [vmem:[%s0 + $0x4c] sm:$0xf]
  %v41 = vld [vmem:[%s0 + $0x50] sm:$0xf]
  %v42 = vld [vmem:[%s0 + $0x54] sm:$0xf]
  %v43 = vld [vmem:[%s0 + $0x58] sm:$0xf]
  %v44 = vld [vmem:[%s0 + $0x5c] sm:$0xf]
  %v45 = vld [vmem:[%s0 + $0x60] sm:$0xf]
  %v46 = vld [vmem:[%s0 + $0x64] sm:$0xf]
  %v47 = vld [vmem:[%s0 + $0x68] sm:$0xf]
  %v48 = vld [vmem:[%s0 + $0x6c] sm:$0xf]
  %v49 = vld [vmem:[%s0 + $0x70] sm:$0xf]
  %v50 = vld [vmem:[%s0 + $0x74] sm:$0xf]
  %v51 = vld [vmem:[%s0 + $0x78] sm:$0xf]
  %v52 = vld [vmem:[%s0 + $0x7c] sm:$0xf]
  %v53 = vld [vmem:[%s0 + $0x80] sm:$0xf]
  %v54 = vld [vmem:[%s0 + $0x84] sm:$0xf]
  %v55 = vld [vmem:[%s0 + $0x88] sm:$0xf]
  %v56 = vld [vmem:[%s0 + $0x8c] sm:$0xf]
  %v57 = vld [vmem:[%s0 + $0x90] sm:$0xf]
  %v58 = vld [vmem:[%s0 + $0x94] sm:$0xf]
  %v59 = vld [vmem:[%s0 + $0x98] sm:$0xf]
  %v60 = vld [vmem:[%s0 + $0x9c] sm:$0xf]
  %v61 = vld [vmem:[%s0 + $0xa0] sm:$0xf]
  %v62 = vld [vmem:[%s0 + $0xa4] sm:$0xf]
  %v63 = vld [vmem:[%s0 + $0xa8] sm:$0xf]
  %v64 = vld [vmem:[%s0 + $0xac] sm:$0xf]
  %v65 = vld [vmem:[%s0 + $0xb0] sm:$0xf]
  %v66 = vld [vmem:[%s0 + $0xb4] sm:$0xf]
  %v67 = vld [vmem:[%s0 + $0xb8] sm:$0xf]
  %v68 = vld [vmem:[%s0 + $0xbc] sm:$0xf]
  %v69 = vld [vmem:[%s0 + $0xc0] sm:$0xf]
  %v70 = vld [vmem:[%s0 + $0xc4] sm:$0xf]
  %v71 = vld [vmem:[%s0 + $0xc8] sm:$0xf]
  %v72 = vld [vmem:[%s0 + $0xcc] sm:$0xf]
  %v73 = vld [vmem:[%s0 + $0xd0] sm:$0xf]
  %v74 = vld [vmem:[%s0 + $0xd4] sm:$0xf]
  %v75 = vld [vmem:[%s0 + $0xd8] sm:$0xf]
  %v76 = vld [vmem:[%s0 + $0xdc] sm:$0xf]
  %v77 = vld [vmem:[%s0 + $0xe0] sm:$0xf]
  %v78 = vld [vmem:[%s0 + $0xe4] sm:$0xf]
  %v79 = vld [vmem:[%s0 + $0xe8] sm:$0xf]
  %v80 = vld [vmem:[%s0 + $0xec] sm:$0xf]
  %v81 = vld [vmem:[%s0 + $0xf0] sm:$0xf]
  %v82 = vld [vmem:[%s0 + $0xf4] sm:$0xf]
  %v83 = vld [vmem:[%s0 + $0xf8] sm:$0xf]
  %v84 = vld [vmem:[%s0 + $0xfc] sm:$0xf]
  %v85 = vld [vmem:[%s1] sm:$0xf]
  %v86 = vld [vmem:[%s1 + $0x4] sm:$0xf]
  %v87 = vld [vmem:[%s1 + $0x8] sm:$0xf]
  %v88 = vld [vmem:[%s1 + $0xc] sm:$0xf]
  %v89 = vld [vmem:[%s1 + $0x10] sm:$0xf]
  %v90 = vld [vmem:[%s1 + $0x14] sm:$0xf]
  %v91 = vld [vmem:[%s1 + $0x18] sm:$0xf]
  %v92 = vld [vmem:[%s1 + $0x1c] sm:$0xf]
  %v93 = vld [vmem:[%s1 + $0x20] sm:$0xf]
  %v94 = vld [vmem:[%s1 + $0x24] sm:$0xf]
  %v95 = vld [vmem:[%s1 + $0x28] sm:$0xf]
  %v96 = vld [vmem:[%s1 + $0x2c] sm:$0xf]
  %v97 = vld [vmem:[%s1 + $0x30] sm:$0xf]
  %v98 = vld [vmem:[%s1 + $0x34] sm:$0xf]
  %v99 = vld [vmem:[%s1 + $0x38] sm:$0xf]
  %v100 = vld [vmem:[%s1 + $0x3c] sm:$0xf]
  %v165 = vunpack.c.l.b16 %v21
  %v166 = vunpack.c.l.b16 %v22
  %v167 = vunpack.c.l.b16 %v23
  %v168 = vunpack.c.l.b16 %v24
  %v169 = vunpack.c.l.b16 %v25
  %v170 = vunpack.c.l.b16 %v26
  %v171 = vunpack.c.l.b16 %v27
  %v172 = vunpack.c.l.b16 %v28
  %v173 = vunpack.c.l.b16 %v29
  %v174 = vunpack.c.l.b16 %v30
  %v175 = vunpack.c.l.b16 %v31
  %v176 = vunpack.c.l.b16 %v32
  %v177 = vunpack.c.l.b16 %v33
  %v178 = vunpack.c.l.b16 %v34
  %v179 = vunpack.c.l.b16 %v35
  %v180 = vunpack.c.l.b16 %v36
  %v181 = vunpack.c.l.b16 %v37
  %v182 = vunpack.c.l.b16 %v38
  %v183 = vunpack.c.l.b16 %v39
  %v184 = vunpack.c.l.b16 %v40
  %v185 = vunpack.c.l.b16 %v41
  %v186 = vunpack.c.l.b16 %v42
  %v187 = vunpack.c.l.b16 %v43
  %v188 = vunpack.c.l.b16 %v44
  %v189 = vunpack.c.l.b16 %v45
  %v190 = vunpack.c.l.b16 %v46
  %v191 = vunpack.c.l.b16 %v47
  %v192 = vunpack.c.l.b16 %v48
  %v193 = vunpack.c.l.b16 %v49
  %v194 = vunpack.c.l.b16 %v50
  %v195 = vunpack.c.l.b16 %v51
  %v196 = vunpack.c.l.b16 %v52
  %v197 = vunpack.c.l.b16 %v53
  %v198 = vunpack.c.l.b16 %v54
  %v199 = vunpack.c.l.b16 %v55
  %v200 = vunpack.c.l.b16 %v56
  %v201 = vunpack.c.l.b16 %v57
  %v202 = vunpack.c.l.b16 %v58
  %v203 = vunpack.c.l.b16 %v59
  %v204 = vunpack.c.l.b16 %v60
  %v205 = vunpack.c.l.b16 %v61
  %v206 = vunpack.c.l.b16 %v62
  %v207 = vunpack.c.l.b16 %v63
  %v208 = vunpack.c.l.b16 %v64
  %v209 = vunpack.c.l.b16 %v65
  %v210 = vunpack.c.l.b16 %v66
  %v211 = vunpack.c.l.b16 %v67
  %v212 = vunpack.c.l.b16 %v68
  %v213 = vunpack.c.l.b16 %v69
  %v214 = vunpack.c.l.b16 %v70
  %v215 = vunpack.c.l.b16 %v71
  %v216 = vunpack.c.l.b16 %v72
  %v217 = vunpack.c.l.b16 %v73
  %v218 = vunpack.c.l.b16 %v74
  %v219 = vunpack.c.l.b16 %v75
  %v220 = vunpack.c.l.b16 %v76
  %v221 = vunpack.c.l.b16 %v77
  %v222 = vunpack.c.l.b16 %v78
  %v223 = vunpack.c.l.b16 %v79
  %v224 = vunpack.c.l.b16 %v80
  %v225 = vunpack.c.l.b16 %v81
  %v226 = vunpack.c.l.b16 %v82
  %v227 = vunpack.c.l.b16 %v83
  %v228 = vunpack.c.l.b16 %v84
  %v229 = vpack.c.b16 %v166, %v165
  %v230 = vpack.c.b16 %v168, %v167
  %v231 = vpack.c.b16 %v170, %v169
  %v232 = vpack.c.b16 %v172, %v171
  %v233 = vpack.c.b16 %v174, %v173
  %v234 = vpack.c.b16 %v176, %v175
  %v235 = vpack.c.b16 %v178, %v177
  %v236 = vpack.c.b16 %v180, %v179
  %v237 = vpack.c.b16 %v182, %v181
  %v238 = vpack.c.b16 %v184, %v183
  %v239 = vpack.c.b16 %v186, %v185
  %v240 = vpack.c.b16 %v188, %v187
  %v241 = vpack.c.b16 %v190, %v189
  %v242 = vpack.c.b16 %v192, %v191
  %v243 = vpack.c.b16 %v194, %v193
  %v244 = vpack.c.b16 %v196, %v195
  %v245 = vpack.c.b16 %v198, %v197
  %v246 = vpack.c.b16 %v200, %v199
  %v247 = vpack.c.b16 %v202, %v201
  %v248 = vpack.c.b16 %v204, %v203
  %v249 = vpack.c.b16 %v206, %v205
  %v250 = vpack.c.b16 %v208, %v207
  %v251 = vpack.c.b16 %v210, %v209
  %v252 = vpack.c.b16 %v212, %v211
  %v253 = vpack.c.b16 %v214, %v213
  %v254 = vpack.c.b16 %v216, %v215
  %v255 = vpack.c.b16 %v218, %v217
  %v256 = vpack.c.b16 %v220, %v219
  %v257 = vpack.c.b16 %v222, %v221
  %v258 = vpack.c.b16 %v224, %v223
  %v259 = vpack.c.b16 %v226, %v225
  %v260 = vpack.c.b16 %v228, %v227
  %v309 = vunpack.c.l.b16 %v85
  %v310 = vunpack.c.l.b16 %v86
  %v311 = vunpack.c.l.b16 %v87
  %v312 = vunpack.c.l.b16 %v88
  %v313 = vunpack.c.l.b16 %v89
  %v314 = vunpack.c.l.b16 %v90
  %v315 = vunpack.c.l.b16 %v91
  %v316 = vunpack.c.l.b16 %v92
  %v317 = vunpack.c.l.b16 %v93
  %v318 = vunpack.c.l.b16 %v94
  %v319 = vunpack.c.l.b16 %v95
  %v320 = vunpack.c.l.b16 %v96
  %v321 = vunpack.c.l.b16 %v97
  %v322 = vunpack.c.l.b16 %v98
  %v323 = vunpack.c.l.b16 %v99
  %v324 = vunpack.c.l.b16 %v100
  %v325 = vpack.c.b16 %v310, %v309
  %v326 = vpack.c.b16 %v312, %v311
  %v327 = vpack.c.b16 %v314, %v313
  %v328 = vpack.c.b16 %v316, %v315
  %v329 = vpack.c.b16 %v318, %v317
  %v330 = vpack.c.b16 %v320, %v319
  %v331 = vpack.c.b16 %v322, %v321
  %v332 = vpack.c.b16 %v324, %v323
  %341 = vmatprep.subr.bf16.mxu0 0
  %342 = vmatpush1.bf16.msra.mxu0 %v332
  %343 = vmatprep.subr.bf16.mxu0 0
  %344 = vmatpush1.bf16.msra.mxu0 %v331
  %345 = vmatprep.subr.bf16.mxu0 0
  %346 = vmatpush1.bf16.msra.mxu0 %v330
  %347 = vmatprep.subr.bf16.mxu0 0
  %348 = vmatpush1.bf16.msra.mxu0 %v329
  %349 = vmatprep.subr.bf16.mxu0 0
  %350 = vmatpush1.bf16.msra.mxu0 %v328
  %351 = vmatprep.subr.bf16.mxu0 0
  %352 = vmatpush1.bf16.msra.mxu0 %v327
  %353 = vmatprep.subr.bf16.mxu0 0
  %354 = vmatpush1.bf16.msra.mxu0 %v326
  %355 = vmatprep.subr.bf16.mxu0 0
  %356 = vmatpush1.bf16.msra.mxu0 %v325
  %357 = vmatprep.subr.bf16.mxu0 0
  %358 = vmatpush2.bf16.msra.mxu0 0
  %359 = vmatprep.subr.bf16.mxu0 0
  %360 = vmatpush2.bf16.msra.mxu0 0
  %361 = vmatprep.subr.bf16.mxu0 0
  %362 = vmatpush2.bf16.msra.mxu0 0
  %363 = vmatprep.subr.bf16.mxu0 0
  %364 = vmatpush2.bf16.msra.mxu0 0
  %365 = vmatprep.subr.bf16.mxu0 0
  %366 = vmatpush2.bf16.msra.mxu0 0
  %367 = vmatprep.subr.bf16.mxu0 0
  %368 = vmatpush2.bf16.msra.mxu0 0
  %369 = vmatprep.subr.bf16.mxu0 0
  %370 = vmatpush2.bf16.msra.mxu0 0
  %371 = vmatprep.subr.bf16.mxu0 0
  %372 = vmatpush2.bf16.msra.mxu0 0
  %373 = vmatprep.mubr.bf16.mxu0 0
  %374 = vmatmul.mubr.bf16.gmra.mxu0 %v229
  %v375 = vpop.f32.mrf.mxu0
  %v376 = vadd.f32 0.0, %v375
  %v377 = vpop.f32.mrf.mxu0
  %v378 = vpop.f32.mrf.mxu0
  %v379 = vadd.f32 0.0, %v378
  %v380 = vpop.f32.mrf.mxu0
  %381 = vmatprep.mubr.bf16.mxu0 0
  %382 = vmatmul.mubr.bf16.gmra.mxu0 %v230
  %v383 = vpop.f32.mrf.mxu0
  %v384 = vadd.f32 0.0, %v383
  %v385 = vpop.f32.mrf.mxu0
  %v386 = vpop.f32.mrf.mxu0
  %v387 = vadd.f32 0.0, %v386
  %v388 = vpop.f32.mrf.mxu0
  %389 = vmatprep.mubr.bf16.mxu0 0
  %390 = vmatmul.mubr.bf16.gmra.mxu0 %v231
  %v391 = vpop.f32.mrf.mxu0
  %v392 = vadd.f32 0.0, %v391
  %v393 = vpop.f32.mrf.mxu0
  %v394 = vpop.f32.mrf.mxu0
  %v395 = vadd.f32 0.0, %v394
  %v396 = vpop.f32.mrf.mxu0
  %397 = vmatprep.mubr.bf16.mxu0 0
  %398 = vmatmul.mubr.bf16.gmra.mxu0 %v232
  %v399 = vpop.f32.mrf.mxu0
  %v400 = vadd.f32 0.0, %v399
  %v401 = vpop.f32.mrf.mxu0
  %v402 = vpop.f32.mrf.mxu0
  %v403 = vadd.f32 0.0, %v402
  %v404 = vpop.f32.mrf.mxu0
  %405 = vmatprep.mubr.bf16.mxu0 0
  %406 = vmatmul.mubr.bf16.gmra.mxu0 %v233
  %v407 = vpop.f32.mrf.mxu0
  %v408 = vadd.f32 0.0, %v407
  %v409 = vpop.f32.mrf.mxu0
  %v410 = vpop.f32.mrf.mxu0
  %v411 = vadd.f32 0.0, %v410
  %v412 = vpop.f32.mrf.mxu0
  %413 = vmatprep.mubr.bf16.mxu0 0
  %414 = vmatmul.mubr.bf16.gmra.mxu0 %v234
  %v415 = vpop.f32.mrf.mxu0
  %v416 = vadd.f32 0.0, %v415
  %v417 = vpop.f32.mrf.mxu0
  %v418 = vpop.f32.mrf.mxu0
  %v419 = vadd.f32 0.0, %v418
  %v420 = vpop.f32.mrf.mxu0
  %421 = vmatprep.mubr.bf16.mxu0 0
  %422 = vmatmul.mubr.bf16.gmra.mxu0 %v235
  %v423 = vpop.f32.mrf.mxu0
  %v424 = vadd.f32 0.0, %v423
  %v425 = vpop.f32.mrf.mxu0
  %v426 = vpop.f32.mrf.mxu0
  %v427 = vadd.f32 0.0, %v426
  %v428 = vpop.f32.mrf.mxu0
  %429 = vmatprep.mubr.bf16.mxu0 0
  %430 = vmatmul.mubr.bf16.gmra.mxu0 %v236
  %v431 = vpop.f32.mrf.mxu0
  %v432 = vadd.f32 0.0, %v431
  %v433 = vpop.f32.mrf.mxu0
  %v434 = vpop.f32.mrf.mxu0
  %v435 = vadd.f32 0.0, %v434
  %v436 = vpop.f32.mrf.mxu0
  %437 = vmatprep.mubr.bf16.mxu0 0
  %438 = vmatmul.mubr.bf16.gmra.mxu0 %v237
  %v439 = vpop.f32.mrf.mxu0
  %v440 = vadd.f32 0.0, %v439
  %v441 = vpop.f32.mrf.mxu0
  %v442 = vpop.f32.mrf.mxu0
  %v443 = vadd.f32 0.0, %v442
  %v444 = vpop.f32.mrf.mxu0
  %445 = vmatprep.mubr.bf16.mxu0 0
  %446 = vmatmul.mubr.bf16.gmra.mxu0 %v238
  %v447 = vpop.f32.mrf.mxu0
  %v448 = vadd.f32 0.0, %v447
  %v449 = vpop.f32.mrf.mxu0
  %v450 = vpop.f32.mrf.mxu0
  %v451 = vadd.f32 0.0, %v450
  %v452 = vpop.f32.mrf.mxu0
  %453 = vmatprep.mubr.bf16.mxu0 0
  %454 = vmatmul.mubr.bf16.gmra.mxu0 %v239
  %v455 = vpop.f32.mrf.mxu0
  %v456 = vadd.f32 0.0, %v455
  %v457 = vpop.f32.mrf.mxu0
  %v458 = vpop.f32.mrf.mxu0
  %v459 = vadd.f32 0.0, %v458
  %v460 = vpop.f32.mrf.mxu0
  %461 = vmatprep.mubr.bf16.mxu0 0
  %462 = vmatmul.mubr.bf16.gmra.mxu0 %v240
  %v463 = vpop.f32.mrf.mxu0
  %v464 = vadd.f32 0.0, %v463
  %v465 = vpop.f32.mrf.mxu0
  %v466 = vpop.f32.mrf.mxu0
  %v467 = vadd.f32 0.0, %v466
  %v468 = vpop.f32.mrf.mxu0
  %469 = vmatprep.mubr.bf16.mxu0 0
  %470 = vmatmul.mubr.bf16.gmra.mxu0 %v241
  %v471 = vpop.f32.mrf.mxu0
  %v472 = vadd.f32 0.0, %v471
  %v473 = vpop.f32.mrf.mxu0
  %v474 = vpop.f32.mrf.mxu0
  %v475 = vadd.f32 0.0, %v474
  %v476 = vpop.f32.mrf.mxu0
  %477 = vmatprep.mubr.bf16.mxu0 0
  %478 = vmatmul.mubr.bf16.gmra.mxu0 %v242
  %v479 = vpop.f32.mrf.mxu0
  %v480 = vadd.f32 0.0, %v479
  %v481 = vpop.f32.mrf.mxu0
  %v482 = vpop.f32.mrf.mxu0
  %v483 = vadd.f32 0.0, %v482
  %v484 = vpop.f32.mrf.mxu0
  %485 = vmatprep.mubr.bf16.mxu0 0
  %486 = vmatmul.mubr.bf16.gmra.mxu0 %v243
  %v487 = vpop.f32.mrf.mxu0
  %v488 = vadd.f32 0.0, %v487
  %v489 = vpop.f32.mrf.mxu0
  %v490 = vpop.f32.mrf.mxu0
  %v491 = vadd.f32 0.0, %v490
  %v492 = vpop.f32.mrf.mxu0
  %493 = vmatprep.mubr.bf16.mxu0 0
  %494 = vmatmul.mubr.bf16.gmra.mxu0 %v244
  %v495 = vpop.f32.mrf.mxu0
  %v496 = vadd.f32 0.0, %v495
  %v497 = vpop.f32.mrf.mxu0
  %v498 = vpop.f32.mrf.mxu0
  %v499 = vadd.f32 0.0, %v498
  %v500 = vpop.f32.mrf.mxu0
  %501 = vmatprep.mubr.bf16.mxu0 0
  %502 = vmatmul.mubr.bf16.gmra.mxu0 %v245
  %v503 = vpop.f32.mrf.mxu0
  %v504 = vadd.f32 0.0, %v503
  %v505 = vpop.f32.mrf.mxu0
  %v506 = vpop.f32.mrf.mxu0
  %v507 = vadd.f32 0.0, %v506
  %v508 = vpop.f32.mrf.mxu0
  %509 = vmatprep.mubr.bf16.mxu0 0
  %510 = vmatmul.mubr.bf16.gmra.mxu0 %v246
  %v511 = vpop.f32.mrf.mxu0
  %v512 = vadd.f32 0.0, %v511
  %v513 = vpop.f32.mrf.mxu0
  %v514 = vpop.f32.mrf.mxu0
  %v515 = vadd.f32 0.0, %v514
  %v516 = vpop.f32.mrf.mxu0
  %517 = vmatprep.mubr.bf16.mxu0 0
  %518 = vmatmul.mubr.bf16.gmra.mxu0 %v247
  %v519 = vpop.f32.mrf.mxu0
  %v520 = vadd.f32 0.0, %v519
  %v521 = vpop.f32.mrf.mxu0
  %v522 = vpop.f32.mrf.mxu0
  %v523 = vadd.f32 0.0, %v522
  %v524 = vpop.f32.mrf.mxu0
  %525 = vmatprep.mubr.bf16.mxu0 0
  %526 = vmatmul.mubr.bf16.gmra.mxu0 %v248
  %v527 = vpop.f32.mrf.mxu0
  %v528 = vadd.f32 0.0, %v527
  %v529 = vpop.f32.mrf.mxu0
  %v530 = vpop.f32.mrf.mxu0
  %v531 = vadd.f32 0.0, %v530
  %v532 = vpop.f32.mrf.mxu0
  %533 = vmatprep.mubr.bf16.mxu0 0
  %534 = vmatmul.mubr.bf16.gmra.mxu0 %v249
  %v535 = vpop.f32.mrf.mxu0
  %v536 = vadd.f32 0.0, %v535
  %v537 = vpop.f32.mrf.mxu0
  %v538 = vpop.f32.mrf.mxu0
  %v539 = vadd.f32 0.0, %v538
  %v540 = vpop.f32.mrf.mxu0
  %541 = vmatprep.mubr.bf16.mxu0 0
  %542 = vmatmul.mubr.bf16.gmra.mxu0 %v250
  %v543 = vpop.f32.mrf.mxu0
  %v544 = vadd.f32 0.0, %v543
  %v545 = vpop.f32.mrf.mxu0
  %v546 = vpop.f32.mrf.mxu0
  %v547 = vadd.f32 0.0, %v546
  %v548 = vpop.f32.mrf.mxu0
  %549 = vmatprep.mubr.bf16.mxu0 0
  %550 = vmatmul.mubr.bf16.gmra.mxu0 %v251
  %v551 = vpop.f32.mrf.mxu0
  %v552 = vadd.f32 0.0, %v551
  %v553 = vpop.f32.mrf.mxu0
  %v554 = vpop.f32.mrf.mxu0
  %v555 = vadd.f32 0.0, %v554
  %v556 = vpop.f32.mrf.mxu0
  %557 = vmatprep.mubr.bf16.mxu0 0
  %558 = vmatmul.mubr.bf16.gmra.mxu0 %v252
  %v559 = vpop.f32.mrf.mxu0
  %v560 = vadd.f32 0.0, %v559
  %v561 = vpop.f32.mrf.mxu0
  %v562 = vpop.f32.mrf.mxu0
  %v563 = vadd.f32 0.0, %v562
  %v564 = vpop.f32.mrf.mxu0
  %565 = vmatprep.mubr.bf16.mxu0 0
  %566 = vmatmul.mubr.bf16.gmra.mxu0 %v253
  %v567 = vpop.f32.mrf.mxu0
  %v568 = vadd.f32 0.0, %v567
  %v569 = vpop.f32.mrf.mxu0
  %v570 = vpop.f32.mrf.mxu0
  %v571 = vadd.f32 0.0, %v570
  %v572 = vpop.f32.mrf.mxu0
  %573 = vmatprep.mubr.bf16.mxu0 0
  %574 = vmatmul.mubr.bf16.gmra.mxu0 %v254
  %v575 = vpop.f32.mrf.mxu0
  %v576 = vadd.f32 0.0, %v575
  %v577 = vpop.f32.mrf.mxu0
  %v578 = vpop.f32.mrf.mxu0
  %v579 = vadd.f32 0.0, %v578
  %v580 = vpop.f32.mrf.mxu0
  %581 = vmatprep.mubr.bf16.mxu0 0
  %582 = vmatmul.mubr.bf16.gmra.mxu0 %v255
  %v583 = vpop.f32.mrf.mxu0
  %v584 = vadd.f32 0.0, %v583
  %v585 = vpop.f32.mrf.mxu0
  %v586 = vpop.f32.mrf.mxu0
  %v587 = vadd.f32 0.0, %v586
  %v588 = vpop.f32.mrf.mxu0
  %589 = vmatprep.mubr.bf16.mxu0 0
  %590 = vmatmul.mubr.bf16.gmra.mxu0 %v256
  %v591 = vpop.f32.mrf.mxu0
  %v592 = vadd.f32 0.0, %v591
  %v593 = vpop.f32.mrf.mxu0
  %v594 = vpop.f32.mrf.mxu0
  %v595 = vadd.f32 0.0, %v594
  %v596 = vpop.f32.mrf.mxu0
  %597 = vmatprep.mubr.bf16.mxu0 0
  %598 = vmatmul.mubr.bf16.gmra.mxu0 %v257
  %v599 = vpop.f32.mrf.mxu0
  %v600 = vadd.f32 0.0, %v599
  %v601 = vpop.f32.mrf.mxu0
  %v602 = vpop.f32.mrf.mxu0
  %v603 = vadd.f32 0.0, %v602
  %v604 = vpop.f32.mrf.mxu0
  %605 = vmatprep.mubr.bf16.mxu0 0
  %606 = vmatmul.mubr.bf16.gmra.mxu0 %v258
  %v607 = vpop.f32.mrf.mxu0
  %v608 = vadd.f32 0.0, %v607
  %v609 = vpop.f32.mrf.mxu0
  %v610 = vpop.f32.mrf.mxu0
  %v611 = vadd.f32 0.0, %v610
  %v612 = vpop.f32.mrf.mxu0
  %613 = vmatprep.mubr.bf16.mxu0 0
  %614 = vmatmul.mubr.bf16.gmra.mxu0 %v259
  %v615 = vpop.f32.mrf.mxu0
  %v616 = vadd.f32 0.0, %v615
  %v617 = vpop.f32.mrf.mxu0
  %v618 = vpop.f32.mrf.mxu0
  %v619 = vadd.f32 0.0, %v618
  %v620 = vpop.f32.mrf.mxu0
  %621 = vmatprep.mubr.bf16.mxu0 0
  %622 = vmatmul.mubr.bf16.gmra.mxu0 %v260
  %v623 = vpop.f32.mrf.mxu0
  %v624 = vadd.f32 0.0, %v623
  %v625 = vpop.f32.mrf.mxu0
  %v626 = vpop.f32.mrf.mxu0
  %v627 = vadd.f32 0.0, %v626
  %v628 = vpop.f32.mrf.mxu0
  %629 = vdwg.mxu0
  %v630 = vpack.c.bf16 %v379, %v376
  %v631 = vpack.c.bf16 %v387, %v384
  %v632 = vpack.c.bf16 %v395, %v392
  %v633 = vpack.c.bf16 %v403, %v400
  %v634 = vpack.c.bf16 %v411, %v408
  %v635 = vpack.c.bf16 %v419, %v416
  %v636 = vpack.c.bf16 %v427, %v424
  %v637 = vpack.c.bf16 %v435, %v432
  %v638 = vpack.c.bf16 %v443, %v440
  %v639 = vpack.c.bf16 %v451, %v448
  %v640 = vpack.c.bf16 %v459, %v456
  %v641 = vpack.c.bf16 %v467, %v464
  %v642 = vpack.c.bf16 %v475, %v472
  %v643 = vpack.c.bf16 %v483, %v480
  %v644 = vpack.c.bf16 %v491, %v488
  %v645 = vpack.c.bf16 %v499, %v496
  %v646 = vpack.c.bf16 %v507, %v504
  %v647 = vpack.c.bf16 %v515, %v512
  %v648 = vpack.c.bf16 %v523, %v520
  %v649 = vpack.c.bf16 %v531, %v528
  %v650 = vpack.c.bf16 %v539, %v536
  %v651 = vpack.c.bf16 %v547, %v544
  %v652 = vpack.c.bf16 %v555, %v552
  %v653 = vpack.c.bf16 %v563, %v560
  %v654 = vpack.c.bf16 %v571, %v568
  %v655 = vpack.c.bf16 %v579, %v576
  %v656 = vpack.c.bf16 %v587, %v584
  %v657 = vpack.c.bf16 %v595, %v592
  %v658 = vpack.c.bf16 %v603, %v600
  %v659 = vpack.c.bf16 %v611, %v608
  %v660 = vpack.c.bf16 %v619, %v616
  %v661 = vpack.c.bf16 %v627, %v624
  %v694 = vunpack.c.l.b16 %v630
  %v695 = vunpack.c.h.b16 %v630
  %v696 = vunpack.c.l.b16 %v631
  %v697 = vunpack.c.h.b16 %v631
  %v698 = vunpack.c.l.b16 %v632
  %v699 = vunpack.c.h.b16 %v632
  %v700 = vunpack.c.l.b16 %v633
  %v701 = vunpack.c.h.b16 %v633
  %v702 = vunpack.c.l.b16 %v634
  %v703 = vunpack.c.h.b16 %v634
  %v704 = vunpack.c.l.b16 %v635
  %v705 = vunpack.c.h.b16 %v635
  %v706 = vunpack.c.l.b16 %v636
  %v707 = vunpack.c.h.b16 %v636
  %v708 = vunpack.c.l.b16 %v637
  %v709 = vunpack.c.h.b16 %v637
  %v710 = vunpack.c.l.b16 %v638
  %v711 = vunpack.c.h.b16 %v638
  %v712 = vunpack.c.l.b16 %v639
  %v713 = vunpack.c.h.b16 %v639
  %v714 = vunpack.c.l.b16 %v640
  %v715 = vunpack.c.h.b16 %v640
  %v716 = vunpack.c.l.b16 %v641
  %v717 = vunpack.c.h.b16 %v641
  %v718 = vunpack.c.l.b16 %v642
  %v719 = vunpack.c.h.b16 %v642
  %v720 = vunpack.c.l.b16 %v643
  %v721 = vunpack.c.h.b16 %v643
  %v722 = vunpack.c.l.b16 %v644
  %v723 = vunpack.c.h.b16 %v644
  %v724 = vunpack.c.l.b16 %v645
  %v725 = vunpack.c.h.b16 %v645
  %v726 = vunpack.c.l.b16 %v646
  %v727 = vunpack.c.h.b16 %v646
  %v728 = vunpack.c.l.b16 %v647
  %v729 = vunpack.c.h.b16 %v647
  %v730 = vunpack.c.l.b16 %v648
  %v731 = vunpack.c.h.b16 %v648
  %v732 = vunpack.c.l.b16 %v649
  %v733 = vunpack.c.h.b16 %v649
  %v734 = vunpack.c.l.b16 %v650
  %v735 = vunpack.c.h.b16 %v650
  %v736 = vunpack.c.l.b16 %v651
  %v737 = vunpack.c.h.b16 %v651
  %v738 = vunpack.c.l.b16 %v652
  %v739 = vunpack.c.h.b16 %v652
  %v740 = vunpack.c.l.b16 %v653
  %v741 = vunpack.c.h.b16 %v653
  %v742 = vunpack.c.l.b16 %v654
  %v743 = vunpack.c.h.b16 %v654
  %v744 = vunpack.c.l.b16 %v655
  %v745 = vunpack.c.h.b16 %v655
  %v746 = vunpack.c.l.b16 %v656
  %v747 = vunpack.c.h.b16 %v656
  %v748 = vunpack.c.l.b16 %v657
  %v749 = vunpack.c.h.b16 %v657
  %v750 = vunpack.c.l.b16 %v658
  %v751 = vunpack.c.h.b16 %v658
  %v752 = vunpack.c.l.b16 %v659
  %v753 = vunpack.c.h.b16 %v659
  %v754 = vunpack.c.l.b16 %v660
  %v755 = vunpack.c.h.b16 %v660
  %v756 = vunpack.c.l.b16 %v661
  %v757 = vunpack.c.h.b16 %v661
  %v758 = vpack.c.b16 %v694, %v694
  %v759 = vpack.c.b16 %v695, %v695
  %v760 = vpack.c.b16 %v696, %v696
  %v761 = vpack.c.b16 %v697, %v697
  %v762 = vpack.c.b16 %v698, %v698
  %v763 = vpack.c.b16 %v699, %v699
  %v764 = vpack.c.b16 %v700, %v700
  %v765 = vpack.c.b16 %v701, %v701
  %v766 = vpack.c.b16 %v702, %v702
  %v767 = vpack.c.b16 %v703, %v703
  %v768 = vpack.c.b16 %v704, %v704
  %v769 = vpack.c.b16 %v705, %v705
  %v770 = vpack.c.b16 %v706, %v706
  %v771 = vpack.c.b16 %v707, %v707
  %v772 = vpack.c.b16 %v708, %v708
  %v773 = vpack.c.b16 %v709, %v709
  %v774 = vpack.c.b16 %v710, %v710
  %v775 = vpack.c.b16 %v711, %v711
  %v776 = vpack.c.b16 %v712, %v712
  %v777 = vpack.c.b16 %v713, %v713
  %v778 = vpack.c.b16 %v714, %v714
  %v779 = vpack.c.b16 %v715, %v715
  %v780 = vpack.c.b16 %v716, %v716
  %v781 = vpack.c.b16 %v717, %v717
  %v782 = vpack.c.b16 %v718, %v718
  %v783 = vpack.c.b16 %v719, %v719
  %v784 = vpack.c.b16 %v720, %v720
  %v785 = vpack.c.b16 %v721, %v721
  %v786 = vpack.c.b16 %v722, %v722
  %v787 = vpack.c.b16 %v723, %v723
  %v788 = vpack.c.b16 %v724, %v724
  %v789 = vpack.c.b16 %v725, %v725
  %v790 = vpack.c.b16 %v726, %v726
  %v791 = vpack.c.b16 %v727, %v727
  %v792 = vpack.c.b16 %v728, %v728
  %v793 = vpack.c.b16 %v729, %v729
  %v794 = vpack.c.b16 %v730, %v730
  %v795 = vpack.c.b16 %v731, %v731
  %v796 = vpack.c.b16 %v732, %v732
  %v797 = vpack.c.b16 %v733, %v733
  %v798 = vpack.c.b16 %v734, %v734
  %v799 = vpack.c.b16 %v735, %v735
  %v800 = vpack.c.b16 %v736, %v736
  %v801 = vpack.c.b16 %v737, %v737
  %v802 = vpack.c.b16 %v738, %v738
  %v803 = vpack.c.b16 %v739, %v739
  %v804 = vpack.c.b16 %v740, %v740
  %v805 = vpack.c.b16 %v741, %v741
  %v806 = vpack.c.b16 %v742, %v742
  %v807 = vpack.c.b16 %v743, %v743
  %v808 = vpack.c.b16 %v744, %v744
  %v809 = vpack.c.b16 %v745, %v745
  %v810 = vpack.c.b16 %v746, %v746
  %v811 = vpack.c.b16 %v747, %v747
  %v812 = vpack.c.b16 %v748, %v748
  %v813 = vpack.c.b16 %v749, %v749
  %v814 = vpack.c.b16 %v750, %v750
  %v815 = vpack.c.b16 %v751, %v751
  %v816 = vpack.c.b16 %v752, %v752
  %v817 = vpack.c.b16 %v753, %v753
  %v818 = vpack.c.b16 %v754, %v754
  %v819 = vpack.c.b16 %v755, %v755
  %v820 = vpack.c.b16 %v756, %v756
  %v821 = vpack.c.b16 %v757, %v757
  %886 = vst [vmem:[%s3] sm:$0xf] %v758
  %887 = vst [vmem:[%s3 + $0x4] sm:$0xf] %v759
  %888 = vst [vmem:[%s3 + $0x8] sm:$0xf] %v760
  %889 = vst [vmem:[%s3 + $0xc] sm:$0xf] %v761
  %890 = vst [vmem:[%s3 + $0x10] sm:$0xf] %v762
  %891 = vst [vmem:[%s3 + $0x14] sm:$0xf] %v763
  %892 = vst [vmem:[%s3 + $0x18] sm:$0xf] %v764
  %893 = vst [vmem:[%s3 + $0x1c] sm:$0xf] %v765
  %894 = vst [vmem:[%s3 + $0x20] sm:$0xf] %v766
  %895 = vst [vmem:[%s3 + $0x24] sm:$0xf] %v767
  %896 = vst [vmem:[%s3 + $0x28] sm:$0xf] %v768
  %897 = vst [vmem:[%s3 + $0x2c] sm:$0xf] %v769
  %898 = vst [vmem:[%s3 + $0x30] sm:$0xf] %v770
  %899 = vst [vmem:[%s3 + $0x34] sm:$0xf] %v771
  %900 = vst [vmem:[%s3 + $0x38] sm:$0xf] %v772
  %901 = vst [vmem:[%s3 + $0x3c] sm:$0xf] %v773
  %902 = vst [vmem:[%s3 + $0x40] sm:$0xf] %v774
  %903 = vst [vmem:[%s3 + $0x44] sm:$0xf] %v775
  %904 = vst [vmem:[%s3 + $0x48] sm:$0xf] %v776
  %905 = vst [vmem:[%s3 + $0x4c] sm:$0xf] %v777
  %906 = vst [vmem:[%s3 + $0x50] sm:$0xf] %v778
  %907 = vst [vmem:[%s3 + $0x54] sm:$0xf] %v779
  %908 = vst [vmem:[%s3 + $0x58] sm:$0xf] %v780
  %909 = vst [vmem:[%s3 + $0x5c] sm:$0xf] %v781
  %910 = vst [vmem:[%s3 + $0x60] sm:$0xf] %v782
  %911 = vst [vmem:[%s3 + $0x64] sm:$0xf] %v783
  %912 = vst [vmem:[%s3 + $0x68] sm:$0xf] %v784
  %913 = vst [vmem:[%s3 + $0x6c] sm:$0xf] %v785
  %914 = vst [vmem:[%s3 + $0x70] sm:$0xf] %v786
  %915 = vst [vmem:[%s3 + $0x74] sm:$0xf] %v787
  %916 = vst [vmem:[%s3 + $0x78] sm:$0xf] %v788
  %917 = vst [vmem:[%s3 + $0x7c] sm:$0xf] %v789
  %918 = vst [vmem:[%s3 + $0x80] sm:$0xf] %v790
  %919 = vst [vmem:[%s3 + $0x84] sm:$0xf] %v791
  %920 = vst [vmem:[%s3 + $0x88] sm:$0xf] %v792
  %921 = vst [vmem:[%s3 + $0x8c] sm:$0xf] %v793
  %922 = vst [vmem:[%s3 + $0x90] sm:$0xf] %v794
  %923 = vst [vmem:[%s3 + $0x94] sm:$0xf] %v795
  %924 = vst [vmem:[%s3 + $0x98] sm:$0xf] %v796
  %925 = vst [vmem:[%s3 + $0x9c] sm:$0xf] %v797
  %926 = vst [vmem:[%s3 + $0xa0] sm:$0xf] %v798
  %927 = vst [vmem:[%s3 + $0xa4] sm:$0xf] %v799
  %928 = vst [vmem:[%s3 + $0xa8] sm:$0xf] %v800
  %929 = vst [vmem:[%s3 + $0xac] sm:$0xf] %v801
  %930 = vst [vmem:[%s3 + $0xb0] sm:$0xf] %v802
  %931 = vst [vmem:[%s3 + $0xb4] sm:$0xf] %v803
  %932 = vst [vmem:[%s3 + $0xb8] sm:$0xf] %v804
  %933 = vst [vmem:[%s3 + $0xbc] sm:$0xf] %v805
  %934 = vst [vmem:[%s3 + $0xc0] sm:$0xf] %v806
  %935 = vst [vmem:[%s3 + $0xc4] sm:$0xf] %v807
  %936 = vst [vmem:[%s3 + $0xc8] sm:$0xf] %v808
  %937 = vst [vmem:[%s3 + $0xcc] sm:$0xf] %v809
  %938 = vst [vmem:[%s3 + $0xd0] sm:$0xf] %v810
  %939 = vst [vmem:[%s3 + $0xd4] sm:$0xf] %v811
  %940 = vst [vmem:[%s3 + $0xd8] sm:$0xf] %v812
  %941 = vst [vmem:[%s3 + $0xdc] sm:$0xf] %v813
  %942 = vst [vmem:[%s3 + $0xe0] sm:$0xf] %v814
  %943 = vst [vmem:[%s3 + $0xe4] sm:$0xf] %v815
  %944 = vst [vmem:[%s3 + $0xe8] sm:$0xf] %v816
  %945 = vst [vmem:[%s3 + $0xec] sm:$0xf] %v817
  %946 = vst [vmem:[%s3 + $0xf0] sm:$0xf] %v818
  %947 = vst [vmem:[%s3 + $0xf4] sm:$0xf] %v819
  %948 = vst [vmem:[%s3 + $0xf8] sm:$0xf] %v820
  %949 = vst [vmem:[%s3 + $0xfc] sm:$0xf] %v821
  %v950 = vadd.f32 %v376, %v379
  %v951 = vadd.f32 %v950, %v384
  %v952 = vadd.f32 %v951, %v387
  %v953 = vadd.f32 %v952, %v392
  %v954 = vadd.f32 %v953, %v395
  %v955 = vadd.f32 %v954, %v400
  %v956 = vadd.f32 %v955, %v403
  %v957 = vadd.f32 %v956, %v408
  %v958 = vadd.f32 %v957, %v411
  %v959 = vadd.f32 %v958, %v416
  %v960 = vadd.f32 %v959, %v419
  %v961 = vadd.f32 %v960, %v424
  %v962 = vadd.f32 %v961, %v427
  %v963 = vadd.f32 %v962, %v432
  %v964 = vadd.f32 %v963, %v435
  %v965 = vadd.f32 %v964, %v440
  %v966 = vadd.f32 %v965, %v443
  %v967 = vadd.f32 %v966, %v448
  %v968 = vadd.f32 %v967, %v451
  %v969 = vadd.f32 %v968, %v456
  %v970 = vadd.f32 %v969, %v459
  %v971 = vadd.f32 %v970, %v464
  %v972 = vadd.f32 %v971, %v467
  %v973 = vadd.f32 %v972, %v472
  %v974 = vadd.f32 %v973, %v475
  %v975 = vadd.f32 %v974, %v480
  %v976 = vadd.f32 %v975, %v483
  %v977 = vadd.f32 %v976, %v488
  %v978 = vadd.f32 %v977, %v491
  %v979 = vadd.f32 %v978, %v496
  %v980 = vadd.f32 %v979, %v499
  %v981 = vadd.f32 %v980, %v504
  %v982 = vadd.f32 %v981, %v507
  %v983 = vadd.f32 %v982, %v512
  %v984 = vadd.f32 %v983, %v515
  %v985 = vadd.f32 %v984, %v520
  %v986 = vadd.f32 %v985, %v523
  %v987 = vadd.f32 %v986, %v528
  %v988 = vadd.f32 %v987, %v531
  %v989 = vadd.f32 %v988, %v536
  %v990 = vadd.f32 %v989, %v539
  %v991 = vadd.f32 %v990, %v544
  %v992 = vadd.f32 %v991, %v547
  %v993 = vadd.f32 %v992, %v552
  %v994 = vadd.f32 %v993, %v555
  %v995 = vadd.f32 %v994, %v560
  %v996 = vadd.f32 %v995, %v563
  %v997 = vadd.f32 %v996, %v568
  %v998 = vadd.f32 %v997, %v571
  %v999 = vadd.f32 %v998, %v576
  %v1000 = vadd.f32 %v999, %v579
  %v1001 = vadd.f32 %v1000, %v584
  %v1002 = vadd.f32 %v1001, %v587
  %v1003 = vadd.f32 %v1002, %v592
  %v1004 = vadd.f32 %v1003, %v595
  %v1005 = vadd.f32 %v1004, %v600
  %v1006 = vadd.f32 %v1005, %v603
  %v1007 = vadd.f32 %v1006, %v608
  %v1008 = vadd.f32 %v1007, %v611
  %v1009 = vadd.f32 %v1008, %v616
  %v1010 = vadd.f32 %v1009, %v619
  %v1011 = vadd.f32 %v1010, %v624
  %v1012 = vadd.f32 %v1011, %v627
  %v1013 = vrot.slane %v1012, 4
  %v1014 = vadd.f32 %v1012, %v1013
  %v1015 = vrot.slane %v1014, 2
  %v1016 = vadd.f32 %v1014, %v1015
  %v1017 = vrot.slane %v1016, 1
  %v1018 = vadd.f32 %v1016, %v1017
  %v1019 = vmul.f32 %v376, %v376
  %v1020 = vmul.f32 %v379, %v379
  %v1021 = vmul.f32 %v384, %v384
  %v1022 = vmul.f32 %v387, %v387
  %v1023 = vmul.f32 %v392, %v392
  %v1024 = vmul.f32 %v395, %v395
  %v1025 = vmul.f32 %v400, %v400
  %v1026 = vmul.f32 %v403, %v403
  %v1027 = vmul.f32 %v408, %v408
  %v1028 = vmul.f32 %v411, %v411
  %v1029 = vmul.f32 %v416, %v416
  %v1030 = vmul.f32 %v419, %v419
  %v1031 = vmul.f32 %v424, %v424
  %v1032 = vmul.f32 %v427, %v427
  %v1033 = vmul.f32 %v432, %v432
  %v1034 = vmul.f32 %v435, %v435
  %v1035 = vmul.f32 %v440, %v440
  %v1036 = vmul.f32 %v443, %v443
  %v1037 = vmul.f32 %v448, %v448
  %v1038 = vmul.f32 %v451, %v451
  %v1039 = vmul.f32 %v456, %v456
  %v1040 = vmul.f32 %v459, %v459
  %v1041 = vmul.f32 %v464, %v464
  %v1042 = vmul.f32 %v467, %v467
  %v1043 = vmul.f32 %v472, %v472
  %v1044 = vmul.f32 %v475, %v475
  %v1045 = vmul.f32 %v480, %v480
  %v1046 = vmul.f32 %v483, %v483
  %v1047 = vmul.f32 %v488, %v488
  %v1048 = vmul.f32 %v491, %v491
  %v1049 = vmul.f32 %v496, %v496
  %v1050 = vmul.f32 %v499, %v499
  %v1051 = vmul.f32 %v504, %v504
  %v1052 = vmul.f32 %v507, %v507
  %v1053 = vmul.f32 %v512, %v512
  %v1054 = vmul.f32 %v515, %v515
  %v1055 = vmul.f32 %v520, %v520
  %v1056 = vmul.f32 %v523, %v523
  %v1057 = vmul.f32 %v528, %v528
  %v1058 = vmul.f32 %v531, %v531
  %v1059 = vmul.f32 %v536, %v536
  %v1060 = vmul.f32 %v539, %v539
  %v1061 = vmul.f32 %v544, %v544
  %v1062 = vmul.f32 %v547, %v547
  %v1063 = vmul.f32 %v552, %v552
  %v1064 = vmul.f32 %v555, %v555
  %v1065 = vmul.f32 %v560, %v560
  %v1066 = vmul.f32 %v563, %v563
  %v1067 = vmul.f32 %v568, %v568
  %v1068 = vmul.f32 %v571, %v571
  %v1069 = vmul.f32 %v576, %v576
  %v1070 = vmul.f32 %v579, %v579
  %v1071 = vmul.f32 %v584, %v584
  %v1072 = vmul.f32 %v587, %v587
  %v1073 = vmul.f32 %v592, %v592
  %v1074 = vmul.f32 %v595, %v595
  %v1075 = vmul.f32 %v600, %v600
  %v1076 = vmul.f32 %v603, %v603
  %v1077 = vmul.f32 %v608, %v608
  %v1078 = vmul.f32 %v611, %v611
  %v1079 = vmul.f32 %v616, %v616
  %v1080 = vmul.f32 %v619, %v619
  %v1081 = vmul.f32 %v624, %v624
  %v1082 = vmul.f32 %v627, %v627
  %v1083 = vadd.f32 %v1019, %v1020
  %v1084 = vadd.f32 %v1083, %v1021
  %v1085 = vadd.f32 %v1084, %v1022
  %v1086 = vadd.f32 %v1085, %v1023
  %v1087 = vadd.f32 %v1086, %v1024
  %v1088 = vadd.f32 %v1087, %v1025
  %v1089 = vadd.f32 %v1088, %v1026
  %v1090 = vadd.f32 %v1089, %v1027
  %v1091 = vadd.f32 %v1090, %v1028
  %v1092 = vadd.f32 %v1091, %v1029
  %v1093 = vadd.f32 %v1092, %v1030
  %v1094 = vadd.f32 %v1093, %v1031
  %v1095 = vadd.f32 %v1094, %v1032
  %v1096 = vadd.f32 %v1095, %v1033
  %v1097 = vadd.f32 %v1096, %v1034
  %v1098 = vadd.f32 %v1097, %v1035
  %v1099 = vadd.f32 %v1098, %v1036
  %v1100 = vadd.f32 %v1099, %v1037
  %v1101 = vadd.f32 %v1100, %v1038
  %v1102 = vadd.f32 %v1101, %v1039
  %v1103 = vadd.f32 %v1102, %v1040
  %v1104 = vadd.f32 %v1103, %v1041
  %v1105 = vadd.f32 %v1104, %v1042
  %v1106 = vadd.f32 %v1105, %v1043
  %v1107 = vadd.f32 %v1106, %v1044
  %v1108 = vadd.f32 %v1107, %v1045
  %v1109 = vadd.f32 %v1108, %v1046
  %v1110 = vadd.f32 %v1109, %v1047
  %v1111 = vadd.f32 %v1110, %v1048
  %v1112 = vadd.f32 %v1111, %v1049
  %v1113 = vadd.f32 %v1112, %v1050
  %v1114 = vadd.f32 %v1113, %v1051
  %v1115 = vadd.f32 %v1114, %v1052
  %v1116 = vadd.f32 %v1115, %v1053
  %v1117 = vadd.f32 %v1116, %v1054
  %v1118 = vadd.f32 %v1117, %v1055
  %v1119 = vadd.f32 %v1118, %v1056
  %v1120 = vadd.f32 %v1119, %v1057
  %v1121 = vadd.f32 %v1120, %v1058
  %v1122 = vadd.f32 %v1121, %v1059
  %v1123 = vadd.f32 %v1122, %v1060
  %v1124 = vadd.f32 %v1123, %v1061
  %v1125 = vadd.f32 %v1124, %v1062
  %v1126 = vadd.f32 %v1125, %v1063
  %v1127 = vadd.f32 %v1126, %v1064
  %v1128 = vadd.f32 %v1127, %v1065
  %v1129 = vadd.f32 %v1128, %v1066
  %v1130 = vadd.f32 %v1129, %v1067
  %v1131 = vadd.f32 %v1130, %v1068
  %v1132 = vadd.f32 %v1131, %v1069
  %v1133 = vadd.f32 %v1132, %v1070
  %v1134 = vadd.f32 %v1133, %v1071
  %v1135 = vadd.f32 %v1134, %v1072
  %v1136 = vadd.f32 %v1135, %v1073
  %v1137 = vadd.f32 %v1136, %v1074
  %v1138 = vadd.f32 %v1137, %v1075
  %v1139 = vadd.f32 %v1138, %v1076
  %v1140 = vadd.f32 %v1139, %v1077
  %v1141 = vadd.f32 %v1140, %v1078
  %v1142 = vadd.f32 %v1141, %v1079
  %v1143 = vadd.f32 %v1142, %v1080
  %v1144 = vadd.f32 %v1143, %v1081
  %v1145 = vadd.f32 %v1144, %v1082
  %v1146 = vrot.slane %v1145, 4
  %v1147 = vadd.f32 %v1145, %v1146
  %v1148 = vrot.slane %v1147, 2
  %v1149 = vadd.f32 %v1147, %v1148
  %v1150 = vrot.slane %v1149, 1
  %v1151 = vadd.f32 %v1149, %v1150
  %1152 = vst [vmem:[%s5] sm:$0x1] %v1018
  %1153 = vst [vmem:[%s6] sm:$0x1] %v1151
  %v1154 = vld [vmem:[%s2] sm:$0xf]
  %v1155 = vld [vmem:[%s2 + $0x4] sm:$0xf]
  %v1156 = vld [vmem:[%s2 + $0x8] sm:$0xf]
  %v1157 = vld [vmem:[%s2 + $0xc] sm:$0xf]
  %v1158 = vld [vmem:[%s2 + $0x10] sm:$0xf]
  %v1159 = vld [vmem:[%s2 + $0x14] sm:$0xf]
  %v1160 = vld [vmem:[%s2 + $0x18] sm:$0xf]
  %v1161 = vld [vmem:[%s2 + $0x1c] sm:$0xf]
  %v1162 = vld [vmem:[%s2 + $0x20] sm:$0xf]
  %v1163 = vld [vmem:[%s2 + $0x24] sm:$0xf]
  %v1164 = vld [vmem:[%s2 + $0x28] sm:$0xf]
  %v1165 = vld [vmem:[%s2 + $0x2c] sm:$0xf]
  %v1166 = vld [vmem:[%s2 + $0x30] sm:$0xf]
  %v1167 = vld [vmem:[%s2 + $0x34] sm:$0xf]
  %v1168 = vld [vmem:[%s2 + $0x38] sm:$0xf]
  %v1169 = vld [vmem:[%s2 + $0x3c] sm:$0xf]
  %v1186 = vunpack.c.l.b16 %v1154
  %v1187 = vunpack.c.l.b16 %v1155
  %v1188 = vunpack.c.l.b16 %v1156
  %v1189 = vunpack.c.l.b16 %v1157
  %v1190 = vunpack.c.l.b16 %v1158
  %v1191 = vunpack.c.l.b16 %v1159
  %v1192 = vunpack.c.l.b16 %v1160
  %v1193 = vunpack.c.l.b16 %v1161
  %v1194 = vunpack.c.l.b16 %v1162
  %v1195 = vunpack.c.l.b16 %v1163
  %v1196 = vunpack.c.l.b16 %v1164
  %v1197 = vunpack.c.l.b16 %v1165
  %v1198 = vunpack.c.l.b16 %v1166
  %v1199 = vunpack.c.l.b16 %v1167
  %v1200 = vunpack.c.l.b16 %v1168
  %v1201 = vunpack.c.l.b16 %v1169
  %v1202 = vpack.c.b16 %v1187, %v1186
  %v1203 = vpack.c.b16 %v1189, %v1188
  %v1204 = vpack.c.b16 %v1191, %v1190
  %v1205 = vpack.c.b16 %v1193, %v1192
  %v1206 = vpack.c.b16 %v1195, %v1194
  %v1207 = vpack.c.b16 %v1197, %v1196
  %v1208 = vpack.c.b16 %v1199, %v1198
  %v1209 = vpack.c.b16 %v1201, %v1200
  %1218 = vmatprep.subr.bf16.mxu0 0
  %1219 = vmatpush1.bf16.msra.mxu0 %v1209
  %1220 = vmatprep.subr.bf16.mxu0 0
  %1221 = vmatpush1.bf16.msra.mxu0 %v1208
  %1222 = vmatprep.subr.bf16.mxu0 0
  %1223 = vmatpush1.bf16.msra.mxu0 %v1207
  %1224 = vmatprep.subr.bf16.mxu0 0
  %1225 = vmatpush1.bf16.msra.mxu0 %v1206
  %1226 = vmatprep.subr.bf16.mxu0 0
  %1227 = vmatpush1.bf16.msra.mxu0 %v1205
  %1228 = vmatprep.subr.bf16.mxu0 0
  %1229 = vmatpush1.bf16.msra.mxu0 %v1204
  %1230 = vmatprep.subr.bf16.mxu0 0
  %1231 = vmatpush1.bf16.msra.mxu0 %v1203
  %1232 = vmatprep.subr.bf16.mxu0 0
  %1233 = vmatpush1.bf16.msra.mxu0 %v1202
  %1234 = vmatprep.subr.bf16.mxu0 0
  %1235 = vmatpush2.bf16.msra.mxu0 0
  %1236 = vmatprep.subr.bf16.mxu0 0
  %1237 = vmatpush2.bf16.msra.mxu0 0
  %1238 = vmatprep.subr.bf16.mxu0 0
  %1239 = vmatpush2.bf16.msra.mxu0 0
  %1240 = vmatprep.subr.bf16.mxu0 0
  %1241 = vmatpush2.bf16.msra.mxu0 0
  %1242 = vmatprep.subr.bf16.mxu0 0
  %1243 = vmatpush2.bf16.msra.mxu0 0
  %1244 = vmatprep.subr.bf16.mxu0 0
  %1245 = vmatpush2.bf16.msra.mxu0 0
  %1246 = vmatprep.subr.bf16.mxu0 0
  %1247 = vmatpush2.bf16.msra.mxu0 0
  %1248 = vmatprep.subr.bf16.mxu0 0
  %1249 = vmatpush2.bf16.msra.mxu0 0
  %1250 = vmatprep.mubr.bf16.mxu0 0
  %1251 = vmatmul.mubr.bf16.gmra.mxu0 %v229
  %v1252 = vpop.f32.mrf.mxu0
  %v1253 = vadd.f32 0.0, %v1252
  %v1254 = vpop.f32.mrf.mxu0
  %v1255 = vpop.f32.mrf.mxu0
  %v1256 = vadd.f32 0.0, %v1255
  %v1257 = vpop.f32.mrf.mxu0
  %1258 = vmatprep.mubr.bf16.mxu0 0
  %1259 = vmatmul.mubr.bf16.gmra.mxu0 %v230
  %v1260 = vpop.f32.mrf.mxu0
  %v1261 = vadd.f32 0.0, %v1260
  %v1262 = vpop.f32.mrf.mxu0
  %v1263 = vpop.f32.mrf.mxu0
  %v1264 = vadd.f32 0.0, %v1263
  %v1265 = vpop.f32.mrf.mxu0
  %1266 = vmatprep.mubr.bf16.mxu0 0
  %1267 = vmatmul.mubr.bf16.gmra.mxu0 %v231
  %v1268 = vpop.f32.mrf.mxu0
  %v1269 = vadd.f32 0.0, %v1268
  %v1270 = vpop.f32.mrf.mxu0
  %v1271 = vpop.f32.mrf.mxu0
  %v1272 = vadd.f32 0.0, %v1271
  %v1273 = vpop.f32.mrf.mxu0
  %1274 = vmatprep.mubr.bf16.mxu0 0
  %1275 = vmatmul.mubr.bf16.gmra.mxu0 %v232
  %v1276 = vpop.f32.mrf.mxu0
  %v1277 = vadd.f32 0.0, %v1276
  %v1278 = vpop.f32.mrf.mxu0
  %v1279 = vpop.f32.mrf.mxu0
  %v1280 = vadd.f32 0.0, %v1279
  %v1281 = vpop.f32.mrf.mxu0
  %1282 = vmatprep.mubr.bf16.mxu0 0
  %1283 = vmatmul.mubr.bf16.gmra.mxu0 %v233
  %v1284 = vpop.f32.mrf.mxu0
  %v1285 = vadd.f32 0.0, %v1284
  %v1286 = vpop.f32.mrf.mxu0
  %v1287 = vpop.f32.mrf.mxu0
  %v1288 = vadd.f32 0.0, %v1287
  %v1289 = vpop.f32.mrf.mxu0
  %1290 = vmatprep.mubr.bf16.mxu0 0
  %1291 = vmatmul.mubr.bf16.gmra.mxu0 %v234
  %v1292 = vpop.f32.mrf.mxu0
  %v1293 = vadd.f32 0.0, %v1292
  %v1294 = vpop.f32.mrf.mxu0
  %v1295 = vpop.f32.mrf.mxu0
  %v1296 = vadd.f32 0.0, %v1295
  %v1297 = vpop.f32.mrf.mxu0
  %1298 = vmatprep.mubr.bf16.mxu0 0
  %1299 = vmatmul.mubr.bf16.gmra.mxu0 %v235
  %v1300 = vpop.f32.mrf.mxu0
  %v1301 = vadd.f32 0.0, %v1300
  %v1302 = vpop.f32.mrf.mxu0
  %v1303 = vpop.f32.mrf.mxu0
  %v1304 = vadd.f32 0.0, %v1303
  %v1305 = vpop.f32.mrf.mxu0
  %1306 = vmatprep.mubr.bf16.mxu0 0
  %1307 = vmatmul.mubr.bf16.gmra.mxu0 %v236
  %v1308 = vpop.f32.mrf.mxu0
  %v1309 = vadd.f32 0.0, %v1308
  %v1310 = vpop.f32.mrf.mxu0
  %v1311 = vpop.f32.mrf.mxu0
  %v1312 = vadd.f32 0.0, %v1311
  %v1313 = vpop.f32.mrf.mxu0
  %1314 = vmatprep.mubr.bf16.mxu0 0
  %1315 = vmatmul.mubr.bf16.gmra.mxu0 %v237
  %v1316 = vpop.f32.mrf.mxu0
  %v1317 = vadd.f32 0.0, %v1316
  %v1318 = vpop.f32.mrf.mxu0
  %v1319 = vpop.f32.mrf.mxu0
  %v1320 = vadd.f32 0.0, %v1319
  %v1321 = vpop.f32.mrf.mxu0
  %1322 = vmatprep.mubr.bf16.mxu0 0
  %1323 = vmatmul.mubr.bf16.gmra.mxu0 %v238
  %v1324 = vpop.f32.mrf.mxu0
  %v1325 = vadd.f32 0.0, %v1324
  %v1326 = vpop.f32.mrf.mxu0
  %v1327 = vpop.f32.mrf.mxu0
  %v1328 = vadd.f32 0.0, %v1327
  %v1329 = vpop.f32.mrf.mxu0
  %1330 = vmatprep.mubr.bf16.mxu0 0
  %1331 = vmatmul.mubr.bf16.gmra.mxu0 %v239
  %v1332 = vpop.f32.mrf.mxu0
  %v1333 = vadd.f32 0.0, %v1332
  %v1334 = vpop.f32.mrf.mxu0
  %v1335 = vpop.f32.mrf.mxu0
  %v1336 = vadd.f32 0.0, %v1335
  %v1337 = vpop.f32.mrf.mxu0
  %1338 = vmatprep.mubr.bf16.mxu0 0
  %1339 = vmatmul.mubr.bf16.gmra.mxu0 %v240
  %v1340 = vpop.f32.mrf.mxu0
  %v1341 = vadd.f32 0.0, %v1340
  %v1342 = vpop.f32.mrf.mxu0
  %v1343 = vpop.f32.mrf.mxu0
  %v1344 = vadd.f32 0.0, %v1343
  %v1345 = vpop.f32.mrf.mxu0
  %1346 = vmatprep.mubr.bf16.mxu0 0
  %1347 = vmatmul.mubr.bf16.gmra.mxu0 %v241
  %v1348 = vpop.f32.mrf.mxu0
  %v1349 = vadd.f32 0.0, %v1348
  %v1350 = vpop.f32.mrf.mxu0
  %v1351 = vpop.f32.mrf.mxu0
  %v1352 = vadd.f32 0.0, %v1351
  %v1353 = vpop.f32.mrf.mxu0
  %1354 = vmatprep.mubr.bf16.mxu0 0
  %1355 = vmatmul.mubr.bf16.gmra.mxu0 %v242
  %v1356 = vpop.f32.mrf.mxu0
  %v1357 = vadd.f32 0.0, %v1356
  %v1358 = vpop.f32.mrf.mxu0
  %v1359 = vpop.f32.mrf.mxu0
  %v1360 = vadd.f32 0.0, %v1359
  %v1361 = vpop.f32.mrf.mxu0
  %1362 = vmatprep.mubr.bf16.mxu0 0
  %1363 = vmatmul.mubr.bf16.gmra.mxu0 %v243
  %v1364 = vpop.f32.mrf.mxu0
  %v1365 = vadd.f32 0.0, %v1364
  %v1366 = vpop.f32.mrf.mxu0
  %v1367 = vpop.f32.mrf.mxu0
  %v1368 = vadd.f32 0.0, %v1367
  %v1369 = vpop.f32.mrf.mxu0
  %1370 = vmatprep.mubr.bf16.mxu0 0
  %1371 = vmatmul.mubr.bf16.gmra.mxu0 %v244
  %v1372 = vpop.f32.mrf.mxu0
  %v1373 = vadd.f32 0.0, %v1372
  %v1374 = vpop.f32.mrf.mxu0
  %v1375 = vpop.f32.mrf.mxu0
  %v1376 = vadd.f32 0.0, %v1375
  %v1377 = vpop.f32.mrf.mxu0
  %1378 = vmatprep.mubr.bf16.mxu0 0
  %1379 = vmatmul.mubr.bf16.gmra.mxu0 %v245
  %v1380 = vpop.f32.mrf.mxu0
  %v1381 = vadd.f32 0.0, %v1380
  %v1382 = vpop.f32.mrf.mxu0
  %v1383 = vpop.f32.mrf.mxu0
  %v1384 = vadd.f32 0.0, %v1383
  %v1385 = vpop.f32.mrf.mxu0
  %1386 = vmatprep.mubr.bf16.mxu0 0
  %1387 = vmatmul.mubr.bf16.gmra.mxu0 %v246
  %v1388 = vpop.f32.mrf.mxu0
  %v1389 = vadd.f32 0.0, %v1388
  %v1390 = vpop.f32.mrf.mxu0
  %v1391 = vpop.f32.mrf.mxu0
  %v1392 = vadd.f32 0.0, %v1391
  %v1393 = vpop.f32.mrf.mxu0
  %1394 = vmatprep.mubr.bf16.mxu0 0
  %1395 = vmatmul.mubr.bf16.gmra.mxu0 %v247
  %v1396 = vpop.f32.mrf.mxu0
  %v1397 = vadd.f32 0.0, %v1396
  %v1398 = vpop.f32.mrf.mxu0
  %v1399 = vpop.f32.mrf.mxu0
  %v1400 = vadd.f32 0.0, %v1399
  %v1401 = vpop.f32.mrf.mxu0
  %1402 = vmatprep.mubr.bf16.mxu0 0
  %1403 = vmatmul.mubr.bf16.gmra.mxu0 %v248
  %v1404 = vpop.f32.mrf.mxu0
  %v1405 = vadd.f32 0.0, %v1404
  %v1406 = vpop.f32.mrf.mxu0
  %v1407 = vpop.f32.mrf.mxu0
  %v1408 = vadd.f32 0.0, %v1407
  %v1409 = vpop.f32.mrf.mxu0
  %1410 = vmatprep.mubr.bf16.mxu0 0
  %1411 = vmatmul.mubr.bf16.gmra.mxu0 %v249
  %v1412 = vpop.f32.mrf.mxu0
  %v1413 = vadd.f32 0.0, %v1412
  %v1414 = vpop.f32.mrf.mxu0
  %v1415 = vpop.f32.mrf.mxu0
  %v1416 = vadd.f32 0.0, %v1415
  %v1417 = vpop.f32.mrf.mxu0
  %1418 = vmatprep.mubr.bf16.mxu0 0
  %1419 = vmatmul.mubr.bf16.gmra.mxu0 %v250
  %v1420 = vpop.f32.mrf.mxu0
  %v1421 = vadd.f32 0.0, %v1420
  %v1422 = vpop.f32.mrf.mxu0
  %v1423 = vpop.f32.mrf.mxu0
  %v1424 = vadd.f32 0.0, %v1423
  %v1425 = vpop.f32.mrf.mxu0
  %1426 = vmatprep.mubr.bf16.mxu0 0
  %1427 = vmatmul.mubr.bf16.gmra.mxu0 %v251
  %v1428 = vpop.f32.mrf.mxu0
  %v1429 = vadd.f32 0.0, %v1428
  %v1430 = vpop.f32.mrf.mxu0
  %v1431 = vpop.f32.mrf.mxu0
  %v1432 = vadd.f32 0.0, %v1431
  %v1433 = vpop.f32.mrf.mxu0
  %1434 = vmatprep.mubr.bf16.mxu0 0
  %1435 = vmatmul.mubr.bf16.gmra.mxu0 %v252
  %v1436 = vpop.f32.mrf.mxu0
  %v1437 = vadd.f32 0.0, %v1436
  %v1438 = vpop.f32.mrf.mxu0
  %v1439 = vpop.f32.mrf.mxu0
  %v1440 = vadd.f32 0.0, %v1439
  %v1441 = vpop.f32.mrf.mxu0
  %1442 = vmatprep.mubr.bf16.mxu0 0
  %1443 = vmatmul.mubr.bf16.gmra.mxu0 %v253
  %v1444 = vpop.f32.mrf.mxu0
  %v1445 = vadd.f32 0.0, %v1444
  %v1446 = vpop.f32.mrf.mxu0
  %v1447 = vpop.f32.mrf.mxu0
  %v1448 = vadd.f32 0.0, %v1447
  %v1449 = vpop.f32.mrf.mxu0
  %1450 = vmatprep.mubr.bf16.mxu0 0
  %1451 = vmatmul.mubr.bf16.gmra.mxu0 %v254
  %v1452 = vpop.f32.mrf.mxu0
  %v1453 = vadd.f32 0.0, %v1452
  %v1454 = vpop.f32.mrf.mxu0
  %v1455 = vpop.f32.mrf.mxu0
  %v1456 = vadd.f32 0.0, %v1455
  %v1457 = vpop.f32.mrf.mxu0
  %1458 = vmatprep.mubr.bf16.mxu0 0
  %1459 = vmatmul.mubr.bf16.gmra.mxu0 %v255
  %v1460 = vpop.f32.mrf.mxu0
  %v1461 = vadd.f32 0.0, %v1460
  %v1462 = vpop.f32.mrf.mxu0
  %v1463 = vpop.f32.mrf.mxu0
  %v1464 = vadd.f32 0.0, %v1463
  %v1465 = vpop.f32.mrf.mxu0
  %1466 = vmatprep.mubr.bf16.mxu0 0
  %1467 = vmatmul.mubr.bf16.gmra.mxu0 %v256
  %v1468 = vpop.f32.mrf.mxu0
  %v1469 = vadd.f32 0.0, %v1468
  %v1470 = vpop.f32.mrf.mxu0
  %v1471 = vpop.f32.mrf.mxu0
  %v1472 = vadd.f32 0.0, %v1471
  %v1473 = vpop.f32.mrf.mxu0
  %1474 = vmatprep.mubr.bf16.mxu0 0
  %1475 = vmatmul.mubr.bf16.gmra.mxu0 %v257
  %v1476 = vpop.f32.mrf.mxu0
  %v1477 = vadd.f32 0.0, %v1476
  %v1478 = vpop.f32.mrf.mxu0
  %v1479 = vpop.f32.mrf.mxu0
  %v1480 = vadd.f32 0.0, %v1479
  %v1481 = vpop.f32.mrf.mxu0
  %1482 = vmatprep.mubr.bf16.mxu0 0
  %1483 = vmatmul.mubr.bf16.gmra.mxu0 %v258
  %v1484 = vpop.f32.mrf.mxu0
  %v1485 = vadd.f32 0.0, %v1484
  %v1486 = vpop.f32.mrf.mxu0
  %v1487 = vpop.f32.mrf.mxu0
  %v1488 = vadd.f32 0.0, %v1487
  %v1489 = vpop.f32.mrf.mxu0
  %1490 = vmatprep.mubr.bf16.mxu0 0
  %1491 = vmatmul.mubr.bf16.gmra.mxu0 %v259
  %v1492 = vpop.f32.mrf.mxu0
  %v1493 = vadd.f32 0.0, %v1492
  %v1494 = vpop.f32.mrf.mxu0
  %v1495 = vpop.f32.mrf.mxu0
  %v1496 = vadd.f32 0.0, %v1495
  %v1497 = vpop.f32.mrf.mxu0
  %1498 = vmatprep.mubr.bf16.mxu0 0
  %1499 = vmatmul.mubr.bf16.gmra.mxu0 %v260
  %v1500 = vpop.f32.mrf.mxu0
  %v1501 = vadd.f32 0.0, %v1500
  %v1502 = vpop.f32.mrf.mxu0
  %v1503 = vpop.f32.mrf.mxu0
  %v1504 = vadd.f32 0.0, %v1503
  %v1505 = vpop.f32.mrf.mxu0
  %1506 = vdwg.mxu0
  %1507 = vst [vmem:[%s4] sm:$0xff] %v1253
  %1508 = vst [vmem:[%s4 + $0x8] sm:$0xff] %v1256
  %1509 = vst [vmem:[%s4 + $0x10] sm:$0xff] %v1261
  %1510 = vst [vmem:[%s4 + $0x18] sm:$0xff] %v1264
  %1511 = vst [vmem:[%s4 + $0x20] sm:$0xff] %v1269
  %1512 = vst [vmem:[%s4 + $0x28] sm:$0xff] %v1272
  %1513 = vst [vmem:[%s4 + $0x30] sm:$0xff] %v1277
  %1514 = vst [vmem:[%s4 + $0x38] sm:$0xff] %v1280
  %1515 = vst [vmem:[%s4 + $0x40] sm:$0xff] %v1285
  %1516 = vst [vmem:[%s4 + $0x48] sm:$0xff] %v1288
  %1517 = vst [vmem:[%s4 + $0x50] sm:$0xff] %v1293
  %1518 = vst [vmem:[%s4 + $0x58] sm:$0xff] %v1296
  %1519 = vst [vmem:[%s4 + $0x60] sm:$0xff] %v1301
  %1520 = vst [vmem:[%s4 + $0x68] sm:$0xff] %v1304
  %1521 = vst [vmem:[%s4 + $0x70] sm:$0xff] %v1309
  %1522 = vst [vmem:[%s4 + $0x78] sm:$0xff] %v1312
  %1523 = vst [vmem:[%s4 + $0x80] sm:$0xff] %v1317
  %1524 = vst [vmem:[%s4 + $0x88] sm:$0xff] %v1320
  %1525 = vst [vmem:[%s4 + $0x90] sm:$0xff] %v1325
  %1526 = vst [vmem:[%s4 + $0x98] sm:$0xff] %v1328
  %1527 = vst [vmem:[%s4 + $0xa0] sm:$0xff] %v1333
  %1528 = vst [vmem:[%s4 + $0xa8] sm:$0xff] %v1336
  %1529 = vst [vmem:[%s4 + $0xb0] sm:$0xff] %v1341
  %1530 = vst [vmem:[%s4 + $0xb8] sm:$0xff] %v1344
  %1531 = vst [vmem:[%s4 + $0xc0] sm:$0xff] %v1349
  %1532 = vst [vmem:[%s4 + $0xc8] sm:$0xff] %v1352
  %1533 = vst [vmem:[%s4 + $0xd0] sm:$0xff] %v1357
  %1534 = vst [vmem:[%s4 + $0xd8] sm:$0xff] %v1360
  %1535 = vst [vmem:[%s4 + $0xe0] sm:$0xff] %v1365
  %1536 = vst [vmem:[%s4 + $0xe8] sm:$0xff] %v1368
  %1537 = vst [vmem:[%s4 + $0xf0] sm:$0xff] %v1373
  %1538 = vst [vmem:[%s4 + $0xf8] sm:$0xff] %v1376
  %1539 = vst [vmem:[%s4 + $0x100] sm:$0xff] %v1381
  %1540 = vst [vmem:[%s4 + $0x108] sm:$0xff] %v1384
  %1541 = vst [vmem:[%s4 + $0x110] sm:$0xff] %v1389
  %1542 = vst [vmem:[%s4 + $0x118] sm:$0xff] %v1392
  %1543 = vst [vmem:[%s4 + $0x120] sm:$0xff] %v1397
  %1544 = vst [vmem:[%s4 + $0x128] sm:$0xff] %v1400
  %1545 = vst [vmem:[%s4 + $0x130] sm:$0xff] %v1405
  %1546 = vst [vmem:[%s4 + $0x138] sm:$0xff] %v1408
  %1547 = vst [vmem:[%s4 + $0x140] sm:$0xff] %v1413
  %1548 = vst [vmem:[%s4 + $0x148] sm:$0xff] %v1416
  %1549 = vst [vmem:[%s4 + $0x150] sm:$0xff] %v1421
  %1550 = vst [vmem:[%s4 + $0x158] sm:$0xff] %v1424
  %1551 = vst [vmem:[%s4 + $0x160] sm:$0xff] %v1429
  %1552 = vst [vmem:[%s4 + $0x168] sm:$0xff] %v1432
  %1553 = vst [vmem:[%s4 + $0x170] sm:$0xff] %v1437
  %1554 = vst [vmem:[%s4 + $0x178] sm:$0xff] %v1440
  %1555 = vst [vmem:[%s4 + $0x180] sm:$0xff] %v1445
  %1556 = vst [vmem:[%s4 + $0x188] sm:$0xff] %v1448
  %1557 = vst [vmem:[%s4 + $0x190] sm:$0xff] %v1453
  %1558 = vst [vmem:[%s4 + $0x198] sm:$0xff] %v1456
  %1559 = vst [vmem:[%s4 + $0x1a0] sm:$0xff] %v1461
  %1560 = vst [vmem:[%s4 + $0x1a8] sm:$0xff] %v1464
  %1561 = vst [vmem:[%s4 + $0x1b0] sm:$0xff] %v1469
  %1562 = vst [vmem:[%s4 + $0x1b8] sm:$0xff] %v1472
  %1563 = vst [vmem:[%s4 + $0x1c0] sm:$0xff] %v1477
  %1564 = vst [vmem:[%s4 + $0x1c8] sm:$0xff] %v1480
  %1565 = vst [vmem:[%s4 + $0x1d0] sm:$0xff] %v1485
  %1566 = vst [vmem:[%s4 + $0x1d8] sm:$0xff] %v1488
  %1567 = vst [vmem:[%s4 + $0x1e0] sm:$0xff] %v1493
  %1568 = vst [vmem:[%s4 + $0x1e8] sm:$0xff] %v1496
  %1569 = vst [vmem:[%s4 + $0x1f0] sm:$0xff] %v1501
  %1570 = vst [vmem:[%s4 + $0x1f8] sm:$0xff] %v1504
  %v1571 = vadd.f32 %v1253, %v1256
  %v1572 = vadd.f32 %v1571, %v1261
  %v1573 = vadd.f32 %v1572, %v1264
  %v1574 = vadd.f32 %v1573, %v1269
  %v1575 = vadd.f32 %v1574, %v1272
  %v1576 = vadd.f32 %v1575, %v1277
  %v1577 = vadd.f32 %v1576, %v1280
  %v1578 = vadd.f32 %v1577, %v1285
  %v1579 = vadd.f32 %v1578, %v1288
  %v1580 = vadd.f32 %v1579, %v1293
  %v1581 = vadd.f32 %v1580, %v1296
  %v1582 = vadd.f32 %v1581, %v1301
  %v1583 = vadd.f32 %v1582, %v1304
  %v1584 = vadd.f32 %v1583, %v1309
  %v1585 = vadd.f32 %v1584, %v1312
  %v1586 = vadd.f32 %v1585, %v1317
  %v1587 = vadd.f32 %v1586, %v1320
  %v1588 = vadd.f32 %v1587, %v1325
  %v1589 = vadd.f32 %v1588, %v1328
  %v1590 = vadd.f32 %v1589, %v1333
  %v1591 = vadd.f32 %v1590, %v1336
  %v1592 = vadd.f32 %v1591, %v1341
  %v1593 = vadd.f32 %v1592, %v1344
  %v1594 = vadd.f32 %v1593, %v1349
  %v1595 = vadd.f32 %v1594, %v1352
  %v1596 = vadd.f32 %v1595, %v1357
  %v1597 = vadd.f32 %v1596, %v1360
  %v1598 = vadd.f32 %v1597, %v1365
  %v1599 = vadd.f32 %v1598, %v1368
  %v1600 = vadd.f32 %v1599, %v1373
  %v1601 = vadd.f32 %v1600, %v1376
  %v1602 = vadd.f32 %v1601, %v1381
  %v1603 = vadd.f32 %v1602, %v1384
  %v1604 = vadd.f32 %v1603, %v1389
  %v1605 = vadd.f32 %v1604, %v1392
  %v1606 = vadd.f32 %v1605, %v1397
  %v1607 = vadd.f32 %v1606, %v1400
  %v1608 = vadd.f32 %v1607, %v1405
  %v1609 = vadd.f32 %v1608, %v1408
  %v1610 = vadd.f32 %v1609, %v1413
  %v1611 = vadd.f32 %v1610, %v1416
  %v1612 = vadd.f32 %v1611, %v1421
  %v1613 = vadd.f32 %v1612, %v1424
  %v1614 = vadd.f32 %v1613, %v1429
  %v1615 = vadd.f32 %v1614, %v1432
  %v1616 = vadd.f32 %v1615, %v1437
  %v1617 = vadd.f32 %v1616, %v1440
  %v1618 = vadd.f32 %v1617, %v1445
  %v1619 = vadd.f32 %v1618, %v1448
  %v1620 = vadd.f32 %v1619, %v1453
  %v1621 = vadd.f32 %v1620, %v1456
  %v1622 = vadd.f32 %v1621, %v1461
  %v1623 = vadd.f32 %v1622, %v1464
  %v1624 = vadd.f32 %v1623, %v1469
  %v1625 = vadd.f32 %v1624, %v1472
  %v1626 = vadd.f32 %v1625, %v1477
  %v1627 = vadd.f32 %v1626, %v1480
  %v1628 = vadd.f32 %v1627, %v1485
  %v1629 = vadd.f32 %v1628, %v1488
  %v1630 = vadd.f32 %v1629, %v1493
  %v1631 = vadd.f32 %v1630, %v1496
  %v1632 = vadd.f32 %v1631, %v1501
  %v1633 = vadd.f32 %v1632, %v1504
  %v1634 = vrot.slane %v1633, 4
  %v1635 = vadd.f32 %v1633, %v1634
  %v1636 = vrot.slane %v1635, 2
  %v1637 = vadd.f32 %v1635, %v1636
  %v1638 = vrot.slane %v1637, 1
  %v1639 = vadd.f32 %v1637, %v1638
  %v1640 = vmul.f32 %v1253, %v1253
  %v1641 = vmul.f32 %v1256, %v1256
  %v1642 = vmul.f32 %v1261, %v1261
  %v1643 = vmul.f32 %v1264, %v1264
  %v1644 = vmul.f32 %v1269, %v1269
  %v1645 = vmul.f32 %v1272, %v1272
  %v1646 = vmul.f32 %v1277, %v1277
  %v1647 = vmul.f32 %v1280, %v1280
  %v1648 = vmul.f32 %v1285, %v1285
  %v1649 = vmul.f32 %v1288, %v1288
  %v1650 = vmul.f32 %v1293, %v1293
  %v1651 = vmul.f32 %v1296, %v1296
  %v1652 = vmul.f32 %v1301, %v1301
  %v1653 = vmul.f32 %v1304, %v1304
  %v1654 = vmul.f32 %v1309, %v1309
  %v1655 = vmul.f32 %v1312, %v1312
  %v1656 = vmul.f32 %v1317, %v1317
  %v1657 = vmul.f32 %v1320, %v1320
  %v1658 = vmul.f32 %v1325, %v1325
  %v1659 = vmul.f32 %v1328, %v1328
  %v1660 = vmul.f32 %v1333, %v1333
  %v1661 = vmul.f32 %v1336, %v1336
  %v1662 = vmul.f32 %v1341, %v1341
  %v1663 = vmul.f32 %v1344, %v1344
  %v1664 = vmul.f32 %v1349, %v1349
  %v1665 = vmul.f32 %v1352, %v1352
  %v1666 = vmul.f32 %v1357, %v1357
  %v1667 = vmul.f32 %v1360, %v1360
  %v1668 = vmul.f32 %v1365, %v1365
  %v1669 = vmul.f32 %v1368, %v1368
  %v1670 = vmul.f32 %v1373, %v1373
  %v1671 = vmul.f32 %v1376, %v1376
  %v1672 = vmul.f32 %v1381, %v1381
  %v1673 = vmul.f32 %v1384, %v1384
  %v1674 = vmul.f32 %v1389, %v1389
  %v1675 = vmul.f32 %v1392, %v1392
  %v1676 = vmul.f32 %v1397, %v1397
  %v1677 = vmul.f32 %v1400, %v1400
  %v1678 = vmul.f32 %v1405, %v1405
  %v1679 = vmul.f32 %v1408, %v1408
  %v1680 = vmul.f32 %v1413, %v1413
  %v1681 = vmul.f32 %v1416, %v1416
  %v1682 = vmul.f32 %v1421, %v1421
  %v1683 = vmul.f32 %v1424, %v1424
  %v1684 = vmul.f32 %v1429, %v1429
  %v1685 = vmul.f32 %v1432, %v1432
  %v1686 = vmul.f32 %v1437, %v1437
  %v1687 = vmul.f32 %v1440, %v1440
  %v1688 = vmul.f32 %v1445, %v1445
  %v1689 = vmul.f32 %v1448, %v1448
  %v1690 = vmul.f32 %v1453, %v1453
  %v1691 = vmul.f32 %v1456, %v1456
  %v1692 = vmul.f32 %v1461, %v1461
  %v1693 = vmul.f32 %v1464, %v1464
  %v1694 = vmul.f32 %v1469, %v1469
  %v1695 = vmul.f32 %v1472, %v1472
  %v1696 = vmul.f32 %v1477, %v1477
  %v1697 = vmul.f32 %v1480, %v1480
  %v1698 = vmul.f32 %v1485, %v1485
  %v1699 = vmul.f32 %v1488, %v1488
  %v1700 = vmul.f32 %v1493, %v1493
  %v1701 = vmul.f32 %v1496, %v1496
  %v1702 = vmul.f32 %v1501, %v1501
  %v1703 = vmul.f32 %v1504, %v1504
  %v1704 = vadd.f32 %v1640, %v1641
  %v1705 = vadd.f32 %v1704, %v1642
  %v1706 = vadd.f32 %v1705, %v1643
  %v1707 = vadd.f32 %v1706, %v1644
  %v1708 = vadd.f32 %v1707, %v1645
  %v1709 = vadd.f32 %v1708, %v1646
  %v1710 = vadd.f32 %v1709, %v1647
  %v1711 = vadd.f32 %v1710, %v1648
  %v1712 = vadd.f32 %v1711, %v1649
  %v1713 = vadd.f32 %v1712, %v1650
  %v1714 = vadd.f32 %v1713, %v1651
  %v1715 = vadd.f32 %v1714, %v1652
  %v1716 = vadd.f32 %v1715, %v1653
  %v1717 = vadd.f32 %v1716, %v1654
  %v1718 = vadd.f32 %v1717, %v1655
  %v1719 = vadd.f32 %v1718, %v1656
  %v1720 = vadd.f32 %v1719, %v1657
  %v1721 = vadd.f32 %v1720, %v1658
  %v1722 = vadd.f32 %v1721, %v1659
  %v1723 = vadd.f32 %v1722, %v1660
  %v1724 = vadd.f32 %v1723, %v1661
  %v1725 = vadd.f32 %v1724, %v1662
  %v1726 = vadd.f32 %v1725, %v1663
  %v1727 = vadd.f32 %v1726, %v1664
  %v1728 = vadd.f32 %v1727, %v1665
  %v1729 = vadd.f32 %v1728, %v1666
  %v1730 = vadd.f32 %v1729, %v1667
  %v1731 = vadd.f32 %v1730, %v1668
  %v1732 = vadd.f32 %v1731, %v1669
  %v1733 = vadd.f32 %v1732, %v1670
  %v1734 = vadd.f32 %v1733, %v1671
  %v1735 = vadd.f32 %v1734, %v1672
  %v1736 = vadd.f32 %v1735, %v1673
  %v1737 = vadd.f32 %v1736, %v1674
  %v1738 = vadd.f32 %v1737, %v1675
  %v1739 = vadd.f32 %v1738, %v1676
  %v1740 = vadd.f32 %v1739, %v1677
  %v1741 = vadd.f32 %v1740, %v1678
  %v1742 = vadd.f32 %v1741, %v1679
  %v1743 = vadd.f32 %v1742, %v1680
  %v1744 = vadd.f32 %v1743, %v1681
  %v1745 = vadd.f32 %v1744, %v1682
  %v1746 = vadd.f32 %v1745, %v1683
  %v1747 = vadd.f32 %v1746, %v1684
  %v1748 = vadd.f32 %v1747, %v1685
  %v1749 = vadd.f32 %v1748, %v1686
  %v1750 = vadd.f32 %v1749, %v1687
  %v1751 = vadd.f32 %v1750, %v1688
  %v1752 = vadd.f32 %v1751, %v1689
  %v1753 = vadd.f32 %v1752, %v1690
  %v1754 = vadd.f32 %v1753, %v1691
  %v1755 = vadd.f32 %v1754, %v1692
  %v1756 = vadd.f32 %v1755, %v1693
  %v1757 = vadd.f32 %v1756, %v1694
  %v1758 = vadd.f32 %v1757, %v1695
  %v1759 = vadd.f32 %v1758, %v1696
  %v1760 = vadd.f32 %v1759, %v1697
  %v1761 = vadd.f32 %v1760, %v1698
  %v1762 = vadd.f32 %v1761, %v1699
  %v1763 = vadd.f32 %v1762, %v1700
  %v1764 = vadd.f32 %v1763, %v1701
  %v1765 = vadd.f32 %v1764, %v1702
  %v1766 = vadd.f32 %v1765, %v1703
  %v1767 = vrot.slane %v1766, 4
  %v1768 = vadd.f32 %v1766, %v1767
  %v1769 = vrot.slane %v1768, 2
  %v1770 = vadd.f32 %v1768, %v1769
  %v1771 = vrot.slane %v1770, 1
  %v1772 = vadd.f32 %v1770, %v1771
  %1773 = vst [vmem:[%s7] sm:$0x1] %v1639
  %1774 = vst [vmem:[%s8] sm:$0x1] %v1772
  // Predicated region
  $region14: #{bottleneck_forward.4} parent=0 // pred_check
    _
  $region15: #{bottleneck_forward.4} parent=0 // pred_check_branch
    %1776 = sbr.rel (0) target = $region17
  $region16: #{bottleneck_forward.4} parent=0 // pred_region
    _
  $region17: #{bottleneck_forward.4} parent=0 // pred_fallthru
    _
  // Predicated region
  $region18: #{bottleneck_forward.4} parent=0 // pred_check
    _
  $region19: #{bottleneck_forward.4} parent=0 // pred_check_branch
    %1778 = sbr.rel (0) target = $region21
  $region20: #{bottleneck_forward.4} parent=0 // pred_region
    _
  $region21: #{bottleneck_forward.4} parent=0 // pred_fallthru
    _
  // Predicated region
  $region22: #{bottleneck_forward.4} parent=0 // pred_check
    _
  $region23: #{bottleneck_forward.4} parent=0 // pred_check_branch
    %1780 = sbr.rel (0) target = $region25
  $region24: #{bottleneck_forward.4} parent=0 // pred_region
    _
  $region25: #{bottleneck_forward.4} parent=0 // pred_fallthru
    _
  // Predicated region
  $region26: #{bottleneck_forward.4} parent=0 // pred_check
    _
  $region27: #{bottleneck_forward.4} parent=0 // pred_check_branch
    %1782 = sbr.rel (0) target = $region29
  $region28: #{bottleneck_forward.4} parent=0 // pred_region
    _
  $region29: #{bottleneck_forward.4} parent=0 // pred_fallthru
    _
  // Predicated region
  $region30: #{bottleneck_forward.4} parent=0 // pred_check
    _
  $region31: #{bottleneck_forward.4} parent=0 // pred_check_branch
    %1784 = sbr.rel (0) target = $region33
  $region32: #{bottleneck_forward.4} parent=0 // pred_region
    _
  $region33: #{bottleneck_forward.4} parent=0 // pred_fallthru
    _
  // Predicated region
  $region34: #{bottleneck_forward.4} parent=0 // pred_check
    _
  $region35: #{bottleneck_forward.4} parent=0 // pred_check_branch
    %1786 = sbr.rel (0) target = $region37
  $region36: #{bottleneck_forward.4} parent=0 // pred_region
    _
  $region37: #{bottleneck_forward.4} parent=0 // pred_fallthru
    _
  // Predicated region
  $region38: #{bottleneck_forward.4} parent=0 // pred_check
    _
  $region39: #{bottleneck_forward.4} parent=0 // pred_check_branch
    %1788 = sbr.rel (0) target = $region41
  $region40: #{bottleneck_forward.4} parent=0 // pred_region
    _
  $region41: #{bottleneck_forward.4} parent=0 // pred_fallthru
    _
  // Predicated region
  $region42: #{bottleneck_forward.4} parent=0 // pred_check
    _
  $region43: #{bottleneck_forward.4} parent=0 // pred_check_branch
    %1790 = sbr.rel (0) target = $region45
  $region44: #{bottleneck_forward.4} parent=0 // pred_region
    _
  $region45: #{bottleneck_forward.4} parent=0 // pred_fallthru
    _
  // Predicated region
  $region46: #{bottleneck_forward.4} parent=0 // pred_check
    _
  $region47: #{bottleneck_forward.4} parent=0 // pred_check_branch
    %1792 = sbr.rel (0) target = $region49
  $region48: #{bottleneck_forward.4} parent=0 // pred_region
    _
  $region49: #{bottleneck_forward.4} parent=0 // pred_fallthru
    _
  // Predicated region
  $region50: #{bottleneck_forward.4} parent=0 // pred_check
    _
  $region51: #{bottleneck_forward.4} parent=0 // pred_check_branch
    %1794 = sbr.rel (0) target = $region53
  $region52: #{bottleneck_forward.4} parent=0 // pred_region
    _
  $region53: #{bottleneck_forward.4} parent=0 // pred_fallthru
    _
  // Predicated region
  $region54: #{bottleneck_forward.4} parent=0 // pred_check
    _
  $region55: #{bottleneck_forward.4} parent=0 // pred_check_branch
    %1796 = sbr.rel (0) target = $region57
  $region56: #{bottleneck_forward.4} parent=0 // pred_region
    _
  $region57: #{bottleneck_forward.4} parent=0 // pred_fallthru
    _
  // Predicated region
  $region58: #{bottleneck_forward.4} parent=0 // pred_check
    _
  $region59: #{bottleneck_forward.4} parent=0 // pred_check_branch
    %1798 = sbr.rel (0) target = $region61
  $region60: #{bottleneck_forward.4} parent=0 // pred_region
    _
  $region61: #{bottleneck_forward.4} parent=0 // pred_fallthru
    _

// kernel: bottleneck_forward.5
$region0: #{bottleneck_forward.5}
  #allocation0 [shape = 'u32[]', space=smem, size = 0x4, offset = 0x4, fixed_abs, tag = 'smem constant byte address 0x4 - core index']
  #allocation1 [shape = 'u32[144,128]{1,0:T(1,128)}', space=vmem, size = 0x12000, scoped, tag = 'internal scratch']
  #allocation2 [shape = 'f32[18,18,128]{2,1,0:T(8,128)}', space=vmem, size = 0x36000, scoped, tag = 'scratch operand']
  %s0 = inlined_call_operand.vmem [shape: bf16[2,16,16,128], index: 0, kind: input, shape index: {}]
  %s1 = inlined_call_operand.vmem [shape: f32[1,128], index: 1, kind: input, shape index: {}]
  %s2 = inlined_call_operand.vmem [shape: f32[1,128], index: 2, kind: input, shape index: {}]
  %s3 = inlined_call_operand.vmem [shape: bf16[9,128,128], index: 3, kind: input, shape index: {}]
  %s4 = inlined_call_operand.vmem [shape: bf16[2,16,16,128], index: 4, kind: output, shape index: {0}]
  %s5 = inlined_call_operand.vmem [shape: f32[2,1,128], index: 5, kind: output, shape index: {1}]
  %s6 = inlined_call_operand.vmem [shape: f32[2,1,128], index: 6, kind: output, shape index: {2}]
  %7 = xla_tuple %s4, %s5, %s6
  %s8 = sld [smem:[#allocation0]]
  $region65: #{bottleneck_forward.5} parent=0
    _
  %s10 = ssub.s32 1, %s8
  %s11 = scalar_select 0, %s10, %s8
  loop: start=0, step=1, limit=4
  $region2: #{bottleneck_forward.5} parent=0 // loop_pre_header
    _
  $region3: #{bottleneck_forward.5} parent=0 // loop_header
    %s13 = sphi 0, %s17
    %p14 = scmp.ge.s32.totalorder %s13, 4
    %s23 = sphi 0, %s25
    %s26 = sphi 0, %s23
    %s27 = sphi 0, %s26
    %s43 = sphi 0, %s27
    %s47 = sphi 0, %s47
    %s49 = sphi 0, %s47
    %s50 = sphi 0, %s49
    %s64 = sphi 0, %s50
    %s68 = sphi 0, %s68
    %s70 = sphi 0, %s68
    %s71 = sphi 0, %s70
    %s85 = sphi 0, %s71
    %s89 = sphi 0, %s89
    %s91 = sphi 0, %s89
    %s92 = sphi 0, %s91
    %s106 = sphi 0, %s92
    %s112 = sphi 0, %s114
    %s115 = sphi 0, %s112
    %s116 = sphi 0, %s115
    %s132 = sphi 0, %s116
    %s138 = sphi 0, %s140
    %s141 = sphi 0, %s138
    %s142 = sphi 0, %s141
    %s158 = sphi 0, %s142
    %s164 = sphi 0, %s166
    %s167 = sphi 0, %s164
    %s168 = sphi 0, %s167
    %s184 = sphi 0, %s168
  $region4: #{bottleneck_forward.5} parent=0 // loop_header_branch
    %16 = sbr.rel (%p14) target = $region8
  $region5: #{bottleneck_forward.5} parent=0 // loop_body
    %s18 = ssub.s32 %s13, 1
    %s19 = ssub.s32 %s13, 2
    %s20 = sadd.s32 %s13, 1
    %s21 = ssub.s32 %s13, %s20
    %p22 = scmp.eq.s32.totalorder %s21, 0
    %s24 = sadd.s32 %s23, 1
    %s25 = scalar_select %p22, %s23, %s24
    %p28 = pneg %p22
    %p29 = scmp.eq.s32.totalorder %s13, 1
    %p30 = por %p28, %p29
    %p31 = scmp.ne.s32.totalorder %s23, %s26
    %p32 = scmp.eq.s32.totalorder %s13, 0
    %p33 = por %p31, %p32
    %p34 = scmp.ne.s32.totalorder %s23, %s26
    %p35 = scmp.eq.s32.totalorder %s18, 1
    %p36 = por %p34, %p35
    %p37 = scmp.ne.s32.totalorder %s26, %s27
    %p38 = scmp.eq.s32.totalorder %s18, 0
    %p39 = por %p37, %p38
    %p40 = scmp.ne.s32.totalorder %s26, %s27
    %p41 = scmp.eq.s32.totalorder %s19, 1
    %p42 = por %p40, %p41
    %p44 = scmp.ne.s32.totalorder %s27, %s43
    %p45 = scmp.eq.s32.totalorder %s19, 0
    %p46 = por %p44, %p45
    %s48 = sadd.s32 %s47, 1
    %p51 = scmp.eq.s32.totalorder %s13, 1
    %p52 = scmp.ne.s32.totalorder %s47, %s49
    %p53 = scmp.eq.s32.totalorder %s13, 0
    %p54 = por %p52, %p53
    %p55 = scmp.ne.s32.totalorder %s47, %s49
    %p56 = scmp.eq.s32.totalorder %s18, 1
    %p57 = por %p55, %p56
    %p58 = scmp.ne.s32.totalorder %s49, %s50
    %p59 = scmp.eq.s32.totalorder %s18, 0
    %p60 = por %p58, %p59
    %p61 = scmp.ne.s32.totalorder %s49, %s50
    %p62 = scmp.eq.s32.totalorder %s19, 1
    %p63 = por %p61, %p62
    %p65 = scmp.ne.s32.totalorder %s50, %s64
    %p66 = scmp.eq.s32.totalorder %s19, 0
    %p67 = por %p65, %p66
    %s69 = sadd.s32 %s68, 1
    %p72 = scmp.eq.s32.totalorder %s13, 1
    %p73 = scmp.ne.s32.totalorder %s68, %s70
    %p74 = scmp.eq.s32.totalorder %s13, 0
    %p75 = por %p73, %p74
    %p76 = scmp.ne.s32.totalorder %s68, %s70
    %p77 = scmp.eq.s32.totalorder %s18, 1
    %p78 = por %p76, %p77
    %p79 = scmp.ne.s32.totalorder %s70, %s71
    %p80 = scmp.eq.s32.totalorder %s18, 0
    %p81 = por %p79, %p80
    %p82 = scmp.ne.s32.totalorder %s70, %s71
    %p83 = scmp.eq.s32.totalorder %s19, 1
    %p84 = por %p82, %p83
    %p86 = scmp.ne.s32.totalorder %s71, %s85
    %p87 = scmp.eq.s32.totalorder %s19, 0
    %p88 = por %p86, %p87
    %s90 = sadd.s32 %s89, 1
    %p93 = scmp.eq.s32.totalorder %s13, 1
    %p94 = scmp.ne.s32.totalorder %s89, %s91
    %p95 = scmp.eq.s32.totalorder %s13, 0
    %p96 = por %p94, %p95
    %p97 = scmp.ne.s32.totalorder %s89, %s91
    %p98 = scmp.eq.s32.totalorder %s18, 1
    %p99 = por %p97, %p98
    %p100 = scmp.ne.s32.totalorder %s91, %s92
    %p101 = scmp.eq.s32.totalorder %s18, 0
    %p102 = por %p100, %p101
    %p103 = scmp.ne.s32.totalorder %s91, %s92
    %p104 = scmp.eq.s32.totalorder %s19, 1
    %p105 = por %p103, %p104
    %p107 = scmp.ne.s32.totalorder %s92, %s106
    %p108 = scmp.eq.s32.totalorder %s19, 0
    %p109 = por %p107, %p108
    %s110 = ssub.s32 %s13, %s20
    %p111 = scmp.eq.s32.totalorder %s110, 0
    %s113 = sadd.s32 %s112, 1
    %s114 = scalar_select %p111, %s112, %s113
    %p117 = pneg %p111
    %p118 = scmp.eq.s32.totalorder %s13, 1
    %p119 = por %p117, %p118
    %p120 = scmp.ne.s32.totalorder %s112, %s115
    %p121 = scmp.eq.s32.totalorder %s13, 0
    %p122 = por %p120, %p121
    %p123 = scmp.ne.s32.totalorder %s112, %s115
    %p124 = scmp.eq.s32.totalorder %s18, 1
    %p125 = por %p123, %p124
    %p126 = scmp.ne.s32.totalorder %s115, %s116
    %p127 = scmp.eq.s32.totalorder %s18, 0
    %p128 = por %p126, %p127
    %p129 = scmp.ne.s32.totalorder %s115, %s116
    %p130 = scmp.eq.s32.totalorder %s19, 1
    %p131 = por %p129, %p130
    %p133 = scmp.ne.s32.totalorder %s116, %s132
    %p134 = scmp.eq.s32.totalorder %s19, 0
    %p135 = por %p133, %p134
    %s136 = ssub.s32 %s13, %s20
    %p137 = scmp.eq.s32.totalorder %s136, 0
    %s139 = sadd.s32 %s138, 1
    %s140 = scalar_select %p137, %s138, %s139
    %p143 = pneg %p137
    %p144 = scmp.eq.s32.totalorder %s13, 1
    %p145 = por %p143, %p144
    %p146 = scmp.ne.s32.totalorder %s138, %s141
    %p147 = scmp.eq.s32.totalorder %s13, 0
    %p148 = por %p146, %p147
    %p149 = scmp.ne.s32.totalorder %s138, %s141
    %p150 = scmp.eq.s32.totalorder %s18, 1
    %p151 = por %p149, %p150
    %p152 = scmp.ne.s32.totalorder %s141, %s142
    %p153 = scmp.eq.s32.totalorder %s18, 0
    %p154 = por %p152, %p153
    %p155 = scmp.ne.s32.totalorder %s141, %s142
    %p156 = scmp.eq.s32.totalorder %s19, 1
    %p157 = por %p155, %p156
    %p159 = scmp.ne.s32.totalorder %s142, %s158
    %p160 = scmp.eq.s32.totalorder %s19, 0
    %p161 = por %p159, %p160
    %s162 = ssub.s32 %s13, %s20
    %p163 = scmp.eq.s32.totalorder %s162, 0
    %s165 = sadd.s32 %s164, 1
    %s166 = scalar_select %p163, %s164, %s165
    %p169 = pneg %p163
    %p170 = scmp.eq.s32.totalorder %s13, 1
    %p171 = por %p169, %p170
    %p172 = scmp.ne.s32.totalorder %s164, %s167
    %p173 = scmp.eq.s32.totalorder %s13, 0
    %p174 = por %p172, %p173
    %p175 = scmp.ne.s32.totalorder %s164, %s167
    %p176 = scmp.eq.s32.totalorder %s18, 1
    %p177 = por %p175, %p176
    %p178 = scmp.ne.s32.totalorder %s167, %s168
    %p179 = scmp.eq.s32.totalorder %s18, 0
    %p180 = por %p178, %p179
    %p181 = scmp.ne.s32.totalorder %s167, %s168
    %p182 = scmp.eq.s32.totalorder %s19, 1
    %p183 = por %p181, %p182
    %p185 = scmp.ne.s32.totalorder %s168, %s184
    %p186 = scmp.eq.s32.totalorder %s19, 0
    %p187 = por %p185, %p186
    %p188 = scmp.le.s32.totalorder 1, %s13
    %p189 = scmp.lt.s32.totalorder %s13, 3
    %p190 = pnand %p188, %p189
    %p191 = pneg %p190
    // Predicated region
    $region9: #{bottleneck_forward.5} parent=5 // pred_check
      _
    $region10: #{bottleneck_forward.5} parent=5 // pred_check_branch
      %193 = sbr.rel (%p190) target = $region12
    $region11: #{bottleneck_forward.5} parent=5 // pred_region
      %s194 = ssub.s32 %s13, 1
      // Predicated region
      $region13: #{bottleneck_forward.5} parent=11 // pred_check
        %p195 = pneg %p60
      $region14: #{bottleneck_forward.5} parent=11 // pred_check_branch
        %197 = sbr.rel (%p195) target = $region16
      $region15: #{bottleneck_forward.5} parent=11 // pred_region
        _
      $region16: #{bottleneck_forward.5} parent=11 // pred_fallthru
        _
      // Predicated region
      $region17: #{bottleneck_forward.5} parent=11 // pred_check
        %p198 = pneg %p81
      $region18: #{bottleneck_forward.5} parent=11 // pred_check_branch
        %200 = sbr.rel (%p198) target = $region20
      $region19: #{bottleneck_forward.5} parent=11 // pred_region
        _
      $region20: #{bottleneck_forward.5} parent=11 // pred_fallthru
        _
      // Predicated region
      $region21: #{bottleneck_forward.5} parent=11 // pred_check
        %p201 = pneg %p102
      $region22: #{bottleneck_forward.5} parent=11 // pred_check_branch
        %203 = sbr.rel (%p201) target = $region24
      $region23: #{bottleneck_forward.5} parent=11 // pred_region
        _
      $region24: #{bottleneck_forward.5} parent=11 // pred_fallthru
        _
    $region12: #{bottleneck_forward.5} parent=5 // pred_fallthru
      _
    %p204 = scmp.lt.s32.totalorder %s13, 2
    // Predicated region
    $region25: #{bottleneck_forward.5} parent=5 // pred_check
      %p205 = pneg %p204
    $region26: #{bottleneck_forward.5} parent=5 // pred_check_branch
      %207 = sbr.rel (%p205) target = $region28
    $region27: #{bottleneck_forward.5} parent=5 // pred_region
      // Predicated region
      $region29: #{bottleneck_forward.5} parent=27 // pred_check
        %p208 = pneg %p33
      $region30: #{bottleneck_forward.5} parent=27 // pred_check_branch
        %210 = sbr.rel (%p208) target = $region32
      $region31: #{bottleneck_forward.5} parent=27 // pred_region
        %p211 = scmp.lt.s32.totalorder %s13, 1
        %s212 = scalar_select %p211, %s13, 1
        %s213 = smul.addr %s212, 32
        %s214 = smul.addr %s213, 4
        %s215 = scalar_lea.vmem %s0, %s214
      $region32: #{bottleneck_forward.5} parent=27 // pred_fallthru
        _
    $region28: #{bottleneck_forward.5} parent=5 // pred_fallthru
      _
    %p216 = scmp.le.s32.totalorder 1, %s13
    %p217 = scmp.lt.s32.totalorder %s13, 3
    %p218 = pnand %p216, %p217
    %p219 = pneg %p218
    // Predicated region
    $region33: #{bottleneck_forward.5} parent=5 // pred_check
      _
    $region34: #{bottleneck_forward.5} parent=5 // pred_check_branch
      %221 = sbr.rel (%p218) target = $region36
    $region35: #{bottleneck_forward.5} parent=5 // pred_region
      %s222 = ssub.s32 %s13, 1
      %p223 = scmp.lt.s32.totalorder %s18, 1
      %s224 = scalar_select %p223, %s18, 1
      %s225 = smul.addr %s224, 32
      %s226 = smul.addr %s225, 4
      %s227 = scalar_lea.vmem %s0, %s226
      %p228 = pneg %p39
      %p229 = pneg %p36
      %p230 = pneg %p60
      %p231 = pneg %p57
      %p232 = pneg %p81
      %p233 = pneg %p78
      %p234 = pneg %p102
      %p235 = pneg %p99
      %p236 = pneg %p128
      %p237 = pneg %p125
      %p238 = scmp.lt.s32.totalorder %s18, 1
      %s239 = scalar_select %p238, %s18, 1
      %s240 = smul.addr %s239, 32
      %s241 = smul.addr %s240, 4
      %s242 = scalar_lea.vmem %s4, %s241
      %p243 = pneg %p154
      %p244 = pneg %p151
      %p245 = scmp.lt.s32.totalorder %s18, 1
      %s246 = scalar_select %p245, %s18, 1
      %s247 = scalar_lea.vmem %s5, %s246
      %p248 = pneg %p180
      %p249 = pneg %p177
      %p250 = scmp.lt.s32.totalorder %s18, 1
      %s251 = scalar_select %p250, %s18, 1
      %s252 = scalar_lea.vmem %s6, %s251
      %p253 = scmp.lt.s32.totalorder %s18, 1
      %s254 = scalar_select %p253, %s18, 1
      %s255 = smul.addr %s254, 32
      %s256 = smul.addr %s255, 4
      %s257 = scalar_lea.vmem %s0, %s256
      %p258 = scmp.lt.s32.totalorder %s18, 1
      %s259 = scalar_select %p258, %s18, 1
      %s260 = smul.addr %s259, 32
      %s261 = smul.addr %s260, 4
      %s262 = scalar_lea.vmem %s4, %s261
      %p263 = scmp.lt.s32.totalorder %s18, 1
      %s264 = scalar_select %p263, %s18, 1
      %s265 = scalar_lea.vmem %s5, %s264
      %p266 = scmp.lt.s32.totalorder %s18, 1
      %s267 = scalar_select %p266, %s18, 1
      %s268 = scalar_lea.vmem %s6, %s267
      %270 = vst [vmem:[#allocation2] sm:$0xff] 0.0
      %271 = vst [vmem:[#allocation2 + $0x8] sm:$0xff] 0.0
      %272 = vst [vmem:[#allocation2 + $0x10] sm:$0x3] 0.0
      %273 = vst [vmem:[#allocation2 + $0x18] sm:$0xff] 0.0
      %274 = vst [vmem:[#allocation2 + $0x20] sm:$0xff] 0.0
      %275 = vst [vmem:[#allocation2 + $0x28] sm:$0x3] 0.0
      %276 = vst [vmem:[#allocation2 + $0x30] sm:$0xff] 0.0
      %277 = vst [vmem:[#allocation2 + $0x38] sm:$0xff] 0.0
      %278 = vst [vmem:[#allocation2 + $0x40] sm:$0x3] 0.0
      %279 = vst [vmem:[#allocation2 + $0x48] sm:$0xff] 0.0
      %280 = vst [vmem:[#allocation2 + $0x50] sm:$0xff] 0.0
      %281 = vst [vmem:[#allocation2 + $0x58] sm:$0x3] 0.0
      %282 = vst [vmem:[#allocation2 + $0x60] sm:$0xff] 0.0
      %283 = vst [vmem:[#allocation2 + $0x68] sm:$0xff] 0.0
      %284 = vst [vmem:[#allocation2 + $0x70] sm:$0x3] 0.0
      %285 = vst [vmem:[#allocation2 + $0x78] sm:$0xff] 0.0
      %286 = vst [vmem:[#allocation2 + $0x80] sm:$0xff] 0.0
      %287 = vst [vmem:[#allocation2 + $0x88] sm:$0x3] 0.0
      %288 = vst [vmem:[#allocation2 + $0x90] sm:$0xff] 0.0
      %289 = vst [vmem:[#allocation2 + $0x98] sm:$0xff] 0.0
      %290 = vst [vmem:[#allocation2 + $0xa0] sm:$0x3] 0.0
      %291 = vst [vmem:[#allocation2 + $0xa8] sm:$0xff] 0.0
      %292 = vst [vmem:[#allocation2 + $0xb0] sm:$0xff] 0.0
      %293 = vst [vmem:[#allocation2 + $0xb8] sm:$0x3] 0.0
      %294 = vst [vmem:[#allocation2 + $0xc0] sm:$0xff] 0.0
      %295 = vst [vmem:[#allocation2 + $0xc8] sm:$0xff] 0.0
      %296 = vst [vmem:[#allocation2 + $0xd0] sm:$0x3] 0.0
      %297 = vst [vmem:[#allocation2 + $0xd8] sm:$0xff] 0.0
      %298 = vst [vmem:[#allocation2 + $0xe0] sm:$0xff] 0.0
      %299 = vst [vmem:[#allocation2 + $0xe8] sm:$0x3] 0.0
      %300 = vst [vmem:[#allocation2 + $0xf0] sm:$0xff] 0.0
      %301 = vst [vmem:[#allocation2 + $0xf8] sm:$0xff] 0.0
      %302 = vst [vmem:[#allocation2 + $0x100] sm:$0x3] 0.0
      %303 = vst [vmem:[#allocation2 + $0x108] sm:$0xff] 0.0
      %304 = vst [vmem:[#allocation2 + $0x110] sm:$0xff] 0.0
      %305 = vst [vmem:[#allocation2 + $0x118] sm:$0x3] 0.0
      %306 = vst [vmem:[#allocation2 + $0x120] sm:$0xff] 0.0
      %307 = vst [vmem:[#allocation2 + $0x128] sm:$0xff] 0.0
      %308 = vst [vmem:[#allocation2 + $0x130] sm:$0x3] 0.0
      %309 = vst [vmem:[#allocation2 + $0x138] sm:$0xff] 0.0
      %310 = vst [vmem:[#allocation2 + $0x140] sm:$0xff] 0.0
      %311 = vst [vmem:[#allocation2 + $0x148] sm:$0x3] 0.0
      %312 = vst [vmem:[#allocation2 + $0x150] sm:$0xff] 0.0
      %313 = vst [vmem:[#allocation2 + $0x158] sm:$0xff] 0.0
      %314 = vst [vmem:[#allocation2 + $0x160] sm:$0x3] 0.0
      %315 = vst [vmem:[#allocation2 + $0x168] sm:$0xff] 0.0
      %316 = vst [vmem:[#allocation2 + $0x170] sm:$0xff] 0.0
      %317 = vst [vmem:[#allocation2 + $0x178] sm:$0x3] 0.0
      %318 = vst [vmem:[#allocation2 + $0x180] sm:$0xff] 0.0
      %319 = vst [vmem:[#allocation2 + $0x188] sm:$0xff] 0.0
      %320 = vst [vmem:[#allocation2 + $0x190] sm:$0x3] 0.0
      %321 = vst [vmem:[#allocation2 + $0x198] sm:$0xff] 0.0
      %322 = vst [vmem:[#allocation2 + $0x1a0] sm:$0xff] 0.0
      %323 = vst [vmem:[#allocation2 + $0x1a8] sm:$0x3] 0.0
      %v324 = vld [vmem:[%s1] sm:$0x1]
      %v325 = vld [vmem:[%s2] sm:$0x1]
      %v326 = vld [vmem:[%s257] sm:$0xf]
      %v327 = vld [vmem:[%s257 + $0x4] sm:$0xf]
      %v328 = vld [vmem:[%s257 + $0x8] sm:$0xf]
      %v329 = vld [vmem:[%s257 + $0xc] sm:$0xf]
      %v330 = vld [vmem:[%s257 + $0x10] sm:$0xf]
      %v331 = vld [vmem:[%s257 + $0x14] sm:$0xf]
      %v332 = vld [vmem:[%s257 + $0x18] sm:$0xf]
      %v333 = vld [vmem:[%s257 + $0x1c] sm:$0xf]
      %v334 = vld [vmem:[%s257 + $0x20] sm:$0xf]
      %v335 = vld [vmem:[%s257 + $0x24] sm:$0xf]
      %v336 = vld [vmem:[%s257 + $0x28] sm:$0xf]
      %v337 = vld [vmem:[%s257 + $0x2c] sm:$0xf]
      %v338 = vld [vmem:[%s257 + $0x30] sm:$0xf]
      %v339 = vld [vmem:[%s257 + $0x34] sm:$0xf]
      %v340 = vld [vmem:[%s257 + $0x38] sm:$0xf]
      %v341 = vld [vmem:[%s257 + $0x3c] sm:$0xf]
      %v342 = vld [vmem:[%s257 + $0x40] sm:$0xf]
      %v343 = vld [vmem:[%s257 + $0x44] sm:$0xf]
      %v344 = vld [vmem:[%s257 + $0x48] sm:$0xf]
      %v345 = vld [vmem:[%s257 + $0x4c] sm:$0xf]
      %v346 = vld [vmem:[%s257 + $0x50] sm:$0xf]
      %v347 = vld [vmem:[%s257 + $0x54] sm:$0xf]
      %v348 = vld [vmem:[%s257 + $0x58] sm:$0xf]
      %v349 = vld [vmem:[%s257 + $0x5c] sm:$0xf]
      %v350 = vld [vmem:[%s257 + $0x60] sm:$0xf]
      %v351 = vld [vmem:[%s257 + $0x64] sm:$0xf]
      %v352 = vld [vmem:[%s257 + $0x68] sm:$0xf]
      %v353 = vld [vmem:[%s257 + $0x6c] sm:$0xf]
      %v354 = vld [vmem:[%s257 + $0x70] sm:$0xf]
      %v355 = vld [vmem:[%s257 + $0x74] sm:$0xf]
      %v356 = vld [vmem:[%s257 + $0x78] sm:$0xf]
      %v357 = vld [vmem:[%s257 + $0x7c] sm:$0xf]
      %v358 = vunpack.c.l.bf16 %v326
      %v359 = vunpack.c.l.bf16 %v327
      %v360 = vunpack.c.l.bf16 %v328
      %v361 = vunpack.c.l.bf16 %v329
      %v362 = vunpack.c.l.bf16 %v330
      %v363 = vunpack.c.l.bf16 %v331
      %v364 = vunpack.c.l.bf16 %v332
      %v365 = vunpack.c.l.bf16 %v333
      %v366 = vunpack.c.l.bf16 %v334
      %v367 = vunpack.c.l.bf16 %v335
      %v368 = vunpack.c.l.bf16 %v336
      %v369 = vunpack.c.l.bf16 %v337
      %v370 = vunpack.c.l.bf16 %v338
      %v371 = vunpack.c.l.bf16 %v339
      %v372 = vunpack.c.l.bf16 %v340
      %v373 = vunpack.c.l.bf16 %v341
      %v374 = vunpack.c.l.bf16 %v342
      %v375 = vunpack.c.l.bf16 %v343
      %v376 = vunpack.c.l.bf16 %v344
      %v377 = vunpack.c.l.bf16 %v345
      %v378 = vunpack.c.l.bf16 %v346
      %v379 = vunpack.c.l.bf16 %v347
      %v380 = vunpack.c.l.bf16 %v348
      %v381 = vunpack.c.l.bf16 %v349
      %v382 = vunpack.c.l.bf16 %v350
      %v383 = vunpack.c.l.bf16 %v351
      %v384 = vunpack.c.l.bf16 %v352
      %v385 = vunpack.c.l.bf16 %v353
      %v386 = vunpack.c.l.bf16 %v354
      %v387 = vunpack.c.l.bf16 %v355
      %v388 = vunpack.c.l.bf16 %v356
      %v389 = vunpack.c.l.bf16 %v357
      %v391 = vlaneseq
      %v392 = vshrl.u32 %v391, 7
      %v393 = vsub.s32 0, %v392
      %v394 = vrot.slane %v324, %v393
      %v396 = vmul.f32 %v358, %v394
      %v397 = vmul.f32 %v359, %v394
      %v398 = vmul.f32 %v360, %v394
      %v399 = vmul.f32 %v361, %v394
      %v400 = vmul.f32 %v362, %v394
      %v401 = vmul.f32 %v363, %v394
      %v402 = vmul.f32 %v364, %v394
      %v403 = vmul.f32 %v365, %v394
      %v404 = vmul.f32 %v366, %v394
      %v405 = vmul.f32 %v367, %v394
      %v406 = vmul.f32 %v368, %v394
      %v407 = vmul.f32 %v369, %v394
      %v408 = vmul.f32 %v370, %v394
      %v409 = vmul.f32 %v371, %v394
      %v410 = vmul.f32 %v372, %v394
      %v411 = vmul.f32 %v373, %v394
      %v412 = vmul.f32 %v374, %v394
      %v413 = vmul.f32 %v375, %v394
      %v414 = vmul.f32 %v376, %v394
      %v415 = vmul.f32 %v377, %v394
      %v416 = vmul.f32 %v378, %v394
      %v417 = vmul.f32 %v379, %v394
      %v418 = vmul.f32 %v380, %v394
      %v419 = vmul.f32 %v381, %v394
      %v420 = vmul.f32 %v382, %v394
      %v421 = vmul.f32 %v383, %v394
      %v422 = vmul.f32 %v384, %v394
      %v423 = vmul.f32 %v385, %v394
      %v424 = vmul.f32 %v386, %v394
      %v425 = vmul.f32 %v387, %v394
      %v426 = vmul.f32 %v388, %v394
      %v427 = vmul.f32 %v389, %v394
      %v429 = vlaneseq
      %v430 = vshrl.u32 %v429, 7
      %v431 = vsub.s32 0, %v430
      %v432 = vrot.slane %v325, %v431
      %v434 = vadd.f32 %v396, %v432
      %v435 = vadd.f32 %v397, %v432
      %v436 = vadd.f32 %v398, %v432
      %v437 = vadd.f32 %v399, %v432
      %v438 = vadd.f32 %v400, %v432
      %v439 = vadd.f32 %v401, %v432
      %v440 = vadd.f32 %v402, %v432
      %v441 = vadd.f32 %v403, %v432
      %v442 = vadd.f32 %v404, %v432
      %v443 = vadd.f32 %v405, %v432
      %v444 = vadd.f32 %v406, %v432
      %v445 = vadd.f32 %v407, %v432
      %v446 = vadd.f32 %v408, %v432
      %v447 = vadd.f32 %v409, %v432
      %v448 = vadd.f32 %v410, %v432
      %v449 = vadd.f32 %v411, %v432
      %v450 = vadd.f32 %v412, %v432
      %v451 = vadd.f32 %v413, %v432
      %v452 = vadd.f32 %v414, %v432
      %v453 = vadd.f32 %v415, %v432
      %v454 = vadd.f32 %v416, %v432
      %v455 = vadd.f32 %v417, %v432
      %v456 = vadd.f32 %v418, %v432
      %v457 = vadd.f32 %v419, %v432
      %v458 = vadd.f32 %v420, %v432
      %v459 = vadd.f32 %v421, %v432
      %v460 = vadd.f32 %v422, %v432
      %v461 = vadd.f32 %v423, %v432
      %v462 = vadd.f32 %v424, %v432
      %v463 = vadd.f32 %v425, %v432
      %v464 = vadd.f32 %v426, %v432
      %v465 = vadd.f32 %v427, %v432
      %v466 = vmax.f32 %v434, 0.0
      %v467 = vmax.f32 %v435, 0.0
      %v468 = vmax.f32 %v436, 0.0
      %v469 = vmax.f32 %v437, 0.0
      %v470 = vmax.f32 %v438, 0.0
      %v471 = vmax.f32 %v439, 0.0
      %v472 = vmax.f32 %v440, 0.0
      %v473 = vmax.f32 %v441, 0.0
      %v474 = vmax.f32 %v442, 0.0
      %v475 = vmax.f32 %v443, 0.0
      %v476 = vmax.f32 %v444, 0.0
      %v477 = vmax.f32 %v445, 0.0
      %v478 = vmax.f32 %v446, 0.0
      %v479 = vmax.f32 %v447, 0.0
      %v480 = vmax.f32 %v448, 0.0
      %v481 = vmax.f32 %v449, 0.0
      %v482 = vmax.f32 %v450, 0.0
      %v483 = vmax.f32 %v451, 0.0
      %v484 = vmax.f32 %v452, 0.0
      %v485 = vmax.f32 %v453, 0.0
      %v486 = vmax.f32 %v454, 0.0
      %v487 = vmax.f32 %v455, 0.0
      %v488 = vmax.f32 %v456, 0.0
      %v489 = vmax.f32 %v457, 0.0
      %v490 = vmax.f32 %v458, 0.0
      %v491 = vmax.f32 %v459, 0.0
      %v492 = vmax.f32 %v460, 0.0
      %v493 = vmax.f32 %v461, 0.0
      %v494 = vmax.f32 %v462, 0.0
      %v495 = vmax.f32 %v463, 0.0
      %v496 = vmax.f32 %v464, 0.0
      %v497 = vmax.f32 %v465, 0.0
      %s498 = scalar_lea.vmem [#allocation2], 24
      %499 = vst [vmem:[%s498 + $0x1] sm:$0xff] %v466
      %500 = vst [vmem:[%s498 + $0x9] sm:$0xff] %v467
      %501 = vst [vmem:[%s498 + $0x19] sm:$0xff] %v468
      %502 = vst [vmem:[%s498 + $0x21] sm:$0xff] %v469
      %503 = vst [vmem:[%s498 + $0x31] sm:$0xff] %v470
      %504 = vst [vmem:[%s498 + $0x39] sm:$0xff] %v471
      %505 = vst [vmem:[%s498 + $0x49] sm:$0xff] %v472
      %506 = vst [vmem:[%s498 + $0x51] sm:$0xff] %v473
      %507 = vst [vmem:[%s498 + $0x61] sm:$0xff] %v474
      %508 = vst [vmem:[%s498 + $0x69] sm:$0xff] %v475
      %509 = vst [vmem:[%s498 + $0x79] sm:$0xff] %v476
      %510 = vst [vmem:[%s498 + $0x81] sm:$0xff] %v477
      %511 = vst [vmem:[%s498 + $0x91] sm:$0xff] %v478
      %512 = vst [vmem:[%s498 + $0x99] sm:$0xff] %v479
      %513 = vst [vmem:[%s498 + $0xa9] sm:$0xff] %v480
      %514 = vst [vmem:[%s498 + $0xb1] sm:$0xff] %v481
      %515 = vst [vmem:[%s498 + $0xc1] sm:$0xff] %v482
      %516 = vst [vmem:[%s498 + $0xc9] sm:$0xff] %v483
      %517 = vst [vmem:[%s498 + $0xd9] sm:$0xff] %v484
      %518 = vst [vmem:[%s498 + $0xe1] sm:$0xff] %v485
      %519 = vst [vmem:[%s498 + $0xf1] sm:$0xff] %v486
      %520 = vst [vmem:[%s498 + $0xf9] sm:$0xff] %v487
      %521 = vst [vmem:[%s498 + $0x109] sm:$0xff] %v488
      %522 = vst [vmem:[%s498 + $0x111] sm:$0xff] %v489
      %523 = vst [vmem:[%s498 + $0x121] sm:$0xff] %v490
      %524 = vst [vmem:[%s498 + $0x129] sm:$0xff] %v491
      %525 = vst [vmem:[%s498 + $0x139] sm:$0xff] %v492
      %526 = vst [vmem:[%s498 + $0x141] sm:$0xff] %v493
      %527 = vst [vmem:[%s498 + $0x151] sm:$0xff] %v494
      %528 = vst [vmem:[%s498 + $0x159] sm:$0xff] %v495
      %529 = vst [vmem:[%s498 + $0x169] sm:$0xff] %v496
      %530 = vst [vmem:[%s498 + $0x171] sm:$0xff] %v497
      %v531 = vld [vmem:[#allocation2] sm:$0xff]
      %v532 = vld [vmem:[#allocation2 + $0x8] sm:$0xff]
      %v533 = vld [vmem:[#allocation2 + $0x18] sm:$0xff]
      %v534 = vld [vmem:[#allocation2 + $0x20] sm:$0xff]
      %v535 = vld [vmem:[#allocation2 + $0x30] sm:$0xff]
      %v536 = vld [vmem:[#allocation2 + $0x38] sm:$0xff]
      %v537 = vld [vmem:[#allocation2 + $0x48] sm:$0xff]
      %v538 = vld [vmem:[#allocation2 + $0x50] sm:$0xff]
      %v539 = vld [vmem:[#allocation2 + $0x60] sm:$0xff]
      %v540 = vld [vmem:[#allocation2 + $0x68] sm:$0xff]
      %v541 = vld [vmem:[#allocation2 + $0x78] sm:$0xff]
      %v542 = vld [vmem:[#allocation2 + $0x80] sm:$0xff]
      %v543 = vld [vmem:[#allocation2 + $0x90] sm:$0xff]
      %v544 = vld [vmem:[#allocation2 + $0x98] sm:$0xff]
      %v545 = vld [vmem:[#allocation2 + $0xa8] sm:$0xff]
      %v546 = vld [vmem:[#allocation2 + $0xb0] sm:$0xff]
      %v547 = vld [vmem:[#allocation2 + $0xc0] sm:$0xff]
      %v548 = vld [vmem:[#allocation2 + $0xc8] sm:$0xff]
      %v549 = vld [vmem:[#allocation2 + $0xd8] sm:$0xff]
      %v550 = vld [vmem:[#allocation2 + $0xe0] sm:$0xff]
      %v551 = vld [vmem:[#allocation2 + $0xf0] sm:$0xff]
      %v552 = vld [vmem:[#allocation2 + $0xf8] sm:$0xff]
      %v553 = vld [vmem:[#allocation2 + $0x108] sm:$0xff]
      %v554 = vld [vmem:[#allocation2 + $0x110] sm:$0xff]
      %v555 = vld [vmem:[#allocation2 + $0x120] sm:$0xff]
      %v556 = vld [vmem:[#allocation2 + $0x128] sm:$0xff]
      %v557 = vld [vmem:[#allocation2 + $0x138] sm:$0xff]
      %v558 = vld [vmem:[#allocation2 + $0x140] sm:$0xff]
      %v559 = vld [vmem:[#allocation2 + $0x150] sm:$0xff]
      %v560 = vld [vmem:[#allocation2 + $0x158] sm:$0xff]
      %v561 = vld [vmem:[#allocation2 + $0x168] sm:$0xff]
      %v562 = vld [vmem:[#allocation2 + $0x170] sm:$0xff]
      %v563 = vpack.c.bf16 %v532, %v531
      %v564 = vpack.c.bf16 %v534, %v533
      %v565 = vpack.c.bf16 %v536, %v535
      %v566 = vpack.c.bf16 %v538, %v537
      %v567 = vpack.c.bf16 %v540, %v539
      %v568 = vpack.c.bf16 %v542, %v541
      %v569 = vpack.c.bf16 %v544, %v543
      %v570 = vpack.c.bf16 %v546, %v545
      %v571 = vpack.c.bf16 %v548, %v547
      %v572 = vpack.c.bf16 %v550, %v549
      %v573 = vpack.c.bf16 %v552, %v551
      %v574 = vpack.c.bf16 %v554, %v553
      %v575 = vpack.c.bf16 %v556, %v555
      %v576 = vpack.c.bf16 %v558, %v557
      %v577 = vpack.c.bf16 %v560, %v559
      %v578 = vpack.c.bf16 %v562, %v561
      %v579 = vld [vmem:[%s3] sm:$0xf]
      %v580 = vld [vmem:[%s3 + $0x4] sm:$0xf]
      %v581 = vld [vmem:[%s3 + $0x8] sm:$0xf]
      %v582 = vld [vmem:[%s3 + $0xc] sm:$0xf]
      %v583 = vld [vmem:[%s3 + $0x10] sm:$0xf]
      %v584 = vld [vmem:[%s3 + $0x14] sm:$0xf]
      %v585 = vld [vmem:[%s3 + $0x18] sm:$0xf]
      %v586 = vld [vmem:[%s3 + $0x1c] sm:$0xf]
      %v587 = vld [vmem:[%s3 + $0x20] sm:$0xf]
      %v588 = vld [vmem:[%s3 + $0x24] sm:$0xf]
      %v589 = vld [vmem:[%s3 + $0x28] sm:$0xf]
      %v590 = vld [vmem:[%s3 + $0x2c] sm:$0xf]
      %v591 = vld [vmem:[%s3 + $0x30] sm:$0xf]
      %v592 = vld [vmem:[%s3 + $0x34] sm:$0xf]
      %v593 = vld [vmem:[%s3 + $0x38] sm:$0xf]
      %v594 = vld [vmem:[%s3 + $0x3c] sm:$0xf]
      %v595 = vld [vmem:[#allocation2 + $0x1] sm:$0xff]
      %v596 = vld [vmem:[#allocation2 + $0x9] sm:$0xff]
      %v597 = vld [vmem:[#allocation2 + $0x19] sm:$0xff]
      %v598 = vld [vmem:[#allocation2 + $0x21] sm:$0xff]
      %v599 = vld [vmem:[#allocation2 + $0x31] sm:$0xff]
      %v600 = vld [vmem:[#allocation2 + $0x39] sm:$0xff]
      %v601 = vld [vmem:[#allocation2 + $0x49] sm:$0xff]
      %v602 = vld [vmem:[#allocation2 + $0x51] sm:$0xff]
      %v603 = vld [vmem:[#allocation2 + $0x61] sm:$0xff]
      %v604 = vld [vmem:[#allocation2 + $0x69] sm:$0xff]
      %v605 = vld [vmem:[#allocation2 + $0x79] sm:$0xff]
      %v606 = vld [vmem:[#allocation2 + $0x81] sm:$0xff]
      %v607 = vld [vmem:[#allocation2 + $0x91] sm:$0xff]
      %v608 = vld [vmem:[#allocation2 + $0x99] sm:$0xff]
      %v609 = vld [vmem:[#allocation2 + $0xa9] sm:$0xff]
      %v610 = vld [vmem:[#allocation2 + $0xb1] sm:$0xff]
      %v611 = vld [vmem:[#allocation2 + $0xc1] sm:$0xff]
      %v612 = vld [vmem:[#allocation2 + $0xc9] sm:$0xff]
      %v613 = vld [vmem:[#allocation2 + $0xd9] sm:$0xff]
      %v614 = vld [vmem:[#allocation2 + $0xe1] sm:$0xff]
      %v615 = vld [vmem:[#allocation2 + $0xf1] sm:$0xff]
      %v616 = vld [vmem:[#allocation2 + $0xf9] sm:$0xff]
      %v617 = vld [vmem:[#allocation2 + $0x109] sm:$0xff]
      %v618 = vld [vmem:[#allocation2 + $0x111] sm:$0xff]
      %v619 = vld [vmem:[#allocation2 + $0x121] sm:$0xff]
      %v620 = vld [vmem:[#allocation2 + $0x129] sm:$0xff]
      %v621 = vld [vmem:[#allocation2 + $0x139] sm:$0xff]
      %v622 = vld [vmem:[#allocation2 + $0x141] sm:$0xff]
      %v623 = vld [vmem:[#allocation2 + $0x151] sm:$0xff]
      %v624 = vld [vmem:[#allocation2 + $0x159] sm:$0xff]
      %v625 = vld [vmem:[#allocation2 + $0x169] sm:$0xff]
      %v626 = vld [vmem:[#allocation2 + $0x171] sm:$0xff]
      %v627 = vpack.c.bf16 %v596, %v595
      %v628 = vpack.c.bf16 %v598, %v597
      %v629 = vpack.c.bf16 %v600, %v599
      %v630 = vpack.c.bf16 %v602, %v601
      %v631 = vpack.c.bf16 %v604, %v603
      %v632 = vpack.c.bf16 %v606, %v605
      %v633 = vpack.c.bf16 %v608, %v607
      %v634 = vpack.c.bf16 %v610, %v609
      %v635 = vpack.c.bf16 %v612, %v611
      %v636 = vpack.c.bf16 %v614, %v613
      %v637 = vpack.c.bf16 %v616, %v615
      %v638 = vpack.c.bf16 %v618, %v617
      %v639 = vpack.c.bf16 %v620, %v619
      %v640 = vpack.c.bf16 %v622, %v621
      %v641 = vpack.c.bf16 %v624, %v623
      %v642 = vpack.c.bf16 %v626, %v625
      %s643 = scalar_lea.vmem %s3, 64
      %v644 = vld [vmem:[%s643] sm:$0xf]
      %v645 = vld [vmem:[%s643 + $0x4] sm:$0xf]
      %v646 = vld [vmem:[%s643 + $0x8] sm:$0xf]
      %v647 = vld [vmem:[%s643 + $0xc] sm:$0xf]
      %v648 = vld [vmem:[%s643 + $0x10] sm:$0xf]
      %v649 = vld [vmem:[%s643 + $0x14] sm:$0xf]
      %v650 = vld [vmem:[%s643 + $0x18] sm:$0xf]
      %v651 = vld [vmem:[%s643 + $0x1c] sm:$0xf]
      %v652 = vld [vmem:[%s643 + $0x20] sm:$0xf]
      %v653 = vld [vmem:[%s643 + $0x24] sm:$0xf]
      %v654 = vld [vmem:[%s643 + $0x28] sm:$0xf]
      %v655 = vld [vmem:[%s643 + $0x2c] sm:$0xf]
      %v656 = vld [vmem:[%s643 + $0x30] sm:$0xf]
      %v657 = vld [vmem:[%s643 + $0x34] sm:$0xf]
      %v658 = vld [vmem:[%s643 + $0x38] sm:$0xf]
      %v659 = vld [vmem:[%s643 + $0x3c] sm:$0xf]
      %v676 = vunpack.c.l.b16 %v644
      %v677 = vunpack.c.l.b16 %v645
      %v678 = vunpack.c.l.b16 %v646
      %v679 = vunpack.c.l.b16 %v647
      %v680 = vunpack.c.l.b16 %v648
      %v681 = vunpack.c.l.b16 %v649
      %v682 = vunpack.c.l.b16 %v650
      %v683 = vunpack.c.l.b16 %v651
      %v684 = vunpack.c.l.b16 %v652
      %v685 = vunpack.c.l.b16 %v653
      %v686 = vunpack.c.l.b16 %v654
      %v687 = vunpack.c.l.b16 %v655
      %v688 = vunpack.c.l.b16 %v656
      %v689 = vunpack.c.l.b16 %v657
      %v690 = vunpack.c.l.b16 %v658
      %v691 = vunpack.c.l.b16 %v659
      %v692 = vpack.c.b16 %v677, %v676
      %v693 = vpack.c.b16 %v679, %v678
      %v694 = vpack.c.b16 %v681, %v680
      %v695 = vpack.c.b16 %v683, %v682
      %v696 = vpack.c.b16 %v685, %v684
      %v697 = vpack.c.b16 %v687, %v686
      %v698 = vpack.c.b16 %v689, %v688
      %v699 = vpack.c.b16 %v691, %v690
      %708 = vmatprep.subr.bf16.mxu0 0
      %709 = vmatpush1.bf16.msra.mxu0 %v699
      %710 = vmatprep.subr.bf16.mxu0 0
      %711 = vmatpush1.bf16.msra.mxu0 %v698
      %712 = vmatprep.subr.bf16.mxu0 0
      %713 = vmatpush1.bf16.msra.mxu0 %v697
      %714 = vmatprep.subr.bf16.mxu0 0
      %715 = vmatpush1.bf16.msra.mxu0 %v696
      %716 = vmatprep.subr.bf16.mxu0 0
      %717 = vmatpush1.bf16.msra.mxu0 %v695
      %718 = vmatprep.subr.bf16.mxu0 0
      %719 = vmatpush1.bf16.msra.mxu0 %v694
      %720 = vmatprep.subr.bf16.mxu0 0
      %721 = vmatpush1.bf16.msra.mxu0 %v693
      %722 = vmatprep.subr.bf16.mxu0 0
      %723 = vmatpush1.bf16.msra.mxu0 %v692
      %724 = vmatprep.subr.bf16.mxu0 0
      %725 = vmatpush2.bf16.msra.mxu0 0
      %726 = vmatprep.subr.bf16.mxu0 0
      %727 = vmatpush2.bf16.msra.mxu0 0
      %728 = vmatprep.subr.bf16.mxu0 0
      %729 = vmatpush2.bf16.msra.mxu0 0
      %730 = vmatprep.subr.bf16.mxu0 0
      %731 = vmatpush2.bf16.msra.mxu0 0
      %732 = vmatprep.subr.bf16.mxu0 0
      %733 = vmatpush2.bf16.msra.mxu0 0
      %734 = vmatprep.subr.bf16.mxu0 0
      %735 = vmatpush2.bf16.msra.mxu0 0
      %736 = vmatprep.subr.bf16.mxu0 0
      %737 = vmatpush2.bf16.msra.mxu0 0
      %738 = vmatprep.subr.bf16.mxu0 0
      %739 = vmatpush2.bf16.msra.mxu0 0
      %740 = vmatprep.mubr.bf16.mxu0 0
      %741 = vmatmul.mubr.bf16.gmra.mxu0 %v627
      %v742 = vpop.f32.mrf.mxu0
      %v743 = vadd.f32 0.0, %v742
      %v744 = vpop.f32.mrf.mxu0
      %v745 = vpop.f32.mrf.mxu0
      %v746 = vadd.f32 0.0, %v745
      %v747 = vpop.f32.mrf.mxu0
      %748 = vmatprep.mubr.bf16.mxu0 0
      %749 = vmatmul.mubr.bf16.gmra.mxu0 %v628
      %v750 = vpop.f32.mrf.mxu0
      %v751 = vadd.f32 0.0, %v750
      %v752 = vpop.f32.mrf.mxu0
      %v753 = vpop.f32.mrf.mxu0
      %v754 = vadd.f32 0.0, %v753
      %v755 = vpop.f32.mrf.mxu0
      %756 = vmatprep.mubr.bf16.mxu0 0
      %757 = vmatmul.mubr.bf16.gmra.mxu0 %v629
      %v758 = vpop.f32.mrf.mxu0
      %v759 = vadd.f32 0.0, %v758
      %v760 = vpop.f32.mrf.mxu0
      %v761 = vpop.f32.mrf.mxu0
      %v762 = vadd.f32 0.0, %v761
      %v763 = vpop.f32.mrf.mxu0
      %764 = vmatprep.mubr.bf16.mxu0 0
      %765 = vmatmul.mubr.bf16.gmra.mxu0 %v630
      %v766 = vpop.f32.mrf.mxu0
      %v767 = vadd.f32 0.0, %v766
      %v768 = vpop.f32.mrf.mxu0
      %v769 = vpop.f32.mrf.mxu0
      %v770 = vadd.f32 0.0, %v769
      %v771 = vpop.f32.mrf.mxu0
      %772 = vmatprep.mubr.bf16.mxu0 0
      %773 = vmatmul.mubr.bf16.gmra.mxu0 %v631
      %v774 = vpop.f32.mrf.mxu0
      %v775 = vadd.f32 0.0, %v774
      %v776 = vpop.f32.mrf.mxu0
      %v777 = vpop.f32.mrf.mxu0
      %v778 = vadd.f32 0.0, %v777
      %v779 = vpop.f32.mrf.mxu0
      %780 = vmatprep.mubr.bf16.mxu0 0
      %781 = vmatmul.mubr.bf16.gmra.mxu0 %v632
      %v782 = vpop.f32.mrf.mxu0
      %v783 = vadd.f32 0.0, %v782
      %v784 = vpop.f32.mrf.mxu0
      %v785 = vpop.f32.mrf.mxu0
      %v786 = vadd.f32 0.0, %v785
      %v787 = vpop.f32.mrf.mxu0
      %788 = vmatprep.mubr.bf16.mxu0 0
      %789 = vmatmul.mubr.bf16.gmra.mxu0 %v633
      %v790 = vpop.f32.mrf.mxu0
      %v791 = vadd.f32 0.0, %v790
      %v792 = vpop.f32.mrf.mxu0
      %v793 = vpop.f32.mrf.mxu0
      %v794 = vadd.f32 0.0, %v793
      %v795 = vpop.f32.mrf.mxu0
      %796 = vmatprep.mubr.bf16.mxu0 0
      %797 = vmatmul.mubr.bf16.gmra.mxu0 %v634
      %v798 = vpop.f32.mrf.mxu0
      %v799 = vadd.f32 0.0, %v798
      %v800 = vpop.f32.mrf.mxu0
      %v801 = vpop.f32.mrf.mxu0
      %v802 = vadd.f32 0.0, %v801
      %v803 = vpop.f32.mrf.mxu0
      %804 = vmatprep.mubr.bf16.mxu0 0
      %805 = vmatmul.mubr.bf16.gmra.mxu0 %v635
      %v806 = vpop.f32.mrf.mxu0
      %v807 = vadd.f32 0.0, %v806
      %v808 = vpop.f32.mrf.mxu0
      %v809 = vpop.f32.mrf.mxu0
      %v810 = vadd.f32 0.0, %v809
      %v811 = vpop.f32.mrf.mxu0
      %812 = vmatprep.mubr.bf16.mxu0 0
      %813 = vmatmul.mubr.bf16.gmra.mxu0 %v636
      %v814 = vpop.f32.mrf.mxu0
      %v815 = vadd.f32 0.0, %v814
      %v816 = vpop.f32.mrf.mxu0
      %v817 = vpop.f32.mrf.mxu0
      %v818 = vadd.f32 0.0, %v817
      %v819 = vpop.f32.mrf.mxu0
      %820 = vmatprep.mubr.bf16.mxu0 0
      %821 = vmatmul.mubr.bf16.gmra.mxu0 %v637
      %v822 = vpop.f32.mrf.mxu0
      %v823 = vadd.f32 0.0, %v822
      %v824 = vpop.f32.mrf.mxu0
      %v825 = vpop.f32.mrf.mxu0
      %v826 = vadd.f32 0.0, %v825
      %v827 = vpop.f32.mrf.mxu0
      %828 = vmatprep.mubr.bf16.mxu0 0
      %829 = vmatmul.mubr.bf16.gmra.mxu0 %v638
      %v830 = vpop.f32.mrf.mxu0
      %v831 = vadd.f32 0.0, %v830
      %v832 = vpop.f32.mrf.mxu0
      %v833 = vpop.f32.mrf.mxu0
      %v834 = vadd.f32 0.0, %v833
      %v835 = vpop.f32.mrf.mxu0
      %836 = vmatprep.mubr.bf16.mxu0 0
      %837 = vmatmul.mubr.bf16.gmra.mxu0 %v639
      %v838 = vpop.f32.mrf.mxu0
      %v839 = vadd.f32 0.0, %v838
      %v840 = vpop.f32.mrf.mxu0
      %v841 = vpop.f32.mrf.mxu0
      %v842 = vadd.f32 0.0, %v841
      %v843 = vpop.f32.mrf.mxu0
      %844 = vmatprep.mubr.bf16.mxu0 0
      %845 = vmatmul.mubr.bf16.gmra.mxu0 %v640
      %v846 = vpop.f32.mrf.mxu0
      %v847 = vadd.f32 0.0, %v846
      %v848 = vpop.f32.mrf.mxu0
      %v849 = vpop.f32.mrf.mxu0
      %v850 = vadd.f32 0.0, %v849
      %v851 = vpop.f32.mrf.mxu0
      %852 = vmatprep.mubr.bf16.mxu0 0
      %853 = vmatmul.mubr.bf16.gmra.mxu0 %v641
      %v854 = vpop.f32.mrf.mxu0
      %v855 = vadd.f32 0.0, %v854
      %v856 = vpop.f32.mrf.mxu0
      %v857 = vpop.f32.mrf.mxu0
      %v858 = vadd.f32 0.0, %v857
      %v859 = vpop.f32.mrf.mxu0
      %860 = vmatprep.mubr.bf16.mxu0 0
      %861 = vmatmul.mubr.bf16.gmra.mxu0 %v642
      %v862 = vpop.f32.mrf.mxu0
      %v863 = vadd.f32 0.0, %v862
      %v864 = vpop.f32.mrf.mxu0
      %v865 = vpop.f32.mrf.mxu0
      %v866 = vadd.f32 0.0, %v865
      %v867 = vpop.f32.mrf.mxu0
      %868 = vdwg.mxu0
      %v885 = vunpack.c.l.b16 %v579
      %v886 = vunpack.c.l.b16 %v580
      %v887 = vunpack.c.l.b16 %v581
      %v888 = vunpack.c.l.b16 %v582
      %v889 = vunpack.c.l.b16 %v583
      %v890 = vunpack.c.l.b16 %v584
      %v891 = vunpack.c.l.b16 %v585
      %v892 = vunpack.c.l.b16 %v586
      %v893 = vunpack.c.l.b16 %v587
      %v894 = vunpack.c.l.b16 %v588
      %v895 = vunpack.c.l.b16 %v589
      %v896 = vunpack.c.l.b16 %v590
      %v897 = vunpack.c.l.b16 %v591
      %v898 = vunpack.c.l.b16 %v592
      %v899 = vunpack.c.l.b16 %v593
      %v900 = vunpack.c.l.b16 %v594
      %v901 = vpack.c.b16 %v886, %v885
      %v902 = vpack.c.b16 %v888, %v887
      %v903 = vpack.c.b16 %v890, %v889
      %v904 = vpack.c.b16 %v892, %v891
      %v905 = vpack.c.b16 %v894, %v893
      %v906 = vpack.c.b16 %v896, %v895
      %v907 = vpack.c.b16 %v898, %v897
      %v908 = vpack.c.b16 %v900, %v899
      %917 = vmatprep.subr.bf16.mxu0 0
      %918 = vmatpush1.bf16.msra.mxu0 %v908
      %919 = vmatprep.subr.bf16.mxu0 0
      %920 = vmatpush1.bf16.msra.mxu0 %v907
      %921 = vmatprep.subr.bf16.mxu0 0
      %922 = vmatpush1.bf16.msra.mxu0 %v906
      %923 = vmatprep.subr.bf16.mxu0 0
      %924 = vmatpush1.bf16.msra.mxu0 %v905
      %925 = vmatprep.subr.bf16.mxu0 0
      %926 = vmatpush1.bf16.msra.mxu0 %v904
      %927 = vmatprep.subr.bf16.mxu0 0
      %928 = vmatpush1.bf16.msra.mxu0 %v903
      %929 = vmatprep.subr.bf16.mxu0 0
      %930 = vmatpush1.bf16.msra.mxu0 %v902
      %931 = vmatprep.subr.bf16.mxu0 0
      %932 = vmatpush1.bf16.msra.mxu0 %v901
      %933 = vmatprep.subr.bf16.mxu0 0
      %934 = vmatpush2.bf16.msra.mxu0 0
      %935 = vmatprep.subr.bf16.mxu0 0
      %936 = vmatpush2.bf16.msra.mxu0 0
      %937 = vmatprep.subr.bf16.mxu0 0
      %938 = vmatpush2.bf16.msra.mxu0 0
      %939 = vmatprep.subr.bf16.mxu0 0
      %940 = vmatpush2.bf16.msra.mxu0 0
      %941 = vmatprep.subr.bf16.mxu0 0
      %942 = vmatpush2.bf16.msra.mxu0 0
      %943 = vmatprep.subr.bf16.mxu0 0
      %944 = vmatpush2.bf16.msra.mxu0 0
      %945 = vmatprep.subr.bf16.mxu0 0
      %946 = vmatpush2.bf16.msra.mxu0 0
      %947 = vmatprep.subr.bf16.mxu0 0
      %948 = vmatpush2.bf16.msra.mxu0 0
      %949 = vmatprep.mubr.bf16.mxu0 0
      %950 = vmatmul.mubr.bf16.gmra.mxu0 %v563
      %v951 = vpop.f32.mrf.mxu0
      %v952 = vadd.f32 %v743, %v951
      %v953 = vpop.f32.mrf.mxu0
      %v954 = vpop.f32.mrf.mxu0
      %v955 = vadd.f32 %v746, %v954
      %v956 = vpop.f32.mrf.mxu0
      %957 = vmatprep.mubr.bf16.mxu0 0
      %958 = vmatmul.mubr.bf16.gmra.mxu0 %v564
      %v959 = vpop.f32.mrf.mxu0
      %v960 = vadd.f32 %v751, %v959
      %v961 = vpop.f32.mrf.mxu0
      %v962 = vpop.f32.mrf.mxu0
      %v963 = vadd.f32 %v754, %v962
      %v964 = vpop.f32.mrf.mxu0
      %965 = vmatprep.mubr.bf16.mxu0 0
      %966 = vmatmul.mubr.bf16.gmra.mxu0 %v565
      %v967 = vpop.f32.mrf.mxu0
      %v968 = vadd.f32 %v759, %v967
      %v969 = vpop.f32.mrf.mxu0
      %v970 = vpop.f32.mrf.mxu0
      %v971 = vadd.f32 %v762, %v970
      %v972 = vpop.f32.mrf.mxu0
      %973 = vmatprep.mubr.bf16.mxu0 0
      %974 = vmatmul.mubr.bf16.gmra.mxu0 %v566
      %v975 = vpop.f32.mrf.mxu0
      %v976 = vadd.f32 %v767, %v975
      %v977 = vpop.f32.mrf.mxu0
      %v978 = vpop.f32.mrf.mxu0
      %v979 = vadd.f32 %v770, %v978
      %v980 = vpop.f32.mrf.mxu0
      %981 = vmatprep.mubr.bf16.mxu0 0
      %982 = vmatmul.mubr.bf16.gmra.mxu0 %v567
      %v983 = vpop.f32.mrf.mxu0
      %v984 = vadd.f32 %v775, %v983
      %v985 = vpop.f32.mrf.mxu0
      %v986 = vpop.f32.mrf.mxu0
      %v987 = vadd.f32 %v778, %v986
      %v988 = vpop.f32.mrf.mxu0
      %989 = vmatprep.mubr.bf16.mxu0 0
      %990 = vmatmul.mubr.bf16.gmra.mxu0 %v568
      %v991 = vpop.f32.mrf.mxu0
      %v992 = vadd.f32 %v783, %v991
      %v993 = vpop.f32.mrf.mxu0
      %v994 = vpop.f32.mrf.mxu0
      %v995 = vadd.f32 %v786, %v994
      %v996 = vpop.f32.mrf.mxu0
      %997 = vmatprep.mubr.bf16.mxu0 0
      %998 = vmatmul.mubr.bf16.gmra.mxu0 %v569
      %v999 = vpop.f32.mrf.mxu0
      %v1000 = vadd.f32 %v791, %v999
      %v1001 = vpop.f32.mrf.mxu0
      %v1002 = vpop.f32.mrf.mxu0
      %v1003 = vadd.f32 %v794, %v1002
      %v1004 = vpop.f32.mrf.mxu0
      %1005 = vmatprep.mubr.bf16.mxu0 0
      %1006 = vmatmul.mubr.bf16.gmra.mxu0 %v570
      %v1007 = vpop.f32.mrf.mxu0
      %v1008 = vadd.f32 %v799, %v1007
      %v1009 = vpop.f32.mrf.mxu0
      %v1010 = vpop.f32.mrf.mxu0
      %v1011 = vadd.f32 %v802, %v1010
      %v1012 = vpop.f32.mrf.mxu0
      %1013 = vmatprep.mubr.bf16.mxu0 0
      %1014 = vmatmul.mubr.bf16.gmra.mxu0 %v571
      %v1015 = vpop.f32.mrf.mxu0
      %v1016 = vadd.f32 %v807, %v1015
      %v1017 = vpop.f32.mrf.mxu0
      %v1018 = vpop.f32.mrf.mxu0
      %v1019 = vadd.f32 %v810, %v1018
      %v1020 = vpop.f32.mrf.mxu0
      %1021 = vmatprep.mubr.bf16.mxu0 0
      %1022 = vmatmul.mubr.bf16.gmra.mxu0 %v572
      %v1023 = vpop.f32.mrf.mxu0
      %v1024 = vadd.f32 %v815, %v1023
      %v1025 = vpop.f32.mrf.mxu0
      %v1026 = vpop.f32.mrf.mxu0
      %v1027 = vadd.f32 %v818, %v1026
      %v1028 = vpop.f32.mrf.mxu0
      %1029 = vmatprep.mubr.bf16.mxu0 0
      %1030 = vmatmul.mubr.bf16.gmra.mxu0 %v573
      %v1031 = vpop.f32.mrf.mxu0
      %v1032 = vadd.f32 %v823, %v1031
      %v1033 = vpop.f32.mrf.mxu0
      %v1034 = vpop.f32.mrf.mxu0
      %v1035 = vadd.f32 %v826, %v1034
      %v1036 = vpop.f32.mrf.mxu0
      %1037 = vmatprep.mubr.bf16.mxu0 0
      %1038 = vmatmul.mubr.bf16.gmra.mxu0 %v574
      %v1039 = vpop.f32.mrf.mxu0
      %v1040 = vadd.f32 %v831, %v1039
      %v1041 = vpop.f32.mrf.mxu0
      %v1042 = vpop.f32.mrf.mxu0
      %v1043 = vadd.f32 %v834, %v1042
      %v1044 = vpop.f32.mrf.mxu0
      %1045 = vmatprep.mubr.bf16.mxu0 0
      %1046 = vmatmul.mubr.bf16.gmra.mxu0 %v575
      %v1047 = vpop.f32.mrf.mxu0
      %v1048 = vadd.f32 %v839, %v1047
      %v1049 = vpop.f32.mrf.mxu0
      %v1050 = vpop.f32.mrf.mxu0
      %v1051 = vadd.f32 %v842, %v1050
      %v1052 = vpop.f32.mrf.mxu0
      %1053 = vmatprep.mubr.bf16.mxu0 0
      %1054 = vmatmul.mubr.bf16.gmra.mxu0 %v576
      %v1055 = vpop.f32.mrf.mxu0
      %v1056 = vadd.f32 %v847, %v1055
      %v1057 = vpop.f32.mrf.mxu0
      %v1058 = vpop.f32.mrf.mxu0
      %v1059 = vadd.f32 %v850, %v1058
      %v1060 = vpop.f32.mrf.mxu0
      %1061 = vmatprep.mubr.bf16.mxu0 0
      %1062 = vmatmul.mubr.bf16.gmra.mxu0 %v577
      %v1063 = vpop.f32.mrf.mxu0
      %v1064 = vadd.f32 %v855, %v1063
      %v1065 = vpop.f32.mrf.mxu0
      %v1066 = vpop.f32.mrf.mxu0
      %v1067 = vadd.f32 %v858, %v1066
      %v1068 = vpop.f32.mrf.mxu0
      %1069 = vmatprep.mubr.bf16.mxu0 0
      %1070 = vmatmul.mubr.bf16.gmra.mxu0 %v578
      %v1071 = vpop.f32.mrf.mxu0
      %v1072 = vadd.f32 %v863, %v1071
      %v1073 = vpop.f32.mrf.mxu0
      %v1074 = vpop.f32.mrf.mxu0
      %v1075 = vadd.f32 %v866, %v1074
      %v1076 = vpop.f32.mrf.mxu0
      %1077 = vdwg.mxu0
      %v1078 = vld [vmem:[#allocation2 + $0x2] sm:$0xff]
      %v1079 = vld [vmem:[#allocation2 + $0xa] sm:$0xff]
      %v1080 = vld [vmem:[#allocation2 + $0x1a] sm:$0xff]
      %v1081 = vld [vmem:[#allocation2 + $0x22] sm:$0xff]
      %v1082 = vld [vmem:[#allocation2 + $0x32] sm:$0xff]
      %v1083 = vld [vmem:[#allocation2 + $0x3a] sm:$0xff]
      %v1084 = vld [vmem:[#allocation2 + $0x4a] sm:$0xff]
      %v1085 = vld [vmem:[#allocation2 + $0x52] sm:$0xff]
      %v1086 = vld [vmem:[#allocation2 + $0x62] sm:$0xff]
      %v1087 = vld [vmem:[#allocation2 + $0x6a] sm:$0xff]
      %v1088 = vld [vmem:[#allocation2 + $0x7a] sm:$0xff]
      %v1089 = vld [vmem:[#allocation2 + $0x82] sm:$0xff]
      %v1090 = vld [vmem:[#allocation2 + $0x92] sm:$0xff]
      %v1091 = vld [vmem:[#allocation2 + $0x9a] sm:$0xff]
      %v1092 = vld [vmem:[#allocation2 + $0xaa] sm:$0xff]
      %v1093 = vld [vmem:[#allocation2 + $0xb2] sm:$0xff]
      %v1094 = vld [vmem:[#allocation2 + $0xc2] sm:$0xff]
      %v1095 = vld [vmem:[#allocation2 + $0xca] sm:$0xff]
      %v1096 = vld [vmem:[#allocation2 + $0xda] sm:$0xff]
      %v1097 = vld [vmem:[#allocation2 + $0xe2] sm:$0xff]
      %v1098 = vld [vmem:[#allocation2 + $0xf2] sm:$0xff]
      %v1099 = vld [vmem:[#allocation2 + $0xfa] sm:$0xff]
      %v1100 = vld [vmem:[#allocation2 + $0x10a] sm:$0xff]
      %v1101 = vld [vmem:[#allocation2 + $0x112] sm:$0xff]
      %v1102 = vld [vmem:[#allocation2 + $0x122] sm:$0xff]
      %v1103 = vld [vmem:[#allocation2 + $0x12a] sm:$0xff]
      %v1104 = vld [vmem:[#allocation2 + $0x13a] sm:$0xff]
      %v1105 = vld [vmem:[#allocation2 + $0x142] sm:$0xff]
      %v1106 = vld [vmem:[#allocation2 + $0x152] sm:$0xff]
      %v1107 = vld [vmem:[#allocation2 + $0x15a] sm:$0xff]
      %v1108 = vld [vmem:[#allocation2 + $0x16a] sm:$0xff]
      %v1109 = vld [vmem:[#allocation2 + $0x172] sm:$0xff]
      %v1110 = vpack.c.bf16 %v1079, %v1078
      %v1111 = vpack.c.bf16 %v1081, %v1080
      %v1112 = vpack.c.bf16 %v1083, %v1082
      %v1113 = vpack.c.bf16 %v1085, %v1084
      %v1114 = vpack.c.bf16 %v1087, %v1086
      %v1115 = vpack.c.bf16 %v1089, %v1088
      %v1116 = vpack.c.bf16 %v1091, %v1090
      %v1117 = vpack.c.bf16 %v1093, %v1092
      %v1118 = vpack.c.bf16 %v1095, %v1094
      %v1119 = vpack.c.bf16 %v1097, %v1096
      %v1120 = vpack.c.bf16 %v1099, %v1098
      %v1121 = vpack.c.bf16 %v1101, %v1100
      %v1122 = vpack.c.bf16 %v1103, %v1102
      %v1123 = vpack.c.bf16 %v1105, %v1104
      %v1124 = vpack.c.bf16 %v1107, %v1106
      %v1125 = vpack.c.bf16 %v1109, %v1108
      %s1126 = scalar_lea.vmem %s3, 128
      %v1127 = vld [vmem:[%s1126] sm:$0xf]
      %v1128 = vld [vmem:[%s1126 + $0x4] sm:$0xf]
      %v1129 = vld [vmem:[%s1126 + $0x8] sm:$0xf]
      %v1130 = vld [vmem:[%s1126 + $0xc] sm:$0xf]
      %v1131 = vld [vmem:[%s1126 + $0x10] sm:$0xf]
      %v1132 = vld [vmem:[%s1126 + $0x14] sm:$0xf]
      %v1133 = vld [vmem:[%s1126 + $0x18] sm:$0xf]
      %v1134 = vld [vmem:[%s1126 + $0x1c] sm:$0xf]
      %v1135 = vld [vmem:[%s1126 + $0x20] sm:$0xf]
      %v1136 = vld [vmem:[%s1126 + $0x24] sm:$0xf]
      %v1137 = vld [vmem:[%s1126 + $0x28] sm:$0xf]
      %v1138 = vld [vmem:[%s1126 + $0x2c] sm:$0xf]
      %v1139 = vld [vmem:[%s1126 + $0x30] sm:$0xf]
      %v1140 = vld [vmem:[%s1126 + $0x34] sm:$0xf]
      %v1141 = vld [vmem:[%s1126 + $0x38] sm:$0xf]
      %v1142 = vld [vmem:[%s1126 + $0x3c] sm:$0xf]
      %v1159 = vunpack.c.l.b16 %v1127
      %v1160 = vunpack.c.l.b16 %v1128
      %v1161 = vunpack.c.l.b16 %v1129
      %v1162 = vunpack.c.l.b16 %v1130
      %v1163 = vunpack.c.l.b16 %v1131
      %v1164 = vunpack.c.l.b16 %v1132
      %v1165 = vunpack.c.l.b16 %v1133
      %v1166 = vunpack.c.l.b16 %v1134
      %v1167 = vunpack.c.l.b16 %v1135
      %v1168 = vunpack.c.l.b16 %v1136
      %v1169 = vunpack.c.l.b16 %v1137
      %v1170 = vunpack.c.l.b16 %v1138
      %v1171 = vunpack.c.l.b16 %v1139
      %v1172 = vunpack.c.l.b16 %v1140
      %v1173 = vunpack.c.l.b16 %v1141
      %v1174 = vunpack.c.l.b16 %v1142
      %v1175 = vpack.c.b16 %v1160, %v1159
      %v1176 = vpack.c.b16 %v1162, %v1161
      %v1177 = vpack.c.b16 %v1164, %v1163
      %v1178 = vpack.c.b16 %v1166, %v1165
      %v1179 = vpack.c.b16 %v1168, %v1167
      %v1180 = vpack.c.b16 %v1170, %v1169
      %v1181 = vpack.c.b16 %v1172, %v1171
      %v1182 = vpack.c.b16 %v1174, %v1173
      %1191 = vmatprep.subr.bf16.mxu0 0
      %1192 = vmatpush1.bf16.msra.mxu0 %v1182
      %1193 = vmatprep.subr.bf16.mxu0 0
      %1194 = vmatpush1.bf16.msra.mxu0 %v1181
      %1195 = vmatprep.subr.bf16.mxu0 0
      %1196 = vmatpush1.bf16.msra.mxu0 %v1180
      %1197 = vmatprep.subr.bf16.mxu0 0
      %1198 = vmatpush1.bf16.msra.mxu0 %v1179
      %1199 = vmatprep.subr.bf16.mxu0 0
      %1200 = vmatpush1.bf16.msra.mxu0 %v1178
      %1201 = vmatprep.subr.bf16.mxu0 0
      %1202 = vmatpush1.bf16.msra.mxu0 %v1177
      %1203 = vmatprep.subr.bf16.mxu0 0
      %1204 = vmatpush1.bf16.msra.mxu0 %v1176
      %1205 = vmatprep.subr.bf16.mxu0 0
      %1206 = vmatpush1.bf16.msra.mxu0 %v1175
      %1207 = vmatprep.subr.bf16.mxu0 0
      %1208 = vmatpush2.bf16.msra.mxu0 0
      %1209 = vmatprep.subr.bf16.mxu0 0
      %1210 = vmatpush2.bf16.msra.mxu0 0
      %1211 = vmatprep.subr.bf16.mxu0 0
      %1212 = vmatpush2.bf16.msra.mxu0 0
      %1213 = vmatprep.subr.bf16.mxu0 0
      %1214 = vmatpush2.bf16.msra.mxu0 0
      %1215 = vmatprep.subr.bf16.mxu0 0
      %1216 = vmatpush2.bf16.msra.mxu0 0
      %1217 = vmatprep.subr.bf16.mxu0 0
      %1218 = vmatpush2.bf16.msra.mxu0 0
      %1219 = vmatprep.subr.bf16.mxu0 0
      %1220 = vmatpush2.bf16.msra.mxu0 0
      %1221 = vmatprep.subr.bf16.mxu0 0
      %1222 = vmatpush2.bf16.msra.mxu0 0
      %1223 = vmatprep.mubr.bf16.mxu0 0
      %1224 = vmatmul.mubr.bf16.gmra.mxu0 %v1110
      %v1225 = vpop.f32.mrf.mxu0
      %v1226 = vadd.f32 0.0, %v1225
      %v1227 = vpop.f32.mrf.mxu0
      %v1228 = vpop.f32.mrf.mxu0
      %v1229 = vadd.f32 0.0, %v1228
      %v1230 = vpop.f32.mrf.mxu0
      %1231 = vmatprep.mubr.bf16.mxu0 0
      %1232 = vmatmul.mubr.bf16.gmra.mxu0 %v1111
      %v1233 = vpop.f32.mrf.mxu0
      %v1234 = vadd.f32 0.0, %v1233
      %v1235 = vpop.f32.mrf.mxu0
      %v1236 = vpop.f32.mrf.mxu0
      %v1237 = vadd.f32 0.0, %v1236
      %v1238 = vpop.f32.mrf.mxu0
      %1239 = vmatprep.mubr.bf16.mxu0 0
      %1240 = vmatmul.mubr.bf16.gmra.mxu0 %v1112
      %v1241 = vpop.f32.mrf.mxu0
      %v1242 = vadd.f32 0.0, %v1241
      %v1243 = vpop.f32.mrf.mxu0
      %v1244 = vpop.f32.mrf.mxu0
      %v1245 = vadd.f32 0.0, %v1244
      %v1246 = vpop.f32.mrf.mxu0
      %1247 = vmatprep.mubr.bf16.mxu0 0
      %1248 = vmatmul.mubr.bf16.gmra.mxu0 %v1113
      %v1249 = vpop.f32.mrf.mxu0
      %v1250 = vadd.f32 0.0, %v1249
      %v1251 = vpop.f32.mrf.mxu0
      %v1252 = vpop.f32.mrf.mxu0
      %v1253 = vadd.f32 0.0, %v1252
      %v1254 = vpop.f32.mrf.mxu0
      %1255 = vmatprep.mubr.bf16.mxu0 0
      %1256 = vmatmul.mubr.bf16.gmra.mxu0 %v1114
      %v1257 = vpop.f32.mrf.mxu0
      %v1258 = vadd.f32 0.0, %v1257
      %v1259 = vpop.f32.mrf.mxu0
      %v1260 = vpop.f32.mrf.mxu0
      %v1261 = vadd.f32 0.0, %v1260
      %v1262 = vpop.f32.mrf.mxu0
      %1263 = vmatprep.mubr.bf16.mxu0 0
      %1264 = vmatmul.mubr.bf16.gmra.mxu0 %v1115
      %v1265 = vpop.f32.mrf.mxu0
      %v1266 = vadd.f32 0.0, %v1265
      %v1267 = vpop.f32.mrf.mxu0
      %v1268 = vpop.f32.mrf.mxu0
      %v1269 = vadd.f32 0.0, %v1268
      %v1270 = vpop.f32.mrf.mxu0
      %1271 = vmatprep.mubr.bf16.mxu0 0
      %1272 = vmatmul.mubr.bf16.gmra.mxu0 %v1116
      %v1273 = vpop.f32.mrf.mxu0
      %v1274 = vadd.f32 0.0, %v1273
      %v1275 = vpop.f32.mrf.mxu0
      %v1276 = vpop.f32.mrf.mxu0
      %v1277 = vadd.f32 0.0, %v1276
      %v1278 = vpop.f32.mrf.mxu0
      %1279 = vmatprep.mubr.bf16.mxu0 0
      %1280 = vmatmul.mubr.bf16.gmra.mxu0 %v1117
      %v1281 = vpop.f32.mrf.mxu0
      %v1282 = vadd.f32 0.0, %v1281
      %v1283 = vpop.f32.mrf.mxu0
      %v1284 = vpop.f32.mrf.mxu0
      %v1285 = vadd.f32 0.0, %v1284
      %v1286 = vpop.f32.mrf.mxu0
      %1287 = vmatprep.mubr.bf16.mxu0 0
      %1288 = vmatmul.mubr.bf16.gmra.mxu0 %v1118
      %v1289 = vpop.f32.mrf.mxu0
      %v1290 = vadd.f32 0.0, %v1289
      %v1291 = vpop.f32.mrf.mxu0
      %v1292 = vpop.f32.mrf.mxu0
      %v1293 = vadd.f32 0.0, %v1292
      %v1294 = vpop.f32.mrf.mxu0
      %1295 = vmatprep.mubr.bf16.mxu0 0
      %1296 = vmatmul.mubr.bf16.gmra.mxu0 %v1119
      %v1297 = vpop.f32.mrf.mxu0
      %v1298 = vadd.f32 0.0, %v1297
      %v1299 = vpop.f32.mrf.mxu0
      %v1300 = vpop.f32.mrf.mxu0
      %v1301 = vadd.f32 0.0, %v1300
      %v1302 = vpop.f32.mrf.mxu0
      %1303 = vmatprep.mubr.bf16.mxu0 0
      %1304 = vmatmul.mubr.bf16.gmra.mxu0 %v1120
      %v1305 = vpop.f32.mrf.mxu0
      %v1306 = vadd.f32 0.0, %v1305
      %v1307 = vpop.f32.mrf.mxu0
      %v1308 = vpop.f32.mrf.mxu0
      %v1309 = vadd.f32 0.0, %v1308
      %v1310 = vpop.f32.mrf.mxu0
      %1311 = vmatprep.mubr.bf16.mxu0 0
      %1312 = vmatmul.mubr.bf16.gmra.mxu0 %v1121
      %v1313 = vpop.f32.mrf.mxu0
      %v1314 = vadd.f32 0.0, %v1313
      %v1315 = vpop.f32.mrf.mxu0
      %v1316 = vpop.f32.mrf.mxu0
      %v1317 = vadd.f32 0.0, %v1316
      %v1318 = vpop.f32.mrf.mxu0
      %1319 = vmatprep.mubr.bf16.mxu0 0
      %1320 = vmatmul.mubr.bf16.gmra.mxu0 %v1122
      %v1321 = vpop.f32.mrf.mxu0
      %v1322 = vadd.f32 0.0, %v1321
      %v1323 = vpop.f32.mrf.mxu0
      %v1324 = vpop.f32.mrf.mxu0
      %v1325 = vadd.f32 0.0, %v1324
      %v1326 = vpop.f32.mrf.mxu0
      %1327 = vmatprep.mubr.bf16.mxu0 0
      %1328 = vmatmul.mubr.bf16.gmra.mxu0 %v1123
      %v1329 = vpop.f32.mrf.mxu0
      %v1330 = vadd.f32 0.0, %v1329
      %v1331 = vpop.f32.mrf.mxu0
      %v1332 = vpop.f32.mrf.mxu0
      %v1333 = vadd.f32 0.0, %v1332
      %v1334 = vpop.f32.mrf.mxu0
      %1335 = vmatprep.mubr.bf16.mxu0 0
      %1336 = vmatmul.mubr.bf16.gmra.mxu0 %v1124
      %v1337 = vpop.f32.mrf.mxu0
      %v1338 = vadd.f32 0.0, %v1337
      %v1339 = vpop.f32.mrf.mxu0
      %v1340 = vpop.f32.mrf.mxu0
      %v1341 = vadd.f32 0.0, %v1340
      %v1342 = vpop.f32.mrf.mxu0
      %1343 = vmatprep.mubr.bf16.mxu0 0
      %1344 = vmatmul.mubr.bf16.gmra.mxu0 %v1125
      %v1345 = vpop.f32.mrf.mxu0
      %v1346 = vadd.f32 0.0, %v1345
      %v1347 = vpop.f32.mrf.mxu0
      %v1348 = vpop.f32.mrf.mxu0
      %v1349 = vadd.f32 0.0, %v1348
      %v1350 = vpop.f32.mrf.mxu0
      %1351 = vdwg.mxu0
      %v1352 = vadd.f32 %v952, %v1226
      %v1353 = vadd.f32 %v955, %v1229
      %v1354 = vadd.f32 %v960, %v1234
      %v1355 = vadd.f32 %v963, %v1237
      %v1356 = vadd.f32 %v968, %v1242
      %v1357 = vadd.f32 %v971, %v1245
      %v1358 = vadd.f32 %v976, %v1250
      %v1359 = vadd.f32 %v979, %v1253
      %v1360 = vadd.f32 %v984, %v1258
      %v1361 = vadd.f32 %v987, %v1261
      %v1362 = vadd.f32 %v992, %v1266
      %v1363 = vadd.f32 %v995, %v1269
      %v1364 = vadd.f32 %v1000, %v1274
      %v1365 = vadd.f32 %v1003, %v1277
      %v1366 = vadd.f32 %v1008, %v1282
      %v1367 = vadd.f32 %v1011, %v1285
      %v1368 = vadd.f32 %v1016, %v1290
      %v1369 = vadd.f32 %v1019, %v1293
      %v1370 = vadd.f32 %v1024, %v1298
      %v1371 = vadd.f32 %v1027, %v1301
      %v1372 = vadd.f32 %v1032, %v1306
      %v1373 = vadd.f32 %v1035, %v1309
      %v1374 = vadd.f32 %v1040, %v1314
      %v1375 = vadd.f32 %v1043, %v1317
      %v1376 = vadd.f32 %v1048, %v1322
      %v1377 = vadd.f32 %v1051, %v1325
      %v1378 = vadd.f32 %v1056, %v1330
      %v1379 = vadd.f32 %v1059, %v1333
      %v1380 = vadd.f32 %v1064, %v1338
      %v1381 = vadd.f32 %v1067, %v1341
      %v1382 = vadd.f32 %v1072, %v1346
      %v1383 = vadd.f32 %v1075, %v1349
      %v1384 = vld [vmem:[%s498] sm:$0xff]
      %v1385 = vld [vmem:[%s498 + $0x8] sm:$0xff]
      %v1386 = vld [vmem:[%s498 + $0x18] sm:$0xff]
      %v1387 = vld [vmem:[%s498 + $0x20] sm:$0xff]
      %v1388 = vld [vmem:[%s498 + $0x30] sm:$0xff]
      %v1389 = vld [vmem:[%s498 + $0x38] sm:$0xff]
      %v1390 = vld [vmem:[%s498 + $0x48] sm:$0xff]
      %v1391 = vld [vmem:[%s498 + $0x50] sm:$0xff]
      %v1392 = vld [vmem:[%s498 + $0x60] sm:$0xff]
      %v1393 = vld [vmem:[%s498 + $0x68] sm:$0xff]
      %v1394 = vld [vmem:[%s498 + $0x78] sm:$0xff]
      %v1395 = vld [vmem:[%s498 + $0x80] sm:$0xff]
      %v1396 = vld [vmem:[%s498 + $0x90] sm:$0xff]
      %v1397 = vld [vmem:[%s498 + $0x98] sm:$0xff]
      %v1398 = vld [vmem:[%s498 + $0xa8] sm:$0xff]
      %v1399 = vld [vmem:[%s498 + $0xb0] sm:$0xff]
      %v1400 = vld [vmem:[%s498 + $0xc0] sm:$0xff]
      %v1401 = vld [vmem:[%s498 + $0xc8] sm:$0xff]
      %v1402 = vld [vmem:[%s498 + $0xd8] sm:$0xff]
      %v1403 = vld [vmem:[%s498 + $0xe0] sm:$0xff]
      %v1404 = vld [vmem:[%s498 + $0xf0] sm:$0xff]
      %v1405 = vld [vmem:[%s498 + $0xf8] sm:$0xff]
      %v1406 = vld [vmem:[%s498 + $0x108] sm:$0xff]
      %v1407 = vld [vmem:[%s498 + $0x110] sm:$0xff]
      %v1408 = vld [vmem:[%s498 + $0x120] sm:$0xff]
      %v1409 = vld [vmem:[%s498 + $0x128] sm:$0xff]
      %v1410 = vld [vmem:[%s498 + $0x138] sm:$0xff]
      %v1411 = vld [vmem:[%s498 + $0x140] sm:$0xff]
      %v1412 = vld [vmem:[%s498 + $0x150] sm:$0xff]
      %v1413 = vld [vmem:[%s498 + $0x158] sm:$0xff]
      %v1414 = vld [vmem:[%s498 + $0x168] sm:$0xff]
      %v1415 = vld [vmem:[%s498 + $0x170] sm:$0xff]
      %v1416 = vpack.c.bf16 %v1385, %v1384
      %v1417 = vpack.c.bf16 %v1387, %v1386
      %v1418 = vpack.c.bf16 %v1389, %v1388
      %v1419 = vpack.c.bf16 %v1391, %v1390
      %v1420 = vpack.c.bf16 %v1393, %v1392
      %v1421 = vpack.c.bf16 %v1395, %v1394
      %v1422 = vpack.c.bf16 %v1397, %v1396
      %v1423 = vpack.c.bf16 %v1399, %v1398
      %v1424 = vpack.c.bf16 %v1401, %v1400
      %v1425 = vpack.c.bf16 %v1403, %v1402
      %v1426 = vpack.c.bf16 %v1405, %v1404
      %v1427 = vpack.c.bf16 %v1407, %v1406
      %v1428 = vpack.c.bf16 %v1409, %v1408
      %v1429 = vpack.c.bf16 %v1411, %v1410
      %v1430 = vpack.c.bf16 %v1413, %v1412
      %v1431 = vpack.c.bf16 %v1415, %v1414
      %s1432 = scalar_lea.vmem %s3, 192
      %v1433 = vld [vmem:[%s1432] sm:$0xf]
      %v1434 = vld [vmem:[%s1432 + $0x4] sm:$0xf]
      %v1435 = vld [vmem:[%s1432 + $0x8] sm:$0xf]
      %v1436 = vld [vmem:[%s1432 + $0xc] sm:$0xf]
      %v1437 = vld [vmem:[%s1432 + $0x10] sm:$0xf]
      %v1438 = vld [vmem:[%s1432 + $0x14] sm:$0xf]
      %v1439 = vld [vmem:[%s1432 + $0x18] sm:$0xf]
      %v1440 = vld [vmem:[%s1432 + $0x1c] sm:$0xf]
      %v1441 = vld [vmem:[%s1432 + $0x20] sm:$0xf]
      %v1442 = vld [vmem:[%s1432 + $0x24] sm:$0xf]
      %v1443 = vld [vmem:[%s1432 + $0x28] sm:$0xf]
      %v1444 = vld [vmem:[%s1432 + $0x2c] sm:$0xf]
      %v1445 = vld [vmem:[%s1432 + $0x30] sm:$0xf]
      %v1446 = vld [vmem:[%s1432 + $0x34] sm:$0xf]
      %v1447 = vld [vmem:[%s1432 + $0x38] sm:$0xf]
      %v1448 = vld [vmem:[%s1432 + $0x3c] sm:$0xf]
      %v1465 = vunpack.c.l.b16 %v1433
      %v1466 = vunpack.c.l.b16 %v1434
      %v1467 = vunpack.c.l.b16 %v1435
      %v1468 = vunpack.c.l.b16 %v1436
      %v1469 = vunpack.c.l.b16 %v1437
      %v1470 = vunpack.c.l.b16 %v1438
      %v1471 = vunpack.c.l.b16 %v1439
      %v1472 = vunpack.c.l.b16 %v1440
      %v1473 = vunpack.c.l.b16 %v1441
      %v1474 = vunpack.c.l.b16 %v1442
      %v1475 = vunpack.c.l.b16 %v1443
      %v1476 = vunpack.c.l.b16 %v1444
      %v1477 = vunpack.c.l.b16 %v1445
      %v1478 = vunpack.c.l.b16 %v1446
      %v1479 = vunpack.c.l.b16 %v1447
      %v1480 = vunpack.c.l.b16 %v1448
      %v1481 = vpack.c.b16 %v1466, %v1465
      %v1482 = vpack.c.b16 %v1468, %v1467
      %v1483 = vpack.c.b16 %v1470, %v1469
      %v1484 = vpack.c.b16 %v1472, %v1471
      %v1485 = vpack.c.b16 %v1474, %v1473
      %v1486 = vpack.c.b16 %v1476, %v1475
      %v1487 = vpack.c.b16 %v1478, %v1477
      %v1488 = vpack.c.b16 %v1480, %v1479
      %1497 = vmatprep.subr.bf16.mxu0 0
      %1498 = vmatpush1.bf16.msra.mxu0 %v1488
      %1499 = vmatprep.subr.bf16.mxu0 0
      %1500 = vmatpush1.bf16.msra.mxu0 %v1487
      %1501 = vmatprep.subr.bf16.mxu0 0
      %1502 = vmatpush1.bf16.msra.mxu0 %v1486
      %1503 = vmatprep.subr.bf16.mxu0 0
      %1504 = vmatpush1.bf16.msra.mxu0 %v1485
      %1505 = vmatprep.subr.bf16.mxu0 0
      %1506 = vmatpush1.bf16.msra.mxu0 %v1484
      %1507 = vmatprep.subr.bf16.mxu0 0
      %1508 = vmatpush1.bf16.msra.mxu0 %v1483
      %1509 = vmatprep.subr.bf16.mxu0 0
      %1510 = vmatpush1.bf16.msra.mxu0 %v1482
      %1511 = vmatprep.subr.bf16.mxu0 0
      %1512 = vmatpush1.bf16.msra.mxu0 %v1481
      %1513 = vmatprep.subr.bf16.mxu0 0
      %1514 = vmatpush2.bf16.msra.mxu0 0
      %1515 = vmatprep.subr.bf16.mxu0 0
      %1516 = vmatpush2.bf16.msra.mxu0 0
      %1517 = vmatprep.subr.bf16.mxu0 0
      %1518 = vmatpush2.bf16.msra.mxu0 0
      %1519 = vmatprep.subr.bf16.mxu0 0
      %1520 = vmatpush2.bf16.msra.mxu0 0
      %1521 = vmatprep.subr.bf16.mxu0 0
      %1522 = vmatpush2.bf16.msra.mxu0 0
      %1523 = vmatprep.subr.bf16.mxu0 0
      %1524 = vmatpush2.bf16.msra.mxu0 0
      %1525 = vmatprep.subr.bf16.mxu0 0
      %1526 = vmatpush2.bf16.msra.mxu0 0
      %1527 = vmatprep.subr.bf16.mxu0 0
      %1528 = vmatpush2.bf16.msra.mxu0 0
      %1529 = vmatprep.mubr.bf16.mxu0 0
      %1530 = vmatmul.mubr.bf16.gmra.mxu0 %v1416
      %v1531 = vpop.f32.mrf.mxu0
      %v1532 = vadd.f32 0.0, %v1531
      %v1533 = vpop.f32.mrf.mxu0
      %v1534 = vpop.f32.mrf.mxu0
      %v1535 = vadd.f32 0.0, %v1534
      %v1536 = vpop.f32.mrf.mxu0
      %1537 = vmatprep.mubr.bf16.mxu0 0
      %1538 = vmatmul.mubr.bf16.gmra.mxu0 %v1417
      %v1539 = vpop.f32.mrf.mxu0
      %v1540 = vadd.f32 0.0, %v1539
      %v1541 = vpop.f32.mrf.mxu0
      %v1542 = vpop.f32.mrf.mxu0
      %v1543 = vadd.f32 0.0, %v1542
      %v1544 = vpop.f32.mrf.mxu0
      %1545 = vmatprep.mubr.bf16.mxu0 0
      %1546 = vmatmul.mubr.bf16.gmra.mxu0 %v1418
      %v1547 = vpop.f32.mrf.mxu0
      %v1548 = vadd.f32 0.0, %v1547
      %v1549 = vpop.f32.mrf.mxu0
      %v1550 = vpop.f32.mrf.mxu0
      %v1551 = vadd.f32 0.0, %v1550
      %v1552 = vpop.f32.mrf.mxu0
      %1553 = vmatprep.mubr.bf16.mxu0 0
      %1554 = vmatmul.mubr.bf16.gmra.mxu0 %v1419
      %v1555 = vpop.f32.mrf.mxu0
      %v1556 = vadd.f32 0.0, %v1555
      %v1557 = vpop.f32.mrf.mxu0
      %v1558 = vpop.f32.mrf.mxu0
      %v1559 = vadd.f32 0.0, %v1558
      %v1560 = vpop.f32.mrf.mxu0
      %1561 = vmatprep.mubr.bf16.mxu0 0
      %1562 = vmatmul.mubr.bf16.gmra.mxu0 %v1420
      %v1563 = vpop.f32.mrf.mxu0
      %v1564 = vadd.f32 0.0, %v1563
      %v1565 = vpop.f32.mrf.mxu0
      %v1566 = vpop.f32.mrf.mxu0
      %v1567 = vadd.f32 0.0, %v1566
      %v1568 = vpop.f32.mrf.mxu0
      %1569 = vmatprep.mubr.bf16.mxu0 0
      %1570 = vmatmul.mubr.bf16.gmra.mxu0 %v1421
      %v1571 = vpop.f32.mrf.mxu0
      %v1572 = vadd.f32 0.0, %v1571
      %v1573 = vpop.f32.mrf.mxu0
      %v1574 = vpop.f32.mrf.mxu0
      %v1575 = vadd.f32 0.0, %v1574
      %v1576 = vpop.f32.mrf.mxu0
      %1577 = vmatprep.mubr.bf16.mxu0 0
      %1578 = vmatmul.mubr.bf16.gmra.mxu0 %v1422
      %v1579 = vpop.f32.mrf.mxu0
      %v1580 = vadd.f32 0.0, %v1579
      %v1581 = vpop.f32.mrf.mxu0
      %v1582 = vpop.f32.mrf.mxu0
      %v1583 = vadd.f32 0.0, %v1582
      %v1584 = vpop.f32.mrf.mxu0
      %1585 = vmatprep.mubr.bf16.mxu0 0
      %1586 = vmatmul.mubr.bf16.gmra.mxu0 %v1423
      %v1587 = vpop.f32.mrf.mxu0
      %v1588 = vadd.f32 0.0, %v1587
      %v1589 = vpop.f32.mrf.mxu0
      %v1590 = vpop.f32.mrf.mxu0
      %v1591 = vadd.f32 0.0, %v1590
      %v1592 = vpop.f32.mrf.mxu0
      %1593 = vmatprep.mubr.bf16.mxu0 0
      %1594 = vmatmul.mubr.bf16.gmra.mxu0 %v1424
      %v1595 = vpop.f32.mrf.mxu0
      %v1596 = vadd.f32 0.0, %v1595
      %v1597 = vpop.f32.mrf.mxu0
      %v1598 = vpop.f32.mrf.mxu0
      %v1599 = vadd.f32 0.0, %v1598
      %v1600 = vpop.f32.mrf.mxu0
      %1601 = vmatprep.mubr.bf16.mxu0 0
      %1602 = vmatmul.mubr.bf16.gmra.mxu0 %v1425
      %v1603 = vpop.f32.mrf.mxu0
      %v1604 = vadd.f32 0.0, %v1603
      %v1605 = vpop.f32.mrf.mxu0
      %v1606 = vpop.f32.mrf.mxu0
      %v1607 = vadd.f32 0.0, %v1606
      %v1608 = vpop.f32.mrf.mxu0
      %1609 = vmatprep.mubr.bf16.mxu0 0
      %1610 = vmatmul.mubr.bf16.gmra.mxu0 %v1426
      %v1611 = vpop.f32.mrf.mxu0
      %v1612 = vadd.f32 0.0, %v1611
      %v1613 = vpop.f32.mrf.mxu0
      %v1614 = vpop.f32.mrf.mxu0
      %v1615 = vadd.f32 0.0, %v1614
      %v1616 = vpop.f32.mrf.mxu0
      %1617 = vmatprep.mubr.bf16.mxu0 0
      %1618 = vmatmul.mubr.bf16.gmra.mxu0 %v1427
      %v1619 = vpop.f32.mrf.mxu0
      %v1620 = vadd.f32 0.0, %v1619
      %v1621 = vpop.f32.mrf.mxu0
      %v1622 = vpop.f32.mrf.mxu0
      %v1623 = vadd.f32 0.0, %v1622
      %v1624 = vpop.f32.mrf.mxu0
      %1625 = vmatprep.mubr.bf16.mxu0 0
      %1626 = vmatmul.mubr.bf16.gmra.mxu0 %v1428
      %v1627 = vpop.f32.mrf.mxu0
      %v1628 = vadd.f32 0.0, %v1627
      %v1629 = vpop.f32.mrf.mxu0
      %v1630 = vpop.f32.mrf.mxu0
      %v1631 = vadd.f32 0.0, %v1630
      %v1632 = vpop.f32.mrf.mxu0
      %1633 = vmatprep.mubr.bf16.mxu0 0
      %1634 = vmatmul.mubr.bf16.gmra.mxu0 %v1429
      %v1635 = vpop.f32.mrf.mxu0
      %v1636 = vadd.f32 0.0, %v1635
      %v1637 = vpop.f32.mrf.mxu0
      %v1638 = vpop.f32.mrf.mxu0
      %v1639 = vadd.f32 0.0, %v1638
      %v1640 = vpop.f32.mrf.mxu0
      %1641 = vmatprep.mubr.bf16.mxu0 0
      %1642 = vmatmul.mubr.bf16.gmra.mxu0 %v1430
      %v1643 = vpop.f32.mrf.mxu0
      %v1644 = vadd.f32 0.0, %v1643
      %v1645 = vpop.f32.mrf.mxu0
      %v1646 = vpop.f32.mrf.mxu0
      %v1647 = vadd.f32 0.0, %v1646
      %v1648 = vpop.f32.mrf.mxu0
      %1649 = vmatprep.mubr.bf16.mxu0 0
      %1650 = vmatmul.mubr.bf16.gmra.mxu0 %v1431
      %v1651 = vpop.f32.mrf.mxu0
      %v1652 = vadd.f32 0.0, %v1651
      %v1653 = vpop.f32.mrf.mxu0
      %v1654 = vpop.f32.mrf.mxu0
      %v1655 = vadd.f32 0.0, %v1654
      %v1656 = vpop.f32.mrf.mxu0
      %1657 = vdwg.mxu0
      %v1658 = vadd.f32 %v1352, %v1532
      %v1659 = vadd.f32 %v1353, %v1535
      %v1660 = vadd.f32 %v1354, %v1540
      %v1661 = vadd.f32 %v1355, %v1543
      %v1662 = vadd.f32 %v1356, %v1548
      %v1663 = vadd.f32 %v1357, %v1551
      %v1664 = vadd.f32 %v1358, %v1556
      %v1665 = vadd.f32 %v1359, %v1559
      %v1666 = vadd.f32 %v1360, %v1564
      %v1667 = vadd.f32 %v1361, %v1567
      %v1668 = vadd.f32 %v1362, %v1572
      %v1669 = vadd.f32 %v1363, %v1575
      %v1670 = vadd.f32 %v1364, %v1580
      %v1671 = vadd.f32 %v1365, %v1583
      %v1672 = vadd.f32 %v1366, %v1588
      %v1673 = vadd.f32 %v1367, %v1591
      %v1674 = vadd.f32 %v1368, %v1596
      %v1675 = vadd.f32 %v1369, %v1599
      %v1676 = vadd.f32 %v1370, %v1604
      %v1677 = vadd.f32 %v1371, %v1607
      %v1678 = vadd.f32 %v1372, %v1612
      %v1679 = vadd.f32 %v1373, %v1615
      %v1680 = vadd.f32 %v1374, %v1620
      %v1681 = vadd.f32 %v1375, %v1623
      %v1682 = vadd.f32 %v1376, %v1628
      %v1683 = vadd.f32 %v1377, %v1631
      %v1684 = vadd.f32 %v1378, %v1636
      %v1685 = vadd.f32 %v1379, %v1639
      %v1686 = vadd.f32 %v1380, %v1644
      %v1687 = vadd.f32 %v1381, %v1647
      %v1688 = vadd.f32 %v1382, %v1652
      %v1689 = vadd.f32 %v1383, %v1655
      %v1690 = vld [vmem:[%s498 + $0x1] sm:$0xff]
      %v1691 = vld [vmem:[%s498 + $0x9] sm:$0xff]
      %v1692 = vld [vmem:[%s498 + $0x19] sm:$0xff]
      %v1693 = vld [vmem:[%s498 + $0x21] sm:$0xff]
      %v1694 = vld [vmem:[%s498 + $0x31] sm:$0xff]
      %v1695 = vld [vmem:[%s498 + $0x39] sm:$0xff]
      %v1696 = vld [vmem:[%s498 + $0x49] sm:$0xff]
      %v1697 = vld [vmem:[%s498 + $0x51] sm:$0xff]
      %v1698 = vld [vmem:[%s498 + $0x61] sm:$0xff]
      %v1699 = vld [vmem:[%s498 + $0x69] sm:$0xff]
      %v1700 = vld [vmem:[%s498 + $0x79] sm:$0xff]
      %v1701 = vld [vmem:[%s498 + $0x81] sm:$0xff]
      %v1702 = vld [vmem:[%s498 + $0x91] sm:$0xff]
      %v1703 = vld [vmem:[%s498 + $0x99] sm:$0xff]
      %v1704 = vld [vmem:[%s498 + $0xa9] sm:$0xff]
      %v1705 = vld [vmem:[%s498 + $0xb1] sm:$0xff]
      %v1706 = vld [vmem:[%s498 + $0xc1] sm:$0xff]
      %v1707 = vld [vmem:[%s498 + $0xc9] sm:$0xff]
      %v1708 = vld [vmem:[%s498 + $0xd9] sm:$0xff]
      %v1709 = vld [vmem:[%s498 + $0xe1] sm:$0xff]
      %v1710 = vld [vmem:[%s498 + $0xf1] sm:$0xff]
      %v1711 = vld [vmem:[%s498 + $0xf9] sm:$0xff]
      %v1712 = vld [vmem:[%s498 + $0x109] sm:$0xff]
      %v1713 = vld [vmem:[%s498 + $0x111] sm:$0xff]
      %v1714 = vld [vmem:[%s498 + $0x121] sm:$0xff]
      %v1715 = vld [vmem:[%s498 + $0x129] sm:$0xff]
      %v1716 = vld [vmem:[%s498 + $0x139] sm:$0xff]
      %v1717 = vld [vmem:[%s498 + $0x141] sm:$0xff]
      %v1718 = vld [vmem:[%s498 + $0x151] sm:$0xff]
      %v1719 = vld [vmem:[%s498 + $0x159] sm:$0xff]
      %v1720 = vld [vmem:[%s498 + $0x169] sm:$0xff]
      %v1721 = vld [vmem:[%s498 + $0x171] sm:$0xff]
      %v1722 = vpack.c.bf16 %v1691, %v1690
      %v1723 = vpack.c.bf16 %v1693, %v1692
      %v1724 = vpack.c.bf16 %v1695, %v1694
      %v1725 = vpack.c.bf16 %v1697, %v1696
      %v1726 = vpack.c.bf16 %v1699, %v1698
      %v1727 = vpack.c.bf16 %v1701, %v1700
      %v1728 = vpack.c.bf16 %v1703, %v1702
      %v1729 = vpack.c.bf16 %v1705, %v1704
      %v1730 = vpack.c.bf16 %v1707, %v1706
      %v1731 = vpack.c.bf16 %v1709, %v1708
      %v1732 = vpack.c.bf16 %v1711, %v1710
      %v1733 = vpack.c.bf16 %v1713, %v1712
      %v1734 = vpack.c.bf16 %v1715, %v1714
      %v1735 = vpack.c.bf16 %v1717, %v1716
      %v1736 = vpack.c.bf16 %v1719, %v1718
      %v1737 = vpack.c.bf16 %v1721, %v1720
      %s1738 = scalar_lea.vmem %s3, 256
      %v1739 = vld [vmem:[%s1738] sm:$0xf]
      %v1740 = vld [vmem:[%s1738 + $0x4] sm:$0xf]
      %v1741 = vld [vmem:[%s1738 + $0x8] sm:$0xf]
      %v1742 = vld [vmem:[%s1738 + $0xc] sm:$0xf]
      %v1743 = vld [vmem:[%s1738 + $0x10] sm:$0xf]
      %v1744 = vld [vmem:[%s1738 + $0x14] sm:$0xf]
      %v1745 = vld [vmem:[%s1738 + $0x18] sm:$0xf]
      %v1746 = vld [vmem:[%s1738 + $0x1c] sm:$0xf]
      %v1747 = vld [vmem:[%s1738 + $0x20] sm:$0xf]
      %v1748 = vld [vmem:[%s1738 + $0x24] sm:$0xf]
      %v1749 = vld [vmem:[%s1738 + $0x28] sm:$0xf]
      %v1750 = vld [vmem:[%s1738 + $0x2c] sm:$0xf]
      %v1751 = vld [vmem:[%s1738 + $0x30] sm:$0xf]
      %v1752 = vld [vmem:[%s1738 + $0x34] sm:$0xf]
      %v1753 = vld [vmem:[%s1738 + $0x38] sm:$0xf]
      %v1754 = vld [vmem:[%s1738 + $0x3c] sm:$0xf]
      %v1771 = vunpack.c.l.b16 %v1739
      %v1772 = vunpack.c.l.b16 %v1740
      %v1773 = vunpack.c.l.b16 %v1741
      %v1774 = vunpack.c.l.b16 %v1742
      %v1775 = vunpack.c.l.b16 %v1743
      %v1776 = vunpack.c.l.b16 %v1744
      %v1777 = vunpack.c.l.b16 %v1745
      %v1778 = vunpack.c.l.b16 %v1746
      %v1779 = vunpack.c.l.b16 %v1747
      %v1780 = vunpack.c.l.b16 %v1748
      %v1781 = vunpack.c.l.b16 %v1749
      %v1782 = vunpack.c.l.b16 %v1750
      %v1783 = vunpack.c.l.b16 %v1751
      %v1784 = vunpack.c.l.b16 %v1752
      %v1785 = vunpack.c.l.b16 %v1753
      %v1786 = vunpack.c.l.b16 %v1754
      %v1787 = vpack.c.b16 %v1772, %v1771
      %v1788 = vpack.c.b16 %v1774, %v1773
      %v1789 = vpack.c.b16 %v1776, %v1775
      %v1790 = vpack.c.b16 %v1778, %v1777
      %v1791 = vpack.c.b16 %v1780, %v1779
      %v1792 = vpack.c.b16 %v1782, %v1781
      %v1793 = vpack.c.b16 %v1784, %v1783
      %v1794 = vpack.c.b16 %v1786, %v1785
      %1803 = vmatprep.subr.bf16.mxu0 0
      %1804 = vmatpush1.bf16.msra.mxu0 %v1794
      %1805 = vmatprep.subr.bf16.mxu0 0
      %1806 = vmatpush1.bf16.msra.mxu0 %v1793
      %1807 = vmatprep.subr.bf16.mxu0 0
      %1808 = vmatpush1.bf16.msra.mxu0 %v1792
      %1809 = vmatprep.subr.bf16.mxu0 0
      %1810 = vmatpush1.bf16.msra.mxu0 %v1791
      %1811 = vmatprep.subr.bf16.mxu0 0
      %1812 = vmatpush1.bf16.msra.mxu0 %v1790
      %1813 = vmatprep.subr.bf16.mxu0 0
      %1814 = vmatpush1.bf16.msra.mxu0 %v1789
      %1815 = vmatprep.subr.bf16.mxu0 0
      %1816 = vmatpush1.bf16.msra.mxu0 %v1788
      %1817 = vmatprep.subr.bf16.mxu0 0
      %1818 = vmatpush1.bf16.msra.mxu0 %v1787
      %1819 = vmatprep.subr.bf16.mxu0 0
      %1820 = vmatpush2.bf16.msra.mxu0 0
      %1821 = vmatprep.subr.bf16.mxu0 0
      %1822 = vmatpush2.bf16.msra.mxu0 0
      %1823 = vmatprep.subr.bf16.mxu0 0
      %1824 = vmatpush2.bf16.msra.mxu0 0
      %1825 = vmatprep.subr.bf16.mxu0 0
      %1826 = vmatpush2.bf16.msra.mxu0 0
      %1827 = vmatprep.subr.bf16.mxu0 0
      %1828 = vmatpush2.bf16.msra.mxu0 0
      %1829 = vmatprep.subr.bf16.mxu0 0
      %1830 = vmatpush2.bf16.msra.mxu0 0
      %1831 = vmatprep.subr.bf16.mxu0 0
      %1832 = vmatpush2.bf16.msra.mxu0 0
      %1833 = vmatprep.subr.bf16.mxu0 0
      %1834 = vmatpush2.bf16.msra.mxu0 0
      %1835 = vmatprep.mubr.bf16.mxu0 0
      %1836 = vmatmul.mubr.bf16.gmra.mxu0 %v1722
      %v1837 = vpop.f32.mrf.mxu0
      %v1838 = vadd.f32 0.0, %v1837
      %v1839 = vpop.f32.mrf.mxu0
      %v1840 = vpop.f32.mrf.mxu0
      %v1841 = vadd.f32 0.0, %v1840
      %v1842 = vpop.f32.mrf.mxu0
      %1843 = vmatprep.mubr.bf16.mxu0 0
      %1844 = vmatmul.mubr.bf16.gmra.mxu0 %v1723
      %v1845 = vpop.f32.mrf.mxu0
      %v1846 = vadd.f32 0.0, %v1845
      %v1847 = vpop.f32.mrf.mxu0
      %v1848 = vpop.f32.mrf.mxu0
      %v1849 = vadd.f32 0.0, %v1848
      %v1850 = vpop.f32.mrf.mxu0
      %1851 = vmatprep.mubr.bf16.mxu0 0
      %1852 = vmatmul.mubr.bf16.gmra.mxu0 %v1724
      %v1853 = vpop.f32.mrf.mxu0
      %v1854 = vadd.f32 0.0, %v1853
      %v1855 = vpop.f32.mrf.mxu0
      %v1856 = vpop.f32.mrf.mxu0
      %v1857 = vadd.f32 0.0, %v1856
      %v1858 = vpop.f32.mrf.mxu0
      %1859 = vmatprep.mubr.bf16.mxu0 0
      %1860 = vmatmul.mubr.bf16.gmra.mxu0 %v1725
      %v1861 = vpop.f32.mrf.mxu0
      %v1862 = vadd.f32 0.0, %v1861
      %v1863 = vpop.f32.mrf.mxu0
      %v1864 = vpop.f32.mrf.mxu0
      %v1865 = vadd.f32 0.0, %v1864
      %v1866 = vpop.f32.mrf.mxu0
      %1867 = vmatprep.mubr.bf16.mxu0 0
      %1868 = vmatmul.mubr.bf16.gmra.mxu0 %v1726
      %v1869 = vpop.f32.mrf.mxu0
      %v1870 = vadd.f32 0.0, %v1869
      %v1871 = vpop.f32.mrf.mxu0
      %v1872 = vpop.f32.mrf.mxu0
      %v1873 = vadd.f32 0.0, %v1872
      %v1874 = vpop.f32.mrf.mxu0
      %1875 = vmatprep.mubr.bf16.mxu0 0
      %1876 = vmatmul.mubr.bf16.gmra.mxu0 %v1727
      %v1877 = vpop.f32.mrf.mxu0
      %v1878 = vadd.f32 0.0, %v1877
      %v1879 = vpop.f32.mrf.mxu0
      %v1880 = vpop.f32.mrf.mxu0
      %v1881 = vadd.f32 0.0, %v1880
      %v1882 = vpop.f32.mrf.mxu0
      %1883 = vmatprep.mubr.bf16.mxu0 0
      %1884 = vmatmul.mubr.bf16.gmra.mxu0 %v1728
      %v1885 = vpop.f32.mrf.mxu0
      %v1886 = vadd.f32 0.0, %v1885
      %v1887 = vpop.f32.mrf.mxu0
      %v1888 = vpop.f32.mrf.mxu0
      %v1889 = vadd.f32 0.0, %v1888
      %v1890 = vpop.f32.mrf.mxu0
      %1891 = vmatprep.mubr.bf16.mxu0 0
      %1892 = vmatmul.mubr.bf16.gmra.mxu0 %v1729
      %v1893 = vpop.f32.mrf.mxu0
      %v1894 = vadd.f32 0.0, %v1893
      %v1895 = vpop.f32.mrf.mxu0
      %v1896 = vpop.f32.mrf.mxu0
      %v1897 = vadd.f32 0.0, %v1896
      %v1898 = vpop.f32.mrf.mxu0
      %1899 = vmatprep.mubr.bf16.mxu0 0
      %1900 = vmatmul.mubr.bf16.gmra.mxu0 %v1730
      %v1901 = vpop.f32.mrf.mxu0
      %v1902 = vadd.f32 0.0, %v1901
      %v1903 = vpop.f32.mrf.mxu0
      %v1904 = vpop.f32.mrf.mxu0
      %v1905 = vadd.f32 0.0, %v1904
      %v1906 = vpop.f32.mrf.mxu0
      %1907 = vmatprep.mubr.bf16.mxu0 0
      %1908 = vmatmul.mubr.bf16.gmra.mxu0 %v1731
      %v1909 = vpop.f32.mrf.mxu0
      %v1910 = vadd.f32 0.0, %v1909
      %v1911 = vpop.f32.mrf.mxu0
      %v1912 = vpop.f32.mrf.mxu0
      %v1913 = vadd.f32 0.0, %v1912
      %v1914 = vpop.f32.mrf.mxu0
      %1915 = vmatprep.mubr.bf16.mxu0 0
      %1916 = vmatmul.mubr.bf16.gmra.mxu0 %v1732
      %v1917 = vpop.f32.mrf.mxu0
      %v1918 = vadd.f32 0.0, %v1917
      %v1919 = vpop.f32.mrf.mxu0
      %v1920 = vpop.f32.mrf.mxu0
      %v1921 = vadd.f32 0.0, %v1920
      %v1922 = vpop.f32.mrf.mxu0
      %1923 = vmatprep.mubr.bf16.mxu0 0
      %1924 = vmatmul.mubr.bf16.gmra.mxu0 %v1733
      %v1925 = vpop.f32.mrf.mxu0
      %v1926 = vadd.f32 0.0, %v1925
      %v1927 = vpop.f32.mrf.mxu0
      %v1928 = vpop.f32.mrf.mxu0
      %v1929 = vadd.f32 0.0, %v1928
      %v1930 = vpop.f32.mrf.mxu0
      %1931 = vmatprep.mubr.bf16.mxu0 0
      %1932 = vmatmul.mubr.bf16.gmra.mxu0 %v1734
      %v1933 = vpop.f32.mrf.mxu0
      %v1934 = vadd.f32 0.0, %v1933
      %v1935 = vpop.f32.mrf.mxu0
      %v1936 = vpop.f32.mrf.mxu0
      %v1937 = vadd.f32 0.0, %v1936
      %v1938 = vpop.f32.mrf.mxu0
      %1939 = vmatprep.mubr.bf16.mxu0 0
      %1940 = vmatmul.mubr.bf16.gmra.mxu0 %v1735
      %v1941 = vpop.f32.mrf.mxu0
      %v1942 = vadd.f32 0.0, %v1941
      %v1943 = vpop.f32.mrf.mxu0
      %v1944 = vpop.f32.mrf.mxu0
      %v1945 = vadd.f32 0.0, %v1944
      %v1946 = vpop.f32.mrf.mxu0
      %1947 = vmatprep.mubr.bf16.mxu0 0
      %1948 = vmatmul.mubr.bf16.gmra.mxu0 %v1736
      %v1949 = vpop.f32.mrf.mxu0
      %v1950 = vadd.f32 0.0, %v1949
      %v1951 = vpop.f32.mrf.mxu0
      %v1952 = vpop.f32.mrf.mxu0
      %v1953 = vadd.f32 0.0, %v1952
      %v1954 = vpop.f32.mrf.mxu0
      %1955 = vmatprep.mubr.bf16.mxu0 0
      %1956 = vmatmul.mubr.bf16.gmra.mxu0 %v1737
      %v1957 = vpop.f32.mrf.mxu0
      %v1958 = vadd.f32 0.0, %v1957
      %v1959 = vpop.f32.mrf.mxu0
      %v1960 = vpop.f32.mrf.mxu0
      %v1961 = vadd.f32 0.0, %v1960
      %v1962 = vpop.f32.mrf.mxu0
      %1963 = vdwg.mxu0
      %v1964 = vadd.f32 %v1658, %v1838
      %v1965 = vadd.f32 %v1659, %v1841
      %v1966 = vadd.f32 %v1660, %v1846
      %v1967 = vadd.f32 %v1661, %v1849
      %v1968 = vadd.f32 %v1662, %v1854
      %v1969 = vadd.f32 %v1663, %v1857
      %v1970 = vadd.f32 %v1664, %v1862
      %v1971 = vadd.f32 %v1665, %v1865
      %v1972 = vadd.f32 %v1666, %v1870
      %v1973 = vadd.f32 %v1667, %v1873
      %v1974 = vadd.f32 %v1668, %v1878
      %v1975 = vadd.f32 %v1669, %v1881
      %v1976 = vadd.f32 %v1670, %v1886
      %v1977 = vadd.f32 %v1671, %v1889
      %v1978 = vadd.f32 %v1672, %v1894
      %v1979 = vadd.f32 %v1673, %v1897
      %v1980 = vadd.f32 %v1674, %v1902
      %v1981 = vadd.f32 %v1675, %v1905
      %v1982 = vadd.f32 %v1676, %v1910
      %v1983 = vadd.f32 %v1677, %v1913
      %v1984 = vadd.f32 %v1678, %v1918
      %v1985 = vadd.f32 %v1679, %v1921
      %v1986 = vadd.f32 %v1680, %v1926
      %v1987 = vadd.f32 %v1681, %v1929
      %v1988 = vadd.f32 %v1682, %v1934
      %v1989 = vadd.f32 %v1683, %v1937
      %v1990 = vadd.f32 %v1684, %v1942
      %v1991 = vadd.f32 %v1685, %v1945
      %v1992 = vadd.f32 %v1686, %v1950
      %v1993 = vadd.f32 %v1687, %v1953
      %v1994 = vadd.f32 %v1688, %v1958
      %v1995 = vadd.f32 %v1689, %v1961
      %v1996 = vld [vmem:[%s498 + $0x2] sm:$0xff]
      %v1997 = vld [vmem:[%s498 + $0xa] sm:$0xff]
      %v1998 = vld [vmem:[%s498 + $0x1a] sm:$0xff]
      %v1999 = vld [vmem:[%s498 + $0x22] sm:$0xff]
      %v2000 = vld [vmem:[%s498 + $0x32] sm:$0xff]
      %v2001 = vld [vmem:[%s498 + $0x3a] sm:$0xff]
      %v2002 = vld [vmem:[%s498 + $0x4a] sm:$0xff]
      %v2003 = vld [vmem:[%s498 + $0x52] sm:$0xff]
      %v2004 = vld [vmem:[%s498 + $0x62] sm:$0xff]
      %v2005 = vld [vmem:[%s498 + $0x6a] sm:$0xff]
      %v2006 = vld [vmem:[%s498 + $0x7a] sm:$0xff]
      %v2007 = vld [vmem:[%s498 + $0x82] sm:$0xff]
      %v2008 = vld [vmem:[%s498 + $0x92] sm:$0xff]
      %v2009 = vld [vmem:[%s498 + $0x9a] sm:$0xff]
      %v2010 = vld [vmem:[%s498 + $0xaa] sm:$0xff]
      %v2011 = vld [vmem:[%s498 + $0xb2] sm:$0xff]
      %v2012 = vld [vmem:[%s498 + $0xc2] sm:$0xff]
      %v2013 = vld [vmem:[%s498 + $0xca] sm:$0xff]
      %v2014 = vld [vmem:[%s498 + $0xda] sm:$0xff]
      %v2015 = vld [vmem:[%s498 + $0xe2] sm:$0xff]
      %v2016 = vld [vmem:[%s498 + $0xf2] sm:$0xff]
      %v2017 = vld [vmem:[%s498 + $0xfa] sm:$0xff]
      %v2018 = vld [vmem:[%s498 + $0x10a] sm:$0xff]
      %v2019 = vld [vmem:[%s498 + $0x112] sm:$0xff]
      %v2020 = vld [vmem:[%s498 + $0x122] sm:$0xff]
      %v2021 = vld [vmem:[%s498 + $0x12a] sm:$0xff]
      %v2022 = vld [vmem:[%s498 + $0x13a] sm:$0xff]
      %v2023 = vld [vmem:[%s498 + $0x142] sm:$0xff]
      %v2024 = vld [vmem:[%s498 + $0x152] sm:$0xff]
      %v2025 = vld [vmem:[%s498 + $0x15a] sm:$0xff]
      %v2026 = vld [vmem:[%s498 + $0x16a] sm:$0xff]
      %v2027 = vld [vmem:[%s498 + $0x172] sm:$0xff]
      %v2028 = vpack.c.bf16 %v1997, %v1996
      %v2029 = vpack.c.bf16 %v1999, %v1998
      %v2030 = vpack.c.bf16 %v2001, %v2000
      %v2031 = vpack.c.bf16 %v2003, %v2002
      %v2032 = vpack.c.bf16 %v2005, %v2004
      %v2033 = vpack.c.bf16 %v2007, %v2006
      %v2034 = vpack.c.bf16 %v2009, %v2008
      %v2035 = vpack.c.bf16 %v2011, %v2010
      %v2036 = vpack.c.bf16 %v2013, %v2012
      %v2037 = vpack.c.bf16 %v2015, %v2014
      %v2038 = vpack.c.bf16 %v2017, %v2016
      %v2039 = vpack.c.bf16 %v2019, %v2018
      %v2040 = vpack.c.bf16 %v2021, %v2020
      %v2041 = vpack.c.bf16 %v2023, %v2022
      %v2042 = vpack.c.bf16 %v2025, %v2024
      %v2043 = vpack.c.bf16 %v2027, %v2026
      %s2044 = scalar_lea.vmem %s3, 320
      %v2045 = vld [vmem:[%s2044] sm:$0xf]
      %v2046 = vld [vmem:[%s2044 + $0x4] sm:$0xf]
      %v2047 = vld [vmem:[%s2044 + $0x8] sm:$0xf]
      %v2048 = vld [vmem:[%s2044 + $0xc] sm:$0xf]
      %v2049 = vld [vmem:[%s2044 + $0x10] sm:$0xf]
      %v2050 = vld [vmem:[%s2044 + $0x14] sm:$0xf]
      %v2051 = vld [vmem:[%s2044 + $0x18] sm:$0xf]
      %v2052 = vld [vmem:[%s2044 + $0x1c] sm:$0xf]
      %v2053 = vld [vmem:[%s2044 + $0x20] sm:$0xf]
      %v2054 = vld [vmem:[%s2044 + $0x24] sm:$0xf]
      %v2055 = vld [vmem:[%s2044 + $0x28] sm:$0xf]
      %v2056 = vld [vmem:[%s2044 + $0x2c] sm:$0xf]
      %v2057 = vld [vmem:[%s2044 + $0x30] sm:$0xf]
      %v2058 = vld [vmem:[%s2044 + $0x34] sm:$0xf]
      %v2059 = vld [vmem:[%s2044 + $0x38] sm:$0xf]
      %v2060 = vld [vmem:[%s2044 + $0x3c] sm:$0xf]
      %v2077 = vunpack.c.l.b16 %v2045
      %v2078 = vunpack.c.l.b16 %v2046
      %v2079 = vunpack.c.l.b16 %v2047
      %v2080 = vunpack.c.l.b16 %v2048
      %v2081 = vunpack.c.l.b16 %v2049
      %v2082 = vunpack.c.l.b16 %v2050
      %v2083 = vunpack.c.l.b16 %v2051
      %v2084 = vunpack.c.l.b16 %v2052
      %v2085 = vunpack.c.l.b16 %v2053
      %v2086 = vunpack.c.l.b16 %v2054
      %v2087 = vunpack.c.l.b16 %v2055
      %v2088 = vunpack.c.l.b16 %v2056
      %v2089 = vunpack.c.l.b16 %v2057
      %v2090 = vunpack.c.l.b16 %v2058
      %v2091 = vunpack.c.l.b16 %v2059
      %v2092 = vunpack.c.l.b16 %v2060
      %v2093 = vpack.c.b16 %v2078, %v2077
      %v2094 = vpack.c.b16 %v2080, %v2079
      %v2095 = vpack.c.b16 %v2082, %v2081
      %v2096 = vpack.c.b16 %v2084, %v2083
      %v2097 = vpack.c.b16 %v2086, %v2085
      %v2098 = vpack.c.b16 %v2088, %v2087
      %v2099 = vpack.c.b16 %v2090, %v2089
      %v2100 = vpack.c.b16 %v2092, %v2091
      %2109 = vmatprep.subr.bf16.mxu0 0
      %2110 = vmatpush1.bf16.msra.mxu0 %v2100
      %2111 = vmatprep.subr.bf16.mxu0 0
      %2112 = vmatpush1.bf16.msra.mxu0 %v2099
      %2113 = vmatprep.subr.bf16.mxu0 0
      %2114 = vmatpush1.bf16.msra.mxu0 %v2098
      %2115 = vmatprep.subr.bf16.mxu0 0
      %2116 = vmatpush1.bf16.msra.mxu0 %v2097
      %2117 = vmatprep.subr.bf16.mxu0 0
      %2118 = vmatpush1.bf16.msra.mxu0 %v2096
      %2119 = vmatprep.subr.bf16.mxu0 0
      %2120 = vmatpush1.bf16.msra.mxu0 %v2095
      %2121 = vmatprep.subr.bf16.mxu0 0
      %2122 = vmatpush1.bf16.msra.mxu0 %v2094
      %2123 = vmatprep.subr.bf16.mxu0 0
      %2124 = vmatpush1.bf16.msra.mxu0 %v2093
      %2125 = vmatprep.subr.bf16.mxu0 0
      %2126 = vmatpush2.bf16.msra.mxu0 0
      %2127 = vmatprep.subr.bf16.mxu0 0
      %2128 = vmatpush2.bf16.msra.mxu0 0
      %2129 = vmatprep.subr.bf16.mxu0 0
      %2130 = vmatpush2.bf16.msra.mxu0 0
      %2131 = vmatprep.subr.bf16.mxu0 0
      %2132 = vmatpush2.bf16.msra.mxu0 0
      %2133 = vmatprep.subr.bf16.mxu0 0
      %2134 = vmatpush2.bf16.msra.mxu0 0
      %2135 = vmatprep.subr.bf16.mxu0 0
      %2136 = vmatpush2.bf16.msra.mxu0 0
      %2137 = vmatprep.subr.bf16.mxu0 0
      %2138 = vmatpush2.bf16.msra.mxu0 0
      %2139 = vmatprep.subr.bf16.mxu0 0
      %2140 = vmatpush2.bf16.msra.mxu0 0
      %2141 = vmatprep.mubr.bf16.mxu0 0
      %2142 = vmatmul.mubr.bf16.gmra.mxu0 %v2028
      %v2143 = vpop.f32.mrf.mxu0
      %v2144 = vadd.f32 0.0, %v2143
      %v2145 = vpop.f32.mrf.mxu0
      %v2146 = vpop.f32.mrf.mxu0
      %v2147 = vadd.f32 0.0, %v2146
      %v2148 = vpop.f32.mrf.mxu0
      %2149 = vmatprep.mubr.bf16.mxu0 0
      %2150 = vmatmul.mubr.bf16.gmra.mxu0 %v2029
      %v2151 = vpop.f32.mrf.mxu0
      %v2152 = vadd.f32 0.0, %v2151
      %v2153 = vpop.f32.mrf.mxu0
      %v2154 = vpop.f32.mrf.mxu0
      %v2155 = vadd.f32 0.0, %v2154
      %v2156 = vpop.f32.mrf.mxu0
      %2157 = vmatprep.mubr.bf16.mxu0 0
      %2158 = vmatmul.mubr.bf16.gmra.mxu0 %v2030
      %v2159 = vpop.f32.mrf.mxu0
      %v2160 = vadd.f32 0.0, %v2159
      %v2161 = vpop.f32.mrf.mxu0
      %v2162 = vpop.f32.mrf.mxu0
      %v2163 = vadd.f32 0.0, %v2162
      %v2164 = vpop.f32.mrf.mxu0
      %2165 = vmatprep.mubr.bf16.mxu0 0
      %2166 = vmatmul.mubr.bf16.gmra.mxu0 %v2031
      %v2167 = vpop.f32.mrf.mxu0
      %v2168 = vadd.f32 0.0, %v2167
      %v2169 = vpop.f32.mrf.mxu0
      %v2170 = vpop.f32.mrf.mxu0
      %v2171 = vadd.f32 0.0, %v2170
      %v2172 = vpop.f32.mrf.mxu0
      %2173 = vmatprep.mubr.bf16.mxu0 0
      %2174 = vmatmul.mubr.bf16.gmra.mxu0 %v2032
      %v2175 = vpop.f32.mrf.mxu0
      %v2176 = vadd.f32 0.0, %v2175
      %v2177 = vpop.f32.mrf.mxu0
      %v2178 = vpop.f32.mrf.mxu0
      %v2179 = vadd.f32 0.0, %v2178
      %v2180 = vpop.f32.mrf.mxu0
      %2181 = vmatprep.mubr.bf16.mxu0 0
      %2182 = vmatmul.mubr.bf16.gmra.mxu0 %v2033
      %v2183 = vpop.f32.mrf.mxu0
      %v2184 = vadd.f32 0.0, %v2183
      %v2185 = vpop.f32.mrf.mxu0
      %v2186 = vpop.f32.mrf.mxu0
      %v2187 = vadd.f32 0.0, %v2186
      %v2188 = vpop.f32.mrf.mxu0
      %2189 = vmatprep.mubr.bf16.mxu0 0
      %2190 = vmatmul.mubr.bf16.gmra.mxu0 %v2034
      %v2191 = vpop.f32.mrf.mxu0
      %v2192 = vadd.f32 0.0, %v2191
      %v2193 = vpop.f32.mrf.mxu0
      %v2194 = vpop.f32.mrf.mxu0
      %v2195 = vadd.f32 0.0, %v2194
      %v2196 = vpop.f32.mrf.mxu0
      %2197 = vmatprep.mubr.bf16.mxu0 0
      %2198 = vmatmul.mubr.bf16.gmra.mxu0 %v2035
      %v2199 = vpop.f32.mrf.mxu0
      %v2200 = vadd.f32 0.0, %v2199
      %v2201 = vpop.f32.mrf.mxu0
      %v2202 = vpop.f32.mrf.mxu0
      %v2203 = vadd.f32 0.0, %v2202
      %v2204 = vpop.f32.mrf.mxu0
      %2205 = vmatprep.mubr.bf16.mxu0 0
      %2206 = vmatmul.mubr.bf16.gmra.mxu0 %v2036
      %v2207 = vpop.f32.mrf.mxu0
      %v2208 = vadd.f32 0.0, %v2207
      %v2209 = vpop.f32.mrf.mxu0
      %v2210 = vpop.f32.mrf.mxu0
      %v2211 = vadd.f32 0.0, %v2210
      %v2212 = vpop.f32.mrf.mxu0
      %2213 = vmatprep.mubr.bf16.mxu0 0
      %2214 = vmatmul.mubr.bf16.gmra.mxu0 %v2037
      %v2215 = vpop.f32.mrf.mxu0
      %v2216 = vadd.f32 0.0, %v2215
      %v2217 = vpop.f32.mrf.mxu0
      %v2218 = vpop.f32.mrf.mxu0
      %v2219 = vadd.f32 0.0, %v2218
      %v2220 = vpop.f32.mrf.mxu0
      %2221 = vmatprep.mubr.bf16.mxu0 0
      %2222 = vmatmul.mubr.bf16.gmra.mxu0 %v2038
      %v2223 = vpop.f32.mrf.mxu0
      %v2224 = vadd.f32 0.0, %v2223
      %v2225 = vpop.f32.mrf.mxu0
      %v2226 = vpop.f32.mrf.mxu0
      %v2227 = vadd.f32 0.0, %v2226
      %v2228 = vpop.f32.mrf.mxu0
      %2229 = vmatprep.mubr.bf16.mxu0 0
      %2230 = vmatmul.mubr.bf16.gmra.mxu0 %v2039
      %v2231 = vpop.f32.mrf.mxu0
      %v2232 = vadd.f32 0.0, %v2231
      %v2233 = vpop.f32.mrf.mxu0
      %v2234 = vpop.f32.mrf.mxu0
      %v2235 = vadd.f32 0.0, %v2234
      %v2236 = vpop.f32.mrf.mxu0
      %2237 = vmatprep.mubr.bf16.mxu0 0
      %2238 = vmatmul.mubr.bf16.gmra.mxu0 %v2040
      %v2239 = vpop.f32.mrf.mxu0
      %v2240 = vadd.f32 0.0, %v2239
      %v2241 = vpop.f32.mrf.mxu0
      %v2242 = vpop.f32.mrf.mxu0
      %v2243 = vadd.f32 0.0, %v2242
      %v2244 = vpop.f32.mrf.mxu0
      %2245 = vmatprep.mubr.bf16.mxu0 0
      %2246 = vmatmul.mubr.bf16.gmra.mxu0 %v2041
      %v2247 = vpop.f32.mrf.mxu0
      %v2248 = vadd.f32 0.0, %v2247
      %v2249 = vpop.f32.mrf.mxu0
      %v2250 = vpop.f32.mrf.mxu0
      %v2251 = vadd.f32 0.0, %v2250
      %v2252 = vpop.f32.mrf.mxu0
      %2253 = vmatprep.mubr.bf16.mxu0 0
      %2254 = vmatmul.mubr.bf16.gmra.mxu0 %v2042
      %v2255 = vpop.f32.mrf.mxu0
      %v2256 = vadd.f32 0.0, %v2255
      %v2257 = vpop.f32.mrf.mxu0
      %v2258 = vpop.f32.mrf.mxu0
      %v2259 = vadd.f32 0.0, %v2258
      %v2260 = vpop.f32.mrf.mxu0
      %2261 = vmatprep.mubr.bf16.mxu0 0
      %2262 = vmatmul.mubr.bf16.gmra.mxu0 %v2043
      %v2263 = vpop.f32.mrf.mxu0
      %v2264 = vadd.f32 0.0, %v2263
      %v2265 = vpop.f32.mrf.mxu0
      %v2266 = vpop.f32.mrf.mxu0
      %v2267 = vadd.f32 0.0, %v2266
      %v2268 = vpop.f32.mrf.mxu0
      %2269 = vdwg.mxu0
      %v2270 = vadd.f32 %v1964, %v2144
      %v2271 = vadd.f32 %v1965, %v2147
      %v2272 = vadd.f32 %v1966, %v2152
      %v2273 = vadd.f32 %v1967, %v2155
      %v2274 = vadd.f32 %v1968, %v2160
      %v2275 = vadd.f32 %v1969, %v2163
      %v2276 = vadd.f32 %v1970, %v2168
      %v2277 = vadd.f32 %v1971, %v2171
      %v2278 = vadd.f32 %v1972, %v2176
      %v2279 = vadd.f32 %v1973, %v2179
      %v2280 = vadd.f32 %v1974, %v2184
      %v2281 = vadd.f32 %v1975, %v2187
      %v2282 = vadd.f32 %v1976, %v2192
      %v2283 = vadd.f32 %v1977, %v2195
      %v2284 = vadd.f32 %v1978, %v2200
      %v2285 = vadd.f32 %v1979, %v2203
      %v2286 = vadd.f32 %v1980, %v2208
      %v2287 = vadd.f32 %v1981, %v2211
      %v2288 = vadd.f32 %v1982, %v2216
      %v2289 = vadd.f32 %v1983, %v2219
      %v2290 = vadd.f32 %v1984, %v2224
      %v2291 = vadd.f32 %v1985, %v2227
      %v2292 = vadd.f32 %v1986, %v2232
      %v2293 = vadd.f32 %v1987, %v2235
      %v2294 = vadd.f32 %v1988, %v2240
      %v2295 = vadd.f32 %v1989, %v2243
      %v2296 = vadd.f32 %v1990, %v2248
      %v2297 = vadd.f32 %v1991, %v2251
      %v2298 = vadd.f32 %v1992, %v2256
      %v2299 = vadd.f32 %v1993, %v2259
      %v2300 = vadd.f32 %v1994, %v2264
      %v2301 = vadd.f32 %v1995, %v2267
      %s2302 = scalar_lea.vmem [#allocation2], 48
      %v2303 = vld [vmem:[%s2302] sm:$0xff]
      %v2304 = vld [vmem:[%s2302 + $0x8] sm:$0xff]
      %v2305 = vld [vmem:[%s2302 + $0x18] sm:$0xff]
      %v2306 = vld [vmem:[%s2302 + $0x20] sm:$0xff]
      %v2307 = vld [vmem:[%s2302 + $0x30] sm:$0xff]
      %v2308 = vld [vmem:[%s2302 + $0x38] sm:$0xff]
      %v2309 = vld [vmem:[%s2302 + $0x48] sm:$0xff]
      %v2310 = vld [vmem:[%s2302 + $0x50] sm:$0xff]
      %v2311 = vld [vmem:[%s2302 + $0x60] sm:$0xff]
      %v2312 = vld [vmem:[%s2302 + $0x68] sm:$0xff]
      %v2313 = vld [vmem:[%s2302 + $0x78] sm:$0xff]
      %v2314 = vld [vmem:[%s2302 + $0x80] sm:$0xff]
      %v2315 = vld [vmem:[%s2302 + $0x90] sm:$0xff]
      %v2316 = vld [vmem:[%s2302 + $0x98] sm:$0xff]
      %v2317 = vld [vmem:[%s2302 + $0xa8] sm:$0xff]
      %v2318 = vld [vmem:[%s2302 + $0xb0] sm:$0xff]
      %v2319 = vld [vmem:[%s2302 + $0xc0] sm:$0xff]
      %v2320 = vld [vmem:[%s2302 + $0xc8] sm:$0xff]
      %v2321 = vld [vmem:[%s2302 + $0xd8] sm:$0xff]
      %v2322 = vld [vmem:[%s2302 + $0xe0] sm:$0xff]
      %v2323 = vld [vmem:[%s2302 + $0xf0] sm:$0xff]
      %v2324 = vld [vmem:[%s2302 + $0xf8] sm:$0xff]
      %v2325 = vld [vmem:[%s2302 + $0x108] sm:$0xff]
      %v2326 = vld [vmem:[%s2302 + $0x110] sm:$0xff]
      %v2327 = vld [vmem:[%s2302 + $0x120] sm:$0xff]
      %v2328 = vld [vmem:[%s2302 + $0x128] sm:$0xff]
      %v2329 = vld [vmem:[%s2302 + $0x138] sm:$0xff]
      %v2330 = vld [vmem:[%s2302 + $0x140] sm:$0xff]
      %v2331 = vld [vmem:[%s2302 + $0x150] sm:$0xff]
      %v2332 = vld [vmem:[%s2302 + $0x158] sm:$0xff]
      %v2333 = vld [vmem:[%s2302 + $0x168] sm:$0xff]
      %v2334 = vld [vmem:[%s2302 + $0x170] sm:$0xff]
      %v2335 = vpack.c.bf16 %v2304, %v2303
      %v2336 = vpack.c.bf16 %v2306, %v2305
      %v2337 = vpack.c.bf16 %v2308, %v2307
      %v2338 = vpack.c.bf16 %v2310, %v2309
      %v2339 = vpack.c.bf16 %v2312, %v2311
      %v2340 = vpack.c.bf16 %v2314, %v2313
      %v2341 = vpack.c.bf16 %v2316, %v2315
      %v2342 = vpack.c.bf16 %v2318, %v2317
      %v2343 = vpack.c.bf16 %v2320, %v2319
      %v2344 = vpack.c.bf16 %v2322, %v2321
      %v2345 = vpack.c.bf16 %v2324, %v2323
      %v2346 = vpack.c.bf16 %v2326, %v2325
      %v2347 = vpack.c.bf16 %v2328, %v2327
      %v2348 = vpack.c.bf16 %v2330, %v2329
      %v2349 = vpack.c.bf16 %v2332, %v2331
      %v2350 = vpack.c.bf16 %v2334, %v2333
      %s2351 = scalar_lea.vmem %s3, 384
      %v2352 = vld [vmem:[%s2351] sm:$0xf]
      %v2353 = vld [vmem:[%s2351 + $0x4] sm:$0xf]
      %v2354 = vld [vmem:[%s2351 + $0x8] sm:$0xf]
      %v2355 = vld [vmem:[%s2351 + $0xc] sm:$0xf]
      %v2356 = vld [vmem:[%s2351 + $0x10] sm:$0xf]
      %v2357 = vld [vmem:[%s2351 + $0x14] sm:$0xf]
      %v2358 = vld [vmem:[%s2351 + $0x18] sm:$0xf]
      %v2359 = vld [vmem:[%s2351 + $0x1c] sm:$0xf]
      %v2360 = vld [vmem:[%s2351 + $0x20] sm:$0xf]
      %v2361 = vld [vmem:[%s2351 + $0x24] sm:$0xf]
      %v2362 = vld [vmem:[%s2351 + $0x28] sm:$0xf]
      %v2363 = vld [vmem:[%s2351 + $0x2c] sm:$0xf]
      %v2364 = vld [vmem:[%s2351 + $0x30] sm:$0xf]
      %v2365 = vld [vmem:[%s2351 + $0x34] sm:$0xf]
      %v2366 = vld [vmem:[%s2351 + $0x38] sm:$0xf]
      %v2367 = vld [vmem:[%s2351 + $0x3c] sm:$0xf]
      %v2384 = vunpack.c.l.b16 %v2352
      %v2385 = vunpack.c.l.b16 %v2353
      %v2386 = vunpack.c.l.b16 %v2354
      %v2387 = vunpack.c.l.b16 %v2355
      %v2388 = vunpack.c.l.b16 %v2356
      %v2389 = vunpack.c.l.b16 %v2357
      %v2390 = vunpack.c.l.b16 %v2358
      %v2391 = vunpack.c.l.b16 %v2359
      %v2392 = vunpack.c.l.b16 %v2360
      %v2393 = vunpack.c.l.b16 %v2361
      %v2394 = vunpack.c.l.b16 %v2362
      %v2395 = vunpack.c.l.b16 %v2363
      %v2396 = vunpack.c.l.b16 %v2364
      %v2397 = vunpack.c.l.b16 %v2365
      %v2398 = vunpack.c.l.b16 %v2366
      %v2399 = vunpack.c.l.b16 %v2367
      %v2400 = vpack.c.b16 %v2385, %v2384
      %v2401 = vpack.c.b16 %v2387, %v2386
      %v2402 = vpack.c.b16 %v2389, %v2388
      %v2403 = vpack.c.b16 %v2391, %v2390
      %v2404 = vpack.c.b16 %v2393, %v2392
      %v2405 = vpack.c.b16 %v2395, %v2394
      %v2406 = vpack.c.b16 %v2397, %v2396
      %v2407 = vpack.c.b16 %v2399, %v2398
      %2416 = vmatprep.subr.bf16.mxu0 0
      %2417 = vmatpush1.bf16.msra.mxu0 %v2407
      %2418 = vmatprep.subr.bf16.mxu0 0
      %2419 = vmatpush1.bf16.msra.mxu0 %v2406
      %2420 = vmatprep.subr.bf16.mxu0 0
      %2421 = vmatpush1.bf16.msra.mxu0 %v2405
      %2422 = vmatprep.subr.bf16.mxu0 0
      %2423 = vmatpush1.bf16.msra.mxu0 %v2404
      %2424 = vmatprep.subr.bf16.mxu0 0
      %2425 = vmatpush1.bf16.msra.mxu0 %v2403
      %2426 = vmatprep.subr.bf16.mxu0 0
      %2427 = vmatpush1.bf16.msra.mxu0 %v2402
      %2428 = vmatprep.subr.bf16.mxu0 0
      %2429 = vmatpush1.bf16.msra.mxu0 %v2401
      %2430 = vmatprep.subr.bf16.mxu0 0
      %2431 = vmatpush1.bf16.msra.mxu0 %v2400
      %2432 = vmatprep.subr.bf16.mxu0 0
      %2433 = vmatpush2.bf16.msra.mxu0 0
      %2434 = vmatprep.subr.bf16.mxu0 0
      %2435 = vmatpush2.bf16.msra.mxu0 0
      %2436 = vmatprep.subr.bf16.mxu0 0
      %2437 = vmatpush2.bf16.msra.mxu0 0
      %2438 = vmatprep.subr.bf16.mxu0 0
      %2439 = vmatpush2.bf16.msra.mxu0 0
      %2440 = vmatprep.subr.bf16.mxu0 0
      %2441 = vmatpush2.bf16.msra.mxu0 0
      %2442 = vmatprep.subr.bf16.mxu0 0
      %2443 = vmatpush2.bf16.msra.mxu0 0
      %2444 = vmatprep.subr.bf16.mxu0 0
      %2445 = vmatpush2.bf16.msra.mxu0 0
      %2446 = vmatprep.subr.bf16.mxu0 0
      %2447 = vmatpush2.bf16.msra.mxu0 0
      %2448 = vmatprep.mubr.bf16.mxu0 0
      %2449 = vmatmul.mubr.bf16.gmra.mxu0 %v2335
      %v2450 = vpop.f32.mrf.mxu0
      %v2451 = vadd.f32 0.0, %v2450
      %v2452 = vpop.f32.mrf.mxu0
      %v2453 = vpop.f32.mrf.mxu0
      %v2454 = vadd.f32 0.0, %v2453
      %v2455 = vpop.f32.mrf.mxu0
      %2456 = vmatprep.mubr.bf16.mxu0 0
      %2457 = vmatmul.mubr.bf16.gmra.mxu0 %v2336
      %v2458 = vpop.f32.mrf.mxu0
      %v2459 = vadd.f32 0.0, %v2458
      %v2460 = vpop.f32.mrf.mxu0
      %v2461 = vpop.f32.mrf.mxu0
      %v2462 = vadd.f32 0.0, %v2461
      %v2463 = vpop.f32.mrf.mxu0
      %2464 = vmatprep.mubr.bf16.mxu0 0
      %2465 = vmatmul.mubr.bf16.gmra.mxu0 %v2337
      %v2466 = vpop.f32.mrf.mxu0
      %v2467 = vadd.f32 0.0, %v2466
      %v2468 = vpop.f32.mrf.mxu0
      %v2469 = vpop.f32.mrf.mxu0
      %v2470 = vadd.f32 0.0, %v2469
      %v2471 = vpop.f32.mrf.mxu0
      %2472 = vmatprep.mubr.bf16.mxu0 0
      %2473 = vmatmul.mubr.bf16.gmra.mxu0 %v2338
      %v2474 = vpop.f32.mrf.mxu0
      %v2475 = vadd.f32 0.0, %v2474
      %v2476 = vpop.f32.mrf.mxu0
      %v2477 = vpop.f32.mrf.mxu0
      %v2478 = vadd.f32 0.0, %v2477
      %v2479 = vpop.f32.mrf.mxu0
      %2480 = vmatprep.mubr.bf16.mxu0 0
      %2481 = vmatmul.mubr.bf16.gmra.mxu0 %v2339
      %v2482 = vpop.f32.mrf.mxu0
      %v2483 = vadd.f32 0.0, %v2482
      %v2484 = vpop.f32.mrf.mxu0
      %v2485 = vpop.f32.mrf.mxu0
      %v2486 = vadd.f32 0.0, %v2485
      %v2487 = vpop.f32.mrf.mxu0
      %2488 = vmatprep.mubr.bf16.mxu0 0
      %2489 = vmatmul.mubr.bf16.gmra.mxu0 %v2340
      %v2490 = vpop.f32.mrf.mxu0
      %v2491 = vadd.f32 0.0, %v2490
      %v2492 = vpop.f32.mrf.mxu0
      %v2493 = vpop.f32.mrf.mxu0
      %v2494 = vadd.f32 0.0, %v2493
      %v2495 = vpop.f32.mrf.mxu0
      %2496 = vmatprep.mubr.bf16.mxu0 0
      %2497 = vmatmul.mubr.bf16.gmra.mxu0 %v2341
      %v2498 = vpop.f32.mrf.mxu0
      %v2499 = vadd.f32 0.0, %v2498
      %v2500 = vpop.f32.mrf.mxu0
      %v2501 = vpop.f32.mrf.mxu0
      %v2502 = vadd.f32 0.0, %v2501
      %v2503 = vpop.f32.mrf.mxu0
      %2504 = vmatprep.mubr.bf16.mxu0 0
      %2505 = vmatmul.mubr.bf16.gmra.mxu0 %v2342
      %v2506 = vpop.f32.mrf.mxu0
      %v2507 = vadd.f32 0.0, %v2506
      %v2508 = vpop.f32.mrf.mxu0
      %v2509 = vpop.f32.mrf.mxu0
      %v2510 = vadd.f32 0.0, %v2509
      %v2511 = vpop.f32.mrf.mxu0
      %2512 = vmatprep.mubr.bf16.mxu0 0
      %2513 = vmatmul.mubr.bf16.gmra.mxu0 %v2343
      %v2514 = vpop.f32.mrf.mxu0
      %v2515 = vadd.f32 0.0, %v2514
      %v2516 = vpop.f32.mrf.mxu0
      %v2517 = vpop.f32.mrf.mxu0
      %v2518 = vadd.f32 0.0, %v2517
      %v2519 = vpop.f32.mrf.mxu0
      %2520 = vmatprep.mubr.bf16.mxu0 0
      %2521 = vmatmul.mubr.bf16.gmra.mxu0 %v2344
      %v2522 = vpop.f32.mrf.mxu0
      %v2523 = vadd.f32 0.0, %v2522
      %v2524 = vpop.f32.mrf.mxu0
      %v2525 = vpop.f32.mrf.mxu0
      %v2526 = vadd.f32 0.0, %v2525
      %v2527 = vpop.f32.mrf.mxu0
      %2528 = vmatprep.mubr.bf16.mxu0 0
      %2529 = vmatmul.mubr.bf16.gmra.mxu0 %v2345
      %v2530 = vpop.f32.mrf.mxu0
      %v2531 = vadd.f32 0.0, %v2530
      %v2532 = vpop.f32.mrf.mxu0
      %v2533 = vpop.f32.mrf.mxu0
      %v2534 = vadd.f32 0.0, %v2533
      %v2535 = vpop.f32.mrf.mxu0
      %2536 = vmatprep.mubr.bf16.mxu0 0
      %2537 = vmatmul.mubr.bf16.gmra.mxu0 %v2346
      %v2538 = vpop.f32.mrf.mxu0
      %v2539 = vadd.f32 0.0, %v2538
      %v2540 = vpop.f32.mrf.mxu0
      %v2541 = vpop.f32.mrf.mxu0
      %v2542 = vadd.f32 0.0, %v2541
      %v2543 = vpop.f32.mrf.mxu0
      %2544 = vmatprep.mubr.bf16.mxu0 0
      %2545 = vmatmul.mubr.bf16.gmra.mxu0 %v2347
      %v2546 = vpop.f32.mrf.mxu0
      %v2547 = vadd.f32 0.0, %v2546
      %v2548 = vpop.f32.mrf.mxu0
      %v2549 = vpop.f32.mrf.mxu0
      %v2550 = vadd.f32 0.0, %v2549
      %v2551 = vpop.f32.mrf.mxu0
      %2552 = vmatprep.mubr.bf16.mxu0 0
      %2553 = vmatmul.mubr.bf16.gmra.mxu0 %v2348
      %v2554 = vpop.f32.mrf.mxu0
      %v2555 = vadd.f32 0.0, %v2554
      %v2556 = vpop.f32.mrf.mxu0
      %v2557 = vpop.f32.mrf.mxu0
      %v2558 = vadd.f32 0.0, %v2557
      %v2559 = vpop.f32.mrf.mxu0
      %2560 = vmatprep.mubr.bf16.mxu0 0
      %2561 = vmatmul.mubr.bf16.gmra.mxu0 %v2349
      %v2562 = vpop.f32.mrf.mxu0
      %v2563 = vadd.f32 0.0, %v2562
      %v2564 = vpop.f32.mrf.mxu0
      %v2565 = vpop.f32.mrf.mxu0
      %v2566 = vadd.f32 0.0, %v2565
      %v2567 = vpop.f32.mrf.mxu0
      %2568 = vmatprep.mubr.bf16.mxu0 0
      %2569 = vmatmul.mubr.bf16.gmra.mxu0 %v2350
      %v2570 = vpop.f32.mrf.mxu0
      %v2571 = vadd.f32 0.0, %v2570
      %v2572 = vpop.f32.mrf.mxu0
      %v2573 = vpop.f32.mrf.mxu0
      %v2574 = vadd.f32 0.0, %v2573
      %v2575 = vpop.f32.mrf.mxu0
      %2576 = vdwg.mxu0
      %v2577 = vadd.f32 %v2270, %v2451
      %v2578 = vadd.f32 %v2271, %v2454
      %v2579 = vadd.f32 %v2272, %v2459
      %v2580 = vadd.f32 %v2273, %v2462
      %v2581 = vadd.f32 %v2274, %v2467
      %v2582 = vadd.f32 %v2275, %v2470
      %v2583 = vadd.f32 %v2276, %v2475
      %v2584 = vadd.f32 %v2277, %v2478
      %v2585 = vadd.f32 %v2278, %v2483
      %v2586 = vadd.f32 %v2279, %v2486
      %v2587 = vadd.f32 %v2280, %v2491
      %v2588 = vadd.f32 %v2281, %v2494
      %v2589 = vadd.f32 %v2282, %v2499
      %v2590 = vadd.f32 %v2283, %v2502
      %v2591 = vadd.f32 %v2284, %v2507
      %v2592 = vadd.f32 %v2285, %v2510
      %v2593 = vadd.f32 %v2286, %v2515
      %v2594 = vadd.f32 %v2287, %v2518
      %v2595 = vadd.f32 %v2288, %v2523
      %v2596 = vadd.f32 %v2289, %v2526
      %v2597 = vadd.f32 %v2290, %v2531
      %v2598 = vadd.f32 %v2291, %v2534
      %v2599 = vadd.f32 %v2292, %v2539
      %v2600 = vadd.f32 %v2293, %v2542
      %v2601 = vadd.f32 %v2294, %v2547
      %v2602 = vadd.f32 %v2295, %v2550
      %v2603 = vadd.f32 %v2296, %v2555
      %v2604 = vadd.f32 %v2297, %v2558
      %v2605 = vadd.f32 %v2298, %v2563
      %v2606 = vadd.f32 %v2299, %v2566
      %v2607 = vadd.f32 %v2300, %v2571
      %v2608 = vadd.f32 %v2301, %v2574
      %v2609 = vld [vmem:[%s2302 + $0x1] sm:$0xff]
      %v2610 = vld [vmem:[%s2302 + $0x9] sm:$0xff]
      %v2611 = vld [vmem:[%s2302 + $0x19] sm:$0xff]
      %v2612 = vld [vmem:[%s2302 + $0x21] sm:$0xff]
      %v2613 = vld [vmem:[%s2302 + $0x31] sm:$0xff]
      %v2614 = vld [vmem:[%s2302 + $0x39] sm:$0xff]
      %v2615 = vld [vmem:[%s2302 + $0x49] sm:$0xff]
      %v2616 = vld [vmem:[%s2302 + $0x51] sm:$0xff]
      %v2617 = vld [vmem:[%s2302 + $0x61] sm:$0xff]
      %v2618 = vld [vmem:[%s2302 + $0x69] sm:$0xff]
      %v2619 = vld [vmem:[%s2302 + $0x79] sm:$0xff]
      %v2620 = vld [vmem:[%s2302 + $0x81] sm:$0xff]
      %v2621 = vld [vmem:[%s2302 + $0x91] sm:$0xff]
      %v2622 = vld [vmem:[%s2302 + $0x99] sm:$0xff]
      %v2623 = vld [vmem:[%s2302 + $0xa9] sm:$0xff]
      %v2624 = vld [vmem:[%s2302 + $0xb1] sm:$0xff]
      %v2625 = vld [vmem:[%s2302 + $0xc1] sm:$0xff]
      %v2626 = vld [vmem:[%s2302 + $0xc9] sm:$0xff]
      %v2627 = vld [vmem:[%s2302 + $0xd9] sm:$0xff]
      %v2628 = vld [vmem:[%s2302 + $0xe1] sm:$0xff]
      %v2629 = vld [vmem:[%s2302 + $0xf1] sm:$0xff]
      %v2630 = vld [vmem:[%s2302 + $0xf9] sm:$0xff]
      %v2631 = vld [vmem:[%s2302 + $0x109] sm:$0xff]
      %v2632 = vld [vmem:[%s2302 + $0x111] sm:$0xff]
      %v2633 = vld [vmem:[%s2302 + $0x121] sm:$0xff]
      %v2634 = vld [vmem:[%s2302 + $0x129] sm:$0xff]
      %v2635 = vld [vmem:[%s2302 + $0x139] sm:$0xff]
      %v2636 = vld [vmem:[%s2302 + $0x141] sm:$0xff]
      %v2637 = vld [vmem:[%s2302 + $0x151] sm:$0xff]
      %v2638 = vld [vmem:[%s2302 + $0x159] sm:$0xff]
      %v2639 = vld [vmem:[%s2302 + $0x169] sm:$0xff]
      %v2640 = vld [vmem:[%s2302 + $0x171] sm:$0xff]
      %v2641 = vpack.c.bf16 %v2610, %v2609
      %v2642 = vpack.c.bf16 %v2612, %v2611
      %v2643 = vpack.c.bf16 %v2614, %v2613
      %v2644 = vpack.c.bf16 %v2616, %v2615
      %v2645 = vpack.c.bf16 %v2618, %v2617
      %v2646 = vpack.c.bf16 %v2620, %v2619
      %v2647 = vpack.c.bf16 %v2622, %v2621
      %v2648 = vpack.c.bf16 %v2624, %v2623
      %v2649 = vpack.c.bf16 %v2626, %v2625
      %v2650 = vpack.c.bf16 %v2628, %v2627
      %v2651 = vpack.c.bf16 %v2630, %v2629
      %v2652 = vpack.c.bf16 %v2632, %v2631
      %v2653 = vpack.c.bf16 %v2634, %v2633
      %v2654 = vpack.c.bf16 %v2636, %v2635
      %v2655 = vpack.c.bf16 %v2638, %v2637
      %v2656 = vpack.c.bf16 %v2640, %v2639
      %s2657 = scalar_lea.vmem %s3, 448
      %v2658 = vld [vmem:[%s2657] sm:$0xf]
      %v2659 = vld [vmem:[%s2657 + $0x4] sm:$0xf]
      %v2660 = vld [vmem:[%s2657 + $0x8] sm:$0xf]
      %v2661 = vld [vmem:[%s2657 + $0xc] sm:$0xf]
      %v2662 = vld [vmem:[%s2657 + $0x10] sm:$0xf]
      %v2663 = vld [vmem:[%s2657 + $0x14] sm:$0xf]
      %v2664 = vld [vmem:[%s2657 + $0x18] sm:$0xf]
      %v2665 = vld [vmem:[%s2657 + $0x1c] sm:$0xf]
      %v2666 = vld [vmem:[%s2657 + $0x20] sm:$0xf]
      %v2667 = vld [vmem:[%s2657 + $0x24] sm:$0xf]
      %v2668 = vld [vmem:[%s2657 + $0x28] sm:$0xf]
      %v2669 = vld [vmem:[%s2657 + $0x2c] sm:$0xf]
      %v2670 = vld [vmem:[%s2657 + $0x30] sm:$0xf]
      %v2671 = vld [vmem:[%s2657 + $0x34] sm:$0xf]
      %v2672 = vld [vmem:[%s2657 + $0x38] sm:$0xf]
      %v2673 = vld [vmem:[%s2657 + $0x3c] sm:$0xf]
      %v2690 = vunpack.c.l.b16 %v2658
      %v2691 = vunpack.c.l.b16 %v2659
      %v2692 = vunpack.c.l.b16 %v2660
      %v2693 = vunpack.c.l.b16 %v2661
      %v2694 = vunpack.c.l.b16 %v2662
      %v2695 = vunpack.c.l.b16 %v2663
      %v2696 = vunpack.c.l.b16 %v2664
      %v2697 = vunpack.c.l.b16 %v2665
      %v2698 = vunpack.c.l.b16 %v2666
      %v2699 = vunpack.c.l.b16 %v2667
      %v2700 = vunpack.c.l.b16 %v2668
      %v2701 = vunpack.c.l.b16 %v2669
      %v2702 = vunpack.c.l.b16 %v2670
      %v2703 = vunpack.c.l.b16 %v2671
      %v2704 = vunpack.c.l.b16 %v2672
      %v2705 = vunpack.c.l.b16 %v2673
      %v2706 = vpack.c.b16 %v2691, %v2690
      %v2707 = vpack.c.b16 %v2693, %v2692
      %v2708 = vpack.c.b16 %v2695, %v2694
      %v2709 = vpack.c.b16 %v2697, %v2696
      %v2710 = vpack.c.b16 %v2699, %v2698
      %v2711 = vpack.c.b16 %v2701, %v2700
      %v2712 = vpack.c.b16 %v2703, %v2702
      %v2713 = vpack.c.b16 %v2705, %v2704
      %2722 = vmatprep.subr.bf16.mxu0 0
      %2723 = vmatpush1.bf16.msra.mxu0 %v2713
      %2724 = vmatprep.subr.bf16.mxu0 0
      %2725 = vmatpush1.bf16.msra.mxu0 %v2712
      %2726 = vmatprep.subr.bf16.mxu0 0
      %2727 = vmatpush1.bf16.msra.mxu0 %v2711
      %2728 = vmatprep.subr.bf16.mxu0 0
      %2729 = vmatpush1.bf16.msra.mxu0 %v2710
      %2730 = vmatprep.subr.bf16.mxu0 0
      %2731 = vmatpush1.bf16.msra.mxu0 %v2709
      %2732 = vmatprep.subr.bf16.mxu0 0
      %2733 = vmatpush1.bf16.msra.mxu0 %v2708
      %2734 = vmatprep.subr.bf16.mxu0 0
      %2735 = vmatpush1.bf16.msra.mxu0 %v2707
      %2736 = vmatprep.subr.bf16.mxu0 0
      %2737 = vmatpush1.bf16.msra.mxu0 %v2706
      %2738 = vmatprep.subr.bf16.mxu0 0
      %2739 = vmatpush2.bf16.msra.mxu0 0
      %2740 = vmatprep.subr.bf16.mxu0 0
      %2741 = vmatpush2.bf16.msra.mxu0 0
      %2742 = vmatprep.subr.bf16.mxu0 0
      %2743 = vmatpush2.bf16.msra.mxu0 0
      %2744 = vmatprep.subr.bf16.mxu0 0
      %2745 = vmatpush2.bf16.msra.mxu0 0
      %2746 = vmatprep.subr.bf16.mxu0 0
      %2747 = vmatpush2.bf16.msra.mxu0 0
      %2748 = vmatprep.subr.bf16.mxu0 0
      %2749 = vmatpush2.bf16.msra.mxu0 0
      %2750 = vmatprep.subr.bf16.mxu0 0
      %2751 = vmatpush2.bf16.msra.mxu0 0
      %2752 = vmatprep.subr.bf16.mxu0 0
      %2753 = vmatpush2.bf16.msra.mxu0 0
      %2754 = vmatprep.mubr.bf16.mxu0 0
      %2755 = vmatmul.mubr.bf16.gmra.mxu0 %v2641
      %v2756 = vpop.f32.mrf.mxu0
      %v2757 = vadd.f32 0.0, %v2756
      %v2758 = vpop.f32.mrf.mxu0
      %v2759 = vpop.f32.mrf.mxu0
      %v2760 = vadd.f32 0.0, %v2759
      %v2761 = vpop.f32.mrf.mxu0
      %2762 = vmatprep.mubr.bf16.mxu0 0
      %2763 = vmatmul.mubr.bf16.gmra.mxu0 %v2642
      %v2764 = vpop.f32.mrf.mxu0
      %v2765 = vadd.f32 0.0, %v2764
      %v2766 = vpop.f32.mrf.mxu0
      %v2767 = vpop.f32.mrf.mxu0
      %v2768 = vadd.f32 0.0, %v2767
      %v2769 = vpop.f32.mrf.mxu0
      %2770 = vmatprep.mubr.bf16.mxu0 0
      %2771 = vmatmul.mubr.bf16.gmra.mxu0 %v2643
      %v2772 = vpop.f32.mrf.mxu0
      %v2773 = vadd.f32 0.0, %v2772
      %v2774 = vpop.f32.mrf.mxu0
      %v2775 = vpop.f32.mrf.mxu0
      %v2776 = vadd.f32 0.0, %v2775
      %v2777 = vpop.f32.mrf.mxu0
      %2778 = vmatprep.mubr.bf16.mxu0 0
      %2779 = vmatmul.mubr.bf16.gmra.mxu0 %v2644
      %v2780 = vpop.f32.mrf.mxu0
      %v2781 = vadd.f32 0.0, %v2780
      %v2782 = vpop.f32.mrf.mxu0
      %v2783 = vpop.f32.mrf.mxu0
      %v2784 = vadd.f32 0.0, %v2783
      %v2785 = vpop.f32.mrf.mxu0
      %2786 = vmatprep.mubr.bf16.mxu0 0
      %2787 = vmatmul.mubr.bf16.gmra.mxu0 %v2645
      %v2788 = vpop.f32.mrf.mxu0
      %v2789 = vadd.f32 0.0, %v2788
      %v2790 = vpop.f32.mrf.mxu0
      %v2791 = vpop.f32.mrf.mxu0
      %v2792 = vadd.f32 0.0, %v2791
      %v2793 = vpop.f32.mrf.mxu0
      %2794 = vmatprep.mubr.bf16.mxu0 0
      %2795 = vmatmul.mubr.bf16.gmra.mxu0 %v2646
      %v2796 = vpop.f32.mrf.mxu0
      %v2797 = vadd.f32 0.0, %v2796
      %v2798 = vpop.f32.mrf.mxu0
      %v2799 = vpop.f32.mrf.mxu0
      %v2800 = vadd.f32 0.0, %v2799
      %v2801 = vpop.f32.mrf.mxu0
      %2802 = vmatprep.mubr.bf16.mxu0 0
      %2803 = vmatmul.mubr.bf16.gmra.mxu0 %v2647
      %v2804 = vpop.f32.mrf.mxu0
      %v2805 = vadd.f32 0.0, %v2804
      %v2806 = vpop.f32.mrf.mxu0
      %v2807 = vpop.f32.mrf.mxu0
      %v2808 = vadd.f32 0.0, %v2807
      %v2809 = vpop.f32.mrf.mxu0
      %2810 = vmatprep.mubr.bf16.mxu0 0
      %2811 = vmatmul.mubr.bf16.gmra.mxu0 %v2648
      %v2812 = vpop.f32.mrf.mxu0
      %v2813 = vadd.f32 0.0, %v2812
      %v2814 = vpop.f32.mrf.mxu0
      %v2815 = vpop.f32.mrf.mxu0
      %v2816 = vadd.f32 0.0, %v2815
      %v2817 = vpop.f32.mrf.mxu0
      %2818 = vmatprep.mubr.bf16.mxu0 0
      %2819 = vmatmul.mubr.bf16.gmra.mxu0 %v2649
      %v2820 = vpop.f32.mrf.mxu0
      %v2821 = vadd.f32 0.0, %v2820
      %v2822 = vpop.f32.mrf.mxu0
      %v2823 = vpop.f32.mrf.mxu0
      %v2824 = vadd.f32 0.0, %v2823
      %v2825 = vpop.f32.mrf.mxu0
      %2826 = vmatprep.mubr.bf16.mxu0 0
      %2827 = vmatmul.mubr.bf16.gmra.mxu0 %v2650
      %v2828 = vpop.f32.mrf.mxu0
      %v2829 = vadd.f32 0.0, %v2828
      %v2830 = vpop.f32.mrf.mxu0
      %v2831 = vpop.f32.mrf.mxu0
      %v2832 = vadd.f32 0.0, %v2831
      %v2833 = vpop.f32.mrf.mxu0
      %2834 = vmatprep.mubr.bf16.mxu0 0
      %2835 = vmatmul.mubr.bf16.gmra.mxu0 %v2651
      %v2836 = vpop.f32.mrf.mxu0
      %v2837 = vadd.f32 0.0, %v2836
      %v2838 = vpop.f32.mrf.mxu0
      %v2839 = vpop.f32.mrf.mxu0
      %v2840 = vadd.f32 0.0, %v2839
      %v2841 = vpop.f32.mrf.mxu0
      %2842 = vmatprep.mubr.bf16.mxu0 0
      %2843 = vmatmul.mubr.bf16.gmra.mxu0 %v2652
      %v2844 = vpop.f32.mrf.mxu0
      %v2845 = vadd.f32 0.0, %v2844
      %v2846 = vpop.f32.mrf.mxu0
      %v2847 = vpop.f32.mrf.mxu0
      %v2848 = vadd.f32 0.0, %v2847
      %v2849 = vpop.f32.mrf.mxu0
      %2850 = vmatprep.mubr.bf16.mxu0 0
      %2851 = vmatmul.mubr.bf16.gmra.mxu0 %v2653
      %v2852 = vpop.f32.mrf.mxu0
      %v2853 = vadd.f32 0.0, %v2852
      %v2854 = vpop.f32.mrf.mxu0
      %v2855 = vpop.f32.mrf.mxu0
      %v2856 = vadd.f32 0.0, %v2855
      %v2857 = vpop.f32.mrf.mxu0
      %2858 = vmatprep.mubr.bf16.mxu0 0
      %2859 = vmatmul.mubr.bf16.gmra.mxu0 %v2654
      %v2860 = vpop.f32.mrf.mxu0
      %v2861 = vadd.f32 0.0, %v2860
      %v2862 = vpop.f32.mrf.mxu0
      %v2863 = vpop.f32.mrf.mxu0
      %v2864 = vadd.f32 0.0, %v2863
      %v2865 = vpop.f32.mrf.mxu0
      %2866 = vmatprep.mubr.bf16.mxu0 0
      %2867 = vmatmul.mubr.bf16.gmra.mxu0 %v2655
      %v2868 = vpop.f32.mrf.mxu0
      %v2869 = vadd.f32 0.0, %v2868
      %v2870 = vpop.f32.mrf.mxu0
      %v2871 = vpop.f32.mrf.mxu0
      %v2872 = vadd.f32 0.0, %v2871
      %v2873 = vpop.f32.mrf.mxu0
      %2874 = vmatprep.mubr.bf16.mxu0 0
      %2875 = vmatmul.mubr.bf16.gmra.mxu0 %v2656
      %v2876 = vpop.f32.mrf.mxu0
      %v2877 = vadd.f32 0.0, %v2876
      %v2878 = vpop.f32.mrf.mxu0
      %v2879 = vpop.f32.mrf.mxu0
      %v2880 = vadd.f32 0.0, %v2879
      %v2881 = vpop.f32.mrf.mxu0
      %2882 = vdwg.mxu0
      %v2883 = vadd.f32 %v2577, %v2757
      %v2884 = vadd.f32 %v2578, %v2760
      %v2885 = vadd.f32 %v2579, %v2765
      %v2886 = vadd.f32 %v2580, %v2768
      %v2887 = vadd.f32 %v2581, %v2773
      %v2888 = vadd.f32 %v2582, %v2776
      %v2889 = vadd.f32 %v2583, %v2781
      %v2890 = vadd.f32 %v2584, %v2784
      %v2891 = vadd.f32 %v2585, %v2789
      %v2892 = vadd.f32 %v2586, %v2792
      %v2893 = vadd.f32 %v2587, %v2797
      %v2894 = vadd.f32 %v2588, %v2800
      %v2895 = vadd.f32 %v2589, %v2805
      %v2896 = vadd.f32 %v2590, %v2808
      %v2897 = vadd.f32 %v2591, %v2813
      %v2898 = vadd.f32 %v2592, %v2816
      %v2899 = vadd.f32 %v2593, %v2821
      %v2900 = vadd.f32 %v2594, %v2824
      %v2901 = vadd.f32 %v2595, %v2829
      %v2902 = vadd.f32 %v2596, %v2832
      %v2903 = vadd.f32 %v2597, %v2837
      %v2904 = vadd.f32 %v2598, %v2840
      %v2905 = vadd.f32 %v2599, %v2845
      %v2906 = vadd.f32 %v2600, %v2848
      %v2907 = vadd.f32 %v2601, %v2853
      %v2908 = vadd.f32 %v2602, %v2856
      %v2909 = vadd.f32 %v2603, %v2861
      %v2910 = vadd.f32 %v2604, %v2864
      %v2911 = vadd.f32 %v2605, %v2869
      %v2912 = vadd.f32 %v2606, %v2872
      %v2913 = vadd.f32 %v2607, %v2877
      %v2914 = vadd.f32 %v2608, %v2880
      %v2915 = vld [vmem:[%s2302 + $0x2] sm:$0xff]
      %v2916 = vld [vmem:[%s2302 + $0xa] sm:$0xff]
      %v2917 = vld [vmem:[%s2302 + $0x1a] sm:$0xff]
      %v2918 = vld [vmem:[%s2302 + $0x22] sm:$0xff]
      %v2919 = vld [vmem:[%s2302 + $0x32] sm:$0xff]
      %v2920 = vld [vmem:[%s2302 + $0x3a] sm:$0xff]
      %v2921 = vld [vmem:[%s2302 + $0x4a] sm:$0xff]
      %v2922 = vld [vmem:[%s2302 + $0x52] sm:$0xff]
      %v2923 = vld [vmem:[%s2302 + $0x62] sm:$0xff]
      %v2924 = vld [vmem:[%s2302 + $0x6a] sm:$0xff]
      %v2925 = vld [vmem:[%s2302 + $0x7a] sm:$0xff]
      %v2926 = vld [vmem:[%s2302 + $0x82] sm:$0xff]
      %v2927 = vld [vmem:[%s2302 + $0x92] sm:$0xff]
      %v2928 = vld [vmem:[%s2302 + $0x9a] sm:$0xff]
      %v2929 = vld [vmem:[%s2302 + $0xaa] sm:$0xff]
      %v2930 = vld [vmem:[%s2302 + $0xb2] sm:$0xff]
      %v2931 = vld [vmem:[%s2302 + $0xc2] sm:$0xff]
      %v2932 = vld [vmem:[%s2302 + $0xca] sm:$0xff]
      %v2933 = vld [vmem:[%s2302 + $0xda] sm:$0xff]
      %v2934 = vld [vmem:[%s2302 + $0xe2] sm:$0xff]
      %v2935 = vld [vmem:[%s2302 + $0xf2] sm:$0xff]
      %v2936 = vld [vmem:[%s2302 + $0xfa] sm:$0xff]
      %v2937 = vld [vmem:[%s2302 + $0x10a] sm:$0xff]
      %v2938 = vld [vmem:[%s2302 + $0x112] sm:$0xff]
      %v2939 = vld [vmem:[%s2302 + $0x122] sm:$0xff]
      %v2940 = vld [vmem:[%s2302 + $0x12a] sm:$0xff]
      %v2941 = vld [vmem:[%s2302 + $0x13a] sm:$0xff]
      %v2942 = vld [vmem:[%s2302 + $0x142] sm:$0xff]
      %v2943 = vld [vmem:[%s2302 + $0x152] sm:$0xff]
      %v2944 = vld [vmem:[%s2302 + $0x15a] sm:$0xff]
      %v2945 = vld [vmem:[%s2302 + $0x16a] sm:$0xff]
      %v2946 = vld [vmem:[%s2302 + $0x172] sm:$0xff]
      %v2947 = vpack.c.bf16 %v2916, %v2915
      %v2948 = vpack.c.bf16 %v2918, %v2917
      %v2949 = vpack.c.bf16 %v2920, %v2919
      %v2950 = vpack.c.bf16 %v2922, %v2921
      %v2951 = vpack.c.bf16 %v2924, %v2923
      %v2952 = vpack.c.bf16 %v2926, %v2925
      %v2953 = vpack.c.bf16 %v2928, %v2927
      %v2954 = vpack.c.bf16 %v2930, %v2929
      %v2955 = vpack.c.bf16 %v2932, %v2931
      %v2956 = vpack.c.bf16 %v2934, %v2933
      %v2957 = vpack.c.bf16 %v2936, %v2935
      %v2958 = vpack.c.bf16 %v2938, %v2937
      %v2959 = vpack.c.bf16 %v2940, %v2939
      %v2960 = vpack.c.bf16 %v2942, %v2941
      %v2961 = vpack.c.bf16 %v2944, %v2943
      %v2962 = vpack.c.bf16 %v2946, %v2945
      %s2963 = scalar_lea.vmem %s3, 512
      %v2964 = vld [vmem:[%s2963] sm:$0xf]
      %v2965 = vld [vmem:[%s2963 + $0x4] sm:$0xf]
      %v2966 = vld [vmem:[%s2963 + $0x8] sm:$0xf]
      %v2967 = vld [vmem:[%s2963 + $0xc] sm:$0xf]
      %v2968 = vld [vmem:[%s2963 + $0x10] sm:$0xf]
      %v2969 = vld [vmem:[%s2963 + $0x14] sm:$0xf]
      %v2970 = vld [vmem:[%s2963 + $0x18] sm:$0xf]
      %v2971 = vld [vmem:[%s2963 + $0x1c] sm:$0xf]
      %v2972 = vld [vmem:[%s2963 + $0x20] sm:$0xf]
      %v2973 = vld [vmem:[%s2963 + $0x24] sm:$0xf]
      %v2974 = vld [vmem:[%s2963 + $0x28] sm:$0xf]
      %v2975 = vld [vmem:[%s2963 + $0x2c] sm:$0xf]
      %v2976 = vld [vmem:[%s2963 + $0x30] sm:$0xf]
      %v2977 = vld [vmem:[%s2963 + $0x34] sm:$0xf]
      %v2978 = vld [vmem:[%s2963 + $0x38] sm:$0xf]
      %v2979 = vld [vmem:[%s2963 + $0x3c] sm:$0xf]
      %v2996 = vunpack.c.l.b16 %v2964
      %v2997 = vunpack.c.l.b16 %v2965
      %v2998 = vunpack.c.l.b16 %v2966
      %v2999 = vunpack.c.l.b16 %v2967
      %v3000 = vunpack.c.l.b16 %v2968
      %v3001 = vunpack.c.l.b16 %v2969
      %v3002 = vunpack.c.l.b16 %v2970
      %v3003 = vunpack.c.l.b16 %v2971
      %v3004 = vunpack.c.l.b16 %v2972
      %v3005 = vunpack.c.l.b16 %v2973
      %v3006 = vunpack.c.l.b16 %v2974
      %v3007 = vunpack.c.l.b16 %v2975
      %v3008 = vunpack.c.l.b16 %v2976
      %v3009 = vunpack.c.l.b16 %v2977
      %v3010 = vunpack.c.l.b16 %v2978
      %v3011 = vunpack.c.l.b16 %v2979
      %v3012 = vpack.c.b16 %v2997, %v2996
      %v3013 = vpack.c.b16 %v2999, %v2998
      %v3014 = vpack.c.b16 %v3001, %v3000
      %v3015 = vpack.c.b16 %v3003, %v3002
      %v3016 = vpack.c.b16 %v3005, %v3004
      %v3017 = vpack.c.b16 %v3007, %v3006
      %v3018 = vpack.c.b16 %v3009, %v3008
      %v3019 = vpack.c.b16 %v3011, %v3010
      %3028 = vmatprep.subr.bf16.mxu0 0
      %3029 = vmatpush1.bf16.msra.mxu0 %v3019
      %3030 = vmatprep.subr.bf16.mxu0 0
      %3031 = vmatpush1.bf16.msra.mxu0 %v3018
      %3032 = vmatprep.subr.bf16.mxu0 0
      %3033 = vmatpush1.bf16.msra.mxu0 %v3017
      %3034 = vmatprep.subr.bf16.mxu0 0
      %3035 = vmatpush1.bf16.msra.mxu0 %v3016
      %3036 = vmatprep.subr.bf16.mxu0 0
      %3037 = vmatpush1.bf16.msra.mxu0 %v3015
      %3038 = vmatprep.subr.bf16.mxu0 0
      %3039 = vmatpush1.bf16.msra.mxu0 %v3014
      %3040 = vmatprep.subr.bf16.mxu0 0
      %3041 = vmatpush1.bf16.msra.mxu0 %v3013
      %3042 = vmatprep.subr.bf16.mxu0 0
      %3043 = vmatpush1.bf16.msra.mxu0 %v3012
      %3044 = vmatprep.subr.bf16.mxu0 0
      %3045 = vmatpush2.bf16.msra.mxu0 0
      %3046 = vmatprep.subr.bf16.mxu0 0
      %3047 = vmatpush2.bf16.msra.mxu0 0
      %3048 = vmatprep.subr.bf16.mxu0 0
      %3049 = vmatpush2.bf16.msra.mxu0 0
      %3050 = vmatprep.subr.bf16.mxu0 0
      %3051 = vmatpush2.bf16.msra.mxu0 0
      %3052 = vmatprep.subr.bf16.mxu0 0
      %3053 = vmatpush2.bf16.msra.mxu0 0
      %3054 = vmatprep.subr.bf16.mxu0 0
      %3055 = vmatpush2.bf16.msra.mxu0 0
      %3056 = vmatprep.subr.bf16.mxu0 0
      %3057 = vmatpush2.bf16.msra.mxu0 0
      %3058 = vmatprep.subr.bf16.mxu0 0
      %3059 = vmatpush2.bf16.msra.mxu0 0
      %3060 = vmatprep.mubr.bf16.mxu0 0
      %3061 = vmatmul.mubr.bf16.gmra.mxu0 %v2947
      %v3062 = vpop.f32.mrf.mxu0
      %v3063 = vadd.f32 0.0, %v3062
      %v3064 = vpop.f32.mrf.mxu0
      %v3065 = vpop.f32.mrf.mxu0
      %v3066 = vadd.f32 0.0, %v3065
      %v3067 = vpop.f32.mrf.mxu0
      %3068 = vmatprep.mubr.bf16.mxu0 0
      %3069 = vmatmul.mubr.bf16.gmra.mxu0 %v2948
      %v3070 = vpop.f32.mrf.mxu0
      %v3071 = vadd.f32 0.0, %v3070
      %v3072 = vpop.f32.mrf.mxu0
      %v3073 = vpop.f32.mrf.mxu0
      %v3074 = vadd.f32 0.0, %v3073
      %v3075 = vpop.f32.mrf.mxu0
      %3076 = vmatprep.mubr.bf16.mxu0 0
      %3077 = vmatmul.mubr.bf16.gmra.mxu0 %v2949
      %v3078 = vpop.f32.mrf.mxu0
      %v3079 = vadd.f32 0.0, %v3078
      %v3080 = vpop.f32.mrf.mxu0
      %v3081 = vpop.f32.mrf.mxu0
      %v3082 = vadd.f32 0.0, %v3081
      %v3083 = vpop.f32.mrf.mxu0
      %3084 = vmatprep.mubr.bf16.mxu0 0
      %3085 = vmatmul.mubr.bf16.gmra.mxu0 %v2950
      %v3086 = vpop.f32.mrf.mxu0
      %v3087 = vadd.f32 0.0, %v3086
      %v3088 = vpop.f32.mrf.mxu0
      %v3089 = vpop.f32.mrf.mxu0
      %v3090 = vadd.f32 0.0, %v3089
      %v3091 = vpop.f32.mrf.mxu0
      %3092 = vmatprep.mubr.bf16.mxu0 0
      %3093 = vmatmul.mubr.bf16.gmra.mxu0 %v2951
      %v3094 = vpop.f32.mrf.mxu0
      %v3095 = vadd.f32 0.0, %v3094
      %v3096 = vpop.f32.mrf.mxu0
      %v3097 = vpop.f32.mrf.mxu0
      %v3098 = vadd.f32 0.0, %v3097
      %v3099 = vpop.f32.mrf.mxu0
      %3100 = vmatprep.mubr.bf16.mxu0 0
      %3101 = vmatmul.mubr.bf16.gmra.mxu0 %v2952
      %v3102 = vpop.f32.mrf.mxu0
      %v3103 = vadd.f32 0.0, %v3102
      %v3104 = vpop.f32.mrf.mxu0
      %v3105 = vpop.f32.mrf.mxu0
      %v3106 = vadd.f32 0.0, %v3105
      %v3107 = vpop.f32.mrf.mxu0
      %3108 = vmatprep.mubr.bf16.mxu0 0
      %3109 = vmatmul.mubr.bf16.gmra.mxu0 %v2953
      %v3110 = vpop.f32.mrf.mxu0
      %v3111 = vadd.f32 0.0, %v3110
      %v3112 = vpop.f32.mrf.mxu0
      %v3113 = vpop.f32.mrf.mxu0
      %v3114 = vadd.f32 0.0, %v3113
      %v3115 = vpop.f32.mrf.mxu0
      %3116 = vmatprep.mubr.bf16.mxu0 0
      %3117 = vmatmul.mubr.bf16.gmra.mxu0 %v2954
      %v3118 = vpop.f32.mrf.mxu0
      %v3119 = vadd.f32 0.0, %v3118
      %v3120 = vpop.f32.mrf.mxu0
      %v3121 = vpop.f32.mrf.mxu0
      %v3122 = vadd.f32 0.0, %v3121
      %v3123 = vpop.f32.mrf.mxu0
      %3124 = vmatprep.mubr.bf16.mxu0 0
      %3125 = vmatmul.mubr.bf16.gmra.mxu0 %v2955
      %v3126 = vpop.f32.mrf.mxu0
      %v3127 = vadd.f32 0.0, %v3126
      %v3128 = vpop.f32.mrf.mxu0
      %v3129 = vpop.f32.mrf.mxu0
      %v3130 = vadd.f32 0.0, %v3129
      %v3131 = vpop.f32.mrf.mxu0
      %3132 = vmatprep.mubr.bf16.mxu0 0
      %3133 = vmatmul.mubr.bf16.gmra.mxu0 %v2956
      %v3134 = vpop.f32.mrf.mxu0
      %v3135 = vadd.f32 0.0, %v3134
      %v3136 = vpop.f32.mrf.mxu0
      %v3137 = vpop.f32.mrf.mxu0
      %v3138 = vadd.f32 0.0, %v3137
      %v3139 = vpop.f32.mrf.mxu0
      %3140 = vmatprep.mubr.bf16.mxu0 0
      %3141 = vmatmul.mubr.bf16.gmra.mxu0 %v2957
      %v3142 = vpop.f32.mrf.mxu0
      %v3143 = vadd.f32 0.0, %v3142
      %v3144 = vpop.f32.mrf.mxu0
      %v3145 = vpop.f32.mrf.mxu0
      %v3146 = vadd.f32 0.0, %v3145
      %v3147 = vpop.f32.mrf.mxu0
      %3148 = vmatprep.mubr.bf16.mxu0 0
      %3149 = vmatmul.mubr.bf16.gmra.mxu0 %v2958
      %v3150 = vpop.f32.mrf.mxu0
      %v3151 = vadd.f32 0.0, %v3150
      %v3152 = vpop.f32.mrf.mxu0
      %v3153 = vpop.f32.mrf.mxu0
      %v3154 = vadd.f32 0.0, %v3153
      %v3155 = vpop.f32.mrf.mxu0
      %3156 = vmatprep.mubr.bf16.mxu0 0
      %3157 = vmatmul.mubr.bf16.gmra.mxu0 %v2959
      %v3158 = vpop.f32.mrf.mxu0
      %v3159 = vadd.f32 0.0, %v3158
      %v3160 = vpop.f32.mrf.mxu0
      %v3161 = vpop.f32.mrf.mxu0
      %v3162 = vadd.f32 0.0, %v3161
      %v3163 = vpop.f32.mrf.mxu0
      %3164 = vmatprep.mubr.bf16.mxu0 0
      %3165 = vmatmul.mubr.bf16.gmra.mxu0 %v2960
      %v3166 = vpop.f32.mrf.mxu0
      %v3167 = vadd.f32 0.0, %v3166
      %v3168 = vpop.f32.mrf.mxu0
      %v3169 = vpop.f32.mrf.mxu0
      %v3170 = vadd.f32 0.0, %v3169
      %v3171 = vpop.f32.mrf.mxu0
      %3172 = vmatprep.mubr.bf16.mxu0 0
      %3173 = vmatmul.mubr.bf16.gmra.mxu0 %v2961
      %v3174 = vpop.f32.mrf.mxu0
      %v3175 = vadd.f32 0.0, %v3174
      %v3176 = vpop.f32.mrf.mxu0
      %v3177 = vpop.f32.mrf.mxu0
      %v3178 = vadd.f32 0.0, %v3177
      %v3179 = vpop.f32.mrf.mxu0
      %3180 = vmatprep.mubr.bf16.mxu0 0
      %3181 = vmatmul.mubr.bf16.gmra.mxu0 %v2962
      %v3182 = vpop.f32.mrf.mxu0
      %v3183 = vadd.f32 0.0, %v3182
      %v3184 = vpop.f32.mrf.mxu0
      %v3185 = vpop.f32.mrf.mxu0
      %v3186 = vadd.f32 0.0, %v3185
      %v3187 = vpop.f32.mrf.mxu0
      %3188 = vdwg.mxu0
      %v3189 = vadd.f32 %v2883, %v3063
      %v3190 = vadd.f32 %v2884, %v3066
      %v3191 = vadd.f32 %v2885, %v3071
      %v3192 = vadd.f32 %v2886, %v3074
      %v3193 = vadd.f32 %v2887, %v3079
      %v3194 = vadd.f32 %v2888, %v3082
      %v3195 = vadd.f32 %v2889, %v3087
      %v3196 = vadd.f32 %v2890, %v3090
      %v3197 = vadd.f32 %v2891, %v3095
      %v3198 = vadd.f32 %v2892, %v3098
      %v3199 = vadd.f32 %v2893, %v3103
      %v3200 = vadd.f32 %v2894, %v3106
      %v3201 = vadd.f32 %v2895, %v3111
      %v3202 = vadd.f32 %v2896, %v3114
      %v3203 = vadd.f32 %v2897, %v3119
      %v3204 = vadd.f32 %v2898, %v3122
      %v3205 = vadd.f32 %v2899, %v3127
      %v3206 = vadd.f32 %v2900, %v3130
      %v3207 = vadd.f32 %v2901, %v3135
      %v3208 = vadd.f32 %v2902, %v3138
      %v3209 = vadd.f32 %v2903, %v3143
      %v3210 = vadd.f32 %v2904, %v3146
      %v3211 = vadd.f32 %v2905, %v3151
      %v3212 = vadd.f32 %v2906, %v3154
      %v3213 = vadd.f32 %v2907, %v3159
      %v3214 = vadd.f32 %v2908, %v3162
      %v3215 = vadd.f32 %v2909, %v3167
      %v3216 = vadd.f32 %v2910, %v3170
      %v3217 = vadd.f32 %v2911, %v3175
      %v3218 = vadd.f32 %v2912, %v3178
      %v3219 = vadd.f32 %v2913, %v3183
      %v3220 = vadd.f32 %v2914, %v3186
      %v3221 = vpack.c.bf16 %v3190, %v3189
      %v3222 = vpack.c.bf16 %v3192, %v3191
      %v3223 = vpack.c.bf16 %v3194, %v3193
      %v3224 = vpack.c.bf16 %v3196, %v3195
      %v3225 = vpack.c.bf16 %v3198, %v3197
      %v3226 = vpack.c.bf16 %v3200, %v3199
      %v3227 = vpack.c.bf16 %v3202, %v3201
      %v3228 = vpack.c.bf16 %v3204, %v3203
      %v3229 = vpack.c.bf16 %v3206, %v3205
      %v3230 = vpack.c.bf16 %v3208, %v3207
      %v3231 = vpack.c.bf16 %v3210, %v3209
      %v3232 = vpack.c.bf16 %v3212, %v3211
      %v3233 = vpack.c.bf16 %v3214, %v3213
      %v3234 = vpack.c.bf16 %v3216, %v3215
      %v3235 = vpack.c.bf16 %v3218, %v3217
      %v3236 = vpack.c.bf16 %v3220, %v3219
      %v3253 = vunpack.c.l.b16 %v3221
      %v3254 = vunpack.c.h.b16 %v3221
      %v3255 = vunpack.c.l.b16 %v3222
      %v3256 = vunpack.c.h.b16 %v3222
      %v3257 = vunpack.c.l.b16 %v3223
      %v3258 = vunpack.c.h.b16 %v3223
      %v3259 = vunpack.c.l.b16 %v3224
      %v3260 = vunpack.c.h.b16 %v3224
      %v3261 = vunpack.c.l.b16 %v3225
      %v3262 = vunpack.c.h.b16 %v3225
      %v3263 = vunpack.c.l.b16 %v3226
      %v3264 = vunpack.c.h.b16 %v3226
      %v3265 = vunpack.c.l.b16 %v3227
      %v3266 = vunpack.c.h.b16 %v3227
      %v3267 = vunpack.c.l.b16 %v3228
      %v3268 = vunpack.c.h.b16 %v3228
      %v3269 = vunpack.c.l.b16 %v3229
      %v3270 = vunpack.c.h.b16 %v3229
      %v3271 = vunpack.c.l.b16 %v3230
      %v3272 = vunpack.c.h.b16 %v3230
      %v3273 = vunpack.c.l.b16 %v3231
      %v3274 = vunpack.c.h.b16 %v3231
      %v3275 = vunpack.c.l.b16 %v3232
      %v3276 = vunpack.c.h.b16 %v3232
      %v3277 = vunpack.c.l.b16 %v3233
      %v3278 = vunpack.c.h.b16 %v3233
      %v3279 = vunpack.c.l.b16 %v3234
      %v3280 = vunpack.c.h.b16 %v3234
      %v3281 = vunpack.c.l.b16 %v3235
      %v3282 = vunpack.c.h.b16 %v3235
      %v3283 = vunpack.c.l.b16 %v3236
      %v3284 = vunpack.c.h.b16 %v3236
      %v3285 = vpack.c.b16 %v3253, %v3253
      %v3286 = vpack.c.b16 %v3254, %v3254
      %v3287 = vpack.c.b16 %v3255, %v3255
      %v3288 = vpack.c.b16 %v3256, %v3256
      %v3289 = vpack.c.b16 %v3257, %v3257
      %v3290 = vpack.c.b16 %v3258, %v3258
      %v3291 = vpack.c.b16 %v3259, %v3259
      %v3292 = vpack.c.b16 %v3260, %v3260
      %v3293 = vpack.c.b16 %v3261, %v3261
      %v3294 = vpack.c.b16 %v3262, %v3262
      %v3295 = vpack.c.b16 %v3263, %v3263
      %v3296 = vpack.c.b16 %v3264, %v3264
      %v3297 = vpack.c.b16 %v3265, %v3265
      %v3298 = vpack.c.b16 %v3266, %v3266
      %v3299 = vpack.c.b16 %v3267, %v3267
      %v3300 = vpack.c.b16 %v3268, %v3268
      %v3301 = vpack.c.b16 %v3269, %v3269
      %v3302 = vpack.c.b16 %v3270, %v3270
      %v3303 = vpack.c.b16 %v3271, %v3271
      %v3304 = vpack.c.b16 %v3272, %v3272
      %v3305 = vpack.c.b16 %v3273, %v3273
      %v3306 = vpack.c.b16 %v3274, %v3274
      %v3307 = vpack.c.b16 %v3275, %v3275
      %v3308 = vpack.c.b16 %v3276, %v3276
      %v3309 = vpack.c.b16 %v3277, %v3277
      %v3310 = vpack.c.b16 %v3278, %v3278
      %v3311 = vpack.c.b16 %v3279, %v3279
      %v3312 = vpack.c.b16 %v3280, %v3280
      %v3313 = vpack.c.b16 %v3281, %v3281
      %v3314 = vpack.c.b16 %v3282, %v3282
      %v3315 = vpack.c.b16 %v3283, %v3283
      %v3316 = vpack.c.b16 %v3284, %v3284
      %3349 = vst [vmem:[%s262] sm:$0xf] %v3285
      %3350 = vst [vmem:[%s262 + $0x4] sm:$0xf] %v3286
      %3351 = vst [vmem:[%s262 + $0x8] sm:$0xf] %v3287
      %3352 = vst [vmem:[%s262 + $0xc] sm:$0xf] %v3288
      %3353 = vst [vmem:[%s262 + $0x10] sm:$0xf] %v3289
      %3354 = vst [vmem:[%s262 + $0x14] sm:$0xf] %v3290
      %3355 = vst [vmem:[%s262 + $0x18] sm:$0xf] %v3291
      %3356 = vst [vmem:[%s262 + $0x1c] sm:$0xf] %v3292
      %3357 = vst [vmem:[%s262 + $0x20] sm:$0xf] %v3293
      %3358 = vst [vmem:[%s262 + $0x24] sm:$0xf] %v3294
      %3359 = vst [vmem:[%s262 + $0x28] sm:$0xf] %v3295
      %3360 = vst [vmem:[%s262 + $0x2c] sm:$0xf] %v3296
      %3361 = vst [vmem:[%s262 + $0x30] sm:$0xf] %v3297
      %3362 = vst [vmem:[%s262 + $0x34] sm:$0xf] %v3298
      %3363 = vst [vmem:[%s262 + $0x38] sm:$0xf] %v3299
      %3364 = vst [vmem:[%s262 + $0x3c] sm:$0xf] %v3300
      %3365 = vst [vmem:[%s262 + $0x40] sm:$0xf] %v3301
      %3366 = vst [vmem:[%s262 + $0x44] sm:$0xf] %v3302
      %3367 = vst [vmem:[%s262 + $0x48] sm:$0xf] %v3303
      %3368 = vst [vmem:[%s262 + $0x4c] sm:$0xf] %v3304
      %3369 = vst [vmem:[%s262 + $0x50] sm:$0xf] %v3305
      %3370 = vst [vmem:[%s262 + $0x54] sm:$0xf] %v3306
      %3371 = vst [vmem:[%s262 + $0x58] sm:$0xf] %v3307
      %3372 = vst [vmem:[%s262 + $0x5c] sm:$0xf] %v3308
      %3373 = vst [vmem:[%s262 + $0x60] sm:$0xf] %v3309
      %3374 = vst [vmem:[%s262 + $0x64] sm:$0xf] %v3310
      %3375 = vst [vmem:[%s262 + $0x68] sm:$0xf] %v3311
      %3376 = vst [vmem:[%s262 + $0x6c] sm:$0xf] %v3312
      %3377 = vst [vmem:[%s262 + $0x70] sm:$0xf] %v3313
      %3378 = vst [vmem:[%s262 + $0x74] sm:$0xf] %v3314
      %3379 = vst [vmem:[%s262 + $0x78] sm:$0xf] %v3315
      %3380 = vst [vmem:[%s262 + $0x7c] sm:$0xf] %v3316
      %v3381 = vadd.f32 %v3189, %v3190
      %v3382 = vadd.f32 %v3381, %v3191
      %v3383 = vadd.f32 %v3382, %v3192
      %v3384 = vadd.f32 %v3383, %v3193
      %v3385 = vadd.f32 %v3384, %v3194
      %v3386 = vadd.f32 %v3385, %v3195
      %v3387 = vadd.f32 %v3386, %v3196
      %v3388 = vadd.f32 %v3387, %v3197
      %v3389 = vadd.f32 %v3388, %v3198
      %v3390 = vadd.f32 %v3389, %v3199
      %v3391 = vadd.f32 %v3390, %v3200
      %v3392 = vadd.f32 %v3391, %v3201
      %v3393 = vadd.f32 %v3392, %v3202
      %v3394 = vadd.f32 %v3393, %v3203
      %v3395 = vadd.f32 %v3394, %v3204
      %v3396 = vadd.f32 %v3395, %v3205
      %v3397 = vadd.f32 %v3396, %v3206
      %v3398 = vadd.f32 %v3397, %v3207
      %v3399 = vadd.f32 %v3398, %v3208
      %v3400 = vadd.f32 %v3399, %v3209
      %v3401 = vadd.f32 %v3400, %v3210
      %v3402 = vadd.f32 %v3401, %v3211
      %v3403 = vadd.f32 %v3402, %v3212
      %v3404 = vadd.f32 %v3403, %v3213
      %v3405 = vadd.f32 %v3404, %v3214
      %v3406 = vadd.f32 %v3405, %v3215
      %v3407 = vadd.f32 %v3406, %v3216
      %v3408 = vadd.f32 %v3407, %v3217
      %v3409 = vadd.f32 %v3408, %v3218
      %v3410 = vadd.f32 %v3409, %v3219
      %v3411 = vadd.f32 %v3410, %v3220
      %v3412 = vrot.slane %v3411, 4
      %v3413 = vadd.f32 %v3411, %v3412
      %v3414 = vrot.slane %v3413, 2
      %v3415 = vadd.f32 %v3413, %v3414
      %v3416 = vrot.slane %v3415, 1
      %v3417 = vadd.f32 %v3415, %v3416
      %3418 = vst [vmem:[%s265] sm:$0x1] %v3417
      %v3419 = vmul.f32 %v3189, %v3189
      %v3420 = vmul.f32 %v3190, %v3190
      %v3421 = vmul.f32 %v3191, %v3191
      %v3422 = vmul.f32 %v3192, %v3192
      %v3423 = vmul.f32 %v3193, %v3193
      %v3424 = vmul.f32 %v3194, %v3194
      %v3425 = vmul.f32 %v3195, %v3195
      %v3426 = vmul.f32 %v3196, %v3196
      %v3427 = vmul.f32 %v3197, %v3197
      %v3428 = vmul.f32 %v3198, %v3198
      %v3429 = vmul.f32 %v3199, %v3199
      %v3430 = vmul.f32 %v3200, %v3200
      %v3431 = vmul.f32 %v3201, %v3201
      %v3432 = vmul.f32 %v3202, %v3202
      %v3433 = vmul.f32 %v3203, %v3203
      %v3434 = vmul.f32 %v3204, %v3204
      %v3435 = vmul.f32 %v3205, %v3205
      %v3436 = vmul.f32 %v3206, %v3206
      %v3437 = vmul.f32 %v3207, %v3207
      %v3438 = vmul.f32 %v3208, %v3208
      %v3439 = vmul.f32 %v3209, %v3209
      %v3440 = vmul.f32 %v3210, %v3210
      %v3441 = vmul.f32 %v3211, %v3211
      %v3442 = vmul.f32 %v3212, %v3212
      %v3443 = vmul.f32 %v3213, %v3213
      %v3444 = vmul.f32 %v3214, %v3214
      %v3445 = vmul.f32 %v3215, %v3215
      %v3446 = vmul.f32 %v3216, %v3216
      %v3447 = vmul.f32 %v3217, %v3217
      %v3448 = vmul.f32 %v3218, %v3218
      %v3449 = vmul.f32 %v3219, %v3219
      %v3450 = vmul.f32 %v3220, %v3220
      %v3451 = vadd.f32 %v3419, %v3420
      %v3452 = vadd.f32 %v3451, %v3421
      %v3453 = vadd.f32 %v3452, %v3422
      %v3454 = vadd.f32 %v3453, %v3423
      %v3455 = vadd.f32 %v3454, %v3424
      %v3456 = vadd.f32 %v3455, %v3425
      %v3457 = vadd.f32 %v3456, %v3426
      %v3458 = vadd.f32 %v3457, %v3427
      %v3459 = vadd.f32 %v3458, %v3428
      %v3460 = vadd.f32 %v3459, %v3429
      %v3461 = vadd.f32 %v3460, %v3430
      %v3462 = vadd.f32 %v3461, %v3431
      %v3463 = vadd.f32 %v3462, %v3432
      %v3464 = vadd.f32 %v3463, %v3433
      %v3465 = vadd.f32 %v3464, %v3434
      %v3466 = vadd.f32 %v3465, %v3435
      %v3467 = vadd.f32 %v3466, %v3436
      %v3468 = vadd.f32 %v3467, %v3437
      %v3469 = vadd.f32 %v3468, %v3438
      %v3470 = vadd.f32 %v3469, %v3439
      %v3471 = vadd.f32 %v3470, %v3440
      %v3472 = vadd.f32 %v3471, %v3441
      %v3473 = vadd.f32 %v3472, %v3442
      %v3474 = vadd.f32 %v3473, %v3443
      %v3475 = vadd.f32 %v3474, %v3444
      %v3476 = vadd.f32 %v3475, %v3445
      %v3477 = vadd.f32 %v3476, %v3446
      %v3478 = vadd.f32 %v3477, %v3447
      %v3479 = vadd.f32 %v3478, %v3448
      %v3480 = vadd.f32 %v3479, %v3449
      %v3481 = vadd.f32 %v3480, %v3450
      %v3482 = vrot.slane %v3481, 4
      %v3483 = vadd.f32 %v3481, %v3482
      %v3484 = vrot.slane %v3483, 2
      %v3485 = vadd.f32 %v3483, %v3484
      %v3486 = vrot.slane %v3485, 1
      %v3487 = vadd.f32 %v3485, %v3486
      %3488 = vst [vmem:[%s268] sm:$0x1] %v3487
      %p3489 = scmp.lt.s32.totalorder %s18, 1
      %s3490 = scalar_select %p3489, %s18, 1
      %s3491 = smul.addr %s3490, 32
      %s3492 = smul.addr %s3491, 4
      %s3493 = scalar_lea.vmem %s4, %s3492
      %p3494 = scmp.lt.s32.totalorder %s18, 1
      %s3495 = scalar_select %p3494, %s18, 1
      %s3496 = scalar_lea.vmem %s5, %s3495
      %p3497 = scmp.lt.s32.totalorder %s18, 1
      %s3498 = scalar_select %p3497, %s18, 1
      %s3499 = scalar_lea.vmem %s6, %s3498
      // Predicated region
      $region37: #{bottleneck_forward.5} parent=35 // pred_check
        %p3500 = pneg %p125
      $region38: #{bottleneck_forward.5} parent=35 // pred_check_branch
        %3502 = sbr.rel (%p3500) target = $region40
      $region39: #{bottleneck_forward.5} parent=35 // pred_region
        _
      $region40: #{bottleneck_forward.5} parent=35 // pred_fallthru
        _
      // Predicated region
      $region41: #{bottleneck_forward.5} parent=35 // pred_check
        %p3503 = pneg %p151
      $region42: #{bottleneck_forward.5} parent=35 // pred_check_branch
        %3505 = sbr.rel (%p3503) target = $region44
      $region43: #{bottleneck_forward.5} parent=35 // pred_region
        _
      $region44: #{bottleneck_forward.5} parent=35 // pred_fallthru
        _
      // Predicated region
      $region45: #{bottleneck_forward.5} parent=35 // pred_check
        %p3506 = pneg %p177
      $region46: #{bottleneck_forward.5} parent=35 // pred_check_branch
        %3508 = sbr.rel (%p3506) target = $region48
      $region47: #{bottleneck_forward.5} parent=35 // pred_region
        _
      $region48: #{bottleneck_forward.5} parent=35 // pred_fallthru
        _
    $region36: #{bottleneck_forward.5} parent=5 // pred_fallthru
      _
    %p3509 = scmp.le.s32.totalorder 2, %s13
    // Predicated region
    $region49: #{bottleneck_forward.5} parent=5 // pred_check
      %p3510 = pneg %p3509
    $region50: #{bottleneck_forward.5} parent=5 // pred_check_branch
      %3512 = sbr.rel (%p3510) target = $region52
    $region51: #{bottleneck_forward.5} parent=5 // pred_region
      %s3513 = ssub.s32 %s13, 2
      // Predicated region
      $region53: #{bottleneck_forward.5} parent=51 // pred_check
        %p3514 = pneg %p131
      $region54: #{bottleneck_forward.5} parent=51 // pred_check_branch
        %3516 = sbr.rel (%p3514) target = $region56
      $region55: #{bottleneck_forward.5} parent=51 // pred_region
        %p3517 = scmp.lt.s32.totalorder %s19, 1
        %s3518 = scalar_select %p3517, %s19, 1
        %s3519 = smul.addr %s3518, 32
        %s3520 = smul.addr %s3519, 4
        %s3521 = scalar_lea.vmem %s4, %s3520
      $region56: #{bottleneck_forward.5} parent=51 // pred_fallthru
        _
      // Predicated region
      $region57: #{bottleneck_forward.5} parent=51 // pred_check
        %p3522 = pneg %p157
      $region58: #{bottleneck_forward.5} parent=51 // pred_check_branch
        %3524 = sbr.rel (%p3522) target = $region60
      $region59: #{bottleneck_forward.5} parent=51 // pred_region
        %p3525 = scmp.lt.s32.totalorder %s19, 1
        %s3526 = scalar_select %p3525, %s19, 1
        %s3527 = scalar_lea.vmem %s5, %s3526
      $region60: #{bottleneck_forward.5} parent=51 // pred_fallthru
        _
      // Predicated region
      $region61: #{bottleneck_forward.5} parent=51 // pred_check
        %p3528 = pneg %p183
      $region62: #{bottleneck_forward.5} parent=51 // pred_check_branch
        %3530 = sbr.rel (%p3528) target = $region64
      $region63: #{bottleneck_forward.5} parent=51 // pred_region
        %p3531 = scmp.lt.s32.totalorder %s19, 1
        %s3532 = scalar_select %p3531, %s19, 1
        %s3533 = scalar_lea.vmem %s6, %s3532
      $region64: #{bottleneck_forward.5} parent=51 // pred_fallthru
        _
    $region52: #{bottleneck_forward.5} parent=5 // pred_fallthru
      _
  $region6: #{bottleneck_forward.5} parent=0 // loop_footer
    %s17 = sadd.s32 1, %s13
  $region7: #{bottleneck_forward.5} parent=0 // loop_footer_branch
    %12 = sbr.rel target = $region3
  $region8: #{bottleneck_forward.5} parent=0 // loop_exit
    _

</llo_original>
